<compile_context>
chip_gen: v6e
topology: v6e:2x2x1
jax: 0.10.0
libtpu: 0.0.40
codegen_flags: <defaults>
</compile_context>

<pallas_src>
import functools

import jax
import jax.numpy as jnp
from jax import lax
from jax.experimental import pallas as pl
from jax.experimental.pallas import tpu as pltpu


# ---------------------------------------------------------------------------
# In-kernel building blocks
# ---------------------------------------------------------------------------

def _conv_windows_matmul(x_ref, w_ref, taps, oh, ow):
    """Windowed conv as a single MXU matmul, entirely in VMEM.

    x_ref : (N, Hs, Ws, C) bf16   space-to-depth'd input for stride-2 layers,
                                  zero-padded input for the stride-1 layer.
    w_ref : (len(taps)*C, Cout) bf16, K ordered (tap, channel).
    Returns y : (N*oh, ow, Cout) float32.
    """
    n = x_ref.shape[0]
    c = x_ref.shape[3]
    b = n * oh
    wins = []
    for (di, dj) in taps:
        win = x_ref[:, di:di + oh, dj:dj + ow, :]    # static window load
        wins.append(win.reshape(b, ow, c))           # collapse leading dims only
    patches = jnp.concatenate(wins, axis=-1)         # (B, ow, K) lane concat
    k = patches.shape[-1]
    cout = w_ref.shape[1]
    w_b = jnp.broadcast_to(w_ref[...], (b, k, cout))
    return jnp.einsum('bok,bkc->boc', patches, w_b,
                      preferred_element_type=jnp.float32)


def _sum_bo(t):
    """Sum over the two leading (batch-spatial) axes, keepdims."""
    return jnp.sum(jnp.sum(t, axis=1, keepdims=True), axis=0, keepdims=True)


def _cnr_bn_lrelu_kernel(x_ref, w_ref, g_ref, b_ref, o_ref, *,
                         taps, oh, ow, eps, slope):
    """Fused Conv -> BatchNorm(batch stats) -> LeakyReLU, single HBM write."""
    y = _conv_windows_matmul(x_ref, w_ref, taps, oh, ow)     # (B, ow, Cout) f32
    m_total = y.shape[0] * y.shape[1]
    mean = _sum_bo(y) / m_total                               # (1, 1, Cout)
    var = jnp.maximum(_sum_bo(y * y) / m_total - mean * mean, 0.0)
    scale = g_ref[...] * lax.rsqrt(var + eps)
    shift = b_ref[...] - mean * scale
    y = y * scale + shift
    o_ref[...] = jnp.where(y >= 0.0, y, slope * y).astype(o_ref.dtype)


def _conv_only_kernel(x_ref, w_ref, o_ref, *, taps, oh, ow):
    """Plain conv (dsc5: no norm, no activation)."""
    y = _conv_windows_matmul(x_ref, w_ref, taps, oh, ow)
    o_ref[...] = y.astype(o_ref.dtype)


# ---------------------------------------------------------------------------
# pallas_call wrapper (whole-layer resident, VMEM budget from actual sizes)
# ---------------------------------------------------------------------------

def _padded_bytes(shape, dtype):
    dims = list(shape)
    dims[-1] = -(-dims[-1] // 128) * 128
    if len(dims) >= 2:
        dims[-2] = -(-dims[-2] // 8) * 8
    size = 1
    for d in dims:
        size *= int(d)
    return size * jnp.dtype(dtype).itemsize


def _fused_call(kernel, inputs, out_shape, out_dtype):
    est = sum(_padded_bytes(a.shape, a.dtype) for a in inputs)
    est += _padded_bytes(out_shape, out_dtype)
    est *= 8  # headroom for in-kernel temporaries (windows, concat, f32 acc)
    if est > 48 * 1024 * 1024:
        # TODO(synk): M-tiled two-pass grid for layers that exceed VMEM.
        raise ValueError("layer too large for the VMEM-resident fused kernel")
    vmem_limit = max(16 * 1024 * 1024, int(est))
    return pl.pallas_call(
        kernel,
        out_shape=jax.ShapeDtypeStruct(out_shape, out_dtype),
        compiler_params=pltpu.CompilerParams(vmem_limit_bytes=vmem_limit),
    )(*inputs)


# ---------------------------------------------------------------------------
# Layer wrappers (cheap XLA glue: pad + space-to-depth + weight repack)
# ---------------------------------------------------------------------------

def _space_to_depth2(xpad):
    n, hp, wp, c = xpad.shape
    xs = xpad.reshape(n, hp // 2, 2, wp // 2, 2, c)
    xs = jnp.transpose(xs, (0, 1, 3, 2, 4, 5))        # (n, a, b, pi, pj, ci)
    return xs.reshape(n, hp // 2, wp // 2, 4 * c)


def _wmat_stride2(weight):
    # PyTorch (Cout, Cin, 4, 4) -> (16*Cin, Cout) with K order (di, dj, pi, pj, ci)
    cout, cin = weight.shape[0], weight.shape[1]
    w6 = weight.reshape(cout, cin, 2, 2, 2, 2)         # (co, ci, di, pi, dj, pj)
    w6 = jnp.transpose(w6, (2, 4, 3, 5, 1, 0))         # (di, dj, pi, pj, ci, co)
    return w6.reshape(16 * cin, cout)


def _wmat_stride1(weight):
    # PyTorch (Cout, Cin, 4, 4) -> (16*Cin, Cout) with K order (ki, kj, ci)
    cout, cin = weight.shape[0], weight.shape[1]
    return jnp.transpose(weight, (2, 3, 1, 0)).reshape(16 * cin, cout)


_TAPS_S2 = ((0, 0), (0, 1), (1, 0), (1, 1))
_TAPS_S1 = tuple((ki, kj) for ki in range(4) for kj in range(4))


def cnr2d_s2(x_nhwc, weight, gamma, beta, *, slope=0.2, eps=1e-5):
    """Conv2d(k=4, s=2, p=1, bias=False) + BatchNorm2d(batch stats) + LeakyReLU."""
    n, h, w, _ = x_nhwc.shape
    assert h % 2 == 0 and w % 2 == 0, "stride-2 layer needs even spatial dims"
    cout = weight.shape[0]
    oh, ow = h // 2, w // 2
    xpad = jnp.pad(x_nhwc.astype(jnp.bfloat16), ((0, 0), (1, 1), (1, 1), (0, 0)))
    xs = _space_to_depth2(xpad)                        # (N, H/2+1, W/2+1, 4*Cin)
    wmat = _wmat_stride2(weight).astype(jnp.bfloat16)
    g = gamma.reshape(1, 1, cout).astype(jnp.float32)
    b = beta.reshape(1, 1, cout).astype(jnp.float32)
    kernel = functools.partial(_cnr_bn_lrelu_kernel, taps=_TAPS_S2,
                               oh=oh, ow=ow, eps=eps, slope=slope)
    y = _fused_call(kernel, (xs, wmat, g, b), (n * oh, ow, cout), jnp.bfloat16)
    return y.reshape(n, oh, ow, cout)


def conv2d_s1(x_nhwc, weight):
    """Conv2d(k=4, s=1, p=1, bias=False) — dsc5."""
    n, h, w, _ = x_nhwc.shape
    cout = weight.shape[0]
    oh, ow = h - 1, w - 1
    xpad = jnp.pad(x_nhwc.astype(jnp.bfloat16), ((0, 0), (1, 1), (1, 1), (0, 0)))
    wmat = _wmat_stride1(weight).astype(jnp.bfloat16)
    kernel = functools.partial(_conv_only_kernel, taps=_TAPS_S1, oh=oh, ow=ow)
    y = _fused_call(kernel, (xpad, wmat), (n * oh, ow, cout), jnp.float32)
    return y.reshape(n, oh, ow, cout)


# ---------------------------------------------------------------------------
# Full discriminator forward
# ---------------------------------------------------------------------------

@jax.jit
def discriminator_forward(x_nchw, params):
    x = jnp.transpose(x_nchw, (0, 2, 3, 1))            # NCHW -> NHWC
    for name in ("dsc1", "dsc2", "dsc3", "dsc4"):
        w, g, b = params[name]
        x = cnr2d_s2(x, w, g, b)
    (w5,) = params["dsc5"]
    x = conv2d_s1(x, w5)
    return jnp.transpose(x, (0, 3, 1, 2)).astype(jnp.float32)   # NHWC -> NCHW


def init_params(key, nch_in, nch_ker):
    chans = [
        (1 * nch_in, 1 * nch_ker),
        (1 * nch_ker, 2 * nch_ker),
        (2 * nch_ker, 4 * nch_ker),
        (4 * nch_ker, 8 * nch_ker),
    ]
    params = {}
    for idx, (cin, cout) in enumerate(chans):
        key, k1 = jax.random.split(key)
        w = 0.05 * jax.random.normal(k1, (cout, cin, 4, 4), jnp.float32)
        params[f"dsc{idx + 1}"] = (w,
                                   jnp.ones((cout,), jnp.float32),
                                   jnp.zeros((cout,), jnp.float32))
    key, k5 = jax.random.split(key)
    w5 = 0.05 * jax.random.normal(k5, (1, 8 * nch_ker, 4, 4), jnp.float32)
    params["dsc5"] = (w5,)
    return params


if __name__ == "__main__":
    key = jax.random.PRNGKey(0)
    kx, kp = jax.random.split(key)

    # Smallest shapes consistent with the module: four stride-2 (k=4, p=1)
    # convs followed by a stride-1 k=4 conv require input spatial >= 32.
    N, nch_in, nch_ker, H, W = 2, 4, 8, 32, 32
    x = jax.random.normal(kx, (N, nch_in, H, W), jnp.float32)
    params = init_params(kp, nch_in, nch_ker)

    out = jax.block_until_ready(discriminator_forward(x, params))
    assert out.shape == (N, 1, 1, 1), out.shape
    assert bool(jnp.all(jnp.isfinite(out)))
    print("KERNEL_OK")
</pallas_src>

<mosaic_0001>
module attributes {stable_mosaic.version = 11 : i64} {
  func.func @_cnr_bn_lrelu_kernel(%arg0: memref<2x17x17x16xbf16, #tpu.memory_space<vmem>>, %arg1: memref<64x8xbf16, #tpu.memory_space<vmem>>, %arg2: memref<1x1x8xf32, #tpu.memory_space<vmem>>, %arg3: memref<1x1x8xf32, #tpu.memory_space<vmem>>, %arg4: memref<32x16x8xbf16, #tpu.memory_space<vmem>>) attributes {dimension_semantics = [], scalar_prefetch = 0 : i64, scratch_operands = 0 : i64, tpu.core_type = #tpu.core_type<tc>} {
    %c0 = arith.constant 0 : index
    %c0_0 = arith.constant 0 : index
    %c0_1 = arith.constant 0 : index
    %c0_2 = arith.constant 0 : index
    %0 = vector.load %arg0[%c0, %c0_0, %c0_1, %c0_2] : memref<2x17x17x16xbf16, #tpu.memory_space<vmem>>, vector<2x16x16x16xbf16>
    %1 = vector.shape_cast %0 : vector<2x16x16x16xbf16> to vector<32x16x16xbf16>
    %c0_3 = arith.constant 0 : index
    %c0_4 = arith.constant 0 : index
    %c1 = arith.constant 1 : index
    %c0_5 = arith.constant 0 : index
    %2 = vector.load %arg0[%c0_3, %c0_4, %c1, %c0_5] : memref<2x17x17x16xbf16, #tpu.memory_space<vmem>>, vector<2x16x16x16xbf16>
    %3 = vector.shape_cast %2 : vector<2x16x16x16xbf16> to vector<32x16x16xbf16>
    %c0_6 = arith.constant 0 : index
    %c1_7 = arith.constant 1 : index
    %c0_8 = arith.constant 0 : index
    %c0_9 = arith.constant 0 : index
    %4 = vector.load %arg0[%c0_6, %c1_7, %c0_8, %c0_9] : memref<2x17x17x16xbf16, #tpu.memory_space<vmem>>, vector<2x16x16x16xbf16>
    %5 = vector.shape_cast %4 : vector<2x16x16x16xbf16> to vector<32x16x16xbf16>
    %c0_10 = arith.constant 0 : index
    %c1_11 = arith.constant 1 : index
    %c1_12 = arith.constant 1 : index
    %c0_13 = arith.constant 0 : index
    %6 = vector.load %arg0[%c0_10, %c1_11, %c1_12, %c0_13] : memref<2x17x17x16xbf16, #tpu.memory_space<vmem>>, vector<2x16x16x16xbf16>
    %7 = vector.shape_cast %6 : vector<2x16x16x16xbf16> to vector<32x16x16xbf16>
    %8 = tpu.concatenate %1, %3, %5, %7 in 2 : vector<32x16x16xbf16>, vector<32x16x16xbf16>, vector<32x16x16xbf16>, vector<32x16x16xbf16> -> vector<32x16x64xbf16>
    %c0_14 = arith.constant 0 : index
    %c0_15 = arith.constant 0 : index
    %9 = vector.load %arg1[%c0_14, %c0_15] : memref<64x8xbf16, #tpu.memory_space<vmem>>, vector<64x8xbf16>
    %10 = vector.shape_cast %9 : vector<64x8xbf16> to vector<1x64x8xbf16>
    %11 = vector.broadcast %10 : vector<1x64x8xbf16> to vector<32x64x8xbf16>
    "tpu.trace_start"() <{level = 10 : i32, message = "bok,bkc->boc"}> : () -> ()
    %cst = arith.constant dense<0.000000e+00> : vector<32x16x8xf32>
    %12 = tpu.matmul %8, %11, %cst {dimension_numbers = #tpu.dot_dimension_numbers<[2], [1], [1], [2], [0, 0, 0, 1, 1, 2], [0], [0]>} : vector<32x16x64xbf16>, vector<32x64x8xbf16>, vector<32x16x8xf32> -> vector<32x16x8xf32>
    "tpu.trace_stop"() : () -> ()
    %cst_16 = arith.constant dense<0.000000e+00> : vector<32x8xf32>
    %13 = vector.multi_reduction <add>, %12, %cst_16 [1] : vector<32x16x8xf32> to vector<32x8xf32>
    %14 = vector.shape_cast %13 : vector<32x8xf32> to vector<32x1x8xf32>
    %cst_17 = arith.constant dense<0.000000e+00> : vector<1x8xf32>
    %15 = vector.multi_reduction <add>, %14, %cst_17 [0] : vector<32x1x8xf32> to vector<1x8xf32>
    %16 = vector.shape_cast %15 : vector<1x8xf32> to vector<1x1x8xf32>
    %cst_18 = arith.constant 5.120000e+02 : f32
    %17 = vector.broadcast %cst_18 : f32 to vector<1x1x8xf32>
    %18 = arith.divf %16, %17 : vector<1x1x8xf32>
    %19 = arith.mulf %12, %12 : vector<32x16x8xf32>
    %cst_19 = arith.constant dense<0.000000e+00> : vector<32x8xf32>
    %20 = vector.multi_reduction <add>, %19, %cst_19 [1] : vector<32x16x8xf32> to vector<32x8xf32>
    %21 = vector.shape_cast %20 : vector<32x8xf32> to vector<32x1x8xf32>
    %cst_20 = arith.constant dense<0.000000e+00> : vector<1x8xf32>
    %22 = vector.multi_reduction <add>, %21, %cst_20 [0] : vector<32x1x8xf32> to vector<1x8xf32>
    %23 = vector.shape_cast %22 : vector<1x8xf32> to vector<1x1x8xf32>
    %cst_21 = arith.constant 5.120000e+02 : f32
    %24 = vector.broadcast %cst_21 : f32 to vector<1x1x8xf32>
    %25 = arith.divf %23, %24 : vector<1x1x8xf32>
    %26 = arith.mulf %18, %18 : vector<1x1x8xf32>
    %27 = arith.subf %25, %26 : vector<1x1x8xf32>
    %cst_22 = arith.constant 0.000000e+00 : f32
    %28 = vector.broadcast %cst_22 : f32 to vector<1x1x8xf32>
    %29 = arith.maximumf %27, %28 : vector<1x1x8xf32>
    %c0_23 = arith.constant 0 : index
    %c0_24 = arith.constant 0 : index
    %c0_25 = arith.constant 0 : index
    %30 = vector.load %arg2[%c0_23, %c0_24, %c0_25] : memref<1x1x8xf32, #tpu.memory_space<vmem>>, vector<1x1x8xf32>
    %cst_26 = arith.constant 9.99999974E-6 : f32
    %31 = vector.broadcast %cst_26 : f32 to vector<1x1x8xf32>
    %32 = arith.addf %29, %31 : vector<1x1x8xf32>
    %33 = math.rsqrt %32 : vector<1x1x8xf32>
    %34 = arith.mulf %30, %33 : vector<1x1x8xf32>
    %c0_27 = arith.constant 0 : index
    %c0_28 = arith.constant 0 : index
    %c0_29 = arith.constant 0 : index
    %35 = vector.load %arg3[%c0_27, %c0_28, %c0_29] : memref<1x1x8xf32, #tpu.memory_space<vmem>>, vector<1x1x8xf32>
    %36 = arith.mulf %18, %34 : vector<1x1x8xf32>
    %37 = arith.subf %35, %36 : vector<1x1x8xf32>
    %38 = vector.broadcast %34 : vector<1x1x8xf32> to vector<32x16x8xf32>
    %39 = arith.mulf %12, %38 : vector<32x16x8xf32>
    %40 = vector.broadcast %37 : vector<1x1x8xf32> to vector<32x16x8xf32>
    %41 = arith.addf %39, %40 : vector<32x16x8xf32>
    %cst_30 = arith.constant 0.000000e+00 : f32
    %42 = vector.broadcast %cst_30 : f32 to vector<32x16x8xf32>
    %43 = arith.cmpf oge, %41, %42 : vector<32x16x8xf32>
    %cst_31 = arith.constant 2.000000e-01 : f32
    %44 = vector.broadcast %cst_31 : f32 to vector<32x16x8xf32>
    %45 = arith.mulf %44, %41 : vector<32x16x8xf32>
    %46 = arith.select %43, %41, %45 : vector<32x16x8xi1>, vector<32x16x8xf32>
    %47 = arith.truncf %46 : vector<32x16x8xf32> to vector<32x16x8xbf16>
    %c0_32 = arith.constant 0 : index
    %c0_33 = arith.constant 0 : index
    %c0_34 = arith.constant 0 : index
    %48 = vector.load %arg4[%c0_32, %c0_33, %c0_34] : memref<32x16x8xbf16, #tpu.memory_space<vmem>>, vector<32x16x8xbf16>
    tpu.vector_store %arg4[%c0_32, %c0_33, %c0_34], %47 {strides = array<i32>} : memref<32x16x8xbf16, #tpu.memory_space<vmem>>, vector<32x16x8xbf16>,
    return
  }
}

module attributes {stable_mosaic.version = 11 : i64} {
  func.func @_cnr_bn_lrelu_kernel(%arg0: memref<2x9x9x32xbf16, #tpu.memory_space<vmem>>, %arg1: memref<128x16xbf16, #tpu.memory_space<vmem>>, %arg2: memref<1x1x16xf32, #tpu.memory_space<vmem>>, %arg3: memref<1x1x16xf32, #tpu.memory_space<vmem>>, %arg4: memref<16x8x16xbf16, #tpu.memory_space<vmem>>) attributes {dimension_semantics = [], scalar_prefetch = 0 : i64, scratch_operands = 0 : i64, tpu.core_type = #tpu.core_type<tc>} {
    %c0 = arith.constant 0 : index
    %c0_0 = arith.constant 0 : index
    %c0_1 = arith.constant 0 : index
    %c0_2 = arith.constant 0 : index
    %0 = vector.load %arg0[%c0, %c0_0, %c0_1, %c0_2] : memref<2x9x9x32xbf16, #tpu.memory_space<vmem>>, vector<2x8x8x32xbf16>
    %1 = vector.shape_cast %0 : vector<2x8x8x32xbf16> to vector<16x8x32xbf16>
    %c0_3 = arith.constant 0 : index
    %c0_4 = arith.constant 0 : index
    %c1 = arith.constant 1 : index
    %c0_5 = arith.constant 0 : index
    %2 = vector.load %arg0[%c0_3, %c0_4, %c1, %c0_5] : memref<2x9x9x32xbf16, #tpu.memory_space<vmem>>, vector<2x8x8x32xbf16>
    %3 = vector.shape_cast %2 : vector<2x8x8x32xbf16> to vector<16x8x32xbf16>
    %c0_6 = arith.constant 0 : index
    %c1_7 = arith.constant 1 : index
    %c0_8 = arith.constant 0 : index
    %c0_9 = arith.constant 0 : index
    %4 = vector.load %arg0[%c0_6, %c1_7, %c0_8, %c0_9] : memref<2x9x9x32xbf16, #tpu.memory_space<vmem>>, vector<2x8x8x32xbf16>
    %5 = vector.shape_cast %4 : vector<2x8x8x32xbf16> to vector<16x8x32xbf16>
    %c0_10 = arith.constant 0 : index
    %c1_11 = arith.constant 1 : index
    %c1_12 = arith.constant 1 : index
    %c0_13 = arith.constant 0 : index
    %6 = vector.load %arg0[%c0_10, %c1_11, %c1_12, %c0_13] : memref<2x9x9x32xbf16, #tpu.memory_space<vmem>>, vector<2x8x8x32xbf16>
    %7 = vector.shape_cast %6 : vector<2x8x8x32xbf16> to vector<16x8x32xbf16>
    %8 = tpu.concatenate %1, %3, %5, %7 in 2 : vector<16x8x32xbf16>, vector<16x8x32xbf16>, vector<16x8x32xbf16>, vector<16x8x32xbf16> -> vector<16x8x128xbf16>
    %c0_14 = arith.constant 0 : index
    %c0_15 = arith.constant 0 : index
    %9 = vector.load %arg1[%c0_14, %c0_15] : memref<128x16xbf16, #tpu.memory_space<vmem>>, vector<128x16xbf16>
    %10 = vector.shape_cast %9 : vector<128x16xbf16> to vector<1x128x16xbf16>
    %11 = vector.broadcast %10 : vector<1x128x16xbf16> to vector<16x128x16xbf16>
    "tpu.trace_start"() <{level = 10 : i32, message = "bok,bkc->boc"}> : () -> ()
    %cst = arith.constant dense<0.000000e+00> : vector<16x8x16xf32>
    %12 = tpu.matmul %8, %11, %cst {dimension_numbers = #tpu.dot_dimension_numbers<[2], [1], [1], [2], [0, 0, 0, 1, 1, 2], [0], [0]>} : vector<16x8x128xbf16>, vector<16x128x16xbf16>, vector<16x8x16xf32> -> vector<16x8x16xf32>
    "tpu.trace_stop"() : () -> ()
    %cst_16 = arith.constant dense<0.000000e+00> : vector<16x16xf32>
    %13 = vector.multi_reduction <add>, %12, %cst_16 [1] : vector<16x8x16xf32> to vector<16x16xf32>
    %14 = vector.shape_cast %13 : vector<16x16xf32> to vector<16x1x16xf32>
    %cst_17 = arith.constant dense<0.000000e+00> : vector<1x16xf32>
    %15 = vector.multi_reduction <add>, %14, %cst_17 [0] : vector<16x1x16xf32> to vector<1x16xf32>
    %16 = vector.shape_cast %15 : vector<1x16xf32> to vector<1x1x16xf32>
    %cst_18 = arith.constant 1.280000e+02 : f32
    %17 = vector.broadcast %cst_18 : f32 to vector<1x1x16xf32>
    %18 = arith.divf %16, %17 : vector<1x1x16xf32>
    %19 = arith.mulf %12, %12 : vector<16x8x16xf32>
    %cst_19 = arith.constant dense<0.000000e+00> : vector<16x16xf32>
    %20 = vector.multi_reduction <add>, %19, %cst_19 [1] : vector<16x8x16xf32> to vector<16x16xf32>
    %21 = vector.shape_cast %20 : vector<16x16xf32> to vector<16x1x16xf32>
    %cst_20 = arith.constant dense<0.000000e+00> : vector<1x16xf32>
    %22 = vector.multi_reduction <add>, %21, %cst_20 [0] : vector<16x1x16xf32> to vector<1x16xf32>
    %23 = vector.shape_cast %22 : vector<1x16xf32> to vector<1x1x16xf32>
    %cst_21 = arith.constant 1.280000e+02 : f32
    %24 = vector.broadcast %cst_21 : f32 to vector<1x1x16xf32>
    %25 = arith.divf %23, %24 : vector<1x1x16xf32>
    %26 = arith.mulf %18, %18 : vector<1x1x16xf32>
    %27 = arith.subf %25, %26 : vector<1x1x16xf32>
    %cst_22 = arith.constant 0.000000e+00 : f32
    %28 = vector.broadcast %cst_22 : f32 to vector<1x1x16xf32>
    %29 = arith.maximumf %27, %28 : vector<1x1x16xf32>
    %c0_23 = arith.constant 0 : index
    %c0_24 = arith.constant 0 : index
    %c0_25 = arith.constant 0 : index
    %30 = vector.load %arg2[%c0_23, %c0_24, %c0_25] : memref<1x1x16xf32, #tpu.memory_space<vmem>>, vector<1x1x16xf32>
    %cst_26 = arith.constant 9.99999974E-6 : f32
    %31 = vector.broadcast %cst_26 : f32 to vector<1x1x16xf32>
    %32 = arith.addf %29, %31 : vector<1x1x16xf32>
    %33 = math.rsqrt %32 : vector<1x1x16xf32>
    %34 = arith.mulf %30, %33 : vector<1x1x16xf32>
    %c0_27 = arith.constant 0 : index
    %c0_28 = arith.constant 0 : index
    %c0_29 = arith.constant 0 : index
    %35 = vector.load %arg3[%c0_27, %c0_28, %c0_29] : memref<1x1x16xf32, #tpu.memory_space<vmem>>, vector<1x1x16xf32>
    %36 = arith.mulf %18, %34 : vector<1x1x16xf32>
    %37 = arith.subf %35, %36 : vector<1x1x16xf32>
    %38 = vector.broadcast %34 : vector<1x1x16xf32> to vector<16x8x16xf32>
    %39 = arith.mulf %12, %38 : vector<16x8x16xf32>
    %40 = vector.broadcast %37 : vector<1x1x16xf32> to vector<16x8x16xf32>
    %41 = arith.addf %39, %40 : vector<16x8x16xf32>
    %cst_30 = arith.constant 0.000000e+00 : f32
    %42 = vector.broadcast %cst_30 : f32 to vector<16x8x16xf32>
    %43 = arith.cmpf oge, %41, %42 : vector<16x8x16xf32>
    %cst_31 = arith.constant 2.000000e-01 : f32
    %44 = vector.broadcast %cst_31 : f32 to vector<16x8x16xf32>
    %45 = arith.mulf %44, %41 : vector<16x8x16xf32>
    %46 = arith.select %43, %41, %45 : vector<16x8x16xi1>, vector<16x8x16xf32>
    %47 = arith.truncf %46 : vector<16x8x16xf32> to vector<16x8x16xbf16>
    %c0_32 = arith.constant 0 : index
    %c0_33 = arith.constant 0 : index
    %c0_34 = arith.constant 0 : index
    %48 = vector.load %arg4[%c0_32, %c0_33, %c0_34] : memref<16x8x16xbf16, #tpu.memory_space<vmem>>, vector<16x8x16xbf16>
    tpu.vector_store %arg4[%c0_32, %c0_33, %c0_34], %47 {strides = array<i32>} : memref<16x8x16xbf16, #tpu.memory_space<vmem>>, vector<16x8x16xbf16>,
    return
  }
}

module attributes {stable_mosaic.version = 11 : i64} {
  func.func @_cnr_bn_lrelu_kernel(%arg0: memref<2x5x5x64xbf16, #tpu.memory_space<vmem>>, %arg1: memref<256x32xbf16, #tpu.memory_space<vmem>>, %arg2: memref<1x1x32xf32, #tpu.memory_space<vmem>>, %arg3: memref<1x1x32xf32, #tpu.memory_space<vmem>>, %arg4: memref<8x4x32xbf16, #tpu.memory_space<vmem>>) attributes {dimension_semantics = [], scalar_prefetch = 0 : i64, scratch_operands = 0 : i64, tpu.core_type = #tpu.core_type<tc>} {
    %c0 = arith.constant 0 : index
    %c0_0 = arith.constant 0 : index
    %c0_1 = arith.constant 0 : index
    %c0_2 = arith.constant 0 : index
    %0 = vector.load %arg0[%c0, %c0_0, %c0_1, %c0_2] : memref<2x5x5x64xbf16, #tpu.memory_space<vmem>>, vector<2x4x4x64xbf16>
    %1 = vector.shape_cast %0 : vector<2x4x4x64xbf16> to vector<8x4x64xbf16>
    %c0_3 = arith.constant 0 : index
    %c0_4 = arith.constant 0 : index
    %c1 = arith.constant 1 : index
    %c0_5 = arith.constant 0 : index
    %2 = vector.load %arg0[%c0_3, %c0_4, %c1, %c0_5] : memref<2x5x5x64xbf16, #tpu.memory_space<vmem>>, vector<2x4x4x64xbf16>
    %3 = vector.shape_cast %2 : vector<2x4x4x64xbf16> to vector<8x4x64xbf16>
    %c0_6 = arith.constant 0 : index
    %c1_7 = arith.constant 1 : index
    %c0_8 = arith.constant 0 : index
    %c0_9 = arith.constant 0 : index
    %4 = vector.load %arg0[%c0_6, %c1_7, %c0_8, %c0_9] : memref<2x5x5x64xbf16, #tpu.memory_space<vmem>>, vector<2x4x4x64xbf16>
    %5 = vector.shape_cast %4 : vector<2x4x4x64xbf16> to vector<8x4x64xbf16>
    %c0_10 = arith.constant 0 : index
    %c1_11 = arith.constant 1 : index
    %c1_12 = arith.constant 1 : index
    %c0_13 = arith.constant 0 : index
    %6 = vector.load %arg0[%c0_10, %c1_11, %c1_12, %c0_13] : memref<2x5x5x64xbf16, #tpu.memory_space<vmem>>, vector<2x4x4x64xbf16>
    %7 = vector.shape_cast %6 : vector<2x4x4x64xbf16> to vector<8x4x64xbf16>
    %8 = tpu.concatenate %1, %3, %5, %7 in 2 : vector<8x4x64xbf16>, vector<8x4x64xbf16>, vector<8x4x64xbf16>, vector<8x4x64xbf16> -> vector<8x4x256xbf16>
    %c0_14 = arith.constant 0 : index
    %c0_15 = arith.constant 0 : index
    %9 = vector.load %arg1[%c0_14, %c0_15] : memref<256x32xbf16, #tpu.memory_space<vmem>>, vector<256x32xbf16>
    %10 = vector.shape_cast %9 : vector<256x32xbf16> to vector<1x256x32xbf16>
    %11 = vector.broadcast %10 : vector<1x256x32xbf16> to vector<8x256x32xbf16>
    "tpu.trace_start"() <{level = 10 : i32, message = "bok,bkc->boc"}> : () -> ()
    %cst = arith.constant dense<0.000000e+00> : vector<8x4x32xf32>
    %12 = tpu.matmul %8, %11, %cst {dimension_numbers = #tpu.dot_dimension_numbers<[2], [1], [1], [2], [0, 0, 0, 1, 1, 2], [0], [0]>} : vector<8x4x256xbf16>, vector<8x256x32xbf16>, vector<8x4x32xf32> -> vector<8x4x32xf32>
    "tpu.trace_stop"() : () -> ()
    %cst_16 = arith.constant dense<0.000000e+00> : vector<8x32xf32>
    %13 = vector.multi_reduction <add>, %12, %cst_16 [1] : vector<8x4x32xf32> to vector<8x32xf32>
    %14 = vector.shape_cast %13 : vector<8x32xf32> to vector<8x1x32xf32>
    %cst_17 = arith.constant dense<0.000000e+00> : vector<1x32xf32>
    %15 = vector.multi_reduction <add>, %14, %cst_17 [0] : vector<8x1x32xf32> to vector<1x32xf32>
    %16 = vector.shape_cast %15 : vector<1x32xf32> to vector<1x1x32xf32>
    %cst_18 = arith.constant 3.200000e+01 : f32
    %17 = vector.broadcast %cst_18 : f32 to vector<1x1x32xf32>
    %18 = arith.divf %16, %17 : vector<1x1x32xf32>
    %19 = arith.mulf %12, %12 : vector<8x4x32xf32>
    %cst_19 = arith.constant dense<0.000000e+00> : vector<8x32xf32>
    %20 = vector.multi_reduction <add>, %19, %cst_19 [1] : vector<8x4x32xf32> to vector<8x32xf32>
    %21 = vector.shape_cast %20 : vector<8x32xf32> to vector<8x1x32xf32>
    %cst_20 = arith.constant dense<0.000000e+00> : vector<1x32xf32>
    %22 = vector.multi_reduction <add>, %21, %cst_20 [0] : vector<8x1x32xf32> to vector<1x32xf32>
    %23 = vector.shape_cast %22 : vector<1x32xf32> to vector<1x1x32xf32>
    %cst_21 = arith.constant 3.200000e+01 : f32
    %24 = vector.broadcast %cst_21 : f32 to vector<1x1x32xf32>
    %25 = arith.divf %23, %24 : vector<1x1x32xf32>
    %26 = arith.mulf %18, %18 : vector<1x1x32xf32>
    %27 = arith.subf %25, %26 : vector<1x1x32xf32>
    %cst_22 = arith.constant 0.000000e+00 : f32
    %28 = vector.broadcast %cst_22 : f32 to vector<1x1x32xf32>
    %29 = arith.maximumf %27, %28 : vector<1x1x32xf32>
    %c0_23 = arith.constant 0 : index
    %c0_24 = arith.constant 0 : index
    %c0_25 = arith.constant 0 : index
    %30 = vector.load %arg2[%c0_23, %c0_24, %c0_25] : memref<1x1x32xf32, #tpu.memory_space<vmem>>, vector<1x1x32xf32>
    %cst_26 = arith.constant 9.99999974E-6 : f32
    %31 = vector.broadcast %cst_26 : f32 to vector<1x1x32xf32>
    %32 = arith.addf %29, %31 : vector<1x1x32xf32>
    %33 = math.rsqrt %32 : vector<1x1x32xf32>
    %34 = arith.mulf %30, %33 : vector<1x1x32xf32>
    %c0_27 = arith.constant 0 : index
    %c0_28 = arith.constant 0 : index
    %c0_29 = arith.constant 0 : index
    %35 = vector.load %arg3[%c0_27, %c0_28, %c0_29] : memref<1x1x32xf32, #tpu.memory_space<vmem>>, vector<1x1x32xf32>
    %36 = arith.mulf %18, %34 : vector<1x1x32xf32>
    %37 = arith.subf %35, %36 : vector<1x1x32xf32>
    %38 = vector.broadcast %34 : vector<1x1x32xf32> to vector<8x4x32xf32>
    %39 = arith.mulf %12, %38 : vector<8x4x32xf32>
    %40 = vector.broadcast %37 : vector<1x1x32xf32> to vector<8x4x32xf32>
    %41 = arith.addf %39, %40 : vector<8x4x32xf32>
    %cst_30 = arith.constant 0.000000e+00 : f32
    %42 = vector.broadcast %cst_30 : f32 to vector<8x4x32xf32>
    %43 = arith.cmpf oge, %41, %42 : vector<8x4x32xf32>
    %cst_31 = arith.constant 2.000000e-01 : f32
    %44 = vector.broadcast %cst_31 : f32 to vector<8x4x32xf32>
    %45 = arith.mulf %44, %41 : vector<8x4x32xf32>
    %46 = arith.select %43, %41, %45 : vector<8x4x32xi1>, vector<8x4x32xf32>
    %47 = arith.truncf %46 : vector<8x4x32xf32> to vector<8x4x32xbf16>
    %c0_32 = arith.constant 0 : index
    %c0_33 = arith.constant 0 : index
    %c0_34 = arith.constant 0 : index
    %48 = vector.load %arg4[%c0_32, %c0_33, %c0_34] : memref<8x4x32xbf16, #tpu.memory_space<vmem>>, vector<8x4x32xbf16>
    tpu.vector_store %arg4[%c0_32, %c0_33, %c0_34], %47 {strides = array<i32>} : memref<8x4x32xbf16, #tpu.memory_space<vmem>>, vector<8x4x32xbf16>,
    return
  }
}

module attributes {stable_mosaic.version = 11 : i64} {
  func.func @_cnr_bn_lrelu_kernel(%arg0: memref<2x3x3x128xbf16, #tpu.memory_space<vmem>>, %arg1: memref<512x64xbf16, #tpu.memory_space<vmem>>, %arg2: memref<1x1x64xf32, #tpu.memory_space<vmem>>, %arg3: memref<1x1x64xf32, #tpu.memory_space<vmem>>, %arg4: memref<4x2x64xbf16, #tpu.memory_space<vmem>>) attributes {dimension_semantics = [], scalar_prefetch = 0 : i64, scratch_operands = 0 : i64, tpu.core_type = #tpu.core_type<tc>} {
    %c0 = arith.constant 0 : index
    %c0_0 = arith.constant 0 : index
    %c0_1 = arith.constant 0 : index
    %c0_2 = arith.constant 0 : index
    %0 = vector.load %arg0[%c0, %c0_0, %c0_1, %c0_2] : memref<2x3x3x128xbf16, #tpu.memory_space<vmem>>, vector<2x2x2x128xbf16>
    %1 = vector.shape_cast %0 : vector<2x2x2x128xbf16> to vector<4x2x128xbf16>
    %c0_3 = arith.constant 0 : index
    %c0_4 = arith.constant 0 : index
    %c1 = arith.constant 1 : index
    %c0_5 = arith.constant 0 : index
    %2 = vector.load %arg0[%c0_3, %c0_4, %c1, %c0_5] : memref<2x3x3x128xbf16, #tpu.memory_space<vmem>>, vector<2x2x2x128xbf16>
    %3 = vector.shape_cast %2 : vector<2x2x2x128xbf16> to vector<4x2x128xbf16>
    %c0_6 = arith.constant 0 : index
    %c1_7 = arith.constant 1 : index
    %c0_8 = arith.constant 0 : index
    %c0_9 = arith.constant 0 : index
    %4 = vector.load %arg0[%c0_6, %c1_7, %c0_8, %c0_9] : memref<2x3x3x128xbf16, #tpu.memory_space<vmem>>, vector<2x2x2x128xbf16>
    %5 = vector.shape_cast %4 : vector<2x2x2x128xbf16> to vector<4x2x128xbf16>
    %c0_10 = arith.constant 0 : index
    %c1_11 = arith.constant 1 : index
    %c1_12 = arith.constant 1 : index
    %c0_13 = arith.constant 0 : index
    %6 = vector.load %arg0[%c0_10, %c1_11, %c1_12, %c0_13] : memref<2x3x3x128xbf16, #tpu.memory_space<vmem>>, vector<2x2x2x128xbf16>
    %7 = vector.shape_cast %6 : vector<2x2x2x128xbf16> to vector<4x2x128xbf16>
    %8 = tpu.concatenate %1, %3, %5, %7 in 2 : vector<4x2x128xbf16>, vector<4x2x128xbf16>, vector<4x2x128xbf16>, vector<4x2x128xbf16> -> vector<4x2x512xbf16>
    %c0_14 = arith.constant 0 : index
    %c0_15 = arith.constant 0 : index
    %9 = vector.load %arg1[%c0_14, %c0_15] : memref<512x64xbf16, #tpu.memory_space<vmem>>, vector<512x64xbf16>
    %10 = vector.shape_cast %9 : vector<512x64xbf16> to vector<1x512x64xbf16>
    %11 = vector.broadcast %10 : vector<1x512x64xbf16> to vector<4x512x64xbf16>
    "tpu.trace_start"() <{level = 10 : i32, message = "bok,bkc->boc"}> : () -> ()
    %cst = arith.constant dense<0.000000e+00> : vector<4x2x64xf32>
    %12 = tpu.matmul %8, %11, %cst {dimension_numbers = #tpu.dot_dimension_numbers<[2], [1], [1], [2], [0, 0, 0, 1, 1, 2], [0], [0]>} : vector<4x2x512xbf16>, vector<4x512x64xbf16>, vector<4x2x64xf32> -> vector<4x2x64xf32>
    "tpu.trace_stop"() : () -> ()
    %cst_16 = arith.constant dense<0.000000e+00> : vector<4x64xf32>
    %13 = vector.multi_reduction <add>, %12, %cst_16 [1] : vector<4x2x64xf32> to vector<4x64xf32>
    %14 = vector.shape_cast %13 : vector<4x64xf32> to vector<4x1x64xf32>
    %cst_17 = arith.constant dense<0.000000e+00> : vector<1x64xf32>
    %15 = vector.multi_reduction <add>, %14, %cst_17 [0] : vector<4x1x64xf32> to vector<1x64xf32>
    %16 = vector.shape_cast %15 : vector<1x64xf32> to vector<1x1x64xf32>
    %cst_18 = arith.constant 8.000000e+00 : f32
    %17 = vector.broadcast %cst_18 : f32 to vector<1x1x64xf32>
    %18 = arith.divf %16, %17 : vector<1x1x64xf32>
    %19 = arith.mulf %12, %12 : vector<4x2x64xf32>
    %cst_19 = arith.constant dense<0.000000e+00> : vector<4x64xf32>
    %20 = vector.multi_reduction <add>, %19, %cst_19 [1] : vector<4x2x64xf32> to vector<4x64xf32>
    %21 = vector.shape_cast %20 : vector<4x64xf32> to vector<4x1x64xf32>
    %cst_20 = arith.constant dense<0.000000e+00> : vector<1x64xf32>
    %22 = vector.multi_reduction <add>, %21, %cst_20 [0] : vector<4x1x64xf32> to vector<1x64xf32>
    %23 = vector.shape_cast %22 : vector<1x64xf32> to vector<1x1x64xf32>
    %cst_21 = arith.constant 8.000000e+00 : f32
    %24 = vector.broadcast %cst_21 : f32 to vector<1x1x64xf32>
    %25 = arith.divf %23, %24 : vector<1x1x64xf32>
    %26 = arith.mulf %18, %18 : vector<1x1x64xf32>
    %27 = arith.subf %25, %26 : vector<1x1x64xf32>
    %cst_22 = arith.constant 0.000000e+00 : f32
    %28 = vector.broadcast %cst_22 : f32 to vector<1x1x64xf32>
    %29 = arith.maximumf %27, %28 : vector<1x1x64xf32>
    %c0_23 = arith.constant 0 : index
    %c0_24 = arith.constant 0 : index
    %c0_25 = arith.constant 0 : index
    %30 = vector.load %arg2[%c0_23, %c0_24, %c0_25] : memref<1x1x64xf32, #tpu.memory_space<vmem>>, vector<1x1x64xf32>
    %cst_26 = arith.constant 9.99999974E-6 : f32
    %31 = vector.broadcast %cst_26 : f32 to vector<1x1x64xf32>
    %32 = arith.addf %29, %31 : vector<1x1x64xf32>
    %33 = math.rsqrt %32 : vector<1x1x64xf32>
    %34 = arith.mulf %30, %33 : vector<1x1x64xf32>
    %c0_27 = arith.constant 0 : index
    %c0_28 = arith.constant 0 : index
    %c0_29 = arith.constant 0 : index
    %35 = vector.load %arg3[%c0_27, %c0_28, %c0_29] : memref<1x1x64xf32, #tpu.memory_space<vmem>>, vector<1x1x64xf32>
    %36 = arith.mulf %18, %34 : vector<1x1x64xf32>
    %37 = arith.subf %35, %36 : vector<1x1x64xf32>
    %38 = vector.broadcast %34 : vector<1x1x64xf32> to vector<4x2x64xf32>
    %39 = arith.mulf %12, %38 : vector<4x2x64xf32>
    %40 = vector.broadcast %37 : vector<1x1x64xf32> to vector<4x2x64xf32>
    %41 = arith.addf %39, %40 : vector<4x2x64xf32>
    %cst_30 = arith.constant 0.000000e+00 : f32
    %42 = vector.broadcast %cst_30 : f32 to vector<4x2x64xf32>
    %43 = arith.cmpf oge, %41, %42 : vector<4x2x64xf32>
    %cst_31 = arith.constant 2.000000e-01 : f32
    %44 = vector.broadcast %cst_31 : f32 to vector<4x2x64xf32>
    %45 = arith.mulf %44, %41 : vector<4x2x64xf32>
    %46 = arith.select %43, %41, %45 : vector<4x2x64xi1>, vector<4x2x64xf32>
    %47 = arith.truncf %46 : vector<4x2x64xf32> to vector<4x2x64xbf16>
    %c0_32 = arith.constant 0 : index
    %c0_33 = arith.constant 0 : index
    %c0_34 = arith.constant 0 : index
    %48 = vector.load %arg4[%c0_32, %c0_33, %c0_34] : memref<4x2x64xbf16, #tpu.memory_space<vmem>>, vector<4x2x64xbf16>
    tpu.vector_store %arg4[%c0_32, %c0_33, %c0_34], %47 {strides = array<i32>} : memref<4x2x64xbf16, #tpu.memory_space<vmem>>, vector<4x2x64xbf16>,
    return
  }
}

module attributes {stable_mosaic.version = 11 : i64} {
  func.func @_conv_only_kernel(%arg0: memref<2x4x4x64xbf16, #tpu.memory_space<vmem>>, %arg1: memref<1024x1xbf16, #tpu.memory_space<vmem>>, %arg2: memref<2x1x1xf32, #tpu.memory_space<vmem>>) attributes {dimension_semantics = [], scalar_prefetch = 0 : i64, scratch_operands = 0 : i64, tpu.core_type = #tpu.core_type<tc>} {
    %c0 = arith.constant 0 : index
    %c0_0 = arith.constant 0 : index
    %c0_1 = arith.constant 0 : index
    %c0_2 = arith.constant 0 : index
    %0 = vector.load %arg0[%c0, %c0_0, %c0_1, %c0_2] : memref<2x4x4x64xbf16, #tpu.memory_space<vmem>>, vector<2x1x1x64xbf16>
    %1 = vector.shape_cast %0 : vector<2x1x1x64xbf16> to vector<2x1x64xbf16>
    %c0_3 = arith.constant 0 : index
    %c0_4 = arith.constant 0 : index
    %c1 = arith.constant 1 : index
    %c0_5 = arith.constant 0 : index
    %2 = vector.load %arg0[%c0_3, %c0_4, %c1, %c0_5] : memref<2x4x4x64xbf16, #tpu.memory_space<vmem>>, vector<2x1x1x64xbf16>
    %3 = vector.shape_cast %2 : vector<2x1x1x64xbf16> to vector<2x1x64xbf16>
    %c0_6 = arith.constant 0 : index
    %c0_7 = arith.constant 0 : index
    %c2 = arith.constant 2 : index
    %c0_8 = arith.constant 0 : index
    %4 = vector.load %arg0[%c0_6, %c0_7, %c2, %c0_8] : memref<2x4x4x64xbf16, #tpu.memory_space<vmem>>, vector<2x1x1x64xbf16>
    %5 = vector.shape_cast %4 : vector<2x1x1x64xbf16> to vector<2x1x64xbf16>
    %c0_9 = arith.constant 0 : index
    %c0_10 = arith.constant 0 : index
    %c3 = arith.constant 3 : index
    %c0_11 = arith.constant 0 : index
    %6 = vector.load %arg0[%c0_9, %c0_10, %c3, %c0_11] : memref<2x4x4x64xbf16, #tpu.memory_space<vmem>>, vector<2x1x1x64xbf16>
    %7 = vector.shape_cast %6 : vector<2x1x1x64xbf16> to vector<2x1x64xbf16>
    %c0_12 = arith.constant 0 : index
    %c1_13 = arith.constant 1 : index
    %c0_14 = arith.constant 0 : index
    %c0_15 = arith.constant 0 : index
    %8 = vector.load %arg0[%c0_12, %c1_13, %c0_14, %c0_15] : memref<2x4x4x64xbf16, #tpu.memory_space<vmem>>, vector<2x1x1x64xbf16>
    %9 = vector.shape_cast %8 : vector<2x1x1x64xbf16> to vector<2x1x64xbf16>
    %c0_16 = arith.constant 0 : index
    %c1_17 = arith.constant 1 : index
    %c1_18 = arith.constant 1 : index
    %c0_19 = arith.constant 0 : index
    %10 = vector.load %arg0[%c0_16, %c1_17, %c1_18, %c0_19] : memref<2x4x4x64xbf16, #tpu.memory_space<vmem>>, vector<2x1x1x64xbf16>
    %11 = vector.shape_cast %10 : vector<2x1x1x64xbf16> to vector<2x1x64xbf16>
    %c0_20 = arith.constant 0 : index
    %c1_21 = arith.constant 1 : index
    %c2_22 = arith.constant 2 : index
    %c0_23 = arith.constant 0 : index
    %12 = vector.load %arg0[%c0_20, %c1_21, %c2_22, %c0_23] : memref<2x4x4x64xbf16, #tpu.memory_space<vmem>>, vector<2x1x1x64xbf16>
    %13 = vector.shape_cast %12 : vector<2x1x1x64xbf16> to vector<2x1x64xbf16>
    %c0_24 = arith.constant 0 : index
    %c1_25 = arith.constant 1 : index
    %c3_26 = arith.constant 3 : index
    %c0_27 = arith.constant 0 : index
    %14 = vector.load %arg0[%c0_24, %c1_25, %c3_26, %c0_27] : memref<2x4x4x64xbf16, #tpu.memory_space<vmem>>, vector<2x1x1x64xbf16>
    %15 = vector.shape_cast %14 : vector<2x1x1x64xbf16> to vector<2x1x64xbf16>
    %c0_28 = arith.constant 0 : index
    %c2_29 = arith.constant 2 : index
    %c0_30 = arith.constant 0 : index
    %c0_31 = arith.constant 0 : index
    %16 = vector.load %arg0[%c0_28, %c2_29, %c0_30, %c0_31] : memref<2x4x4x64xbf16, #tpu.memory_space<vmem>>, vector<2x1x1x64xbf16>
    %17 = vector.shape_cast %16 : vector<2x1x1x64xbf16> to vector<2x1x64xbf16>
    %c0_32 = arith.constant 0 : index
    %c2_33 = arith.constant 2 : index
    %c1_34 = arith.constant 1 : index
    %c0_35 = arith.constant 0 : index
    %18 = vector.load %arg0[%c0_32, %c2_33, %c1_34, %c0_35] : memref<2x4x4x64xbf16, #tpu.memory_space<vmem>>, vector<2x1x1x64xbf16>
    %19 = vector.shape_cast %18 : vector<2x1x1x64xbf16> to vector<2x1x64xbf16>
    %c0_36 = arith.constant 0 : index
    %c2_37 = arith.constant 2 : index
    %c2_38 = arith.constant 2 : index
    %c0_39 = arith.constant 0 : index
    %20 = vector.load %arg0[%c0_36, %c2_37, %c2_38, %c0_39] : memref<2x4x4x64xbf16, #tpu.memory_space<vmem>>, vector<2x1x1x64xbf16>
    %21 = vector.shape_cast %20 : vector<2x1x1x64xbf16> to vector<2x1x64xbf16>
    %c0_40 = arith.constant 0 : index
    %c2_41 = arith.constant 2 : index
    %c3_42 = arith.constant 3 : index
    %c0_43 = arith.constant 0 : index
    %22 = vector.load %arg0[%c0_40, %c2_41, %c3_42, %c0_43] : memref<2x4x4x64xbf16, #tpu.memory_space<vmem>>, vector<2x1x1x64xbf16>
    %23 = vector.shape_cast %22 : vector<2x1x1x64xbf16> to vector<2x1x64xbf16>
    %c0_44 = arith.constant 0 : index
    %c3_45 = arith.constant 3 : index
    %c0_46 = arith.constant 0 : index
    %c0_47 = arith.constant 0 : index
    %24 = vector.load %arg0[%c0_44, %c3_45, %c0_46, %c0_47] : memref<2x4x4x64xbf16, #tpu.memory_space<vmem>>, vector<2x1x1x64xbf16>
    %25 = vector.shape_cast %24 : vector<2x1x1x64xbf16> to vector<2x1x64xbf16>
    %c0_48 = arith.constant 0 : index
    %c3_49 = arith.constant 3 : index
    %c1_50 = arith.constant 1 : index
    %c0_51 = arith.constant 0 : index
    %26 = vector.load %arg0[%c0_48, %c3_49, %c1_50, %c0_51] : memref<2x4x4x64xbf16, #tpu.memory_space<vmem>>, vector<2x1x1x64xbf16>
    %27 = vector.shape_cast %26 : vector<2x1x1x64xbf16> to vector<2x1x64xbf16>
    %c0_52 = arith.constant 0 : index
    %c3_53 = arith.constant 3 : index
    %c2_54 = arith.constant 2 : index
    %c0_55 = arith.constant 0 : index
    %28 = vector.load %arg0[%c0_52, %c3_53, %c2_54, %c0_55] : memref<2x4x4x64xbf16, #tpu.memory_space<vmem>>, vector<2x1x1x64xbf16>
    %29 = vector.shape_cast %28 : vector<2x1x1x64xbf16> to vector<2x1x64xbf16>
    %c0_56 = arith.constant 0 : index
    %c3_57 = arith.constant 3 : index
    %c3_58 = arith.constant 3 : index
    %c0_59 = arith.constant 0 : index
    %30 = vector.load %arg0[%c0_56, %c3_57, %c3_58, %c0_59] : memref<2x4x4x64xbf16, #tpu.memory_space<vmem>>, vector<2x1x1x64xbf16>
    %31 = vector.shape_cast %30 : vector<2x1x1x64xbf16> to vector<2x1x64xbf16>
    %32 = tpu.concatenate %1, %3, %5, %7, %9, %11, %13, %15, %17, %19, %21, %23, %25, %27, %29, %31 in 2 : vector<2x1x64xbf16>, vector<2x1x64xbf16>, vector<2x1x64xbf16>, vector<2x1x64xbf16>, vector<2x1x64xbf16>, vector<2x1x64xbf16>, vector<2x1x64xbf16>, vector<2x1x64xbf16>, vector<2x1x64xbf16>, vector<2x1x64xbf16>, vector<2x1x64xbf16>, vector<2x1x64xbf16>, vector<2x1x64xbf16>, vector<2x1x64xbf16>, vector<2x1x64xbf16>, vector<2x1x64xbf16> -> vector<2x1x1024xbf16>
    %c0_60 = arith.constant 0 : index
    %c0_61 = arith.constant 0 : index
    %33 = vector.load %arg1[%c0_60, %c0_61] : memref<1024x1xbf16, #tpu.memory_space<vmem>>, vector<1024x1xbf16>
    %34 = vector.shape_cast %33 : vector<1024x1xbf16> to vector<1x1024x1xbf16>
    %35 = vector.broadcast %34 : vector<1x1024x1xbf16> to vector<2x1024x1xbf16>
    "tpu.trace_start"() <{level = 10 : i32, message = "bok,bkc->boc"}> : () -> ()
    %cst = arith.constant dense<0.000000e+00> : vector<2x1x1xf32>
    %36 = tpu.matmul %32, %35, %cst {dimension_numbers = #tpu.dot_dimension_numbers<[2], [1], [1], [2], [0, 0, 0, 1, 1, 2], [0], [0]>} : vector<2x1x1024xbf16>, vector<2x1024x1xbf16>, vector<2x1x1xf32> -> vector<2x1x1xf32>
    "tpu.trace_stop"() : () -> ()
    %c0_62 = arith.constant 0 : index
    %c0_63 = arith.constant 0 : index
    %c0_64 = arith.constant 0 : index
    %37 = vector.load %arg2[%c0_62, %c0_63, %c0_64] : memref<2x1x1xf32, #tpu.memory_space<vmem>>, vector<2x1x1xf32>
    tpu.vector_store %arg2[%c0_62, %c0_63, %c0_64], %36 {strides = array<i32>} : memref<2x1x1xf32, #tpu.memory_space<vmem>>, vector<2x1x1xf32>,
    return
  }
}

</mosaic_0001>

<llo_original>
// kernel: discriminator_forward.5
$region0: #{discriminator_forward.5}
  #allocation0 [shape = 'u32[]', space=smem, size = 0x4, offset = 0x4, fixed_abs, tag = 'smem constant byte address 0x4 - core index']
  #allocation1 [shape = 'u32[144,128]{1,0:T(1,128)}', space=vmem, size = 0x12000, scoped, tag = 'internal scratch']
  %s0 = inlined_call_operand.vmem [shape: bf16[2,17,17,16], index: 0, kind: input, shape index: {}]
  %s1 = inlined_call_operand.vmem [shape: bf16[64,8], index: 1, kind: input, shape index: {}]
  %s2 = inlined_call_operand.vmem [shape: f32[1,1,8], index: 2, kind: input, shape index: {}]
  %s3 = inlined_call_operand.vmem [shape: f32[1,1,8], index: 3, kind: input, shape index: {}]
  %s4 = inlined_call_operand.vmem [shape: bf16[32,16,8], index: 4, kind: output, shape index: {}]
  %s5 = sld [smem:[#allocation0]]
  $region26: #{discriminator_forward.5} parent=0
    _
  %s7 = ssub.s32 1, %s5
  %s8 = scalar_select 0, %s7, %s5
  // Predicated region
  $region2: #{discriminator_forward.5} parent=0 // pred_check
    _
  $region3: #{discriminator_forward.5} parent=0 // pred_check_branch
    %10 = sbr.rel (0) target = $region5
  $region4: #{discriminator_forward.5} parent=0 // pred_region
    _
  $region5: #{discriminator_forward.5} parent=0 // pred_fallthru
    _
  // Predicated region
  $region6: #{discriminator_forward.5} parent=0 // pred_check
    _
  $region7: #{discriminator_forward.5} parent=0 // pred_check_branch
    %12 = sbr.rel (0) target = $region9
  $region8: #{discriminator_forward.5} parent=0 // pred_region
    _
  $region9: #{discriminator_forward.5} parent=0 // pred_fallthru
    _
  // Predicated region
  $region10: #{discriminator_forward.5} parent=0 // pred_check
    _
  $region11: #{discriminator_forward.5} parent=0 // pred_check_branch
    %14 = sbr.rel (0) target = $region13
  $region12: #{discriminator_forward.5} parent=0 // pred_region
    _
  $region13: #{discriminator_forward.5} parent=0 // pred_fallthru
    _
  // Predicated region
  $region14: #{discriminator_forward.5} parent=0 // pred_check
    _
  $region15: #{discriminator_forward.5} parent=0 // pred_check_branch
    %16 = sbr.rel (0) target = $region17
  $region16: #{discriminator_forward.5} parent=0 // pred_region
    _
  $region17: #{discriminator_forward.5} parent=0 // pred_fallthru
    _
  %v18 = vld [vmem:[%s0] sm:$0xf]
  %v19 = vld [vmem:[%s0 + $0x4] sm:$0xf]
  %v20 = vld [vmem:[%s0 + $0xc] sm:$0xf]
  %v21 = vld [vmem:[%s0 + $0x10] sm:$0xf]
  %v22 = vld [vmem:[%s0 + $0x18] sm:$0xf]
  %v23 = vld [vmem:[%s0 + $0x1c] sm:$0xf]
  %v24 = vld [vmem:[%s0 + $0x24] sm:$0xf]
  %v25 = vld [vmem:[%s0 + $0x28] sm:$0xf]
  %v26 = vld [vmem:[%s0 + $0x30] sm:$0xf]
  %v27 = vld [vmem:[%s0 + $0x34] sm:$0xf]
  %v28 = vld [vmem:[%s0 + $0x3c] sm:$0xf]
  %v29 = vld [vmem:[%s0 + $0x40] sm:$0xf]
  %v30 = vld [vmem:[%s0 + $0x48] sm:$0xf]
  %v31 = vld [vmem:[%s0 + $0x4c] sm:$0xf]
  %v32 = vld [vmem:[%s0 + $0x54] sm:$0xf]
  %v33 = vld [vmem:[%s0 + $0x58] sm:$0xf]
  %v34 = vld [vmem:[%s0 + $0x60] sm:$0xf]
  %v35 = vld [vmem:[%s0 + $0x64] sm:$0xf]
  %v36 = vld [vmem:[%s0 + $0x6c] sm:$0xf]
  %v37 = vld [vmem:[%s0 + $0x70] sm:$0xf]
  %v38 = vld [vmem:[%s0 + $0x78] sm:$0xf]
  %v39 = vld [vmem:[%s0 + $0x7c] sm:$0xf]
  %v40 = vld [vmem:[%s0 + $0x84] sm:$0xf]
  %v41 = vld [vmem:[%s0 + $0x88] sm:$0xf]
  %v42 = vld [vmem:[%s0 + $0x90] sm:$0xf]
  %v43 = vld [vmem:[%s0 + $0x94] sm:$0xf]
  %v44 = vld [vmem:[%s0 + $0x9c] sm:$0xf]
  %v45 = vld [vmem:[%s0 + $0xa0] sm:$0xf]
  %v46 = vld [vmem:[%s0 + $0xa8] sm:$0xf]
  %v47 = vld [vmem:[%s0 + $0xac] sm:$0xf]
  %v48 = vld [vmem:[%s0 + $0xb4] sm:$0xf]
  %v49 = vld [vmem:[%s0 + $0xb8] sm:$0xf]
  %v50 = vld [vmem:[%s0 + $0xcc] sm:$0xf]
  %v51 = vld [vmem:[%s0 + $0xd0] sm:$0xf]
  %v52 = vld [vmem:[%s0 + $0xd8] sm:$0xf]
  %v53 = vld [vmem:[%s0 + $0xdc] sm:$0xf]
  %v54 = vld [vmem:[%s0 + $0xe4] sm:$0xf]
  %v55 = vld [vmem:[%s0 + $0xe8] sm:$0xf]
  %v56 = vld [vmem:[%s0 + $0xf0] sm:$0xf]
  %v57 = vld [vmem:[%s0 + $0xf4] sm:$0xf]
  %v58 = vld [vmem:[%s0 + $0xfc] sm:$0xf]
  %v59 = vld [vmem:[%s0 + $0x100] sm:$0xf]
  %v60 = vld [vmem:[%s0 + $0x108] sm:$0xf]
  %v61 = vld [vmem:[%s0 + $0x10c] sm:$0xf]
  %v62 = vld [vmem:[%s0 + $0x114] sm:$0xf]
  %v63 = vld [vmem:[%s0 + $0x118] sm:$0xf]
  %v64 = vld [vmem:[%s0 + $0x120] sm:$0xf]
  %v65 = vld [vmem:[%s0 + $0x124] sm:$0xf]
  %v66 = vld [vmem:[%s0 + $0x12c] sm:$0xf]
  %v67 = vld [vmem:[%s0 + $0x130] sm:$0xf]
  %v68 = vld [vmem:[%s0 + $0x138] sm:$0xf]
  %v69 = vld [vmem:[%s0 + $0x13c] sm:$0xf]
  %v70 = vld [vmem:[%s0 + $0x144] sm:$0xf]
  %v71 = vld [vmem:[%s0 + $0x148] sm:$0xf]
  %v72 = vld [vmem:[%s0 + $0x150] sm:$0xf]
  %v73 = vld [vmem:[%s0 + $0x154] sm:$0xf]
  %v74 = vld [vmem:[%s0 + $0x15c] sm:$0xf]
  %v75 = vld [vmem:[%s0 + $0x160] sm:$0xf]
  %v76 = vld [vmem:[%s0 + $0x168] sm:$0xf]
  %v77 = vld [vmem:[%s0 + $0x16c] sm:$0xf]
  %v78 = vld [vmem:[%s0 + $0x174] sm:$0xf]
  %v79 = vld [vmem:[%s0 + $0x178] sm:$0xf]
  %v80 = vld [vmem:[%s0 + $0x180] sm:$0xf]
  %v81 = vld [vmem:[%s0 + $0x184] sm:$0xf]
  %v82 = vld [vmem:[%s0 + $0x8] sm:$0x1]
  %v83 = vld [vmem:[%s0 + $0x14] sm:$0x1]
  %v84 = vld [vmem:[%s0 + $0x20] sm:$0x1]
  %v85 = vld [vmem:[%s0 + $0x2c] sm:$0x1]
  %v86 = vld [vmem:[%s0 + $0x38] sm:$0x1]
  %v87 = vld [vmem:[%s0 + $0x44] sm:$0x1]
  %v88 = vld [vmem:[%s0 + $0x50] sm:$0x1]
  %v89 = vld [vmem:[%s0 + $0x5c] sm:$0x1]
  %v90 = vld [vmem:[%s0 + $0x68] sm:$0x1]
  %v91 = vld [vmem:[%s0 + $0x74] sm:$0x1]
  %v92 = vld [vmem:[%s0 + $0x80] sm:$0x1]
  %v93 = vld [vmem:[%s0 + $0x8c] sm:$0x1]
  %v94 = vld [vmem:[%s0 + $0x98] sm:$0x1]
  %v95 = vld [vmem:[%s0 + $0xa4] sm:$0x1]
  %v96 = vld [vmem:[%s0 + $0xb0] sm:$0x1]
  %v97 = vld [vmem:[%s0 + $0xbc] sm:$0x1]
  %v98 = vld [vmem:[%s0 + $0xd4] sm:$0x1]
  %v99 = vld [vmem:[%s0 + $0xe0] sm:$0x1]
  %v100 = vld [vmem:[%s0 + $0xec] sm:$0x1]
  %v101 = vld [vmem:[%s0 + $0xf8] sm:$0x1]
  %v102 = vld [vmem:[%s0 + $0x104] sm:$0x1]
  %v103 = vld [vmem:[%s0 + $0x110] sm:$0x1]
  %v104 = vld [vmem:[%s0 + $0x11c] sm:$0x1]
  %v105 = vld [vmem:[%s0 + $0x128] sm:$0x1]
  %v106 = vld [vmem:[%s0 + $0x134] sm:$0x1]
  %v107 = vld [vmem:[%s0 + $0x140] sm:$0x1]
  %v108 = vld [vmem:[%s0 + $0x14c] sm:$0x1]
  %v109 = vld [vmem:[%s0 + $0x158] sm:$0x1]
  %v110 = vld [vmem:[%s0 + $0x164] sm:$0x1]
  %v111 = vld [vmem:[%s0 + $0x170] sm:$0x1]
  %v112 = vld [vmem:[%s0 + $0x17c] sm:$0x1]
  %v113 = vld [vmem:[%s0 + $0x188] sm:$0x1]
  %s114 = scalar_lea.vmem %s0, 12
  %v115 = vld [vmem:[%s114] sm:$0xf]
  %v116 = vld [vmem:[%s114 + $0x4] sm:$0xf]
  %v117 = vld [vmem:[%s114 + $0xc] sm:$0xf]
  %v118 = vld [vmem:[%s114 + $0x10] sm:$0xf]
  %v119 = vld [vmem:[%s114 + $0x18] sm:$0xf]
  %v120 = vld [vmem:[%s114 + $0x1c] sm:$0xf]
  %v121 = vld [vmem:[%s114 + $0x24] sm:$0xf]
  %v122 = vld [vmem:[%s114 + $0x28] sm:$0xf]
  %v123 = vld [vmem:[%s114 + $0x30] sm:$0xf]
  %v124 = vld [vmem:[%s114 + $0x34] sm:$0xf]
  %v125 = vld [vmem:[%s114 + $0x3c] sm:$0xf]
  %v126 = vld [vmem:[%s114 + $0x40] sm:$0xf]
  %v127 = vld [vmem:[%s114 + $0x48] sm:$0xf]
  %v128 = vld [vmem:[%s114 + $0x4c] sm:$0xf]
  %v129 = vld [vmem:[%s114 + $0x54] sm:$0xf]
  %v130 = vld [vmem:[%s114 + $0x58] sm:$0xf]
  %v131 = vld [vmem:[%s114 + $0x60] sm:$0xf]
  %v132 = vld [vmem:[%s114 + $0x64] sm:$0xf]
  %v133 = vld [vmem:[%s114 + $0x6c] sm:$0xf]
  %v134 = vld [vmem:[%s114 + $0x70] sm:$0xf]
  %v135 = vld [vmem:[%s114 + $0x78] sm:$0xf]
  %v136 = vld [vmem:[%s114 + $0x7c] sm:$0xf]
  %v137 = vld [vmem:[%s114 + $0x84] sm:$0xf]
  %v138 = vld [vmem:[%s114 + $0x88] sm:$0xf]
  %v139 = vld [vmem:[%s114 + $0x90] sm:$0xf]
  %v140 = vld [vmem:[%s114 + $0x94] sm:$0xf]
  %v141 = vld [vmem:[%s114 + $0x9c] sm:$0xf]
  %v142 = vld [vmem:[%s114 + $0xa0] sm:$0xf]
  %v143 = vld [vmem:[%s114 + $0xa8] sm:$0xf]
  %v144 = vld [vmem:[%s114 + $0xac] sm:$0xf]
  %v145 = vld [vmem:[%s114 + $0xb4] sm:$0xf]
  %v146 = vld [vmem:[%s114 + $0xb8] sm:$0xf]
  %v147 = vld [vmem:[%s114 + $0xcc] sm:$0xf]
  %v148 = vld [vmem:[%s114 + $0xd0] sm:$0xf]
  %v149 = vld [vmem:[%s114 + $0xd8] sm:$0xf]
  %v150 = vld [vmem:[%s114 + $0xdc] sm:$0xf]
  %v151 = vld [vmem:[%s114 + $0xe4] sm:$0xf]
  %v152 = vld [vmem:[%s114 + $0xe8] sm:$0xf]
  %v153 = vld [vmem:[%s114 + $0xf0] sm:$0xf]
  %v154 = vld [vmem:[%s114 + $0xf4] sm:$0xf]
  %v155 = vld [vmem:[%s114 + $0xfc] sm:$0xf]
  %v156 = vld [vmem:[%s114 + $0x100] sm:$0xf]
  %v157 = vld [vmem:[%s114 + $0x108] sm:$0xf]
  %v158 = vld [vmem:[%s114 + $0x10c] sm:$0xf]
  %v159 = vld [vmem:[%s114 + $0x114] sm:$0xf]
  %v160 = vld [vmem:[%s114 + $0x118] sm:$0xf]
  %v161 = vld [vmem:[%s114 + $0x120] sm:$0xf]
  %v162 = vld [vmem:[%s114 + $0x124] sm:$0xf]
  %v163 = vld [vmem:[%s114 + $0x12c] sm:$0xf]
  %v164 = vld [vmem:[%s114 + $0x130] sm:$0xf]
  %v165 = vld [vmem:[%s114 + $0x138] sm:$0xf]
  %v166 = vld [vmem:[%s114 + $0x13c] sm:$0xf]
  %v167 = vld [vmem:[%s114 + $0x144] sm:$0xf]
  %v168 = vld [vmem:[%s114 + $0x148] sm:$0xf]
  %v169 = vld [vmem:[%s114 + $0x150] sm:$0xf]
  %v170 = vld [vmem:[%s114 + $0x154] sm:$0xf]
  %v171 = vld [vmem:[%s114 + $0x15c] sm:$0xf]
  %v172 = vld [vmem:[%s114 + $0x160] sm:$0xf]
  %v173 = vld [vmem:[%s114 + $0x168] sm:$0xf]
  %v174 = vld [vmem:[%s114 + $0x16c] sm:$0xf]
  %v175 = vld [vmem:[%s114 + $0x174] sm:$0xf]
  %v176 = vld [vmem:[%s114 + $0x178] sm:$0xf]
  %v177 = vld [vmem:[%s114 + $0x180] sm:$0xf]
  %v178 = vld [vmem:[%s114 + $0x184] sm:$0xf]
  %v179 = vld [vmem:[%s114 + $0x8] sm:$0x1]
  %v180 = vld [vmem:[%s114 + $0x14] sm:$0x1]
  %v181 = vld [vmem:[%s114 + $0x20] sm:$0x1]
  %v182 = vld [vmem:[%s114 + $0x2c] sm:$0x1]
  %v183 = vld [vmem:[%s114 + $0x38] sm:$0x1]
  %v184 = vld [vmem:[%s114 + $0x44] sm:$0x1]
  %v185 = vld [vmem:[%s114 + $0x50] sm:$0x1]
  %v186 = vld [vmem:[%s114 + $0x5c] sm:$0x1]
  %v187 = vld [vmem:[%s114 + $0x68] sm:$0x1]
  %v188 = vld [vmem:[%s114 + $0x74] sm:$0x1]
  %v189 = vld [vmem:[%s114 + $0x80] sm:$0x1]
  %v190 = vld [vmem:[%s114 + $0x8c] sm:$0x1]
  %v191 = vld [vmem:[%s114 + $0x98] sm:$0x1]
  %v192 = vld [vmem:[%s114 + $0xa4] sm:$0x1]
  %v193 = vld [vmem:[%s114 + $0xb0] sm:$0x1]
  %v194 = vld [vmem:[%s114 + $0xbc] sm:$0x1]
  %v195 = vld [vmem:[%s114 + $0xd4] sm:$0x1]
  %v196 = vld [vmem:[%s114 + $0xe0] sm:$0x1]
  %v197 = vld [vmem:[%s114 + $0xec] sm:$0x1]
  %v198 = vld [vmem:[%s114 + $0xf8] sm:$0x1]
  %v199 = vld [vmem:[%s114 + $0x104] sm:$0x1]
  %v200 = vld [vmem:[%s114 + $0x110] sm:$0x1]
  %v201 = vld [vmem:[%s114 + $0x11c] sm:$0x1]
  %v202 = vld [vmem:[%s114 + $0x128] sm:$0x1]
  %v203 = vld [vmem:[%s114 + $0x134] sm:$0x1]
  %v204 = vld [vmem:[%s114 + $0x140] sm:$0x1]
  %v205 = vld [vmem:[%s114 + $0x14c] sm:$0x1]
  %v206 = vld [vmem:[%s114 + $0x158] sm:$0x1]
  %v207 = vld [vmem:[%s114 + $0x164] sm:$0x1]
  %v208 = vld [vmem:[%s114 + $0x170] sm:$0x1]
  %v209 = vld [vmem:[%s114 + $0x17c] sm:$0x1]
  %v210 = vld [vmem:[%s114 + $0x188] sm:$0x1]
  %v275 = vunpack.c.l.b16 %v18
  %v276 = vunpack.c.l.b16 %v19
  %v277 = vunpack.c.l.b16 %v20
  %v278 = vunpack.c.l.b16 %v21
  %v279 = vunpack.c.l.b16 %v22
  %v280 = vunpack.c.l.b16 %v23
  %v281 = vunpack.c.l.b16 %v24
  %v282 = vunpack.c.l.b16 %v25
  %v283 = vunpack.c.l.b16 %v26
  %v284 = vunpack.c.l.b16 %v27
  %v285 = vunpack.c.l.b16 %v28
  %v286 = vunpack.c.l.b16 %v29
  %v287 = vunpack.c.l.b16 %v30
  %v288 = vunpack.c.l.b16 %v31
  %v289 = vunpack.c.l.b16 %v32
  %v290 = vunpack.c.l.b16 %v33
  %v291 = vunpack.c.l.b16 %v34
  %v292 = vunpack.c.l.b16 %v35
  %v293 = vunpack.c.l.b16 %v36
  %v294 = vunpack.c.l.b16 %v37
  %v295 = vunpack.c.l.b16 %v38
  %v296 = vunpack.c.l.b16 %v39
  %v297 = vunpack.c.l.b16 %v40
  %v298 = vunpack.c.l.b16 %v41
  %v299 = vunpack.c.l.b16 %v42
  %v300 = vunpack.c.l.b16 %v43
  %v301 = vunpack.c.l.b16 %v44
  %v302 = vunpack.c.l.b16 %v45
  %v303 = vunpack.c.l.b16 %v46
  %v304 = vunpack.c.l.b16 %v47
  %v305 = vunpack.c.l.b16 %v48
  %v306 = vunpack.c.l.b16 %v49
  %v307 = vunpack.c.l.b16 %v50
  %v308 = vunpack.c.l.b16 %v51
  %v309 = vunpack.c.l.b16 %v52
  %v310 = vunpack.c.l.b16 %v53
  %v311 = vunpack.c.l.b16 %v54
  %v312 = vunpack.c.l.b16 %v55
  %v313 = vunpack.c.l.b16 %v56
  %v314 = vunpack.c.l.b16 %v57
  %v315 = vunpack.c.l.b16 %v58
  %v316 = vunpack.c.l.b16 %v59
  %v317 = vunpack.c.l.b16 %v60
  %v318 = vunpack.c.l.b16 %v61
  %v319 = vunpack.c.l.b16 %v62
  %v320 = vunpack.c.l.b16 %v63
  %v321 = vunpack.c.l.b16 %v64
  %v322 = vunpack.c.l.b16 %v65
  %v323 = vunpack.c.l.b16 %v66
  %v324 = vunpack.c.l.b16 %v67
  %v325 = vunpack.c.l.b16 %v68
  %v326 = vunpack.c.l.b16 %v69
  %v327 = vunpack.c.l.b16 %v70
  %v328 = vunpack.c.l.b16 %v71
  %v329 = vunpack.c.l.b16 %v72
  %v330 = vunpack.c.l.b16 %v73
  %v331 = vunpack.c.l.b16 %v74
  %v332 = vunpack.c.l.b16 %v75
  %v333 = vunpack.c.l.b16 %v76
  %v334 = vunpack.c.l.b16 %v77
  %v335 = vunpack.c.l.b16 %v78
  %v336 = vunpack.c.l.b16 %v79
  %v337 = vunpack.c.l.b16 %v80
  %v338 = vunpack.c.l.b16 %v81
  %v339 = vpack.c.b16 %v276, %v275
  %v340 = vpack.c.b16 %v278, %v277
  %v341 = vpack.c.b16 %v280, %v279
  %v342 = vpack.c.b16 %v282, %v281
  %v343 = vpack.c.b16 %v284, %v283
  %v344 = vpack.c.b16 %v286, %v285
  %v345 = vpack.c.b16 %v288, %v287
  %v346 = vpack.c.b16 %v290, %v289
  %v347 = vpack.c.b16 %v292, %v291
  %v348 = vpack.c.b16 %v294, %v293
  %v349 = vpack.c.b16 %v296, %v295
  %v350 = vpack.c.b16 %v298, %v297
  %v351 = vpack.c.b16 %v300, %v299
  %v352 = vpack.c.b16 %v302, %v301
  %v353 = vpack.c.b16 %v304, %v303
  %v354 = vpack.c.b16 %v306, %v305
  %v355 = vpack.c.b16 %v308, %v307
  %v356 = vpack.c.b16 %v310, %v309
  %v357 = vpack.c.b16 %v312, %v311
  %v358 = vpack.c.b16 %v314, %v313
  %v359 = vpack.c.b16 %v316, %v315
  %v360 = vpack.c.b16 %v318, %v317
  %v361 = vpack.c.b16 %v320, %v319
  %v362 = vpack.c.b16 %v322, %v321
  %v363 = vpack.c.b16 %v324, %v323
  %v364 = vpack.c.b16 %v326, %v325
  %v365 = vpack.c.b16 %v328, %v327
  %v366 = vpack.c.b16 %v330, %v329
  %v367 = vpack.c.b16 %v332, %v331
  %v368 = vpack.c.b16 %v334, %v333
  %v369 = vpack.c.b16 %v336, %v335
  %v370 = vpack.c.b16 %v338, %v337
  %v403 = vunpack.c.l.b16 %v82
  %v404 = vunpack.c.l.b16 %v83
  %v405 = vunpack.c.l.b16 %v84
  %v406 = vunpack.c.l.b16 %v85
  %v407 = vunpack.c.l.b16 %v86
  %v408 = vunpack.c.l.b16 %v87
  %v409 = vunpack.c.l.b16 %v88
  %v410 = vunpack.c.l.b16 %v89
  %v411 = vunpack.c.l.b16 %v90
  %v412 = vunpack.c.l.b16 %v91
  %v413 = vunpack.c.l.b16 %v92
  %v414 = vunpack.c.l.b16 %v93
  %v415 = vunpack.c.l.b16 %v94
  %v416 = vunpack.c.l.b16 %v95
  %v417 = vunpack.c.l.b16 %v96
  %v418 = vunpack.c.l.b16 %v97
  %v419 = vunpack.c.l.b16 %v98
  %v420 = vunpack.c.l.b16 %v99
  %v421 = vunpack.c.l.b16 %v100
  %v422 = vunpack.c.l.b16 %v101
  %v423 = vunpack.c.l.b16 %v102
  %v424 = vunpack.c.l.b16 %v103
  %v425 = vunpack.c.l.b16 %v104
  %v426 = vunpack.c.l.b16 %v105
  %v427 = vunpack.c.l.b16 %v106
  %v428 = vunpack.c.l.b16 %v107
  %v429 = vunpack.c.l.b16 %v108
  %v430 = vunpack.c.l.b16 %v109
  %v431 = vunpack.c.l.b16 %v110
  %v432 = vunpack.c.l.b16 %v111
  %v433 = vunpack.c.l.b16 %v112
  %v434 = vunpack.c.l.b16 %v113
  %v435 = vpack.c.b16 %v403, %v403
  %v436 = vpack.c.b16 %v404, %v404
  %v437 = vpack.c.b16 %v405, %v405
  %v438 = vpack.c.b16 %v406, %v406
  %v439 = vpack.c.b16 %v407, %v407
  %v440 = vpack.c.b16 %v408, %v408
  %v441 = vpack.c.b16 %v409, %v409
  %v442 = vpack.c.b16 %v410, %v410
  %v443 = vpack.c.b16 %v411, %v411
  %v444 = vpack.c.b16 %v412, %v412
  %v445 = vpack.c.b16 %v413, %v413
  %v446 = vpack.c.b16 %v414, %v414
  %v447 = vpack.c.b16 %v415, %v415
  %v448 = vpack.c.b16 %v416, %v416
  %v449 = vpack.c.b16 %v417, %v417
  %v450 = vpack.c.b16 %v418, %v418
  %v451 = vpack.c.b16 %v419, %v419
  %v452 = vpack.c.b16 %v420, %v420
  %v453 = vpack.c.b16 %v421, %v421
  %v454 = vpack.c.b16 %v422, %v422
  %v455 = vpack.c.b16 %v423, %v423
  %v456 = vpack.c.b16 %v424, %v424
  %v457 = vpack.c.b16 %v425, %v425
  %v458 = vpack.c.b16 %v426, %v426
  %v459 = vpack.c.b16 %v427, %v427
  %v460 = vpack.c.b16 %v428, %v428
  %v461 = vpack.c.b16 %v429, %v429
  %v462 = vpack.c.b16 %v430, %v430
  %v463 = vpack.c.b16 %v431, %v431
  %v464 = vpack.c.b16 %v432, %v432
  %v465 = vpack.c.b16 %v433, %v433
  %v466 = vpack.c.b16 %v434, %v434
  %vm467 = vsmask.f32 7424
  %v469 = vshrl.u32 %v339, 16
  %v471 = vshll.u32 %v339, 16
  %v473 = vrot.slane %v471, 1
  %v474 = vor.u32 %v469, %v473
  %v476 = vshll.u32 %v435, 16
  %v478 = vrot.slane %v476, 1
  %v479 = vsel %vm467, %v474, %v478
  %v481 = vshrl.u32 %v340, 16
  %v483 = vshll.u32 %v340, 16
  %v485 = vrot.slane %v483, 1
  %v486 = vor.u32 %v481, %v485
  %v488 = vshll.u32 %v436, 16
  %v490 = vrot.slane %v488, 1
  %v491 = vsel %vm467, %v486, %v490
  %v493 = vshrl.u32 %v341, 16
  %v495 = vshll.u32 %v341, 16
  %v497 = vrot.slane %v495, 1
  %v498 = vor.u32 %v493, %v497
  %v500 = vshll.u32 %v437, 16
  %v502 = vrot.slane %v500, 1
  %v503 = vsel %vm467, %v498, %v502
  %v505 = vshrl.u32 %v342, 16
  %v507 = vshll.u32 %v342, 16
  %v509 = vrot.slane %v507, 1
  %v510 = vor.u32 %v505, %v509
  %v512 = vshll.u32 %v438, 16
  %v514 = vrot.slane %v512, 1
  %v515 = vsel %vm467, %v510, %v514
  %v517 = vshrl.u32 %v343, 16
  %v519 = vshll.u32 %v343, 16
  %v521 = vrot.slane %v519, 1
  %v522 = vor.u32 %v517, %v521
  %v524 = vshll.u32 %v439, 16
  %v526 = vrot.slane %v524, 1
  %v527 = vsel %vm467, %v522, %v526
  %v529 = vshrl.u32 %v344, 16
  %v531 = vshll.u32 %v344, 16
  %v533 = vrot.slane %v531, 1
  %v534 = vor.u32 %v529, %v533
  %v536 = vshll.u32 %v440, 16
  %v538 = vrot.slane %v536, 1
  %v539 = vsel %vm467, %v534, %v538
  %v541 = vshrl.u32 %v345, 16
  %v543 = vshll.u32 %v345, 16
  %v545 = vrot.slane %v543, 1
  %v546 = vor.u32 %v541, %v545
  %v548 = vshll.u32 %v441, 16
  %v550 = vrot.slane %v548, 1
  %v551 = vsel %vm467, %v546, %v550
  %v553 = vshrl.u32 %v346, 16
  %v555 = vshll.u32 %v346, 16
  %v557 = vrot.slane %v555, 1
  %v558 = vor.u32 %v553, %v557
  %v560 = vshll.u32 %v442, 16
  %v562 = vrot.slane %v560, 1
  %v563 = vsel %vm467, %v558, %v562
  %v565 = vshrl.u32 %v347, 16
  %v567 = vshll.u32 %v347, 16
  %v569 = vrot.slane %v567, 1
  %v570 = vor.u32 %v565, %v569
  %v572 = vshll.u32 %v443, 16
  %v574 = vrot.slane %v572, 1
  %v575 = vsel %vm467, %v570, %v574
  %v577 = vshrl.u32 %v348, 16
  %v579 = vshll.u32 %v348, 16
  %v581 = vrot.slane %v579, 1
  %v582 = vor.u32 %v577, %v581
  %v584 = vshll.u32 %v444, 16
  %v586 = vrot.slane %v584, 1
  %v587 = vsel %vm467, %v582, %v586
  %v589 = vshrl.u32 %v349, 16
  %v591 = vshll.u32 %v349, 16
  %v593 = vrot.slane %v591, 1
  %v594 = vor.u32 %v589, %v593
  %v596 = vshll.u32 %v445, 16
  %v598 = vrot.slane %v596, 1
  %v599 = vsel %vm467, %v594, %v598
  %v601 = vshrl.u32 %v350, 16
  %v603 = vshll.u32 %v350, 16
  %v605 = vrot.slane %v603, 1
  %v606 = vor.u32 %v601, %v605
  %v608 = vshll.u32 %v446, 16
  %v610 = vrot.slane %v608, 1
  %v611 = vsel %vm467, %v606, %v610
  %v613 = vshrl.u32 %v351, 16
  %v615 = vshll.u32 %v351, 16
  %v617 = vrot.slane %v615, 1
  %v618 = vor.u32 %v613, %v617
  %v620 = vshll.u32 %v447, 16
  %v622 = vrot.slane %v620, 1
  %v623 = vsel %vm467, %v618, %v622
  %v625 = vshrl.u32 %v352, 16
  %v627 = vshll.u32 %v352, 16
  %v629 = vrot.slane %v627, 1
  %v630 = vor.u32 %v625, %v629
  %v632 = vshll.u32 %v448, 16
  %v634 = vrot.slane %v632, 1
  %v635 = vsel %vm467, %v630, %v634
  %v637 = vshrl.u32 %v353, 16
  %v639 = vshll.u32 %v353, 16
  %v641 = vrot.slane %v639, 1
  %v642 = vor.u32 %v637, %v641
  %v644 = vshll.u32 %v449, 16
  %v646 = vrot.slane %v644, 1
  %v647 = vsel %vm467, %v642, %v646
  %v649 = vshrl.u32 %v354, 16
  %v651 = vshll.u32 %v354, 16
  %v653 = vrot.slane %v651, 1
  %v654 = vor.u32 %v649, %v653
  %v656 = vshll.u32 %v450, 16
  %v658 = vrot.slane %v656, 1
  %v659 = vsel %vm467, %v654, %v658
  %v661 = vshrl.u32 %v355, 16
  %v663 = vshll.u32 %v355, 16
  %v665 = vrot.slane %v663, 1
  %v666 = vor.u32 %v661, %v665
  %v668 = vshll.u32 %v451, 16
  %v670 = vrot.slane %v668, 1
  %v671 = vsel %vm467, %v666, %v670
  %v673 = vshrl.u32 %v356, 16
  %v675 = vshll.u32 %v356, 16
  %v677 = vrot.slane %v675, 1
  %v678 = vor.u32 %v673, %v677
  %v680 = vshll.u32 %v452, 16
  %v682 = vrot.slane %v680, 1
  %v683 = vsel %vm467, %v678, %v682
  %v685 = vshrl.u32 %v357, 16
  %v687 = vshll.u32 %v357, 16
  %v689 = vrot.slane %v687, 1
  %v690 = vor.u32 %v685, %v689
  %v692 = vshll.u32 %v453, 16
  %v694 = vrot.slane %v692, 1
  %v695 = vsel %vm467, %v690, %v694
  %v697 = vshrl.u32 %v358, 16
  %v699 = vshll.u32 %v358, 16
  %v701 = vrot.slane %v699, 1
  %v702 = vor.u32 %v697, %v701
  %v704 = vshll.u32 %v454, 16
  %v706 = vrot.slane %v704, 1
  %v707 = vsel %vm467, %v702, %v706
  %v709 = vshrl.u32 %v359, 16
  %v711 = vshll.u32 %v359, 16
  %v713 = vrot.slane %v711, 1
  %v714 = vor.u32 %v709, %v713
  %v716 = vshll.u32 %v455, 16
  %v718 = vrot.slane %v716, 1
  %v719 = vsel %vm467, %v714, %v718
  %v721 = vshrl.u32 %v360, 16
  %v723 = vshll.u32 %v360, 16
  %v725 = vrot.slane %v723, 1
  %v726 = vor.u32 %v721, %v725
  %v728 = vshll.u32 %v456, 16
  %v730 = vrot.slane %v728, 1
  %v731 = vsel %vm467, %v726, %v730
  %v733 = vshrl.u32 %v361, 16
  %v735 = vshll.u32 %v361, 16
  %v737 = vrot.slane %v735, 1
  %v738 = vor.u32 %v733, %v737
  %v740 = vshll.u32 %v457, 16
  %v742 = vrot.slane %v740, 1
  %v743 = vsel %vm467, %v738, %v742
  %v745 = vshrl.u32 %v362, 16
  %v747 = vshll.u32 %v362, 16
  %v749 = vrot.slane %v747, 1
  %v750 = vor.u32 %v745, %v749
  %v752 = vshll.u32 %v458, 16
  %v754 = vrot.slane %v752, 1
  %v755 = vsel %vm467, %v750, %v754
  %v757 = vshrl.u32 %v363, 16
  %v759 = vshll.u32 %v363, 16
  %v761 = vrot.slane %v759, 1
  %v762 = vor.u32 %v757, %v761
  %v764 = vshll.u32 %v459, 16
  %v766 = vrot.slane %v764, 1
  %v767 = vsel %vm467, %v762, %v766
  %v769 = vshrl.u32 %v364, 16
  %v771 = vshll.u32 %v364, 16
  %v773 = vrot.slane %v771, 1
  %v774 = vor.u32 %v769, %v773
  %v776 = vshll.u32 %v460, 16
  %v778 = vrot.slane %v776, 1
  %v779 = vsel %vm467, %v774, %v778
  %v781 = vshrl.u32 %v365, 16
  %v783 = vshll.u32 %v365, 16
  %v785 = vrot.slane %v783, 1
  %v786 = vor.u32 %v781, %v785
  %v788 = vshll.u32 %v461, 16
  %v790 = vrot.slane %v788, 1
  %v791 = vsel %vm467, %v786, %v790
  %v793 = vshrl.u32 %v366, 16
  %v795 = vshll.u32 %v366, 16
  %v797 = vrot.slane %v795, 1
  %v798 = vor.u32 %v793, %v797
  %v800 = vshll.u32 %v462, 16
  %v802 = vrot.slane %v800, 1
  %v803 = vsel %vm467, %v798, %v802
  %v805 = vshrl.u32 %v367, 16
  %v807 = vshll.u32 %v367, 16
  %v809 = vrot.slane %v807, 1
  %v810 = vor.u32 %v805, %v809
  %v812 = vshll.u32 %v463, 16
  %v814 = vrot.slane %v812, 1
  %v815 = vsel %vm467, %v810, %v814
  %v817 = vshrl.u32 %v368, 16
  %v819 = vshll.u32 %v368, 16
  %v821 = vrot.slane %v819, 1
  %v822 = vor.u32 %v817, %v821
  %v824 = vshll.u32 %v464, 16
  %v826 = vrot.slane %v824, 1
  %v827 = vsel %vm467, %v822, %v826
  %v829 = vshrl.u32 %v369, 16
  %v831 = vshll.u32 %v369, 16
  %v833 = vrot.slane %v831, 1
  %v834 = vor.u32 %v829, %v833
  %v836 = vshll.u32 %v465, 16
  %v838 = vrot.slane %v836, 1
  %v839 = vsel %vm467, %v834, %v838
  %v841 = vshrl.u32 %v370, 16
  %v843 = vshll.u32 %v370, 16
  %v845 = vrot.slane %v843, 1
  %v846 = vor.u32 %v841, %v845
  %v848 = vshll.u32 %v466, 16
  %v850 = vrot.slane %v848, 1
  %v851 = vsel %vm467, %v846, %v850
  %852 = vrot.lane.b32.xlu0 %v479, 16
  %v853 = vpop.permute.xlu0 %852
  %854 = vrot.lane.b32.xlu0 %v491, 16
  %v855 = vpop.permute.xlu0 %854
  %856 = vrot.lane.b32.xlu0 %v503, 16
  %v857 = vpop.permute.xlu0 %856
  %858 = vrot.lane.b32.xlu0 %v515, 16
  %v859 = vpop.permute.xlu0 %858
  %860 = vrot.lane.b32.xlu0 %v527, 16
  %v861 = vpop.permute.xlu0 %860
  %862 = vrot.lane.b32.xlu0 %v539, 16
  %v863 = vpop.permute.xlu0 %862
  %864 = vrot.lane.b32.xlu0 %v551, 16
  %v865 = vpop.permute.xlu0 %864
  %866 = vrot.lane.b32.xlu0 %v563, 16
  %v867 = vpop.permute.xlu0 %866
  %868 = vrot.lane.b32.xlu0 %v575, 16
  %v869 = vpop.permute.xlu0 %868
  %870 = vrot.lane.b32.xlu0 %v587, 16
  %v871 = vpop.permute.xlu0 %870
  %872 = vrot.lane.b32.xlu0 %v599, 16
  %v873 = vpop.permute.xlu0 %872
  %874 = vrot.lane.b32.xlu0 %v611, 16
  %v875 = vpop.permute.xlu0 %874
  %876 = vrot.lane.b32.xlu0 %v623, 16
  %v877 = vpop.permute.xlu0 %876
  %878 = vrot.lane.b32.xlu0 %v635, 16
  %v879 = vpop.permute.xlu0 %878
  %880 = vrot.lane.b32.xlu0 %v647, 16
  %v881 = vpop.permute.xlu0 %880
  %882 = vrot.lane.b32.xlu0 %v659, 16
  %v883 = vpop.permute.xlu0 %882
  %884 = vrot.lane.b32.xlu0 %v671, 16
  %v885 = vpop.permute.xlu0 %884
  %886 = vrot.lane.b32.xlu0 %v683, 16
  %v887 = vpop.permute.xlu0 %886
  %888 = vrot.lane.b32.xlu0 %v695, 16
  %v889 = vpop.permute.xlu0 %888
  %890 = vrot.lane.b32.xlu0 %v707, 16
  %v891 = vpop.permute.xlu0 %890
  %892 = vrot.lane.b32.xlu0 %v719, 16
  %v893 = vpop.permute.xlu0 %892
  %894 = vrot.lane.b32.xlu0 %v731, 16
  %v895 = vpop.permute.xlu0 %894
  %896 = vrot.lane.b32.xlu0 %v743, 16
  %v897 = vpop.permute.xlu0 %896
  %898 = vrot.lane.b32.xlu0 %v755, 16
  %v899 = vpop.permute.xlu0 %898
  %900 = vrot.lane.b32.xlu0 %v767, 16
  %v901 = vpop.permute.xlu0 %900
  %902 = vrot.lane.b32.xlu0 %v779, 16
  %v903 = vpop.permute.xlu0 %902
  %904 = vrot.lane.b32.xlu0 %v791, 16
  %v905 = vpop.permute.xlu0 %904
  %906 = vrot.lane.b32.xlu0 %v803, 16
  %v907 = vpop.permute.xlu0 %906
  %908 = vrot.lane.b32.xlu0 %v815, 16
  %v909 = vpop.permute.xlu0 %908
  %910 = vrot.lane.b32.xlu0 %v827, 16
  %v911 = vpop.permute.xlu0 %910
  %912 = vrot.lane.b32.xlu0 %v839, 16
  %v913 = vpop.permute.xlu0 %912
  %914 = vrot.lane.b32.xlu0 %v851, 16
  %v915 = vpop.permute.xlu0 %914
  %v980 = vunpack.c.l.b16 %v115
  %v981 = vunpack.c.l.b16 %v116
  %v982 = vunpack.c.l.b16 %v117
  %v983 = vunpack.c.l.b16 %v118
  %v984 = vunpack.c.l.b16 %v119
  %v985 = vunpack.c.l.b16 %v120
  %v986 = vunpack.c.l.b16 %v121
  %v987 = vunpack.c.l.b16 %v122
  %v988 = vunpack.c.l.b16 %v123
  %v989 = vunpack.c.l.b16 %v124
  %v990 = vunpack.c.l.b16 %v125
  %v991 = vunpack.c.l.b16 %v126
  %v992 = vunpack.c.l.b16 %v127
  %v993 = vunpack.c.l.b16 %v128
  %v994 = vunpack.c.l.b16 %v129
  %v995 = vunpack.c.l.b16 %v130
  %v996 = vunpack.c.l.b16 %v131
  %v997 = vunpack.c.l.b16 %v132
  %v998 = vunpack.c.l.b16 %v133
  %v999 = vunpack.c.l.b16 %v134
  %v1000 = vunpack.c.l.b16 %v135
  %v1001 = vunpack.c.l.b16 %v136
  %v1002 = vunpack.c.l.b16 %v137
  %v1003 = vunpack.c.l.b16 %v138
  %v1004 = vunpack.c.l.b16 %v139
  %v1005 = vunpack.c.l.b16 %v140
  %v1006 = vunpack.c.l.b16 %v141
  %v1007 = vunpack.c.l.b16 %v142
  %v1008 = vunpack.c.l.b16 %v143
  %v1009 = vunpack.c.l.b16 %v144
  %v1010 = vunpack.c.l.b16 %v145
  %v1011 = vunpack.c.l.b16 %v146
  %v1012 = vunpack.c.l.b16 %v147
  %v1013 = vunpack.c.l.b16 %v148
  %v1014 = vunpack.c.l.b16 %v149
  %v1015 = vunpack.c.l.b16 %v150
  %v1016 = vunpack.c.l.b16 %v151
  %v1017 = vunpack.c.l.b16 %v152
  %v1018 = vunpack.c.l.b16 %v153
  %v1019 = vunpack.c.l.b16 %v154
  %v1020 = vunpack.c.l.b16 %v155
  %v1021 = vunpack.c.l.b16 %v156
  %v1022 = vunpack.c.l.b16 %v157
  %v1023 = vunpack.c.l.b16 %v158
  %v1024 = vunpack.c.l.b16 %v159
  %v1025 = vunpack.c.l.b16 %v160
  %v1026 = vunpack.c.l.b16 %v161
  %v1027 = vunpack.c.l.b16 %v162
  %v1028 = vunpack.c.l.b16 %v163
  %v1029 = vunpack.c.l.b16 %v164
  %v1030 = vunpack.c.l.b16 %v165
  %v1031 = vunpack.c.l.b16 %v166
  %v1032 = vunpack.c.l.b16 %v167
  %v1033 = vunpack.c.l.b16 %v168
  %v1034 = vunpack.c.l.b16 %v169
  %v1035 = vunpack.c.l.b16 %v170
  %v1036 = vunpack.c.l.b16 %v171
  %v1037 = vunpack.c.l.b16 %v172
  %v1038 = vunpack.c.l.b16 %v173
  %v1039 = vunpack.c.l.b16 %v174
  %v1040 = vunpack.c.l.b16 %v175
  %v1041 = vunpack.c.l.b16 %v176
  %v1042 = vunpack.c.l.b16 %v177
  %v1043 = vunpack.c.l.b16 %v178
  %v1044 = vpack.c.b16 %v981, %v980
  %v1045 = vpack.c.b16 %v983, %v982
  %v1046 = vpack.c.b16 %v985, %v984
  %v1047 = vpack.c.b16 %v987, %v986
  %v1048 = vpack.c.b16 %v989, %v988
  %v1049 = vpack.c.b16 %v991, %v990
  %v1050 = vpack.c.b16 %v993, %v992
  %v1051 = vpack.c.b16 %v995, %v994
  %v1052 = vpack.c.b16 %v997, %v996
  %v1053 = vpack.c.b16 %v999, %v998
  %v1054 = vpack.c.b16 %v1001, %v1000
  %v1055 = vpack.c.b16 %v1003, %v1002
  %v1056 = vpack.c.b16 %v1005, %v1004
  %v1057 = vpack.c.b16 %v1007, %v1006
  %v1058 = vpack.c.b16 %v1009, %v1008
  %v1059 = vpack.c.b16 %v1011, %v1010
  %v1060 = vpack.c.b16 %v1013, %v1012
  %v1061 = vpack.c.b16 %v1015, %v1014
  %v1062 = vpack.c.b16 %v1017, %v1016
  %v1063 = vpack.c.b16 %v1019, %v1018
  %v1064 = vpack.c.b16 %v1021, %v1020
  %v1065 = vpack.c.b16 %v1023, %v1022
  %v1066 = vpack.c.b16 %v1025, %v1024
  %v1067 = vpack.c.b16 %v1027, %v1026
  %v1068 = vpack.c.b16 %v1029, %v1028
  %v1069 = vpack.c.b16 %v1031, %v1030
  %v1070 = vpack.c.b16 %v1033, %v1032
  %v1071 = vpack.c.b16 %v1035, %v1034
  %v1072 = vpack.c.b16 %v1037, %v1036
  %v1073 = vpack.c.b16 %v1039, %v1038
  %v1074 = vpack.c.b16 %v1041, %v1040
  %v1075 = vpack.c.b16 %v1043, %v1042
  %1076 = vrot.lane.b32.xlu0 %v1044, 32
  %v1077 = vpop.permute.xlu0 %1076
  %1078 = vrot.lane.b32.xlu0 %v1045, 32
  %v1079 = vpop.permute.xlu0 %1078
  %1080 = vrot.lane.b32.xlu0 %v1046, 32
  %v1081 = vpop.permute.xlu0 %1080
  %1082 = vrot.lane.b32.xlu0 %v1047, 32
  %v1083 = vpop.permute.xlu0 %1082
  %1084 = vrot.lane.b32.xlu0 %v1048, 32
  %v1085 = vpop.permute.xlu0 %1084
  %1086 = vrot.lane.b32.xlu0 %v1049, 32
  %v1087 = vpop.permute.xlu0 %1086
  %1088 = vrot.lane.b32.xlu0 %v1050, 32
  %v1089 = vpop.permute.xlu0 %1088
  %1090 = vrot.lane.b32.xlu0 %v1051, 32
  %v1091 = vpop.permute.xlu0 %1090
  %1092 = vrot.lane.b32.xlu0 %v1052, 32
  %v1093 = vpop.permute.xlu0 %1092
  %1094 = vrot.lane.b32.xlu0 %v1053, 32
  %v1095 = vpop.permute.xlu0 %1094
  %1096 = vrot.lane.b32.xlu0 %v1054, 32
  %v1097 = vpop.permute.xlu0 %1096
  %1098 = vrot.lane.b32.xlu0 %v1055, 32
  %v1099 = vpop.permute.xlu0 %1098
  %1100 = vrot.lane.b32.xlu0 %v1056, 32
  %v1101 = vpop.permute.xlu0 %1100
  %1102 = vrot.lane.b32.xlu0 %v1057, 32
  %v1103 = vpop.permute.xlu0 %1102
  %1104 = vrot.lane.b32.xlu0 %v1058, 32
  %v1105 = vpop.permute.xlu0 %1104
  %1106 = vrot.lane.b32.xlu0 %v1059, 32
  %v1107 = vpop.permute.xlu0 %1106
  %1108 = vrot.lane.b32.xlu0 %v1060, 32
  %v1109 = vpop.permute.xlu0 %1108
  %1110 = vrot.lane.b32.xlu0 %v1061, 32
  %v1111 = vpop.permute.xlu0 %1110
  %1112 = vrot.lane.b32.xlu0 %v1062, 32
  %v1113 = vpop.permute.xlu0 %1112
  %1114 = vrot.lane.b32.xlu0 %v1063, 32
  %v1115 = vpop.permute.xlu0 %1114
  %1116 = vrot.lane.b32.xlu0 %v1064, 32
  %v1117 = vpop.permute.xlu0 %1116
  %1118 = vrot.lane.b32.xlu0 %v1065, 32
  %v1119 = vpop.permute.xlu0 %1118
  %1120 = vrot.lane.b32.xlu0 %v1066, 32
  %v1121 = vpop.permute.xlu0 %1120
  %1122 = vrot.lane.b32.xlu0 %v1067, 32
  %v1123 = vpop.permute.xlu0 %1122
  %1124 = vrot.lane.b32.xlu0 %v1068, 32
  %v1125 = vpop.permute.xlu0 %1124
  %1126 = vrot.lane.b32.xlu0 %v1069, 32
  %v1127 = vpop.permute.xlu0 %1126
  %1128 = vrot.lane.b32.xlu0 %v1070, 32
  %v1129 = vpop.permute.xlu0 %1128
  %1130 = vrot.lane.b32.xlu0 %v1071, 32
  %v1131 = vpop.permute.xlu0 %1130
  %1132 = vrot.lane.b32.xlu0 %v1072, 32
  %v1133 = vpop.permute.xlu0 %1132
  %1134 = vrot.lane.b32.xlu0 %v1073, 32
  %v1135 = vpop.permute.xlu0 %1134
  %1136 = vrot.lane.b32.xlu0 %v1074, 32
  %v1137 = vpop.permute.xlu0 %1136
  %1138 = vrot.lane.b32.xlu0 %v1075, 32
  %v1139 = vpop.permute.xlu0 %1138
  %v1172 = vunpack.c.l.b16 %v179
  %v1173 = vunpack.c.l.b16 %v180
  %v1174 = vunpack.c.l.b16 %v181
  %v1175 = vunpack.c.l.b16 %v182
  %v1176 = vunpack.c.l.b16 %v183
  %v1177 = vunpack.c.l.b16 %v184
  %v1178 = vunpack.c.l.b16 %v185
  %v1179 = vunpack.c.l.b16 %v186
  %v1180 = vunpack.c.l.b16 %v187
  %v1181 = vunpack.c.l.b16 %v188
  %v1182 = vunpack.c.l.b16 %v189
  %v1183 = vunpack.c.l.b16 %v190
  %v1184 = vunpack.c.l.b16 %v191
  %v1185 = vunpack.c.l.b16 %v192
  %v1186 = vunpack.c.l.b16 %v193
  %v1187 = vunpack.c.l.b16 %v194
  %v1188 = vunpack.c.l.b16 %v195
  %v1189 = vunpack.c.l.b16 %v196
  %v1190 = vunpack.c.l.b16 %v197
  %v1191 = vunpack.c.l.b16 %v198
  %v1192 = vunpack.c.l.b16 %v199
  %v1193 = vunpack.c.l.b16 %v200
  %v1194 = vunpack.c.l.b16 %v201
  %v1195 = vunpack.c.l.b16 %v202
  %v1196 = vunpack.c.l.b16 %v203
  %v1197 = vunpack.c.l.b16 %v204
  %v1198 = vunpack.c.l.b16 %v205
  %v1199 = vunpack.c.l.b16 %v206
  %v1200 = vunpack.c.l.b16 %v207
  %v1201 = vunpack.c.l.b16 %v208
  %v1202 = vunpack.c.l.b16 %v209
  %v1203 = vunpack.c.l.b16 %v210
  %v1204 = vpack.c.b16 %v1172, %v1172
  %v1205 = vpack.c.b16 %v1173, %v1173
  %v1206 = vpack.c.b16 %v1174, %v1174
  %v1207 = vpack.c.b16 %v1175, %v1175
  %v1208 = vpack.c.b16 %v1176, %v1176
  %v1209 = vpack.c.b16 %v1177, %v1177
  %v1210 = vpack.c.b16 %v1178, %v1178
  %v1211 = vpack.c.b16 %v1179, %v1179
  %v1212 = vpack.c.b16 %v1180, %v1180
  %v1213 = vpack.c.b16 %v1181, %v1181
  %v1214 = vpack.c.b16 %v1182, %v1182
  %v1215 = vpack.c.b16 %v1183, %v1183
  %v1216 = vpack.c.b16 %v1184, %v1184
  %v1217 = vpack.c.b16 %v1185, %v1185
  %v1218 = vpack.c.b16 %v1186, %v1186
  %v1219 = vpack.c.b16 %v1187, %v1187
  %v1220 = vpack.c.b16 %v1188, %v1188
  %v1221 = vpack.c.b16 %v1189, %v1189
  %v1222 = vpack.c.b16 %v1190, %v1190
  %v1223 = vpack.c.b16 %v1191, %v1191
  %v1224 = vpack.c.b16 %v1192, %v1192
  %v1225 = vpack.c.b16 %v1193, %v1193
  %v1226 = vpack.c.b16 %v1194, %v1194
  %v1227 = vpack.c.b16 %v1195, %v1195
  %v1228 = vpack.c.b16 %v1196, %v1196
  %v1229 = vpack.c.b16 %v1197, %v1197
  %v1230 = vpack.c.b16 %v1198, %v1198
  %v1231 = vpack.c.b16 %v1199, %v1199
  %v1232 = vpack.c.b16 %v1200, %v1200
  %v1233 = vpack.c.b16 %v1201, %v1201
  %v1234 = vpack.c.b16 %v1202, %v1202
  %v1235 = vpack.c.b16 %v1203, %v1203
  %v1237 = vshrl.u32 %v1044, 16
  %v1239 = vshll.u32 %v1044, 16
  %v1241 = vrot.slane %v1239, 1
  %v1242 = vor.u32 %v1237, %v1241
  %v1244 = vshll.u32 %v1204, 16
  %v1246 = vrot.slane %v1244, 1
  %v1247 = vsel %vm467, %v1242, %v1246
  %v1249 = vshrl.u32 %v1045, 16
  %v1251 = vshll.u32 %v1045, 16
  %v1253 = vrot.slane %v1251, 1
  %v1254 = vor.u32 %v1249, %v1253
  %v1256 = vshll.u32 %v1205, 16
  %v1258 = vrot.slane %v1256, 1
  %v1259 = vsel %vm467, %v1254, %v1258
  %v1261 = vshrl.u32 %v1046, 16
  %v1263 = vshll.u32 %v1046, 16
  %v1265 = vrot.slane %v1263, 1
  %v1266 = vor.u32 %v1261, %v1265
  %v1268 = vshll.u32 %v1206, 16
  %v1270 = vrot.slane %v1268, 1
  %v1271 = vsel %vm467, %v1266, %v1270
  %v1273 = vshrl.u32 %v1047, 16
  %v1275 = vshll.u32 %v1047, 16
  %v1277 = vrot.slane %v1275, 1
  %v1278 = vor.u32 %v1273, %v1277
  %v1280 = vshll.u32 %v1207, 16
  %v1282 = vrot.slane %v1280, 1
  %v1283 = vsel %vm467, %v1278, %v1282
  %v1285 = vshrl.u32 %v1048, 16
  %v1287 = vshll.u32 %v1048, 16
  %v1289 = vrot.slane %v1287, 1
  %v1290 = vor.u32 %v1285, %v1289
  %v1292 = vshll.u32 %v1208, 16
  %v1294 = vrot.slane %v1292, 1
  %v1295 = vsel %vm467, %v1290, %v1294
  %v1297 = vshrl.u32 %v1049, 16
  %v1299 = vshll.u32 %v1049, 16
  %v1301 = vrot.slane %v1299, 1
  %v1302 = vor.u32 %v1297, %v1301
  %v1304 = vshll.u32 %v1209, 16
  %v1306 = vrot.slane %v1304, 1
  %v1307 = vsel %vm467, %v1302, %v1306
  %v1309 = vshrl.u32 %v1050, 16
  %v1311 = vshll.u32 %v1050, 16
  %v1313 = vrot.slane %v1311, 1
  %v1314 = vor.u32 %v1309, %v1313
  %v1316 = vshll.u32 %v1210, 16
  %v1318 = vrot.slane %v1316, 1
  %v1319 = vsel %vm467, %v1314, %v1318
  %v1321 = vshrl.u32 %v1051, 16
  %v1323 = vshll.u32 %v1051, 16
  %v1325 = vrot.slane %v1323, 1
  %v1326 = vor.u32 %v1321, %v1325
  %v1328 = vshll.u32 %v1211, 16
  %v1330 = vrot.slane %v1328, 1
  %v1331 = vsel %vm467, %v1326, %v1330
  %v1333 = vshrl.u32 %v1052, 16
  %v1335 = vshll.u32 %v1052, 16
  %v1337 = vrot.slane %v1335, 1
  %v1338 = vor.u32 %v1333, %v1337
  %v1340 = vshll.u32 %v1212, 16
  %v1342 = vrot.slane %v1340, 1
  %v1343 = vsel %vm467, %v1338, %v1342
  %v1345 = vshrl.u32 %v1053, 16
  %v1347 = vshll.u32 %v1053, 16
  %v1349 = vrot.slane %v1347, 1
  %v1350 = vor.u32 %v1345, %v1349
  %v1352 = vshll.u32 %v1213, 16
  %v1354 = vrot.slane %v1352, 1
  %v1355 = vsel %vm467, %v1350, %v1354
  %v1357 = vshrl.u32 %v1054, 16
  %v1359 = vshll.u32 %v1054, 16
  %v1361 = vrot.slane %v1359, 1
  %v1362 = vor.u32 %v1357, %v1361
  %v1364 = vshll.u32 %v1214, 16
  %v1366 = vrot.slane %v1364, 1
  %v1367 = vsel %vm467, %v1362, %v1366
  %v1369 = vshrl.u32 %v1055, 16
  %v1371 = vshll.u32 %v1055, 16
  %v1373 = vrot.slane %v1371, 1
  %v1374 = vor.u32 %v1369, %v1373
  %v1376 = vshll.u32 %v1215, 16
  %v1378 = vrot.slane %v1376, 1
  %v1379 = vsel %vm467, %v1374, %v1378
  %v1381 = vshrl.u32 %v1056, 16
  %v1383 = vshll.u32 %v1056, 16
  %v1385 = vrot.slane %v1383, 1
  %v1386 = vor.u32 %v1381, %v1385
  %v1388 = vshll.u32 %v1216, 16
  %v1390 = vrot.slane %v1388, 1
  %v1391 = vsel %vm467, %v1386, %v1390
  %v1393 = vshrl.u32 %v1057, 16
  %v1395 = vshll.u32 %v1057, 16
  %v1397 = vrot.slane %v1395, 1
  %v1398 = vor.u32 %v1393, %v1397
  %v1400 = vshll.u32 %v1217, 16
  %v1402 = vrot.slane %v1400, 1
  %v1403 = vsel %vm467, %v1398, %v1402
  %v1405 = vshrl.u32 %v1058, 16
  %v1407 = vshll.u32 %v1058, 16
  %v1409 = vrot.slane %v1407, 1
  %v1410 = vor.u32 %v1405, %v1409
  %v1412 = vshll.u32 %v1218, 16
  %v1414 = vrot.slane %v1412, 1
  %v1415 = vsel %vm467, %v1410, %v1414
  %v1417 = vshrl.u32 %v1059, 16
  %v1419 = vshll.u32 %v1059, 16
  %v1421 = vrot.slane %v1419, 1
  %v1422 = vor.u32 %v1417, %v1421
  %v1424 = vshll.u32 %v1219, 16
  %v1426 = vrot.slane %v1424, 1
  %v1427 = vsel %vm467, %v1422, %v1426
  %v1429 = vshrl.u32 %v1060, 16
  %v1431 = vshll.u32 %v1060, 16
  %v1433 = vrot.slane %v1431, 1
  %v1434 = vor.u32 %v1429, %v1433
  %v1436 = vshll.u32 %v1220, 16
  %v1438 = vrot.slane %v1436, 1
  %v1439 = vsel %vm467, %v1434, %v1438
  %v1441 = vshrl.u32 %v1061, 16
  %v1443 = vshll.u32 %v1061, 16
  %v1445 = vrot.slane %v1443, 1
  %v1446 = vor.u32 %v1441, %v1445
  %v1448 = vshll.u32 %v1221, 16
  %v1450 = vrot.slane %v1448, 1
  %v1451 = vsel %vm467, %v1446, %v1450
  %v1453 = vshrl.u32 %v1062, 16
  %v1455 = vshll.u32 %v1062, 16
  %v1457 = vrot.slane %v1455, 1
  %v1458 = vor.u32 %v1453, %v1457
  %v1460 = vshll.u32 %v1222, 16
  %v1462 = vrot.slane %v1460, 1
  %v1463 = vsel %vm467, %v1458, %v1462
  %v1465 = vshrl.u32 %v1063, 16
  %v1467 = vshll.u32 %v1063, 16
  %v1469 = vrot.slane %v1467, 1
  %v1470 = vor.u32 %v1465, %v1469
  %v1472 = vshll.u32 %v1223, 16
  %v1474 = vrot.slane %v1472, 1
  %v1475 = vsel %vm467, %v1470, %v1474
  %v1477 = vshrl.u32 %v1064, 16
  %v1479 = vshll.u32 %v1064, 16
  %v1481 = vrot.slane %v1479, 1
  %v1482 = vor.u32 %v1477, %v1481
  %v1484 = vshll.u32 %v1224, 16
  %v1486 = vrot.slane %v1484, 1
  %v1487 = vsel %vm467, %v1482, %v1486
  %v1489 = vshrl.u32 %v1065, 16
  %v1491 = vshll.u32 %v1065, 16
  %v1493 = vrot.slane %v1491, 1
  %v1494 = vor.u32 %v1489, %v1493
  %v1496 = vshll.u32 %v1225, 16
  %v1498 = vrot.slane %v1496, 1
  %v1499 = vsel %vm467, %v1494, %v1498
  %v1501 = vshrl.u32 %v1066, 16
  %v1503 = vshll.u32 %v1066, 16
  %v1505 = vrot.slane %v1503, 1
  %v1506 = vor.u32 %v1501, %v1505
  %v1508 = vshll.u32 %v1226, 16
  %v1510 = vrot.slane %v1508, 1
  %v1511 = vsel %vm467, %v1506, %v1510
  %v1513 = vshrl.u32 %v1067, 16
  %v1515 = vshll.u32 %v1067, 16
  %v1517 = vrot.slane %v1515, 1
  %v1518 = vor.u32 %v1513, %v1517
  %v1520 = vshll.u32 %v1227, 16
  %v1522 = vrot.slane %v1520, 1
  %v1523 = vsel %vm467, %v1518, %v1522
  %v1525 = vshrl.u32 %v1068, 16
  %v1527 = vshll.u32 %v1068, 16
  %v1529 = vrot.slane %v1527, 1
  %v1530 = vor.u32 %v1525, %v1529
  %v1532 = vshll.u32 %v1228, 16
  %v1534 = vrot.slane %v1532, 1
  %v1535 = vsel %vm467, %v1530, %v1534
  %v1537 = vshrl.u32 %v1069, 16
  %v1539 = vshll.u32 %v1069, 16
  %v1541 = vrot.slane %v1539, 1
  %v1542 = vor.u32 %v1537, %v1541
  %v1544 = vshll.u32 %v1229, 16
  %v1546 = vrot.slane %v1544, 1
  %v1547 = vsel %vm467, %v1542, %v1546
  %v1549 = vshrl.u32 %v1070, 16
  %v1551 = vshll.u32 %v1070, 16
  %v1553 = vrot.slane %v1551, 1
  %v1554 = vor.u32 %v1549, %v1553
  %v1556 = vshll.u32 %v1230, 16
  %v1558 = vrot.slane %v1556, 1
  %v1559 = vsel %vm467, %v1554, %v1558
  %v1561 = vshrl.u32 %v1071, 16
  %v1563 = vshll.u32 %v1071, 16
  %v1565 = vrot.slane %v1563, 1
  %v1566 = vor.u32 %v1561, %v1565
  %v1568 = vshll.u32 %v1231, 16
  %v1570 = vrot.slane %v1568, 1
  %v1571 = vsel %vm467, %v1566, %v1570
  %v1573 = vshrl.u32 %v1072, 16
  %v1575 = vshll.u32 %v1072, 16
  %v1577 = vrot.slane %v1575, 1
  %v1578 = vor.u32 %v1573, %v1577
  %v1580 = vshll.u32 %v1232, 16
  %v1582 = vrot.slane %v1580, 1
  %v1583 = vsel %vm467, %v1578, %v1582
  %v1585 = vshrl.u32 %v1073, 16
  %v1587 = vshll.u32 %v1073, 16
  %v1589 = vrot.slane %v1587, 1
  %v1590 = vor.u32 %v1585, %v1589
  %v1592 = vshll.u32 %v1233, 16
  %v1594 = vrot.slane %v1592, 1
  %v1595 = vsel %vm467, %v1590, %v1594
  %v1597 = vshrl.u32 %v1074, 16
  %v1599 = vshll.u32 %v1074, 16
  %v1601 = vrot.slane %v1599, 1
  %v1602 = vor.u32 %v1597, %v1601
  %v1604 = vshll.u32 %v1234, 16
  %v1606 = vrot.slane %v1604, 1
  %v1607 = vsel %vm467, %v1602, %v1606
  %v1609 = vshrl.u32 %v1075, 16
  %v1611 = vshll.u32 %v1075, 16
  %v1613 = vrot.slane %v1611, 1
  %v1614 = vor.u32 %v1609, %v1613
  %v1616 = vshll.u32 %v1235, 16
  %v1618 = vrot.slane %v1616, 1
  %v1619 = vsel %vm467, %v1614, %v1618
  %1620 = vrot.lane.b32.xlu0 %v1247, 48
  %v1621 = vpop.permute.xlu0 %1620
  %1622 = vrot.lane.b32.xlu0 %v1259, 48
  %v1623 = vpop.permute.xlu0 %1622
  %1624 = vrot.lane.b32.xlu0 %v1271, 48
  %v1625 = vpop.permute.xlu0 %1624
  %1626 = vrot.lane.b32.xlu0 %v1283, 48
  %v1627 = vpop.permute.xlu0 %1626
  %1628 = vrot.lane.b32.xlu0 %v1295, 48
  %v1629 = vpop.permute.xlu0 %1628
  %1630 = vrot.lane.b32.xlu0 %v1307, 48
  %v1631 = vpop.permute.xlu0 %1630
  %1632 = vrot.lane.b32.xlu0 %v1319, 48
  %v1633 = vpop.permute.xlu0 %1632
  %1634 = vrot.lane.b32.xlu0 %v1331, 48
  %v1635 = vpop.permute.xlu0 %1634
  %1636 = vrot.lane.b32.xlu0 %v1343, 48
  %v1637 = vpop.permute.xlu0 %1636
  %1638 = vrot.lane.b32.xlu0 %v1355, 48
  %v1639 = vpop.permute.xlu0 %1638
  %1640 = vrot.lane.b32.xlu0 %v1367, 48
  %v1641 = vpop.permute.xlu0 %1640
  %1642 = vrot.lane.b32.xlu0 %v1379, 48
  %v1643 = vpop.permute.xlu0 %1642
  %1644 = vrot.lane.b32.xlu0 %v1391, 48
  %v1645 = vpop.permute.xlu0 %1644
  %1646 = vrot.lane.b32.xlu0 %v1403, 48
  %v1647 = vpop.permute.xlu0 %1646
  %1648 = vrot.lane.b32.xlu0 %v1415, 48
  %v1649 = vpop.permute.xlu0 %1648
  %1650 = vrot.lane.b32.xlu0 %v1427, 48
  %v1651 = vpop.permute.xlu0 %1650
  %1652 = vrot.lane.b32.xlu0 %v1439, 48
  %v1653 = vpop.permute.xlu0 %1652
  %1654 = vrot.lane.b32.xlu0 %v1451, 48
  %v1655 = vpop.permute.xlu0 %1654
  %1656 = vrot.lane.b32.xlu0 %v1463, 48
  %v1657 = vpop.permute.xlu0 %1656
  %1658 = vrot.lane.b32.xlu0 %v1475, 48
  %v1659 = vpop.permute.xlu0 %1658
  %1660 = vrot.lane.b32.xlu0 %v1487, 48
  %v1661 = vpop.permute.xlu0 %1660
  %1662 = vrot.lane.b32.xlu0 %v1499, 48
  %v1663 = vpop.permute.xlu0 %1662
  %1664 = vrot.lane.b32.xlu0 %v1511, 48
  %v1665 = vpop.permute.xlu0 %1664
  %1666 = vrot.lane.b32.xlu0 %v1523, 48
  %v1667 = vpop.permute.xlu0 %1666
  %1668 = vrot.lane.b32.xlu0 %v1535, 48
  %v1669 = vpop.permute.xlu0 %1668
  %1670 = vrot.lane.b32.xlu0 %v1547, 48
  %v1671 = vpop.permute.xlu0 %1670
  %1672 = vrot.lane.b32.xlu0 %v1559, 48
  %v1673 = vpop.permute.xlu0 %1672
  %1674 = vrot.lane.b32.xlu0 %v1571, 48
  %v1675 = vpop.permute.xlu0 %1674
  %1676 = vrot.lane.b32.xlu0 %v1583, 48
  %v1677 = vpop.permute.xlu0 %1676
  %1678 = vrot.lane.b32.xlu0 %v1595, 48
  %v1679 = vpop.permute.xlu0 %1678
  %1680 = vrot.lane.b32.xlu0 %v1607, 48
  %v1681 = vpop.permute.xlu0 %1680
  %1682 = vrot.lane.b32.xlu0 %v1619, 48
  %v1683 = vpop.permute.xlu0 %1682
  %vm1684 = vcmask 130048
  %v1686 = vsel %vm1684, %v339, %v853
  %v1688 = vsel %vm1684, %v340, %v855
  %v1690 = vsel %vm1684, %v341, %v857
  %v1692 = vsel %vm1684, %v342, %v859
  %v1694 = vsel %vm1684, %v343, %v861
  %v1696 = vsel %vm1684, %v344, %v863
  %v1698 = vsel %vm1684, %v345, %v865
  %v1700 = vsel %vm1684, %v346, %v867
  %v1702 = vsel %vm1684, %v347, %v869
  %v1704 = vsel %vm1684, %v348, %v871
  %v1706 = vsel %vm1684, %v349, %v873
  %v1708 = vsel %vm1684, %v350, %v875
  %v1710 = vsel %vm1684, %v351, %v877
  %v1712 = vsel %vm1684, %v352, %v879
  %v1714 = vsel %vm1684, %v353, %v881
  %v1716 = vsel %vm1684, %v354, %v883
  %v1718 = vsel %vm1684, %v355, %v885
  %v1720 = vsel %vm1684, %v356, %v887
  %v1722 = vsel %vm1684, %v357, %v889
  %v1724 = vsel %vm1684, %v358, %v891
  %v1726 = vsel %vm1684, %v359, %v893
  %v1728 = vsel %vm1684, %v360, %v895
  %v1730 = vsel %vm1684, %v361, %v897
  %v1732 = vsel %vm1684, %v362, %v899
  %v1734 = vsel %vm1684, %v363, %v901
  %v1736 = vsel %vm1684, %v364, %v903
  %v1738 = vsel %vm1684, %v365, %v905
  %v1740 = vsel %vm1684, %v366, %v907
  %v1742 = vsel %vm1684, %v367, %v909
  %v1744 = vsel %vm1684, %v368, %v911
  %v1746 = vsel %vm1684, %v369, %v913
  %v1748 = vsel %vm1684, %v370, %v915
  %vm1749 = vcmask 261120
  %v1751 = vsel %vm1749, %v1686, %v1077
  %v1753 = vsel %vm1749, %v1688, %v1079
  %v1755 = vsel %vm1749, %v1690, %v1081
  %v1757 = vsel %vm1749, %v1692, %v1083
  %v1759 = vsel %vm1749, %v1694, %v1085
  %v1761 = vsel %vm1749, %v1696, %v1087
  %v1763 = vsel %vm1749, %v1698, %v1089
  %v1765 = vsel %vm1749, %v1700, %v1091
  %v1767 = vsel %vm1749, %v1702, %v1093
  %v1769 = vsel %vm1749, %v1704, %v1095
  %v1771 = vsel %vm1749, %v1706, %v1097
  %v1773 = vsel %vm1749, %v1708, %v1099
  %v1775 = vsel %vm1749, %v1710, %v1101
  %v1777 = vsel %vm1749, %v1712, %v1103
  %v1779 = vsel %vm1749, %v1714, %v1105
  %v1781 = vsel %vm1749, %v1716, %v1107
  %v1783 = vsel %vm1749, %v1718, %v1109
  %v1785 = vsel %vm1749, %v1720, %v1111
  %v1787 = vsel %vm1749, %v1722, %v1113
  %v1789 = vsel %vm1749, %v1724, %v1115
  %v1791 = vsel %vm1749, %v1726, %v1117
  %v1793 = vsel %vm1749, %v1728, %v1119
  %v1795 = vsel %vm1749, %v1730, %v1121
  %v1797 = vsel %vm1749, %v1732, %v1123
  %v1799 = vsel %vm1749, %v1734, %v1125
  %v1801 = vsel %vm1749, %v1736, %v1127
  %v1803 = vsel %vm1749, %v1738, %v1129
  %v1805 = vsel %vm1749, %v1740, %v1131
  %v1807 = vsel %vm1749, %v1742, %v1133
  %v1809 = vsel %vm1749, %v1744, %v1135
  %v1811 = vsel %vm1749, %v1746, %v1137
  %v1813 = vsel %vm1749, %v1748, %v1139
  %vm1814 = vcmask 392192
  %v1816 = vsel %vm1814, %v1751, %v1621
  %v1818 = vsel %vm1814, %v1753, %v1623
  %v1820 = vsel %vm1814, %v1755, %v1625
  %v1822 = vsel %vm1814, %v1757, %v1627
  %v1824 = vsel %vm1814, %v1759, %v1629
  %v1826 = vsel %vm1814, %v1761, %v1631
  %v1828 = vsel %vm1814, %v1763, %v1633
  %v1830 = vsel %vm1814, %v1765, %v1635
  %v1832 = vsel %vm1814, %v1767, %v1637
  %v1834 = vsel %vm1814, %v1769, %v1639
  %v1836 = vsel %vm1814, %v1771, %v1641
  %v1838 = vsel %vm1814, %v1773, %v1643
  %v1840 = vsel %vm1814, %v1775, %v1645
  %v1842 = vsel %vm1814, %v1777, %v1647
  %v1844 = vsel %vm1814, %v1779, %v1649
  %v1846 = vsel %vm1814, %v1781, %v1651
  %v1848 = vsel %vm1814, %v1783, %v1653
  %v1850 = vsel %vm1814, %v1785, %v1655
  %v1852 = vsel %vm1814, %v1787, %v1657
  %v1854 = vsel %vm1814, %v1789, %v1659
  %v1856 = vsel %vm1814, %v1791, %v1661
  %v1858 = vsel %vm1814, %v1793, %v1663
  %v1860 = vsel %vm1814, %v1795, %v1665
  %v1862 = vsel %vm1814, %v1797, %v1667
  %v1864 = vsel %vm1814, %v1799, %v1669
  %v1866 = vsel %vm1814, %v1801, %v1671
  %v1868 = vsel %vm1814, %v1803, %v1673
  %v1870 = vsel %vm1814, %v1805, %v1675
  %v1872 = vsel %vm1814, %v1807, %v1677
  %v1874 = vsel %vm1814, %v1809, %v1679
  %v1876 = vsel %vm1814, %v1811, %v1681
  %v1878 = vsel %vm1814, %v1813, %v1683
  %v1879 = vld [vmem:[%s1] sm:$0xf]
  %v1880 = vld [vmem:[%s1 + $0x4] sm:$0xf]
  %v1881 = vld [vmem:[%s1 + $0x8] sm:$0xf]
  %v1882 = vld [vmem:[%s1 + $0xc] sm:$0xf]
  %v1883 = vld [vmem:[%s1 + $0x10] sm:$0xf]
  %v1884 = vld [vmem:[%s1 + $0x14] sm:$0xf]
  %v1885 = vld [vmem:[%s1 + $0x18] sm:$0xf]
  %v1886 = vld [vmem:[%s1 + $0x1c] sm:$0xf]
  %v1895 = vunpack.c.l.b16 %v1879
  %v1896 = vunpack.c.l.b16 %v1880
  %v1897 = vunpack.c.l.b16 %v1881
  %v1898 = vunpack.c.l.b16 %v1882
  %v1899 = vunpack.c.l.b16 %v1883
  %v1900 = vunpack.c.l.b16 %v1884
  %v1901 = vunpack.c.l.b16 %v1885
  %v1902 = vunpack.c.l.b16 %v1886
  %v1903 = vpack.c.b16 %v1896, %v1895
  %v1904 = vpack.c.b16 %v1898, %v1897
  %v1905 = vpack.c.b16 %v1900, %v1899
  %v1906 = vpack.c.b16 %v1902, %v1901
  %vm1911 = vcmask 523264
  %v1912 = vsel %vm1911, %v1816, 0
  %1914 = vmatprep.subr.bf16.mxu0 0
  %1915 = vmatpush1.bf16.msra.mxu0 0
  %1916 = vmatprep.subr.bf16.mxu0 0
  %1917 = vmatpush1.bf16.msra.mxu0 0
  %1918 = vmatprep.subr.bf16.mxu0 0
  %1919 = vmatpush1.bf16.msra.mxu0 0
  %1920 = vmatprep.subr.bf16.mxu0 0
  %1921 = vmatpush1.bf16.msra.mxu0 0
  %1922 = vmatprep.subr.bf16.mxu0 0
  %1923 = vmatpush1.bf16.msra.mxu0 %v1906
  %1924 = vmatprep.subr.bf16.mxu0 0
  %1925 = vmatpush1.bf16.msra.mxu0 %v1905
  %1926 = vmatprep.subr.bf16.mxu0 0
  %1927 = vmatpush1.bf16.msra.mxu0 %v1904
  %1928 = vmatprep.subr.bf16.mxu0 0
  %1929 = vmatpush1.bf16.msra.mxu0 %v1903
  %1930 = vmatprep.subr.bf16.mxu0 0
  %1931 = vmatpush2.bf16.msra.mxu0 0
  %1932 = vmatprep.subr.bf16.mxu0 0
  %1933 = vmatpush2.bf16.msra.mxu0 0
  %1934 = vmatprep.subr.bf16.mxu0 0
  %1935 = vmatpush2.bf16.msra.mxu0 0
  %1936 = vmatprep.subr.bf16.mxu0 0
  %1937 = vmatpush2.bf16.msra.mxu0 0
  %1938 = vmatprep.subr.bf16.mxu0 0
  %1939 = vmatpush2.bf16.msra.mxu0 0
  %1940 = vmatprep.subr.bf16.mxu0 0
  %1941 = vmatpush2.bf16.msra.mxu0 0
  %1942 = vmatprep.subr.bf16.mxu0 0
  %1943 = vmatpush2.bf16.msra.mxu0 0
  %1944 = vmatprep.subr.bf16.mxu0 0
  %1945 = vmatpush2.bf16.msra.mxu0 0
  %1946 = vmatprep.mubr.bf16.mxu0 0
  %1947 = vmatmul.mubr.bf16.gmra.mxu0 %v1912
  %v1948 = vpop.f32.mrf.mxu0
  %v1949 = vadd.f32 0.0, %v1948
  %v1950 = vpop.f32.mrf.mxu0
  %v1951 = vpop.f32.mrf.mxu0
  %v1952 = vadd.f32 0.0, %v1951
  %v1953 = vpop.f32.mrf.mxu0
  %1954 = vdwg.mxu0
  %v1955 = vsel %vm1911, %v1818, 0
  %1957 = vmatprep.subr.bf16.mxu0 0
  %1958 = vmatpush1.bf16.msra.mxu0 0
  %1959 = vmatprep.subr.bf16.mxu0 0
  %1960 = vmatpush1.bf16.msra.mxu0 0
  %1961 = vmatprep.subr.bf16.mxu0 0
  %1962 = vmatpush1.bf16.msra.mxu0 0
  %1963 = vmatprep.subr.bf16.mxu0 0
  %1964 = vmatpush1.bf16.msra.mxu0 0
  %1965 = vmatprep.subr.bf16.mxu0 0
  %1966 = vmatpush1.bf16.msra.mxu0 %v1906
  %1967 = vmatprep.subr.bf16.mxu0 0
  %1968 = vmatpush1.bf16.msra.mxu0 %v1905
  %1969 = vmatprep.subr.bf16.mxu0 0
  %1970 = vmatpush1.bf16.msra.mxu0 %v1904
  %1971 = vmatprep.subr.bf16.mxu0 0
  %1972 = vmatpush1.bf16.msra.mxu0 %v1903
  %1973 = vmatprep.subr.bf16.mxu0 0
  %1974 = vmatpush2.bf16.msra.mxu0 0
  %1975 = vmatprep.subr.bf16.mxu0 0
  %1976 = vmatpush2.bf16.msra.mxu0 0
  %1977 = vmatprep.subr.bf16.mxu0 0
  %1978 = vmatpush2.bf16.msra.mxu0 0
  %1979 = vmatprep.subr.bf16.mxu0 0
  %1980 = vmatpush2.bf16.msra.mxu0 0
  %1981 = vmatprep.subr.bf16.mxu0 0
  %1982 = vmatpush2.bf16.msra.mxu0 0
  %1983 = vmatprep.subr.bf16.mxu0 0
  %1984 = vmatpush2.bf16.msra.mxu0 0
  %1985 = vmatprep.subr.bf16.mxu0 0
  %1986 = vmatpush2.bf16.msra.mxu0 0
  %1987 = vmatprep.subr.bf16.mxu0 0
  %1988 = vmatpush2.bf16.msra.mxu0 0
  %1989 = vmatprep.mubr.bf16.mxu0 0
  %1990 = vmatmul.mubr.bf16.gmra.mxu0 %v1955
  %v1991 = vpop.f32.mrf.mxu0
  %v1992 = vadd.f32 0.0, %v1991
  %v1993 = vpop.f32.mrf.mxu0
  %v1994 = vpop.f32.mrf.mxu0
  %v1995 = vadd.f32 0.0, %v1994
  %v1996 = vpop.f32.mrf.mxu0
  %1997 = vdwg.mxu0
  %v1998 = vsel %vm1911, %v1820, 0
  %2000 = vmatprep.subr.bf16.mxu0 0
  %2001 = vmatpush1.bf16.msra.mxu0 0
  %2002 = vmatprep.subr.bf16.mxu0 0
  %2003 = vmatpush1.bf16.msra.mxu0 0
  %2004 = vmatprep.subr.bf16.mxu0 0
  %2005 = vmatpush1.bf16.msra.mxu0 0
  %2006 = vmatprep.subr.bf16.mxu0 0
  %2007 = vmatpush1.bf16.msra.mxu0 0
  %2008 = vmatprep.subr.bf16.mxu0 0
  %2009 = vmatpush1.bf16.msra.mxu0 %v1906
  %2010 = vmatprep.subr.bf16.mxu0 0
  %2011 = vmatpush1.bf16.msra.mxu0 %v1905
  %2012 = vmatprep.subr.bf16.mxu0 0
  %2013 = vmatpush1.bf16.msra.mxu0 %v1904
  %2014 = vmatprep.subr.bf16.mxu0 0
  %2015 = vmatpush1.bf16.msra.mxu0 %v1903
  %2016 = vmatprep.subr.bf16.mxu0 0
  %2017 = vmatpush2.bf16.msra.mxu0 0
  %2018 = vmatprep.subr.bf16.mxu0 0
  %2019 = vmatpush2.bf16.msra.mxu0 0
  %2020 = vmatprep.subr.bf16.mxu0 0
  %2021 = vmatpush2.bf16.msra.mxu0 0
  %2022 = vmatprep.subr.bf16.mxu0 0
  %2023 = vmatpush2.bf16.msra.mxu0 0
  %2024 = vmatprep.subr.bf16.mxu0 0
  %2025 = vmatpush2.bf16.msra.mxu0 0
  %2026 = vmatprep.subr.bf16.mxu0 0
  %2027 = vmatpush2.bf16.msra.mxu0 0
  %2028 = vmatprep.subr.bf16.mxu0 0
  %2029 = vmatpush2.bf16.msra.mxu0 0
  %2030 = vmatprep.subr.bf16.mxu0 0
  %2031 = vmatpush2.bf16.msra.mxu0 0
  %2032 = vmatprep.mubr.bf16.mxu0 0
  %2033 = vmatmul.mubr.bf16.gmra.mxu0 %v1998
  %v2034 = vpop.f32.mrf.mxu0
  %v2035 = vadd.f32 0.0, %v2034
  %v2036 = vpop.f32.mrf.mxu0
  %v2037 = vpop.f32.mrf.mxu0
  %v2038 = vadd.f32 0.0, %v2037
  %v2039 = vpop.f32.mrf.mxu0
  %2040 = vdwg.mxu0
  %v2041 = vsel %vm1911, %v1822, 0
  %2043 = vmatprep.subr.bf16.mxu0 0
  %2044 = vmatpush1.bf16.msra.mxu0 0
  %2045 = vmatprep.subr.bf16.mxu0 0
  %2046 = vmatpush1.bf16.msra.mxu0 0
  %2047 = vmatprep.subr.bf16.mxu0 0
  %2048 = vmatpush1.bf16.msra.mxu0 0
  %2049 = vmatprep.subr.bf16.mxu0 0
  %2050 = vmatpush1.bf16.msra.mxu0 0
  %2051 = vmatprep.subr.bf16.mxu0 0
  %2052 = vmatpush1.bf16.msra.mxu0 %v1906
  %2053 = vmatprep.subr.bf16.mxu0 0
  %2054 = vmatpush1.bf16.msra.mxu0 %v1905
  %2055 = vmatprep.subr.bf16.mxu0 0
  %2056 = vmatpush1.bf16.msra.mxu0 %v1904
  %2057 = vmatprep.subr.bf16.mxu0 0
  %2058 = vmatpush1.bf16.msra.mxu0 %v1903
  %2059 = vmatprep.subr.bf16.mxu0 0
  %2060 = vmatpush2.bf16.msra.mxu0 0
  %2061 = vmatprep.subr.bf16.mxu0 0
  %2062 = vmatpush2.bf16.msra.mxu0 0
  %2063 = vmatprep.subr.bf16.mxu0 0
  %2064 = vmatpush2.bf16.msra.mxu0 0
  %2065 = vmatprep.subr.bf16.mxu0 0
  %2066 = vmatpush2.bf16.msra.mxu0 0
  %2067 = vmatprep.subr.bf16.mxu0 0
  %2068 = vmatpush2.bf16.msra.mxu0 0
  %2069 = vmatprep.subr.bf16.mxu0 0
  %2070 = vmatpush2.bf16.msra.mxu0 0
  %2071 = vmatprep.subr.bf16.mxu0 0
  %2072 = vmatpush2.bf16.msra.mxu0 0
  %2073 = vmatprep.subr.bf16.mxu0 0
  %2074 = vmatpush2.bf16.msra.mxu0 0
  %2075 = vmatprep.mubr.bf16.mxu0 0
  %2076 = vmatmul.mubr.bf16.gmra.mxu0 %v2041
  %v2077 = vpop.f32.mrf.mxu0
  %v2078 = vadd.f32 0.0, %v2077
  %v2079 = vpop.f32.mrf.mxu0
  %v2080 = vpop.f32.mrf.mxu0
  %v2081 = vadd.f32 0.0, %v2080
  %v2082 = vpop.f32.mrf.mxu0
  %2083 = vdwg.mxu0
  %v2084 = vsel %vm1911, %v1824, 0
  %2086 = vmatprep.subr.bf16.mxu0 0
  %2087 = vmatpush1.bf16.msra.mxu0 0
  %2088 = vmatprep.subr.bf16.mxu0 0
  %2089 = vmatpush1.bf16.msra.mxu0 0
  %2090 = vmatprep.subr.bf16.mxu0 0
  %2091 = vmatpush1.bf16.msra.mxu0 0
  %2092 = vmatprep.subr.bf16.mxu0 0
  %2093 = vmatpush1.bf16.msra.mxu0 0
  %2094 = vmatprep.subr.bf16.mxu0 0
  %2095 = vmatpush1.bf16.msra.mxu0 %v1906
  %2096 = vmatprep.subr.bf16.mxu0 0
  %2097 = vmatpush1.bf16.msra.mxu0 %v1905
  %2098 = vmatprep.subr.bf16.mxu0 0
  %2099 = vmatpush1.bf16.msra.mxu0 %v1904
  %2100 = vmatprep.subr.bf16.mxu0 0
  %2101 = vmatpush1.bf16.msra.mxu0 %v1903
  %2102 = vmatprep.subr.bf16.mxu0 0
  %2103 = vmatpush2.bf16.msra.mxu0 0
  %2104 = vmatprep.subr.bf16.mxu0 0
  %2105 = vmatpush2.bf16.msra.mxu0 0
  %2106 = vmatprep.subr.bf16.mxu0 0
  %2107 = vmatpush2.bf16.msra.mxu0 0
  %2108 = vmatprep.subr.bf16.mxu0 0
  %2109 = vmatpush2.bf16.msra.mxu0 0
  %2110 = vmatprep.subr.bf16.mxu0 0
  %2111 = vmatpush2.bf16.msra.mxu0 0
  %2112 = vmatprep.subr.bf16.mxu0 0
  %2113 = vmatpush2.bf16.msra.mxu0 0
  %2114 = vmatprep.subr.bf16.mxu0 0
  %2115 = vmatpush2.bf16.msra.mxu0 0
  %2116 = vmatprep.subr.bf16.mxu0 0
  %2117 = vmatpush2.bf16.msra.mxu0 0
  %2118 = vmatprep.mubr.bf16.mxu0 0
  %2119 = vmatmul.mubr.bf16.gmra.mxu0 %v2084
  %v2120 = vpop.f32.mrf.mxu0
  %v2121 = vadd.f32 0.0, %v2120
  %v2122 = vpop.f32.mrf.mxu0
  %v2123 = vpop.f32.mrf.mxu0
  %v2124 = vadd.f32 0.0, %v2123
  %v2125 = vpop.f32.mrf.mxu0
  %2126 = vdwg.mxu0
  %v2127 = vsel %vm1911, %v1826, 0
  %2129 = vmatprep.subr.bf16.mxu0 0
  %2130 = vmatpush1.bf16.msra.mxu0 0
  %2131 = vmatprep.subr.bf16.mxu0 0
  %2132 = vmatpush1.bf16.msra.mxu0 0
  %2133 = vmatprep.subr.bf16.mxu0 0
  %2134 = vmatpush1.bf16.msra.mxu0 0
  %2135 = vmatprep.subr.bf16.mxu0 0
  %2136 = vmatpush1.bf16.msra.mxu0 0
  %2137 = vmatprep.subr.bf16.mxu0 0
  %2138 = vmatpush1.bf16.msra.mxu0 %v1906
  %2139 = vmatprep.subr.bf16.mxu0 0
  %2140 = vmatpush1.bf16.msra.mxu0 %v1905
  %2141 = vmatprep.subr.bf16.mxu0 0
  %2142 = vmatpush1.bf16.msra.mxu0 %v1904
  %2143 = vmatprep.subr.bf16.mxu0 0
  %2144 = vmatpush1.bf16.msra.mxu0 %v1903
  %2145 = vmatprep.subr.bf16.mxu0 0
  %2146 = vmatpush2.bf16.msra.mxu0 0
  %2147 = vmatprep.subr.bf16.mxu0 0
  %2148 = vmatpush2.bf16.msra.mxu0 0
  %2149 = vmatprep.subr.bf16.mxu0 0
  %2150 = vmatpush2.bf16.msra.mxu0 0
  %2151 = vmatprep.subr.bf16.mxu0 0
  %2152 = vmatpush2.bf16.msra.mxu0 0
  %2153 = vmatprep.subr.bf16.mxu0 0
  %2154 = vmatpush2.bf16.msra.mxu0 0
  %2155 = vmatprep.subr.bf16.mxu0 0
  %2156 = vmatpush2.bf16.msra.mxu0 0
  %2157 = vmatprep.subr.bf16.mxu0 0
  %2158 = vmatpush2.bf16.msra.mxu0 0
  %2159 = vmatprep.subr.bf16.mxu0 0
  %2160 = vmatpush2.bf16.msra.mxu0 0
  %2161 = vmatprep.mubr.bf16.mxu0 0
  %2162 = vmatmul.mubr.bf16.gmra.mxu0 %v2127
  %v2163 = vpop.f32.mrf.mxu0
  %v2164 = vadd.f32 0.0, %v2163
  %v2165 = vpop.f32.mrf.mxu0
  %v2166 = vpop.f32.mrf.mxu0
  %v2167 = vadd.f32 0.0, %v2166
  %v2168 = vpop.f32.mrf.mxu0
  %2169 = vdwg.mxu0
  %v2170 = vsel %vm1911, %v1828, 0
  %2172 = vmatprep.subr.bf16.mxu0 0
  %2173 = vmatpush1.bf16.msra.mxu0 0
  %2174 = vmatprep.subr.bf16.mxu0 0
  %2175 = vmatpush1.bf16.msra.mxu0 0
  %2176 = vmatprep.subr.bf16.mxu0 0
  %2177 = vmatpush1.bf16.msra.mxu0 0
  %2178 = vmatprep.subr.bf16.mxu0 0
  %2179 = vmatpush1.bf16.msra.mxu0 0
  %2180 = vmatprep.subr.bf16.mxu0 0
  %2181 = vmatpush1.bf16.msra.mxu0 %v1906
  %2182 = vmatprep.subr.bf16.mxu0 0
  %2183 = vmatpush1.bf16.msra.mxu0 %v1905
  %2184 = vmatprep.subr.bf16.mxu0 0
  %2185 = vmatpush1.bf16.msra.mxu0 %v1904
  %2186 = vmatprep.subr.bf16.mxu0 0
  %2187 = vmatpush1.bf16.msra.mxu0 %v1903
  %2188 = vmatprep.subr.bf16.mxu0 0
  %2189 = vmatpush2.bf16.msra.mxu0 0
  %2190 = vmatprep.subr.bf16.mxu0 0
  %2191 = vmatpush2.bf16.msra.mxu0 0
  %2192 = vmatprep.subr.bf16.mxu0 0
  %2193 = vmatpush2.bf16.msra.mxu0 0
  %2194 = vmatprep.subr.bf16.mxu0 0
  %2195 = vmatpush2.bf16.msra.mxu0 0
  %2196 = vmatprep.subr.bf16.mxu0 0
  %2197 = vmatpush2.bf16.msra.mxu0 0
  %2198 = vmatprep.subr.bf16.mxu0 0
  %2199 = vmatpush2.bf16.msra.mxu0 0
  %2200 = vmatprep.subr.bf16.mxu0 0
  %2201 = vmatpush2.bf16.msra.mxu0 0
  %2202 = vmatprep.subr.bf16.mxu0 0
  %2203 = vmatpush2.bf16.msra.mxu0 0
  %2204 = vmatprep.mubr.bf16.mxu0 0
  %2205 = vmatmul.mubr.bf16.gmra.mxu0 %v2170
  %v2206 = vpop.f32.mrf.mxu0
  %v2207 = vadd.f32 0.0, %v2206
  %v2208 = vpop.f32.mrf.mxu0
  %v2209 = vpop.f32.mrf.mxu0
  %v2210 = vadd.f32 0.0, %v2209
  %v2211 = vpop.f32.mrf.mxu0
  %2212 = vdwg.mxu0
  %v2213 = vsel %vm1911, %v1830, 0
  %2215 = vmatprep.subr.bf16.mxu0 0
  %2216 = vmatpush1.bf16.msra.mxu0 0
  %2217 = vmatprep.subr.bf16.mxu0 0
  %2218 = vmatpush1.bf16.msra.mxu0 0
  %2219 = vmatprep.subr.bf16.mxu0 0
  %2220 = vmatpush1.bf16.msra.mxu0 0
  %2221 = vmatprep.subr.bf16.mxu0 0
  %2222 = vmatpush1.bf16.msra.mxu0 0
  %2223 = vmatprep.subr.bf16.mxu0 0
  %2224 = vmatpush1.bf16.msra.mxu0 %v1906
  %2225 = vmatprep.subr.bf16.mxu0 0
  %2226 = vmatpush1.bf16.msra.mxu0 %v1905
  %2227 = vmatprep.subr.bf16.mxu0 0
  %2228 = vmatpush1.bf16.msra.mxu0 %v1904
  %2229 = vmatprep.subr.bf16.mxu0 0
  %2230 = vmatpush1.bf16.msra.mxu0 %v1903
  %2231 = vmatprep.subr.bf16.mxu0 0
  %2232 = vmatpush2.bf16.msra.mxu0 0
  %2233 = vmatprep.subr.bf16.mxu0 0
  %2234 = vmatpush2.bf16.msra.mxu0 0
  %2235 = vmatprep.subr.bf16.mxu0 0
  %2236 = vmatpush2.bf16.msra.mxu0 0
  %2237 = vmatprep.subr.bf16.mxu0 0
  %2238 = vmatpush2.bf16.msra.mxu0 0
  %2239 = vmatprep.subr.bf16.mxu0 0
  %2240 = vmatpush2.bf16.msra.mxu0 0
  %2241 = vmatprep.subr.bf16.mxu0 0
  %2242 = vmatpush2.bf16.msra.mxu0 0
  %2243 = vmatprep.subr.bf16.mxu0 0
  %2244 = vmatpush2.bf16.msra.mxu0 0
  %2245 = vmatprep.subr.bf16.mxu0 0
  %2246 = vmatpush2.bf16.msra.mxu0 0
  %2247 = vmatprep.mubr.bf16.mxu0 0
  %2248 = vmatmul.mubr.bf16.gmra.mxu0 %v2213
  %v2249 = vpop.f32.mrf.mxu0
  %v2250 = vadd.f32 0.0, %v2249
  %v2251 = vpop.f32.mrf.mxu0
  %v2252 = vpop.f32.mrf.mxu0
  %v2253 = vadd.f32 0.0, %v2252
  %v2254 = vpop.f32.mrf.mxu0
  %2255 = vdwg.mxu0
  %v2256 = vsel %vm1911, %v1832, 0
  %2258 = vmatprep.subr.bf16.mxu0 0
  %2259 = vmatpush1.bf16.msra.mxu0 0
  %2260 = vmatprep.subr.bf16.mxu0 0
  %2261 = vmatpush1.bf16.msra.mxu0 0
  %2262 = vmatprep.subr.bf16.mxu0 0
  %2263 = vmatpush1.bf16.msra.mxu0 0
  %2264 = vmatprep.subr.bf16.mxu0 0
  %2265 = vmatpush1.bf16.msra.mxu0 0
  %2266 = vmatprep.subr.bf16.mxu0 0
  %2267 = vmatpush1.bf16.msra.mxu0 %v1906
  %2268 = vmatprep.subr.bf16.mxu0 0
  %2269 = vmatpush1.bf16.msra.mxu0 %v1905
  %2270 = vmatprep.subr.bf16.mxu0 0
  %2271 = vmatpush1.bf16.msra.mxu0 %v1904
  %2272 = vmatprep.subr.bf16.mxu0 0
  %2273 = vmatpush1.bf16.msra.mxu0 %v1903
  %2274 = vmatprep.subr.bf16.mxu0 0
  %2275 = vmatpush2.bf16.msra.mxu0 0
  %2276 = vmatprep.subr.bf16.mxu0 0
  %2277 = vmatpush2.bf16.msra.mxu0 0
  %2278 = vmatprep.subr.bf16.mxu0 0
  %2279 = vmatpush2.bf16.msra.mxu0 0
  %2280 = vmatprep.subr.bf16.mxu0 0
  %2281 = vmatpush2.bf16.msra.mxu0 0
  %2282 = vmatprep.subr.bf16.mxu0 0
  %2283 = vmatpush2.bf16.msra.mxu0 0
  %2284 = vmatprep.subr.bf16.mxu0 0
  %2285 = vmatpush2.bf16.msra.mxu0 0
  %2286 = vmatprep.subr.bf16.mxu0 0
  %2287 = vmatpush2.bf16.msra.mxu0 0
  %2288 = vmatprep.subr.bf16.mxu0 0
  %2289 = vmatpush2.bf16.msra.mxu0 0
  %2290 = vmatprep.mubr.bf16.mxu0 0
  %2291 = vmatmul.mubr.bf16.gmra.mxu0 %v2256
  %v2292 = vpop.f32.mrf.mxu0
  %v2293 = vadd.f32 0.0, %v2292
  %v2294 = vpop.f32.mrf.mxu0
  %v2295 = vpop.f32.mrf.mxu0
  %v2296 = vadd.f32 0.0, %v2295
  %v2297 = vpop.f32.mrf.mxu0
  %2298 = vdwg.mxu0
  %v2299 = vsel %vm1911, %v1834, 0
  %2301 = vmatprep.subr.bf16.mxu0 0
  %2302 = vmatpush1.bf16.msra.mxu0 0
  %2303 = vmatprep.subr.bf16.mxu0 0
  %2304 = vmatpush1.bf16.msra.mxu0 0
  %2305 = vmatprep.subr.bf16.mxu0 0
  %2306 = vmatpush1.bf16.msra.mxu0 0
  %2307 = vmatprep.subr.bf16.mxu0 0
  %2308 = vmatpush1.bf16.msra.mxu0 0
  %2309 = vmatprep.subr.bf16.mxu0 0
  %2310 = vmatpush1.bf16.msra.mxu0 %v1906
  %2311 = vmatprep.subr.bf16.mxu0 0
  %2312 = vmatpush1.bf16.msra.mxu0 %v1905
  %2313 = vmatprep.subr.bf16.mxu0 0
  %2314 = vmatpush1.bf16.msra.mxu0 %v1904
  %2315 = vmatprep.subr.bf16.mxu0 0
  %2316 = vmatpush1.bf16.msra.mxu0 %v1903
  %2317 = vmatprep.subr.bf16.mxu0 0
  %2318 = vmatpush2.bf16.msra.mxu0 0
  %2319 = vmatprep.subr.bf16.mxu0 0
  %2320 = vmatpush2.bf16.msra.mxu0 0
  %2321 = vmatprep.subr.bf16.mxu0 0
  %2322 = vmatpush2.bf16.msra.mxu0 0
  %2323 = vmatprep.subr.bf16.mxu0 0
  %2324 = vmatpush2.bf16.msra.mxu0 0
  %2325 = vmatprep.subr.bf16.mxu0 0
  %2326 = vmatpush2.bf16.msra.mxu0 0
  %2327 = vmatprep.subr.bf16.mxu0 0
  %2328 = vmatpush2.bf16.msra.mxu0 0
  %2329 = vmatprep.subr.bf16.mxu0 0
  %2330 = vmatpush2.bf16.msra.mxu0 0
  %2331 = vmatprep.subr.bf16.mxu0 0
  %2332 = vmatpush2.bf16.msra.mxu0 0
  %2333 = vmatprep.mubr.bf16.mxu0 0
  %2334 = vmatmul.mubr.bf16.gmra.mxu0 %v2299
  %v2335 = vpop.f32.mrf.mxu0
  %v2336 = vadd.f32 0.0, %v2335
  %v2337 = vpop.f32.mrf.mxu0
  %v2338 = vpop.f32.mrf.mxu0
  %v2339 = vadd.f32 0.0, %v2338
  %v2340 = vpop.f32.mrf.mxu0
  %2341 = vdwg.mxu0
  %v2342 = vsel %vm1911, %v1836, 0
  %2344 = vmatprep.subr.bf16.mxu0 0
  %2345 = vmatpush1.bf16.msra.mxu0 0
  %2346 = vmatprep.subr.bf16.mxu0 0
  %2347 = vmatpush1.bf16.msra.mxu0 0
  %2348 = vmatprep.subr.bf16.mxu0 0
  %2349 = vmatpush1.bf16.msra.mxu0 0
  %2350 = vmatprep.subr.bf16.mxu0 0
  %2351 = vmatpush1.bf16.msra.mxu0 0
  %2352 = vmatprep.subr.bf16.mxu0 0
  %2353 = vmatpush1.bf16.msra.mxu0 %v1906
  %2354 = vmatprep.subr.bf16.mxu0 0
  %2355 = vmatpush1.bf16.msra.mxu0 %v1905
  %2356 = vmatprep.subr.bf16.mxu0 0
  %2357 = vmatpush1.bf16.msra.mxu0 %v1904
  %2358 = vmatprep.subr.bf16.mxu0 0
  %2359 = vmatpush1.bf16.msra.mxu0 %v1903
  %2360 = vmatprep.subr.bf16.mxu0 0
  %2361 = vmatpush2.bf16.msra.mxu0 0
  %2362 = vmatprep.subr.bf16.mxu0 0
  %2363 = vmatpush2.bf16.msra.mxu0 0
  %2364 = vmatprep.subr.bf16.mxu0 0
  %2365 = vmatpush2.bf16.msra.mxu0 0
  %2366 = vmatprep.subr.bf16.mxu0 0
  %2367 = vmatpush2.bf16.msra.mxu0 0
  %2368 = vmatprep.subr.bf16.mxu0 0
  %2369 = vmatpush2.bf16.msra.mxu0 0
  %2370 = vmatprep.subr.bf16.mxu0 0
  %2371 = vmatpush2.bf16.msra.mxu0 0
  %2372 = vmatprep.subr.bf16.mxu0 0
  %2373 = vmatpush2.bf16.msra.mxu0 0
  %2374 = vmatprep.subr.bf16.mxu0 0
  %2375 = vmatpush2.bf16.msra.mxu0 0
  %2376 = vmatprep.mubr.bf16.mxu0 0
  %2377 = vmatmul.mubr.bf16.gmra.mxu0 %v2342
  %v2378 = vpop.f32.mrf.mxu0
  %v2379 = vadd.f32 0.0, %v2378
  %v2380 = vpop.f32.mrf.mxu0
  %v2381 = vpop.f32.mrf.mxu0
  %v2382 = vadd.f32 0.0, %v2381
  %v2383 = vpop.f32.mrf.mxu0
  %2384 = vdwg.mxu0
  %v2385 = vsel %vm1911, %v1838, 0
  %2387 = vmatprep.subr.bf16.mxu0 0
  %2388 = vmatpush1.bf16.msra.mxu0 0
  %2389 = vmatprep.subr.bf16.mxu0 0
  %2390 = vmatpush1.bf16.msra.mxu0 0
  %2391 = vmatprep.subr.bf16.mxu0 0
  %2392 = vmatpush1.bf16.msra.mxu0 0
  %2393 = vmatprep.subr.bf16.mxu0 0
  %2394 = vmatpush1.bf16.msra.mxu0 0
  %2395 = vmatprep.subr.bf16.mxu0 0
  %2396 = vmatpush1.bf16.msra.mxu0 %v1906
  %2397 = vmatprep.subr.bf16.mxu0 0
  %2398 = vmatpush1.bf16.msra.mxu0 %v1905
  %2399 = vmatprep.subr.bf16.mxu0 0
  %2400 = vmatpush1.bf16.msra.mxu0 %v1904
  %2401 = vmatprep.subr.bf16.mxu0 0
  %2402 = vmatpush1.bf16.msra.mxu0 %v1903
  %2403 = vmatprep.subr.bf16.mxu0 0
  %2404 = vmatpush2.bf16.msra.mxu0 0
  %2405 = vmatprep.subr.bf16.mxu0 0
  %2406 = vmatpush2.bf16.msra.mxu0 0
  %2407 = vmatprep.subr.bf16.mxu0 0
  %2408 = vmatpush2.bf16.msra.mxu0 0
  %2409 = vmatprep.subr.bf16.mxu0 0
  %2410 = vmatpush2.bf16.msra.mxu0 0
  %2411 = vmatprep.subr.bf16.mxu0 0
  %2412 = vmatpush2.bf16.msra.mxu0 0
  %2413 = vmatprep.subr.bf16.mxu0 0
  %2414 = vmatpush2.bf16.msra.mxu0 0
  %2415 = vmatprep.subr.bf16.mxu0 0
  %2416 = vmatpush2.bf16.msra.mxu0 0
  %2417 = vmatprep.subr.bf16.mxu0 0
  %2418 = vmatpush2.bf16.msra.mxu0 0
  %2419 = vmatprep.mubr.bf16.mxu0 0
  %2420 = vmatmul.mubr.bf16.gmra.mxu0 %v2385
  %v2421 = vpop.f32.mrf.mxu0
  %v2422 = vadd.f32 0.0, %v2421
  %v2423 = vpop.f32.mrf.mxu0
  %v2424 = vpop.f32.mrf.mxu0
  %v2425 = vadd.f32 0.0, %v2424
  %v2426 = vpop.f32.mrf.mxu0
  %2427 = vdwg.mxu0
  %v2428 = vsel %vm1911, %v1840, 0
  %2430 = vmatprep.subr.bf16.mxu0 0
  %2431 = vmatpush1.bf16.msra.mxu0 0
  %2432 = vmatprep.subr.bf16.mxu0 0
  %2433 = vmatpush1.bf16.msra.mxu0 0
  %2434 = vmatprep.subr.bf16.mxu0 0
  %2435 = vmatpush1.bf16.msra.mxu0 0
  %2436 = vmatprep.subr.bf16.mxu0 0
  %2437 = vmatpush1.bf16.msra.mxu0 0
  %2438 = vmatprep.subr.bf16.mxu0 0
  %2439 = vmatpush1.bf16.msra.mxu0 %v1906
  %2440 = vmatprep.subr.bf16.mxu0 0
  %2441 = vmatpush1.bf16.msra.mxu0 %v1905
  %2442 = vmatprep.subr.bf16.mxu0 0
  %2443 = vmatpush1.bf16.msra.mxu0 %v1904
  %2444 = vmatprep.subr.bf16.mxu0 0
  %2445 = vmatpush1.bf16.msra.mxu0 %v1903
  %2446 = vmatprep.subr.bf16.mxu0 0
  %2447 = vmatpush2.bf16.msra.mxu0 0
  %2448 = vmatprep.subr.bf16.mxu0 0
  %2449 = vmatpush2.bf16.msra.mxu0 0
  %2450 = vmatprep.subr.bf16.mxu0 0
  %2451 = vmatpush2.bf16.msra.mxu0 0
  %2452 = vmatprep.subr.bf16.mxu0 0
  %2453 = vmatpush2.bf16.msra.mxu0 0
  %2454 = vmatprep.subr.bf16.mxu0 0
  %2455 = vmatpush2.bf16.msra.mxu0 0
  %2456 = vmatprep.subr.bf16.mxu0 0
  %2457 = vmatpush2.bf16.msra.mxu0 0
  %2458 = vmatprep.subr.bf16.mxu0 0
  %2459 = vmatpush2.bf16.msra.mxu0 0
  %2460 = vmatprep.subr.bf16.mxu0 0
  %2461 = vmatpush2.bf16.msra.mxu0 0
  %2462 = vmatprep.mubr.bf16.mxu0 0
  %2463 = vmatmul.mubr.bf16.gmra.mxu0 %v2428
  %v2464 = vpop.f32.mrf.mxu0
  %v2465 = vadd.f32 0.0, %v2464
  %v2466 = vpop.f32.mrf.mxu0
  %v2467 = vpop.f32.mrf.mxu0
  %v2468 = vadd.f32 0.0, %v2467
  %v2469 = vpop.f32.mrf.mxu0
  %2470 = vdwg.mxu0
  %v2471 = vsel %vm1911, %v1842, 0
  %2473 = vmatprep.subr.bf16.mxu0 0
  %2474 = vmatpush1.bf16.msra.mxu0 0
  %2475 = vmatprep.subr.bf16.mxu0 0
  %2476 = vmatpush1.bf16.msra.mxu0 0
  %2477 = vmatprep.subr.bf16.mxu0 0
  %2478 = vmatpush1.bf16.msra.mxu0 0
  %2479 = vmatprep.subr.bf16.mxu0 0
  %2480 = vmatpush1.bf16.msra.mxu0 0
  %2481 = vmatprep.subr.bf16.mxu0 0
  %2482 = vmatpush1.bf16.msra.mxu0 %v1906
  %2483 = vmatprep.subr.bf16.mxu0 0
  %2484 = vmatpush1.bf16.msra.mxu0 %v1905
  %2485 = vmatprep.subr.bf16.mxu0 0
  %2486 = vmatpush1.bf16.msra.mxu0 %v1904
  %2487 = vmatprep.subr.bf16.mxu0 0
  %2488 = vmatpush1.bf16.msra.mxu0 %v1903
  %2489 = vmatprep.subr.bf16.mxu0 0
  %2490 = vmatpush2.bf16.msra.mxu0 0
  %2491 = vmatprep.subr.bf16.mxu0 0
  %2492 = vmatpush2.bf16.msra.mxu0 0
  %2493 = vmatprep.subr.bf16.mxu0 0
  %2494 = vmatpush2.bf16.msra.mxu0 0
  %2495 = vmatprep.subr.bf16.mxu0 0
  %2496 = vmatpush2.bf16.msra.mxu0 0
  %2497 = vmatprep.subr.bf16.mxu0 0
  %2498 = vmatpush2.bf16.msra.mxu0 0
  %2499 = vmatprep.subr.bf16.mxu0 0
  %2500 = vmatpush2.bf16.msra.mxu0 0
  %2501 = vmatprep.subr.bf16.mxu0 0
  %2502 = vmatpush2.bf16.msra.mxu0 0
  %2503 = vmatprep.subr.bf16.mxu0 0
  %2504 = vmatpush2.bf16.msra.mxu0 0
  %2505 = vmatprep.mubr.bf16.mxu0 0
  %2506 = vmatmul.mubr.bf16.gmra.mxu0 %v2471
  %v2507 = vpop.f32.mrf.mxu0
  %v2508 = vadd.f32 0.0, %v2507
  %v2509 = vpop.f32.mrf.mxu0
  %v2510 = vpop.f32.mrf.mxu0
  %v2511 = vadd.f32 0.0, %v2510
  %v2512 = vpop.f32.mrf.mxu0
  %2513 = vdwg.mxu0
  %v2514 = vsel %vm1911, %v1844, 0
  %2516 = vmatprep.subr.bf16.mxu0 0
  %2517 = vmatpush1.bf16.msra.mxu0 0
  %2518 = vmatprep.subr.bf16.mxu0 0
  %2519 = vmatpush1.bf16.msra.mxu0 0
  %2520 = vmatprep.subr.bf16.mxu0 0
  %2521 = vmatpush1.bf16.msra.mxu0 0
  %2522 = vmatprep.subr.bf16.mxu0 0
  %2523 = vmatpush1.bf16.msra.mxu0 0
  %2524 = vmatprep.subr.bf16.mxu0 0
  %2525 = vmatpush1.bf16.msra.mxu0 %v1906
  %2526 = vmatprep.subr.bf16.mxu0 0
  %2527 = vmatpush1.bf16.msra.mxu0 %v1905
  %2528 = vmatprep.subr.bf16.mxu0 0
  %2529 = vmatpush1.bf16.msra.mxu0 %v1904
  %2530 = vmatprep.subr.bf16.mxu0 0
  %2531 = vmatpush1.bf16.msra.mxu0 %v1903
  %2532 = vmatprep.subr.bf16.mxu0 0
  %2533 = vmatpush2.bf16.msra.mxu0 0
  %2534 = vmatprep.subr.bf16.mxu0 0
  %2535 = vmatpush2.bf16.msra.mxu0 0
  %2536 = vmatprep.subr.bf16.mxu0 0
  %2537 = vmatpush2.bf16.msra.mxu0 0
  %2538 = vmatprep.subr.bf16.mxu0 0
  %2539 = vmatpush2.bf16.msra.mxu0 0
  %2540 = vmatprep.subr.bf16.mxu0 0
  %2541 = vmatpush2.bf16.msra.mxu0 0
  %2542 = vmatprep.subr.bf16.mxu0 0
  %2543 = vmatpush2.bf16.msra.mxu0 0
  %2544 = vmatprep.subr.bf16.mxu0 0
  %2545 = vmatpush2.bf16.msra.mxu0 0
  %2546 = vmatprep.subr.bf16.mxu0 0
  %2547 = vmatpush2.bf16.msra.mxu0 0
  %2548 = vmatprep.mubr.bf16.mxu0 0
  %2549 = vmatmul.mubr.bf16.gmra.mxu0 %v2514
  %v2550 = vpop.f32.mrf.mxu0
  %v2551 = vadd.f32 0.0, %v2550
  %v2552 = vpop.f32.mrf.mxu0
  %v2553 = vpop.f32.mrf.mxu0
  %v2554 = vadd.f32 0.0, %v2553
  %v2555 = vpop.f32.mrf.mxu0
  %2556 = vdwg.mxu0
  %v2557 = vsel %vm1911, %v1846, 0
  %2559 = vmatprep.subr.bf16.mxu0 0
  %2560 = vmatpush1.bf16.msra.mxu0 0
  %2561 = vmatprep.subr.bf16.mxu0 0
  %2562 = vmatpush1.bf16.msra.mxu0 0
  %2563 = vmatprep.subr.bf16.mxu0 0
  %2564 = vmatpush1.bf16.msra.mxu0 0
  %2565 = vmatprep.subr.bf16.mxu0 0
  %2566 = vmatpush1.bf16.msra.mxu0 0
  %2567 = vmatprep.subr.bf16.mxu0 0
  %2568 = vmatpush1.bf16.msra.mxu0 %v1906
  %2569 = vmatprep.subr.bf16.mxu0 0
  %2570 = vmatpush1.bf16.msra.mxu0 %v1905
  %2571 = vmatprep.subr.bf16.mxu0 0
  %2572 = vmatpush1.bf16.msra.mxu0 %v1904
  %2573 = vmatprep.subr.bf16.mxu0 0
  %2574 = vmatpush1.bf16.msra.mxu0 %v1903
  %2575 = vmatprep.subr.bf16.mxu0 0
  %2576 = vmatpush2.bf16.msra.mxu0 0
  %2577 = vmatprep.subr.bf16.mxu0 0
  %2578 = vmatpush2.bf16.msra.mxu0 0
  %2579 = vmatprep.subr.bf16.mxu0 0
  %2580 = vmatpush2.bf16.msra.mxu0 0
  %2581 = vmatprep.subr.bf16.mxu0 0
  %2582 = vmatpush2.bf16.msra.mxu0 0
  %2583 = vmatprep.subr.bf16.mxu0 0
  %2584 = vmatpush2.bf16.msra.mxu0 0
  %2585 = vmatprep.subr.bf16.mxu0 0
  %2586 = vmatpush2.bf16.msra.mxu0 0
  %2587 = vmatprep.subr.bf16.mxu0 0
  %2588 = vmatpush2.bf16.msra.mxu0 0
  %2589 = vmatprep.subr.bf16.mxu0 0
  %2590 = vmatpush2.bf16.msra.mxu0 0
  %2591 = vmatprep.mubr.bf16.mxu0 0
  %2592 = vmatmul.mubr.bf16.gmra.mxu0 %v2557
  %v2593 = vpop.f32.mrf.mxu0
  %v2594 = vadd.f32 0.0, %v2593
  %v2595 = vpop.f32.mrf.mxu0
  %v2596 = vpop.f32.mrf.mxu0
  %v2597 = vadd.f32 0.0, %v2596
  %v2598 = vpop.f32.mrf.mxu0
  %2599 = vdwg.mxu0
  %v2600 = vsel %vm1911, %v1848, 0
  %2602 = vmatprep.subr.bf16.mxu0 0
  %2603 = vmatpush1.bf16.msra.mxu0 0
  %2604 = vmatprep.subr.bf16.mxu0 0
  %2605 = vmatpush1.bf16.msra.mxu0 0
  %2606 = vmatprep.subr.bf16.mxu0 0
  %2607 = vmatpush1.bf16.msra.mxu0 0
  %2608 = vmatprep.subr.bf16.mxu0 0
  %2609 = vmatpush1.bf16.msra.mxu0 0
  %2610 = vmatprep.subr.bf16.mxu0 0
  %2611 = vmatpush1.bf16.msra.mxu0 %v1906
  %2612 = vmatprep.subr.bf16.mxu0 0
  %2613 = vmatpush1.bf16.msra.mxu0 %v1905
  %2614 = vmatprep.subr.bf16.mxu0 0
  %2615 = vmatpush1.bf16.msra.mxu0 %v1904
  %2616 = vmatprep.subr.bf16.mxu0 0
  %2617 = vmatpush1.bf16.msra.mxu0 %v1903
  %2618 = vmatprep.subr.bf16.mxu0 0
  %2619 = vmatpush2.bf16.msra.mxu0 0
  %2620 = vmatprep.subr.bf16.mxu0 0
  %2621 = vmatpush2.bf16.msra.mxu0 0
  %2622 = vmatprep.subr.bf16.mxu0 0
  %2623 = vmatpush2.bf16.msra.mxu0 0
  %2624 = vmatprep.subr.bf16.mxu0 0
  %2625 = vmatpush2.bf16.msra.mxu0 0
  %2626 = vmatprep.subr.bf16.mxu0 0
  %2627 = vmatpush2.bf16.msra.mxu0 0
  %2628 = vmatprep.subr.bf16.mxu0 0
  %2629 = vmatpush2.bf16.msra.mxu0 0
  %2630 = vmatprep.subr.bf16.mxu0 0
  %2631 = vmatpush2.bf16.msra.mxu0 0
  %2632 = vmatprep.subr.bf16.mxu0 0
  %2633 = vmatpush2.bf16.msra.mxu0 0
  %2634 = vmatprep.mubr.bf16.mxu0 0
  %2635 = vmatmul.mubr.bf16.gmra.mxu0 %v2600
  %v2636 = vpop.f32.mrf.mxu0
  %v2637 = vadd.f32 0.0, %v2636
  %v2638 = vpop.f32.mrf.mxu0
  %v2639 = vpop.f32.mrf.mxu0
  %v2640 = vadd.f32 0.0, %v2639
  %v2641 = vpop.f32.mrf.mxu0
  %2642 = vdwg.mxu0
  %v2643 = vsel %vm1911, %v1850, 0
  %2645 = vmatprep.subr.bf16.mxu0 0
  %2646 = vmatpush1.bf16.msra.mxu0 0
  %2647 = vmatprep.subr.bf16.mxu0 0
  %2648 = vmatpush1.bf16.msra.mxu0 0
  %2649 = vmatprep.subr.bf16.mxu0 0
  %2650 = vmatpush1.bf16.msra.mxu0 0
  %2651 = vmatprep.subr.bf16.mxu0 0
  %2652 = vmatpush1.bf16.msra.mxu0 0
  %2653 = vmatprep.subr.bf16.mxu0 0
  %2654 = vmatpush1.bf16.msra.mxu0 %v1906
  %2655 = vmatprep.subr.bf16.mxu0 0
  %2656 = vmatpush1.bf16.msra.mxu0 %v1905
  %2657 = vmatprep.subr.bf16.mxu0 0
  %2658 = vmatpush1.bf16.msra.mxu0 %v1904
  %2659 = vmatprep.subr.bf16.mxu0 0
  %2660 = vmatpush1.bf16.msra.mxu0 %v1903
  %2661 = vmatprep.subr.bf16.mxu0 0
  %2662 = vmatpush2.bf16.msra.mxu0 0
  %2663 = vmatprep.subr.bf16.mxu0 0
  %2664 = vmatpush2.bf16.msra.mxu0 0
  %2665 = vmatprep.subr.bf16.mxu0 0
  %2666 = vmatpush2.bf16.msra.mxu0 0
  %2667 = vmatprep.subr.bf16.mxu0 0
  %2668 = vmatpush2.bf16.msra.mxu0 0
  %2669 = vmatprep.subr.bf16.mxu0 0
  %2670 = vmatpush2.bf16.msra.mxu0 0
  %2671 = vmatprep.subr.bf16.mxu0 0
  %2672 = vmatpush2.bf16.msra.mxu0 0
  %2673 = vmatprep.subr.bf16.mxu0 0
  %2674 = vmatpush2.bf16.msra.mxu0 0
  %2675 = vmatprep.subr.bf16.mxu0 0
  %2676 = vmatpush2.bf16.msra.mxu0 0
  %2677 = vmatprep.mubr.bf16.mxu0 0
  %2678 = vmatmul.mubr.bf16.gmra.mxu0 %v2643
  %v2679 = vpop.f32.mrf.mxu0
  %v2680 = vadd.f32 0.0, %v2679
  %v2681 = vpop.f32.mrf.mxu0
  %v2682 = vpop.f32.mrf.mxu0
  %v2683 = vadd.f32 0.0, %v2682
  %v2684 = vpop.f32.mrf.mxu0
  %2685 = vdwg.mxu0
  %v2686 = vsel %vm1911, %v1852, 0
  %2688 = vmatprep.subr.bf16.mxu0 0
  %2689 = vmatpush1.bf16.msra.mxu0 0
  %2690 = vmatprep.subr.bf16.mxu0 0
  %2691 = vmatpush1.bf16.msra.mxu0 0
  %2692 = vmatprep.subr.bf16.mxu0 0
  %2693 = vmatpush1.bf16.msra.mxu0 0
  %2694 = vmatprep.subr.bf16.mxu0 0
  %2695 = vmatpush1.bf16.msra.mxu0 0
  %2696 = vmatprep.subr.bf16.mxu0 0
  %2697 = vmatpush1.bf16.msra.mxu0 %v1906
  %2698 = vmatprep.subr.bf16.mxu0 0
  %2699 = vmatpush1.bf16.msra.mxu0 %v1905
  %2700 = vmatprep.subr.bf16.mxu0 0
  %2701 = vmatpush1.bf16.msra.mxu0 %v1904
  %2702 = vmatprep.subr.bf16.mxu0 0
  %2703 = vmatpush1.bf16.msra.mxu0 %v1903
  %2704 = vmatprep.subr.bf16.mxu0 0
  %2705 = vmatpush2.bf16.msra.mxu0 0
  %2706 = vmatprep.subr.bf16.mxu0 0
  %2707 = vmatpush2.bf16.msra.mxu0 0
  %2708 = vmatprep.subr.bf16.mxu0 0
  %2709 = vmatpush2.bf16.msra.mxu0 0
  %2710 = vmatprep.subr.bf16.mxu0 0
  %2711 = vmatpush2.bf16.msra.mxu0 0
  %2712 = vmatprep.subr.bf16.mxu0 0
  %2713 = vmatpush2.bf16.msra.mxu0 0
  %2714 = vmatprep.subr.bf16.mxu0 0
  %2715 = vmatpush2.bf16.msra.mxu0 0
  %2716 = vmatprep.subr.bf16.mxu0 0
  %2717 = vmatpush2.bf16.msra.mxu0 0
  %2718 = vmatprep.subr.bf16.mxu0 0
  %2719 = vmatpush2.bf16.msra.mxu0 0
  %2720 = vmatprep.mubr.bf16.mxu0 0
  %2721 = vmatmul.mubr.bf16.gmra.mxu0 %v2686
  %v2722 = vpop.f32.mrf.mxu0
  %v2723 = vadd.f32 0.0, %v2722
  %v2724 = vpop.f32.mrf.mxu0
  %v2725 = vpop.f32.mrf.mxu0
  %v2726 = vadd.f32 0.0, %v2725
  %v2727 = vpop.f32.mrf.mxu0
  %2728 = vdwg.mxu0
  %v2729 = vsel %vm1911, %v1854, 0
  %2731 = vmatprep.subr.bf16.mxu0 0
  %2732 = vmatpush1.bf16.msra.mxu0 0
  %2733 = vmatprep.subr.bf16.mxu0 0
  %2734 = vmatpush1.bf16.msra.mxu0 0
  %2735 = vmatprep.subr.bf16.mxu0 0
  %2736 = vmatpush1.bf16.msra.mxu0 0
  %2737 = vmatprep.subr.bf16.mxu0 0
  %2738 = vmatpush1.bf16.msra.mxu0 0
  %2739 = vmatprep.subr.bf16.mxu0 0
  %2740 = vmatpush1.bf16.msra.mxu0 %v1906
  %2741 = vmatprep.subr.bf16.mxu0 0
  %2742 = vmatpush1.bf16.msra.mxu0 %v1905
  %2743 = vmatprep.subr.bf16.mxu0 0
  %2744 = vmatpush1.bf16.msra.mxu0 %v1904
  %2745 = vmatprep.subr.bf16.mxu0 0
  %2746 = vmatpush1.bf16.msra.mxu0 %v1903
  %2747 = vmatprep.subr.bf16.mxu0 0
  %2748 = vmatpush2.bf16.msra.mxu0 0
  %2749 = vmatprep.subr.bf16.mxu0 0
  %2750 = vmatpush2.bf16.msra.mxu0 0
  %2751 = vmatprep.subr.bf16.mxu0 0
  %2752 = vmatpush2.bf16.msra.mxu0 0
  %2753 = vmatprep.subr.bf16.mxu0 0
  %2754 = vmatpush2.bf16.msra.mxu0 0
  %2755 = vmatprep.subr.bf16.mxu0 0
  %2756 = vmatpush2.bf16.msra.mxu0 0
  %2757 = vmatprep.subr.bf16.mxu0 0
  %2758 = vmatpush2.bf16.msra.mxu0 0
  %2759 = vmatprep.subr.bf16.mxu0 0
  %2760 = vmatpush2.bf16.msra.mxu0 0
  %2761 = vmatprep.subr.bf16.mxu0 0
  %2762 = vmatpush2.bf16.msra.mxu0 0
  %2763 = vmatprep.mubr.bf16.mxu0 0
  %2764 = vmatmul.mubr.bf16.gmra.mxu0 %v2729
  %v2765 = vpop.f32.mrf.mxu0
  %v2766 = vadd.f32 0.0, %v2765
  %v2767 = vpop.f32.mrf.mxu0
  %v2768 = vpop.f32.mrf.mxu0
  %v2769 = vadd.f32 0.0, %v2768
  %v2770 = vpop.f32.mrf.mxu0
  %2771 = vdwg.mxu0
  %v2772 = vsel %vm1911, %v1856, 0
  %2774 = vmatprep.subr.bf16.mxu0 0
  %2775 = vmatpush1.bf16.msra.mxu0 0
  %2776 = vmatprep.subr.bf16.mxu0 0
  %2777 = vmatpush1.bf16.msra.mxu0 0
  %2778 = vmatprep.subr.bf16.mxu0 0
  %2779 = vmatpush1.bf16.msra.mxu0 0
  %2780 = vmatprep.subr.bf16.mxu0 0
  %2781 = vmatpush1.bf16.msra.mxu0 0
  %2782 = vmatprep.subr.bf16.mxu0 0
  %2783 = vmatpush1.bf16.msra.mxu0 %v1906
  %2784 = vmatprep.subr.bf16.mxu0 0
  %2785 = vmatpush1.bf16.msra.mxu0 %v1905
  %2786 = vmatprep.subr.bf16.mxu0 0
  %2787 = vmatpush1.bf16.msra.mxu0 %v1904
  %2788 = vmatprep.subr.bf16.mxu0 0
  %2789 = vmatpush1.bf16.msra.mxu0 %v1903
  %2790 = vmatprep.subr.bf16.mxu0 0
  %2791 = vmatpush2.bf16.msra.mxu0 0
  %2792 = vmatprep.subr.bf16.mxu0 0
  %2793 = vmatpush2.bf16.msra.mxu0 0
  %2794 = vmatprep.subr.bf16.mxu0 0
  %2795 = vmatpush2.bf16.msra.mxu0 0
  %2796 = vmatprep.subr.bf16.mxu0 0
  %2797 = vmatpush2.bf16.msra.mxu0 0
  %2798 = vmatprep.subr.bf16.mxu0 0
  %2799 = vmatpush2.bf16.msra.mxu0 0
  %2800 = vmatprep.subr.bf16.mxu0 0
  %2801 = vmatpush2.bf16.msra.mxu0 0
  %2802 = vmatprep.subr.bf16.mxu0 0
  %2803 = vmatpush2.bf16.msra.mxu0 0
  %2804 = vmatprep.subr.bf16.mxu0 0
  %2805 = vmatpush2.bf16.msra.mxu0 0
  %2806 = vmatprep.mubr.bf16.mxu0 0
  %2807 = vmatmul.mubr.bf16.gmra.mxu0 %v2772
  %v2808 = vpop.f32.mrf.mxu0
  %v2809 = vadd.f32 0.0, %v2808
  %v2810 = vpop.f32.mrf.mxu0
  %v2811 = vpop.f32.mrf.mxu0
  %v2812 = vadd.f32 0.0, %v2811
  %v2813 = vpop.f32.mrf.mxu0
  %2814 = vdwg.mxu0
  %v2815 = vsel %vm1911, %v1858, 0
  %2817 = vmatprep.subr.bf16.mxu0 0
  %2818 = vmatpush1.bf16.msra.mxu0 0
  %2819 = vmatprep.subr.bf16.mxu0 0
  %2820 = vmatpush1.bf16.msra.mxu0 0
  %2821 = vmatprep.subr.bf16.mxu0 0
  %2822 = vmatpush1.bf16.msra.mxu0 0
  %2823 = vmatprep.subr.bf16.mxu0 0
  %2824 = vmatpush1.bf16.msra.mxu0 0
  %2825 = vmatprep.subr.bf16.mxu0 0
  %2826 = vmatpush1.bf16.msra.mxu0 %v1906
  %2827 = vmatprep.subr.bf16.mxu0 0
  %2828 = vmatpush1.bf16.msra.mxu0 %v1905
  %2829 = vmatprep.subr.bf16.mxu0 0
  %2830 = vmatpush1.bf16.msra.mxu0 %v1904
  %2831 = vmatprep.subr.bf16.mxu0 0
  %2832 = vmatpush1.bf16.msra.mxu0 %v1903
  %2833 = vmatprep.subr.bf16.mxu0 0
  %2834 = vmatpush2.bf16.msra.mxu0 0
  %2835 = vmatprep.subr.bf16.mxu0 0
  %2836 = vmatpush2.bf16.msra.mxu0 0
  %2837 = vmatprep.subr.bf16.mxu0 0
  %2838 = vmatpush2.bf16.msra.mxu0 0
  %2839 = vmatprep.subr.bf16.mxu0 0
  %2840 = vmatpush2.bf16.msra.mxu0 0
  %2841 = vmatprep.subr.bf16.mxu0 0
  %2842 = vmatpush2.bf16.msra.mxu0 0
  %2843 = vmatprep.subr.bf16.mxu0 0
  %2844 = vmatpush2.bf16.msra.mxu0 0
  %2845 = vmatprep.subr.bf16.mxu0 0
  %2846 = vmatpush2.bf16.msra.mxu0 0
  %2847 = vmatprep.subr.bf16.mxu0 0
  %2848 = vmatpush2.bf16.msra.mxu0 0
  %2849 = vmatprep.mubr.bf16.mxu0 0
  %2850 = vmatmul.mubr.bf16.gmra.mxu0 %v2815
  %v2851 = vpop.f32.mrf.mxu0
  %v2852 = vadd.f32 0.0, %v2851
  %v2853 = vpop.f32.mrf.mxu0
  %v2854 = vpop.f32.mrf.mxu0
  %v2855 = vadd.f32 0.0, %v2854
  %v2856 = vpop.f32.mrf.mxu0
  %2857 = vdwg.mxu0
  %v2858 = vsel %vm1911, %v1860, 0
  %2860 = vmatprep.subr.bf16.mxu0 0
  %2861 = vmatpush1.bf16.msra.mxu0 0
  %2862 = vmatprep.subr.bf16.mxu0 0
  %2863 = vmatpush1.bf16.msra.mxu0 0
  %2864 = vmatprep.subr.bf16.mxu0 0
  %2865 = vmatpush1.bf16.msra.mxu0 0
  %2866 = vmatprep.subr.bf16.mxu0 0
  %2867 = vmatpush1.bf16.msra.mxu0 0
  %2868 = vmatprep.subr.bf16.mxu0 0
  %2869 = vmatpush1.bf16.msra.mxu0 %v1906
  %2870 = vmatprep.subr.bf16.mxu0 0
  %2871 = vmatpush1.bf16.msra.mxu0 %v1905
  %2872 = vmatprep.subr.bf16.mxu0 0
  %2873 = vmatpush1.bf16.msra.mxu0 %v1904
  %2874 = vmatprep.subr.bf16.mxu0 0
  %2875 = vmatpush1.bf16.msra.mxu0 %v1903
  %2876 = vmatprep.subr.bf16.mxu0 0
  %2877 = vmatpush2.bf16.msra.mxu0 0
  %2878 = vmatprep.subr.bf16.mxu0 0
  %2879 = vmatpush2.bf16.msra.mxu0 0
  %2880 = vmatprep.subr.bf16.mxu0 0
  %2881 = vmatpush2.bf16.msra.mxu0 0
  %2882 = vmatprep.subr.bf16.mxu0 0
  %2883 = vmatpush2.bf16.msra.mxu0 0
  %2884 = vmatprep.subr.bf16.mxu0 0
  %2885 = vmatpush2.bf16.msra.mxu0 0
  %2886 = vmatprep.subr.bf16.mxu0 0
  %2887 = vmatpush2.bf16.msra.mxu0 0
  %2888 = vmatprep.subr.bf16.mxu0 0
  %2889 = vmatpush2.bf16.msra.mxu0 0
  %2890 = vmatprep.subr.bf16.mxu0 0
  %2891 = vmatpush2.bf16.msra.mxu0 0
  %2892 = vmatprep.mubr.bf16.mxu0 0
  %2893 = vmatmul.mubr.bf16.gmra.mxu0 %v2858
  %v2894 = vpop.f32.mrf.mxu0
  %v2895 = vadd.f32 0.0, %v2894
  %v2896 = vpop.f32.mrf.mxu0
  %v2897 = vpop.f32.mrf.mxu0
  %v2898 = vadd.f32 0.0, %v2897
  %v2899 = vpop.f32.mrf.mxu0
  %2900 = vdwg.mxu0
  %v2901 = vsel %vm1911, %v1862, 0
  %2903 = vmatprep.subr.bf16.mxu0 0
  %2904 = vmatpush1.bf16.msra.mxu0 0
  %2905 = vmatprep.subr.bf16.mxu0 0
  %2906 = vmatpush1.bf16.msra.mxu0 0
  %2907 = vmatprep.subr.bf16.mxu0 0
  %2908 = vmatpush1.bf16.msra.mxu0 0
  %2909 = vmatprep.subr.bf16.mxu0 0
  %2910 = vmatpush1.bf16.msra.mxu0 0
  %2911 = vmatprep.subr.bf16.mxu0 0
  %2912 = vmatpush1.bf16.msra.mxu0 %v1906
  %2913 = vmatprep.subr.bf16.mxu0 0
  %2914 = vmatpush1.bf16.msra.mxu0 %v1905
  %2915 = vmatprep.subr.bf16.mxu0 0
  %2916 = vmatpush1.bf16.msra.mxu0 %v1904
  %2917 = vmatprep.subr.bf16.mxu0 0
  %2918 = vmatpush1.bf16.msra.mxu0 %v1903
  %2919 = vmatprep.subr.bf16.mxu0 0
  %2920 = vmatpush2.bf16.msra.mxu0 0
  %2921 = vmatprep.subr.bf16.mxu0 0
  %2922 = vmatpush2.bf16.msra.mxu0 0
  %2923 = vmatprep.subr.bf16.mxu0 0
  %2924 = vmatpush2.bf16.msra.mxu0 0
  %2925 = vmatprep.subr.bf16.mxu0 0
  %2926 = vmatpush2.bf16.msra.mxu0 0
  %2927 = vmatprep.subr.bf16.mxu0 0
  %2928 = vmatpush2.bf16.msra.mxu0 0
  %2929 = vmatprep.subr.bf16.mxu0 0
  %2930 = vmatpush2.bf16.msra.mxu0 0
  %2931 = vmatprep.subr.bf16.mxu0 0
  %2932 = vmatpush2.bf16.msra.mxu0 0
  %2933 = vmatprep.subr.bf16.mxu0 0
  %2934 = vmatpush2.bf16.msra.mxu0 0
  %2935 = vmatprep.mubr.bf16.mxu0 0
  %2936 = vmatmul.mubr.bf16.gmra.mxu0 %v2901
  %v2937 = vpop.f32.mrf.mxu0
  %v2938 = vadd.f32 0.0, %v2937
  %v2939 = vpop.f32.mrf.mxu0
  %v2940 = vpop.f32.mrf.mxu0
  %v2941 = vadd.f32 0.0, %v2940
  %v2942 = vpop.f32.mrf.mxu0
  %2943 = vdwg.mxu0
  %v2944 = vsel %vm1911, %v1864, 0
  %2946 = vmatprep.subr.bf16.mxu0 0
  %2947 = vmatpush1.bf16.msra.mxu0 0
  %2948 = vmatprep.subr.bf16.mxu0 0
  %2949 = vmatpush1.bf16.msra.mxu0 0
  %2950 = vmatprep.subr.bf16.mxu0 0
  %2951 = vmatpush1.bf16.msra.mxu0 0
  %2952 = vmatprep.subr.bf16.mxu0 0
  %2953 = vmatpush1.bf16.msra.mxu0 0
  %2954 = vmatprep.subr.bf16.mxu0 0
  %2955 = vmatpush1.bf16.msra.mxu0 %v1906
  %2956 = vmatprep.subr.bf16.mxu0 0
  %2957 = vmatpush1.bf16.msra.mxu0 %v1905
  %2958 = vmatprep.subr.bf16.mxu0 0
  %2959 = vmatpush1.bf16.msra.mxu0 %v1904
  %2960 = vmatprep.subr.bf16.mxu0 0
  %2961 = vmatpush1.bf16.msra.mxu0 %v1903
  %2962 = vmatprep.subr.bf16.mxu0 0
  %2963 = vmatpush2.bf16.msra.mxu0 0
  %2964 = vmatprep.subr.bf16.mxu0 0
  %2965 = vmatpush2.bf16.msra.mxu0 0
  %2966 = vmatprep.subr.bf16.mxu0 0
  %2967 = vmatpush2.bf16.msra.mxu0 0
  %2968 = vmatprep.subr.bf16.mxu0 0
  %2969 = vmatpush2.bf16.msra.mxu0 0
  %2970 = vmatprep.subr.bf16.mxu0 0
  %2971 = vmatpush2.bf16.msra.mxu0 0
  %2972 = vmatprep.subr.bf16.mxu0 0
  %2973 = vmatpush2.bf16.msra.mxu0 0
  %2974 = vmatprep.subr.bf16.mxu0 0
  %2975 = vmatpush2.bf16.msra.mxu0 0
  %2976 = vmatprep.subr.bf16.mxu0 0
  %2977 = vmatpush2.bf16.msra.mxu0 0
  %2978 = vmatprep.mubr.bf16.mxu0 0
  %2979 = vmatmul.mubr.bf16.gmra.mxu0 %v2944
  %v2980 = vpop.f32.mrf.mxu0
  %v2981 = vadd.f32 0.0, %v2980
  %v2982 = vpop.f32.mrf.mxu0
  %v2983 = vpop.f32.mrf.mxu0
  %v2984 = vadd.f32 0.0, %v2983
  %v2985 = vpop.f32.mrf.mxu0
  %2986 = vdwg.mxu0
  %v2987 = vsel %vm1911, %v1866, 0
  %2989 = vmatprep.subr.bf16.mxu0 0
  %2990 = vmatpush1.bf16.msra.mxu0 0
  %2991 = vmatprep.subr.bf16.mxu0 0
  %2992 = vmatpush1.bf16.msra.mxu0 0
  %2993 = vmatprep.subr.bf16.mxu0 0
  %2994 = vmatpush1.bf16.msra.mxu0 0
  %2995 = vmatprep.subr.bf16.mxu0 0
  %2996 = vmatpush1.bf16.msra.mxu0 0
  %2997 = vmatprep.subr.bf16.mxu0 0
  %2998 = vmatpush1.bf16.msra.mxu0 %v1906
  %2999 = vmatprep.subr.bf16.mxu0 0
  %3000 = vmatpush1.bf16.msra.mxu0 %v1905
  %3001 = vmatprep.subr.bf16.mxu0 0
  %3002 = vmatpush1.bf16.msra.mxu0 %v1904
  %3003 = vmatprep.subr.bf16.mxu0 0
  %3004 = vmatpush1.bf16.msra.mxu0 %v1903
  %3005 = vmatprep.subr.bf16.mxu0 0
  %3006 = vmatpush2.bf16.msra.mxu0 0
  %3007 = vmatprep.subr.bf16.mxu0 0
  %3008 = vmatpush2.bf16.msra.mxu0 0
  %3009 = vmatprep.subr.bf16.mxu0 0
  %3010 = vmatpush2.bf16.msra.mxu0 0
  %3011 = vmatprep.subr.bf16.mxu0 0
  %3012 = vmatpush2.bf16.msra.mxu0 0
  %3013 = vmatprep.subr.bf16.mxu0 0
  %3014 = vmatpush2.bf16.msra.mxu0 0
  %3015 = vmatprep.subr.bf16.mxu0 0
  %3016 = vmatpush2.bf16.msra.mxu0 0
  %3017 = vmatprep.subr.bf16.mxu0 0
  %3018 = vmatpush2.bf16.msra.mxu0 0
  %3019 = vmatprep.subr.bf16.mxu0 0
  %3020 = vmatpush2.bf16.msra.mxu0 0
  %3021 = vmatprep.mubr.bf16.mxu0 0
  %3022 = vmatmul.mubr.bf16.gmra.mxu0 %v2987
  %v3023 = vpop.f32.mrf.mxu0
  %v3024 = vadd.f32 0.0, %v3023
  %v3025 = vpop.f32.mrf.mxu0
  %v3026 = vpop.f32.mrf.mxu0
  %v3027 = vadd.f32 0.0, %v3026
  %v3028 = vpop.f32.mrf.mxu0
  %3029 = vdwg.mxu0
  %v3030 = vsel %vm1911, %v1868, 0
  %3032 = vmatprep.subr.bf16.mxu0 0
  %3033 = vmatpush1.bf16.msra.mxu0 0
  %3034 = vmatprep.subr.bf16.mxu0 0
  %3035 = vmatpush1.bf16.msra.mxu0 0
  %3036 = vmatprep.subr.bf16.mxu0 0
  %3037 = vmatpush1.bf16.msra.mxu0 0
  %3038 = vmatprep.subr.bf16.mxu0 0
  %3039 = vmatpush1.bf16.msra.mxu0 0
  %3040 = vmatprep.subr.bf16.mxu0 0
  %3041 = vmatpush1.bf16.msra.mxu0 %v1906
  %3042 = vmatprep.subr.bf16.mxu0 0
  %3043 = vmatpush1.bf16.msra.mxu0 %v1905
  %3044 = vmatprep.subr.bf16.mxu0 0
  %3045 = vmatpush1.bf16.msra.mxu0 %v1904
  %3046 = vmatprep.subr.bf16.mxu0 0
  %3047 = vmatpush1.bf16.msra.mxu0 %v1903
  %3048 = vmatprep.subr.bf16.mxu0 0
  %3049 = vmatpush2.bf16.msra.mxu0 0
  %3050 = vmatprep.subr.bf16.mxu0 0
  %3051 = vmatpush2.bf16.msra.mxu0 0
  %3052 = vmatprep.subr.bf16.mxu0 0
  %3053 = vmatpush2.bf16.msra.mxu0 0
  %3054 = vmatprep.subr.bf16.mxu0 0
  %3055 = vmatpush2.bf16.msra.mxu0 0
  %3056 = vmatprep.subr.bf16.mxu0 0
  %3057 = vmatpush2.bf16.msra.mxu0 0
  %3058 = vmatprep.subr.bf16.mxu0 0
  %3059 = vmatpush2.bf16.msra.mxu0 0
  %3060 = vmatprep.subr.bf16.mxu0 0
  %3061 = vmatpush2.bf16.msra.mxu0 0
  %3062 = vmatprep.subr.bf16.mxu0 0
  %3063 = vmatpush2.bf16.msra.mxu0 0
  %3064 = vmatprep.mubr.bf16.mxu0 0
  %3065 = vmatmul.mubr.bf16.gmra.mxu0 %v3030
  %v3066 = vpop.f32.mrf.mxu0
  %v3067 = vadd.f32 0.0, %v3066
  %v3068 = vpop.f32.mrf.mxu0
  %v3069 = vpop.f32.mrf.mxu0
  %v3070 = vadd.f32 0.0, %v3069
  %v3071 = vpop.f32.mrf.mxu0
  %3072 = vdwg.mxu0
  %v3073 = vsel %vm1911, %v1870, 0
  %3075 = vmatprep.subr.bf16.mxu0 0
  %3076 = vmatpush1.bf16.msra.mxu0 0
  %3077 = vmatprep.subr.bf16.mxu0 0
  %3078 = vmatpush1.bf16.msra.mxu0 0
  %3079 = vmatprep.subr.bf16.mxu0 0
  %3080 = vmatpush1.bf16.msra.mxu0 0
  %3081 = vmatprep.subr.bf16.mxu0 0
  %3082 = vmatpush1.bf16.msra.mxu0 0
  %3083 = vmatprep.subr.bf16.mxu0 0
  %3084 = vmatpush1.bf16.msra.mxu0 %v1906
  %3085 = vmatprep.subr.bf16.mxu0 0
  %3086 = vmatpush1.bf16.msra.mxu0 %v1905
  %3087 = vmatprep.subr.bf16.mxu0 0
  %3088 = vmatpush1.bf16.msra.mxu0 %v1904
  %3089 = vmatprep.subr.bf16.mxu0 0
  %3090 = vmatpush1.bf16.msra.mxu0 %v1903
  %3091 = vmatprep.subr.bf16.mxu0 0
  %3092 = vmatpush2.bf16.msra.mxu0 0
  %3093 = vmatprep.subr.bf16.mxu0 0
  %3094 = vmatpush2.bf16.msra.mxu0 0
  %3095 = vmatprep.subr.bf16.mxu0 0
  %3096 = vmatpush2.bf16.msra.mxu0 0
  %3097 = vmatprep.subr.bf16.mxu0 0
  %3098 = vmatpush2.bf16.msra.mxu0 0
  %3099 = vmatprep.subr.bf16.mxu0 0
  %3100 = vmatpush2.bf16.msra.mxu0 0
  %3101 = vmatprep.subr.bf16.mxu0 0
  %3102 = vmatpush2.bf16.msra.mxu0 0
  %3103 = vmatprep.subr.bf16.mxu0 0
  %3104 = vmatpush2.bf16.msra.mxu0 0
  %3105 = vmatprep.subr.bf16.mxu0 0
  %3106 = vmatpush2.bf16.msra.mxu0 0
  %3107 = vmatprep.mubr.bf16.mxu0 0
  %3108 = vmatmul.mubr.bf16.gmra.mxu0 %v3073
  %v3109 = vpop.f32.mrf.mxu0
  %v3110 = vadd.f32 0.0, %v3109
  %v3111 = vpop.f32.mrf.mxu0
  %v3112 = vpop.f32.mrf.mxu0
  %v3113 = vadd.f32 0.0, %v3112
  %v3114 = vpop.f32.mrf.mxu0
  %3115 = vdwg.mxu0
  %v3116 = vsel %vm1911, %v1872, 0
  %3118 = vmatprep.subr.bf16.mxu0 0
  %3119 = vmatpush1.bf16.msra.mxu0 0
  %3120 = vmatprep.subr.bf16.mxu0 0
  %3121 = vmatpush1.bf16.msra.mxu0 0
  %3122 = vmatprep.subr.bf16.mxu0 0
  %3123 = vmatpush1.bf16.msra.mxu0 0
  %3124 = vmatprep.subr.bf16.mxu0 0
  %3125 = vmatpush1.bf16.msra.mxu0 0
  %3126 = vmatprep.subr.bf16.mxu0 0
  %3127 = vmatpush1.bf16.msra.mxu0 %v1906
  %3128 = vmatprep.subr.bf16.mxu0 0
  %3129 = vmatpush1.bf16.msra.mxu0 %v1905
  %3130 = vmatprep.subr.bf16.mxu0 0
  %3131 = vmatpush1.bf16.msra.mxu0 %v1904
  %3132 = vmatprep.subr.bf16.mxu0 0
  %3133 = vmatpush1.bf16.msra.mxu0 %v1903
  %3134 = vmatprep.subr.bf16.mxu0 0
  %3135 = vmatpush2.bf16.msra.mxu0 0
  %3136 = vmatprep.subr.bf16.mxu0 0
  %3137 = vmatpush2.bf16.msra.mxu0 0
  %3138 = vmatprep.subr.bf16.mxu0 0
  %3139 = vmatpush2.bf16.msra.mxu0 0
  %3140 = vmatprep.subr.bf16.mxu0 0
  %3141 = vmatpush2.bf16.msra.mxu0 0
  %3142 = vmatprep.subr.bf16.mxu0 0
  %3143 = vmatpush2.bf16.msra.mxu0 0
  %3144 = vmatprep.subr.bf16.mxu0 0
  %3145 = vmatpush2.bf16.msra.mxu0 0
  %3146 = vmatprep.subr.bf16.mxu0 0
  %3147 = vmatpush2.bf16.msra.mxu0 0
  %3148 = vmatprep.subr.bf16.mxu0 0
  %3149 = vmatpush2.bf16.msra.mxu0 0
  %3150 = vmatprep.mubr.bf16.mxu0 0
  %3151 = vmatmul.mubr.bf16.gmra.mxu0 %v3116
  %v3152 = vpop.f32.mrf.mxu0
  %v3153 = vadd.f32 0.0, %v3152
  %v3154 = vpop.f32.mrf.mxu0
  %v3155 = vpop.f32.mrf.mxu0
  %v3156 = vadd.f32 0.0, %v3155
  %v3157 = vpop.f32.mrf.mxu0
  %3158 = vdwg.mxu0
  %v3159 = vsel %vm1911, %v1874, 0
  %3161 = vmatprep.subr.bf16.mxu0 0
  %3162 = vmatpush1.bf16.msra.mxu0 0
  %3163 = vmatprep.subr.bf16.mxu0 0
  %3164 = vmatpush1.bf16.msra.mxu0 0
  %3165 = vmatprep.subr.bf16.mxu0 0
  %3166 = vmatpush1.bf16.msra.mxu0 0
  %3167 = vmatprep.subr.bf16.mxu0 0
  %3168 = vmatpush1.bf16.msra.mxu0 0
  %3169 = vmatprep.subr.bf16.mxu0 0
  %3170 = vmatpush1.bf16.msra.mxu0 %v1906
  %3171 = vmatprep.subr.bf16.mxu0 0
  %3172 = vmatpush1.bf16.msra.mxu0 %v1905
  %3173 = vmatprep.subr.bf16.mxu0 0
  %3174 = vmatpush1.bf16.msra.mxu0 %v1904
  %3175 = vmatprep.subr.bf16.mxu0 0
  %3176 = vmatpush1.bf16.msra.mxu0 %v1903
  %3177 = vmatprep.subr.bf16.mxu0 0
  %3178 = vmatpush2.bf16.msra.mxu0 0
  %3179 = vmatprep.subr.bf16.mxu0 0
  %3180 = vmatpush2.bf16.msra.mxu0 0
  %3181 = vmatprep.subr.bf16.mxu0 0
  %3182 = vmatpush2.bf16.msra.mxu0 0
  %3183 = vmatprep.subr.bf16.mxu0 0
  %3184 = vmatpush2.bf16.msra.mxu0 0
  %3185 = vmatprep.subr.bf16.mxu0 0
  %3186 = vmatpush2.bf16.msra.mxu0 0
  %3187 = vmatprep.subr.bf16.mxu0 0
  %3188 = vmatpush2.bf16.msra.mxu0 0
  %3189 = vmatprep.subr.bf16.mxu0 0
  %3190 = vmatpush2.bf16.msra.mxu0 0
  %3191 = vmatprep.subr.bf16.mxu0 0
  %3192 = vmatpush2.bf16.msra.mxu0 0
  %3193 = vmatprep.mubr.bf16.mxu0 0
  %3194 = vmatmul.mubr.bf16.gmra.mxu0 %v3159
  %v3195 = vpop.f32.mrf.mxu0
  %v3196 = vadd.f32 0.0, %v3195
  %v3197 = vpop.f32.mrf.mxu0
  %v3198 = vpop.f32.mrf.mxu0
  %v3199 = vadd.f32 0.0, %v3198
  %v3200 = vpop.f32.mrf.mxu0
  %3201 = vdwg.mxu0
  %v3202 = vsel %vm1911, %v1876, 0
  %3204 = vmatprep.subr.bf16.mxu0 0
  %3205 = vmatpush1.bf16.msra.mxu0 0
  %3206 = vmatprep.subr.bf16.mxu0 0
  %3207 = vmatpush1.bf16.msra.mxu0 0
  %3208 = vmatprep.subr.bf16.mxu0 0
  %3209 = vmatpush1.bf16.msra.mxu0 0
  %3210 = vmatprep.subr.bf16.mxu0 0
  %3211 = vmatpush1.bf16.msra.mxu0 0
  %3212 = vmatprep.subr.bf16.mxu0 0
  %3213 = vmatpush1.bf16.msra.mxu0 %v1906
  %3214 = vmatprep.subr.bf16.mxu0 0
  %3215 = vmatpush1.bf16.msra.mxu0 %v1905
  %3216 = vmatprep.subr.bf16.mxu0 0
  %3217 = vmatpush1.bf16.msra.mxu0 %v1904
  %3218 = vmatprep.subr.bf16.mxu0 0
  %3219 = vmatpush1.bf16.msra.mxu0 %v1903
  %3220 = vmatprep.subr.bf16.mxu0 0
  %3221 = vmatpush2.bf16.msra.mxu0 0
  %3222 = vmatprep.subr.bf16.mxu0 0
  %3223 = vmatpush2.bf16.msra.mxu0 0
  %3224 = vmatprep.subr.bf16.mxu0 0
  %3225 = vmatpush2.bf16.msra.mxu0 0
  %3226 = vmatprep.subr.bf16.mxu0 0
  %3227 = vmatpush2.bf16.msra.mxu0 0
  %3228 = vmatprep.subr.bf16.mxu0 0
  %3229 = vmatpush2.bf16.msra.mxu0 0
  %3230 = vmatprep.subr.bf16.mxu0 0
  %3231 = vmatpush2.bf16.msra.mxu0 0
  %3232 = vmatprep.subr.bf16.mxu0 0
  %3233 = vmatpush2.bf16.msra.mxu0 0
  %3234 = vmatprep.subr.bf16.mxu0 0
  %3235 = vmatpush2.bf16.msra.mxu0 0
  %3236 = vmatprep.mubr.bf16.mxu0 0
  %3237 = vmatmul.mubr.bf16.gmra.mxu0 %v3202
  %v3238 = vpop.f32.mrf.mxu0
  %v3239 = vadd.f32 0.0, %v3238
  %v3240 = vpop.f32.mrf.mxu0
  %v3241 = vpop.f32.mrf.mxu0
  %v3242 = vadd.f32 0.0, %v3241
  %v3243 = vpop.f32.mrf.mxu0
  %3244 = vdwg.mxu0
  %v3245 = vsel %vm1911, %v1878, 0
  %3247 = vmatprep.subr.bf16.mxu0 0
  %3248 = vmatpush1.bf16.msra.mxu0 0
  %3249 = vmatprep.subr.bf16.mxu0 0
  %3250 = vmatpush1.bf16.msra.mxu0 0
  %3251 = vmatprep.subr.bf16.mxu0 0
  %3252 = vmatpush1.bf16.msra.mxu0 0
  %3253 = vmatprep.subr.bf16.mxu0 0
  %3254 = vmatpush1.bf16.msra.mxu0 0
  %3255 = vmatprep.subr.bf16.mxu0 0
  %3256 = vmatpush1.bf16.msra.mxu0 %v1906
  %3257 = vmatprep.subr.bf16.mxu0 0
  %3258 = vmatpush1.bf16.msra.mxu0 %v1905
  %3259 = vmatprep.subr.bf16.mxu0 0
  %3260 = vmatpush1.bf16.msra.mxu0 %v1904
  %3261 = vmatprep.subr.bf16.mxu0 0
  %3262 = vmatpush1.bf16.msra.mxu0 %v1903
  %3263 = vmatprep.subr.bf16.mxu0 0
  %3264 = vmatpush2.bf16.msra.mxu0 0
  %3265 = vmatprep.subr.bf16.mxu0 0
  %3266 = vmatpush2.bf16.msra.mxu0 0
  %3267 = vmatprep.subr.bf16.mxu0 0
  %3268 = vmatpush2.bf16.msra.mxu0 0
  %3269 = vmatprep.subr.bf16.mxu0 0
  %3270 = vmatpush2.bf16.msra.mxu0 0
  %3271 = vmatprep.subr.bf16.mxu0 0
  %3272 = vmatpush2.bf16.msra.mxu0 0
  %3273 = vmatprep.subr.bf16.mxu0 0
  %3274 = vmatpush2.bf16.msra.mxu0 0
  %3275 = vmatprep.subr.bf16.mxu0 0
  %3276 = vmatpush2.bf16.msra.mxu0 0
  %3277 = vmatprep.subr.bf16.mxu0 0
  %3278 = vmatpush2.bf16.msra.mxu0 0
  %3279 = vmatprep.mubr.bf16.mxu0 0
  %3280 = vmatmul.mubr.bf16.gmra.mxu0 %v3245
  %v3281 = vpop.f32.mrf.mxu0
  %v3282 = vadd.f32 0.0, %v3281
  %v3283 = vpop.f32.mrf.mxu0
  %v3284 = vpop.f32.mrf.mxu0
  %v3285 = vadd.f32 0.0, %v3284
  %v3286 = vpop.f32.mrf.mxu0
  %3287 = vdwg.mxu0
  %vm3288 = vcmask 64512
  %v3289 = vsel %vm3288, %v1949, 0.0
  %v3290 = vsel %vm3288, %v1952, 0.0
  %v3291 = vadd.f32 %v3289, %v3290
  %v3292 = vrot.slane %v3291, 4
  %v3293 = vadd.f32 %v3291, %v3292
  %v3294 = vrot.slane %v3293, 2
  %v3295 = vadd.f32 %v3293, %v3294
  %v3296 = vrot.slane %v3295, 1
  %v3297 = vadd.f32 %v3295, %v3296
  %v3298 = vsel %vm3288, %v1992, 0.0
  %v3299 = vsel %vm3288, %v1995, 0.0
  %v3300 = vadd.f32 %v3298, %v3299
  %v3301 = vrot.slane %v3300, 4
  %v3302 = vadd.f32 %v3300, %v3301
  %v3303 = vrot.slane %v3302, 2
  %v3304 = vadd.f32 %v3302, %v3303
  %v3305 = vrot.slane %v3304, 1
  %v3306 = vadd.f32 %v3304, %v3305
  %v3307 = vsel %vm3288, %v2035, 0.0
  %v3308 = vsel %vm3288, %v2038, 0.0
  %v3309 = vadd.f32 %v3307, %v3308
  %v3310 = vrot.slane %v3309, 4
  %v3311 = vadd.f32 %v3309, %v3310
  %v3312 = vrot.slane %v3311, 2
  %v3313 = vadd.f32 %v3311, %v3312
  %v3314 = vrot.slane %v3313, 1
  %v3315 = vadd.f32 %v3313, %v3314
  %v3316 = vsel %vm3288, %v2078, 0.0
  %v3317 = vsel %vm3288, %v2081, 0.0
  %v3318 = vadd.f32 %v3316, %v3317
  %v3319 = vrot.slane %v3318, 4
  %v3320 = vadd.f32 %v3318, %v3319
  %v3321 = vrot.slane %v3320, 2
  %v3322 = vadd.f32 %v3320, %v3321
  %v3323 = vrot.slane %v3322, 1
  %v3324 = vadd.f32 %v3322, %v3323
  %v3325 = vsel %vm3288, %v2121, 0.0
  %v3326 = vsel %vm3288, %v2124, 0.0
  %v3327 = vadd.f32 %v3325, %v3326
  %v3328 = vrot.slane %v3327, 4
  %v3329 = vadd.f32 %v3327, %v3328
  %v3330 = vrot.slane %v3329, 2
  %v3331 = vadd.f32 %v3329, %v3330
  %v3332 = vrot.slane %v3331, 1
  %v3333 = vadd.f32 %v3331, %v3332
  %v3334 = vsel %vm3288, %v2164, 0.0
  %v3335 = vsel %vm3288, %v2167, 0.0
  %v3336 = vadd.f32 %v3334, %v3335
  %v3337 = vrot.slane %v3336, 4
  %v3338 = vadd.f32 %v3336, %v3337
  %v3339 = vrot.slane %v3338, 2
  %v3340 = vadd.f32 %v3338, %v3339
  %v3341 = vrot.slane %v3340, 1
  %v3342 = vadd.f32 %v3340, %v3341
  %v3343 = vsel %vm3288, %v2207, 0.0
  %v3344 = vsel %vm3288, %v2210, 0.0
  %v3345 = vadd.f32 %v3343, %v3344
  %v3346 = vrot.slane %v3345, 4
  %v3347 = vadd.f32 %v3345, %v3346
  %v3348 = vrot.slane %v3347, 2
  %v3349 = vadd.f32 %v3347, %v3348
  %v3350 = vrot.slane %v3349, 1
  %v3351 = vadd.f32 %v3349, %v3350
  %v3352 = vsel %vm3288, %v2250, 0.0
  %v3353 = vsel %vm3288, %v2253, 0.0
  %v3354 = vadd.f32 %v3352, %v3353
  %v3355 = vrot.slane %v3354, 4
  %v3356 = vadd.f32 %v3354, %v3355
  %v3357 = vrot.slane %v3356, 2
  %v3358 = vadd.f32 %v3356, %v3357
  %v3359 = vrot.slane %v3358, 1
  %v3360 = vadd.f32 %v3358, %v3359
  %v3361 = vsel %vm3288, %v2293, 0.0
  %v3362 = vsel %vm3288, %v2296, 0.0
  %v3363 = vadd.f32 %v3361, %v3362
  %v3364 = vrot.slane %v3363, 4
  %v3365 = vadd.f32 %v3363, %v3364
  %v3366 = vrot.slane %v3365, 2
  %v3367 = vadd.f32 %v3365, %v3366
  %v3368 = vrot.slane %v3367, 1
  %v3369 = vadd.f32 %v3367, %v3368
  %v3370 = vsel %vm3288, %v2336, 0.0
  %v3371 = vsel %vm3288, %v2339, 0.0
  %v3372 = vadd.f32 %v3370, %v3371
  %v3373 = vrot.slane %v3372, 4
  %v3374 = vadd.f32 %v3372, %v3373
  %v3375 = vrot.slane %v3374, 2
  %v3376 = vadd.f32 %v3374, %v3375
  %v3377 = vrot.slane %v3376, 1
  %v3378 = vadd.f32 %v3376, %v3377
  %v3379 = vsel %vm3288, %v2379, 0.0
  %v3380 = vsel %vm3288, %v2382, 0.0
  %v3381 = vadd.f32 %v3379, %v3380
  %v3382 = vrot.slane %v3381, 4
  %v3383 = vadd.f32 %v3381, %v3382
  %v3384 = vrot.slane %v3383, 2
  %v3385 = vadd.f32 %v3383, %v3384
  %v3386 = vrot.slane %v3385, 1
  %v3387 = vadd.f32 %v3385, %v3386
  %v3388 = vsel %vm3288, %v2422, 0.0
  %v3389 = vsel %vm3288, %v2425, 0.0
  %v3390 = vadd.f32 %v3388, %v3389
  %v3391 = vrot.slane %v3390, 4
  %v3392 = vadd.f32 %v3390, %v3391
  %v3393 = vrot.slane %v3392, 2
  %v3394 = vadd.f32 %v3392, %v3393
  %v3395 = vrot.slane %v3394, 1
  %v3396 = vadd.f32 %v3394, %v3395
  %v3397 = vsel %vm3288, %v2465, 0.0
  %v3398 = vsel %vm3288, %v2468, 0.0
  %v3399 = vadd.f32 %v3397, %v3398
  %v3400 = vrot.slane %v3399, 4
  %v3401 = vadd.f32 %v3399, %v3400
  %v3402 = vrot.slane %v3401, 2
  %v3403 = vadd.f32 %v3401, %v3402
  %v3404 = vrot.slane %v3403, 1
  %v3405 = vadd.f32 %v3403, %v3404
  %v3406 = vsel %vm3288, %v2508, 0.0
  %v3407 = vsel %vm3288, %v2511, 0.0
  %v3408 = vadd.f32 %v3406, %v3407
  %v3409 = vrot.slane %v3408, 4
  %v3410 = vadd.f32 %v3408, %v3409
  %v3411 = vrot.slane %v3410, 2
  %v3412 = vadd.f32 %v3410, %v3411
  %v3413 = vrot.slane %v3412, 1
  %v3414 = vadd.f32 %v3412, %v3413
  %v3415 = vsel %vm3288, %v2551, 0.0
  %v3416 = vsel %vm3288, %v2554, 0.0
  %v3417 = vadd.f32 %v3415, %v3416
  %v3418 = vrot.slane %v3417, 4
  %v3419 = vadd.f32 %v3417, %v3418
  %v3420 = vrot.slane %v3419, 2
  %v3421 = vadd.f32 %v3419, %v3420
  %v3422 = vrot.slane %v3421, 1
  %v3423 = vadd.f32 %v3421, %v3422
  %v3424 = vsel %vm3288, %v2594, 0.0
  %v3425 = vsel %vm3288, %v2597, 0.0
  %v3426 = vadd.f32 %v3424, %v3425
  %v3427 = vrot.slane %v3426, 4
  %v3428 = vadd.f32 %v3426, %v3427
  %v3429 = vrot.slane %v3428, 2
  %v3430 = vadd.f32 %v3428, %v3429
  %v3431 = vrot.slane %v3430, 1
  %v3432 = vadd.f32 %v3430, %v3431
  %v3433 = vsel %vm3288, %v2637, 0.0
  %v3434 = vsel %vm3288, %v2640, 0.0
  %v3435 = vadd.f32 %v3433, %v3434
  %v3436 = vrot.slane %v3435, 4
  %v3437 = vadd.f32 %v3435, %v3436
  %v3438 = vrot.slane %v3437, 2
  %v3439 = vadd.f32 %v3437, %v3438
  %v3440 = vrot.slane %v3439, 1
  %v3441 = vadd.f32 %v3439, %v3440
  %v3442 = vsel %vm3288, %v2680, 0.0
  %v3443 = vsel %vm3288, %v2683, 0.0
  %v3444 = vadd.f32 %v3442, %v3443
  %v3445 = vrot.slane %v3444, 4
  %v3446 = vadd.f32 %v3444, %v3445
  %v3447 = vrot.slane %v3446, 2
  %v3448 = vadd.f32 %v3446, %v3447
  %v3449 = vrot.slane %v3448, 1
  %v3450 = vadd.f32 %v3448, %v3449
  %v3451 = vsel %vm3288, %v2723, 0.0
  %v3452 = vsel %vm3288, %v2726, 0.0
  %v3453 = vadd.f32 %v3451, %v3452
  %v3454 = vrot.slane %v3453, 4
  %v3455 = vadd.f32 %v3453, %v3454
  %v3456 = vrot.slane %v3455, 2
  %v3457 = vadd.f32 %v3455, %v3456
  %v3458 = vrot.slane %v3457, 1
  %v3459 = vadd.f32 %v3457, %v3458
  %v3460 = vsel %vm3288, %v2766, 0.0
  %v3461 = vsel %vm3288, %v2769, 0.0
  %v3462 = vadd.f32 %v3460, %v3461
  %v3463 = vrot.slane %v3462, 4
  %v3464 = vadd.f32 %v3462, %v3463
  %v3465 = vrot.slane %v3464, 2
  %v3466 = vadd.f32 %v3464, %v3465
  %v3467 = vrot.slane %v3466, 1
  %v3468 = vadd.f32 %v3466, %v3467
  %v3469 = vsel %vm3288, %v2809, 0.0
  %v3470 = vsel %vm3288, %v2812, 0.0
  %v3471 = vadd.f32 %v3469, %v3470
  %v3472 = vrot.slane %v3471, 4
  %v3473 = vadd.f32 %v3471, %v3472
  %v3474 = vrot.slane %v3473, 2
  %v3475 = vadd.f32 %v3473, %v3474
  %v3476 = vrot.slane %v3475, 1
  %v3477 = vadd.f32 %v3475, %v3476
  %v3478 = vsel %vm3288, %v2852, 0.0
  %v3479 = vsel %vm3288, %v2855, 0.0
  %v3480 = vadd.f32 %v3478, %v3479
  %v3481 = vrot.slane %v3480, 4
  %v3482 = vadd.f32 %v3480, %v3481
  %v3483 = vrot.slane %v3482, 2
  %v3484 = vadd.f32 %v3482, %v3483
  %v3485 = vrot.slane %v3484, 1
  %v3486 = vadd.f32 %v3484, %v3485
  %v3487 = vsel %vm3288, %v2895, 0.0
  %v3488 = vsel %vm3288, %v2898, 0.0
  %v3489 = vadd.f32 %v3487, %v3488
  %v3490 = vrot.slane %v3489, 4
  %v3491 = vadd.f32 %v3489, %v3490
  %v3492 = vrot.slane %v3491, 2
  %v3493 = vadd.f32 %v3491, %v3492
  %v3494 = vrot.slane %v3493, 1
  %v3495 = vadd.f32 %v3493, %v3494
  %v3496 = vsel %vm3288, %v2938, 0.0
  %v3497 = vsel %vm3288, %v2941, 0.0
  %v3498 = vadd.f32 %v3496, %v3497
  %v3499 = vrot.slane %v3498, 4
  %v3500 = vadd.f32 %v3498, %v3499
  %v3501 = vrot.slane %v3500, 2
  %v3502 = vadd.f32 %v3500, %v3501
  %v3503 = vrot.slane %v3502, 1
  %v3504 = vadd.f32 %v3502, %v3503
  %v3505 = vsel %vm3288, %v2981, 0.0
  %v3506 = vsel %vm3288, %v2984, 0.0
  %v3507 = vadd.f32 %v3505, %v3506
  %v3508 = vrot.slane %v3507, 4
  %v3509 = vadd.f32 %v3507, %v3508
  %v3510 = vrot.slane %v3509, 2
  %v3511 = vadd.f32 %v3509, %v3510
  %v3512 = vrot.slane %v3511, 1
  %v3513 = vadd.f32 %v3511, %v3512
  %v3514 = vsel %vm3288, %v3024, 0.0
  %v3515 = vsel %vm3288, %v3027, 0.0
  %v3516 = vadd.f32 %v3514, %v3515
  %v3517 = vrot.slane %v3516, 4
  %v3518 = vadd.f32 %v3516, %v3517
  %v3519 = vrot.slane %v3518, 2
  %v3520 = vadd.f32 %v3518, %v3519
  %v3521 = vrot.slane %v3520, 1
  %v3522 = vadd.f32 %v3520, %v3521
  %v3523 = vsel %vm3288, %v3067, 0.0
  %v3524 = vsel %vm3288, %v3070, 0.0
  %v3525 = vadd.f32 %v3523, %v3524
  %v3526 = vrot.slane %v3525, 4
  %v3527 = vadd.f32 %v3525, %v3526
  %v3528 = vrot.slane %v3527, 2
  %v3529 = vadd.f32 %v3527, %v3528
  %v3530 = vrot.slane %v3529, 1
  %v3531 = vadd.f32 %v3529, %v3530
  %v3532 = vsel %vm3288, %v3110, 0.0
  %v3533 = vsel %vm3288, %v3113, 0.0
  %v3534 = vadd.f32 %v3532, %v3533
  %v3535 = vrot.slane %v3534, 4
  %v3536 = vadd.f32 %v3534, %v3535
  %v3537 = vrot.slane %v3536, 2
  %v3538 = vadd.f32 %v3536, %v3537
  %v3539 = vrot.slane %v3538, 1
  %v3540 = vadd.f32 %v3538, %v3539
  %v3541 = vsel %vm3288, %v3153, 0.0
  %v3542 = vsel %vm3288, %v3156, 0.0
  %v3543 = vadd.f32 %v3541, %v3542
  %v3544 = vrot.slane %v3543, 4
  %v3545 = vadd.f32 %v3543, %v3544
  %v3546 = vrot.slane %v3545, 2
  %v3547 = vadd.f32 %v3545, %v3546
  %v3548 = vrot.slane %v3547, 1
  %v3549 = vadd.f32 %v3547, %v3548
  %v3550 = vsel %vm3288, %v3196, 0.0
  %v3551 = vsel %vm3288, %v3199, 0.0
  %v3552 = vadd.f32 %v3550, %v3551
  %v3553 = vrot.slane %v3552, 4
  %v3554 = vadd.f32 %v3552, %v3553
  %v3555 = vrot.slane %v3554, 2
  %v3556 = vadd.f32 %v3554, %v3555
  %v3557 = vrot.slane %v3556, 1
  %v3558 = vadd.f32 %v3556, %v3557
  %v3559 = vsel %vm3288, %v3239, 0.0
  %v3560 = vsel %vm3288, %v3242, 0.0
  %v3561 = vadd.f32 %v3559, %v3560
  %v3562 = vrot.slane %v3561, 4
  %v3563 = vadd.f32 %v3561, %v3562
  %v3564 = vrot.slane %v3563, 2
  %v3565 = vadd.f32 %v3563, %v3564
  %v3566 = vrot.slane %v3565, 1
  %v3567 = vadd.f32 %v3565, %v3566
  %v3568 = vsel %vm3288, %v3282, 0.0
  %v3569 = vsel %vm3288, %v3285, 0.0
  %v3570 = vadd.f32 %v3568, %v3569
  %v3571 = vrot.slane %v3570, 4
  %v3572 = vadd.f32 %v3570, %v3571
  %v3573 = vrot.slane %v3572, 2
  %v3574 = vadd.f32 %v3572, %v3573
  %v3575 = vrot.slane %v3574, 1
  %v3576 = vadd.f32 %v3574, %v3575
  %v3577 = vsel %vm3288, %v3297, 0.0
  %v3578 = vsel %vm3288, %v3306, 0.0
  %v3579 = vadd.f32 %v3577, %v3578
  %v3580 = vsel %vm3288, %v3315, 0.0
  %v3581 = vadd.f32 %v3579, %v3580
  %v3582 = vsel %vm3288, %v3324, 0.0
  %v3583 = vadd.f32 %v3581, %v3582
  %v3584 = vsel %vm3288, %v3333, 0.0
  %v3585 = vadd.f32 %v3583, %v3584
  %v3586 = vsel %vm3288, %v3342, 0.0
  %v3587 = vadd.f32 %v3585, %v3586
  %v3588 = vsel %vm3288, %v3351, 0.0
  %v3589 = vadd.f32 %v3587, %v3588
  %v3590 = vsel %vm3288, %v3360, 0.0
  %v3591 = vadd.f32 %v3589, %v3590
  %v3592 = vsel %vm3288, %v3369, 0.0
  %v3593 = vadd.f32 %v3591, %v3592
  %v3594 = vsel %vm3288, %v3378, 0.0
  %v3595 = vadd.f32 %v3593, %v3594
  %v3596 = vsel %vm3288, %v3387, 0.0
  %v3597 = vadd.f32 %v3595, %v3596
  %v3598 = vsel %vm3288, %v3396, 0.0
  %v3599 = vadd.f32 %v3597, %v3598
  %v3600 = vsel %vm3288, %v3405, 0.0
  %v3601 = vadd.f32 %v3599, %v3600
  %v3602 = vsel %vm3288, %v3414, 0.0
  %v3603 = vadd.f32 %v3601, %v3602
  %v3604 = vsel %vm3288, %v3423, 0.0
  %v3605 = vadd.f32 %v3603, %v3604
  %v3606 = vsel %vm3288, %v3432, 0.0
  %v3607 = vadd.f32 %v3605, %v3606
  %v3608 = vsel %vm3288, %v3441, 0.0
  %v3609 = vadd.f32 %v3607, %v3608
  %v3610 = vsel %vm3288, %v3450, 0.0
  %v3611 = vadd.f32 %v3609, %v3610
  %v3612 = vsel %vm3288, %v3459, 0.0
  %v3613 = vadd.f32 %v3611, %v3612
  %v3614 = vsel %vm3288, %v3468, 0.0
  %v3615 = vadd.f32 %v3613, %v3614
  %v3616 = vsel %vm3288, %v3477, 0.0
  %v3617 = vadd.f32 %v3615, %v3616
  %v3618 = vsel %vm3288, %v3486, 0.0
  %v3619 = vadd.f32 %v3617, %v3618
  %v3620 = vsel %vm3288, %v3495, 0.0
  %v3621 = vadd.f32 %v3619, %v3620
  %v3622 = vsel %vm3288, %v3504, 0.0
  %v3623 = vadd.f32 %v3621, %v3622
  %v3624 = vsel %vm3288, %v3513, 0.0
  %v3625 = vadd.f32 %v3623, %v3624
  %v3626 = vsel %vm3288, %v3522, 0.0
  %v3627 = vadd.f32 %v3625, %v3626
  %v3628 = vsel %vm3288, %v3531, 0.0
  %v3629 = vadd.f32 %v3627, %v3628
  %v3630 = vsel %vm3288, %v3540, 0.0
  %v3631 = vadd.f32 %v3629, %v3630
  %v3632 = vsel %vm3288, %v3549, 0.0
  %v3633 = vadd.f32 %v3631, %v3632
  %v3634 = vsel %vm3288, %v3558, 0.0
  %v3635 = vadd.f32 %v3633, %v3634
  %v3636 = vsel %vm3288, %v3567, 0.0
  %v3637 = vadd.f32 %v3635, %v3636
  %v3638 = vsel %vm3288, %v3576, 0.0
  %v3639 = vadd.f32 %v3637, %v3638
  %v3640 = vrcp.pop 512.0
  %v3641 = vmul.f32 %v3639, %v3640
  %v3642 = vmul.f32 %v1949, %v1949
  %v3643 = vmul.f32 %v1952, %v1952
  %v3644 = vmul.f32 %v1992, %v1992
  %v3645 = vmul.f32 %v1995, %v1995
  %v3646 = vmul.f32 %v2035, %v2035
  %v3647 = vmul.f32 %v2038, %v2038
  %v3648 = vmul.f32 %v2078, %v2078
  %v3649 = vmul.f32 %v2081, %v2081
  %v3650 = vmul.f32 %v2121, %v2121
  %v3651 = vmul.f32 %v2124, %v2124
  %v3652 = vmul.f32 %v2164, %v2164
  %v3653 = vmul.f32 %v2167, %v2167
  %v3654 = vmul.f32 %v2207, %v2207
  %v3655 = vmul.f32 %v2210, %v2210
  %v3656 = vmul.f32 %v2250, %v2250
  %v3657 = vmul.f32 %v2253, %v2253
  %v3658 = vmul.f32 %v2293, %v2293
  %v3659 = vmul.f32 %v2296, %v2296
  %v3660 = vmul.f32 %v2336, %v2336
  %v3661 = vmul.f32 %v2339, %v2339
  %v3662 = vmul.f32 %v2379, %v2379
  %v3663 = vmul.f32 %v2382, %v2382
  %v3664 = vmul.f32 %v2422, %v2422
  %v3665 = vmul.f32 %v2425, %v2425
  %v3666 = vmul.f32 %v2465, %v2465
  %v3667 = vmul.f32 %v2468, %v2468
  %v3668 = vmul.f32 %v2508, %v2508
  %v3669 = vmul.f32 %v2511, %v2511
  %v3670 = vmul.f32 %v2551, %v2551
  %v3671 = vmul.f32 %v2554, %v2554
  %v3672 = vmul.f32 %v2594, %v2594
  %v3673 = vmul.f32 %v2597, %v2597
  %v3674 = vmul.f32 %v2637, %v2637
  %v3675 = vmul.f32 %v2640, %v2640
  %v3676 = vmul.f32 %v2680, %v2680
  %v3677 = vmul.f32 %v2683, %v2683
  %v3678 = vmul.f32 %v2723, %v2723
  %v3679 = vmul.f32 %v2726, %v2726
  %v3680 = vmul.f32 %v2766, %v2766
  %v3681 = vmul.f32 %v2769, %v2769
  %v3682 = vmul.f32 %v2809, %v2809
  %v3683 = vmul.f32 %v2812, %v2812
  %v3684 = vmul.f32 %v2852, %v2852
  %v3685 = vmul.f32 %v2855, %v2855
  %v3686 = vmul.f32 %v2895, %v2895
  %v3687 = vmul.f32 %v2898, %v2898
  %v3688 = vmul.f32 %v2938, %v2938
  %v3689 = vmul.f32 %v2941, %v2941
  %v3690 = vmul.f32 %v2981, %v2981
  %v3691 = vmul.f32 %v2984, %v2984
  %v3692 = vmul.f32 %v3024, %v3024
  %v3693 = vmul.f32 %v3027, %v3027
  %v3694 = vmul.f32 %v3067, %v3067
  %v3695 = vmul.f32 %v3070, %v3070
  %v3696 = vmul.f32 %v3110, %v3110
  %v3697 = vmul.f32 %v3113, %v3113
  %v3698 = vmul.f32 %v3153, %v3153
  %v3699 = vmul.f32 %v3156, %v3156
  %v3700 = vmul.f32 %v3196, %v3196
  %v3701 = vmul.f32 %v3199, %v3199
  %v3702 = vmul.f32 %v3239, %v3239
  %v3703 = vmul.f32 %v3242, %v3242
  %v3704 = vmul.f32 %v3282, %v3282
  %v3705 = vmul.f32 %v3285, %v3285
  %v3706 = vsel %vm3288, %v3642, 0.0
  %v3707 = vsel %vm3288, %v3643, 0.0
  %v3708 = vadd.f32 %v3706, %v3707
  %v3709 = vrot.slane %v3708, 4
  %v3710 = vadd.f32 %v3708, %v3709
  %v3711 = vrot.slane %v3710, 2
  %v3712 = vadd.f32 %v3710, %v3711
  %v3713 = vrot.slane %v3712, 1
  %v3714 = vadd.f32 %v3712, %v3713
  %v3715 = vsel %vm3288, %v3644, 0.0
  %v3716 = vsel %vm3288, %v3645, 0.0
  %v3717 = vadd.f32 %v3715, %v3716
  %v3718 = vrot.slane %v3717, 4
  %v3719 = vadd.f32 %v3717, %v3718
  %v3720 = vrot.slane %v3719, 2
  %v3721 = vadd.f32 %v3719, %v3720
  %v3722 = vrot.slane %v3721, 1
  %v3723 = vadd.f32 %v3721, %v3722
  %v3724 = vsel %vm3288, %v3646, 0.0
  %v3725 = vsel %vm3288, %v3647, 0.0
  %v3726 = vadd.f32 %v3724, %v3725
  %v3727 = vrot.slane %v3726, 4
  %v3728 = vadd.f32 %v3726, %v3727
  %v3729 = vrot.slane %v3728, 2
  %v3730 = vadd.f32 %v3728, %v3729
  %v3731 = vrot.slane %v3730, 1
  %v3732 = vadd.f32 %v3730, %v3731
  %v3733 = vsel %vm3288, %v3648, 0.0
  %v3734 = vsel %vm3288, %v3649, 0.0
  %v3735 = vadd.f32 %v3733, %v3734
  %v3736 = vrot.slane %v3735, 4
  %v3737 = vadd.f32 %v3735, %v3736
  %v3738 = vrot.slane %v3737, 2
  %v3739 = vadd.f32 %v3737, %v3738
  %v3740 = vrot.slane %v3739, 1
  %v3741 = vadd.f32 %v3739, %v3740
  %v3742 = vsel %vm3288, %v3650, 0.0
  %v3743 = vsel %vm3288, %v3651, 0.0
  %v3744 = vadd.f32 %v3742, %v3743
  %v3745 = vrot.slane %v3744, 4
  %v3746 = vadd.f32 %v3744, %v3745
  %v3747 = vrot.slane %v3746, 2
  %v3748 = vadd.f32 %v3746, %v3747
  %v3749 = vrot.slane %v3748, 1
  %v3750 = vadd.f32 %v3748, %v3749
  %v3751 = vsel %vm3288, %v3652, 0.0
  %v3752 = vsel %vm3288, %v3653, 0.0
  %v3753 = vadd.f32 %v3751, %v3752
  %v3754 = vrot.slane %v3753, 4
  %v3755 = vadd.f32 %v3753, %v3754
  %v3756 = vrot.slane %v3755, 2
  %v3757 = vadd.f32 %v3755, %v3756
  %v3758 = vrot.slane %v3757, 1
  %v3759 = vadd.f32 %v3757, %v3758
  %v3760 = vsel %vm3288, %v3654, 0.0
  %v3761 = vsel %vm3288, %v3655, 0.0
  %v3762 = vadd.f32 %v3760, %v3761
  %v3763 = vrot.slane %v3762, 4
  %v3764 = vadd.f32 %v3762, %v3763
  %v3765 = vrot.slane %v3764, 2
  %v3766 = vadd.f32 %v3764, %v3765
  %v3767 = vrot.slane %v3766, 1
  %v3768 = vadd.f32 %v3766, %v3767
  %v3769 = vsel %vm3288, %v3656, 0.0
  %v3770 = vsel %vm3288, %v3657, 0.0
  %v3771 = vadd.f32 %v3769, %v3770
  %v3772 = vrot.slane %v3771, 4
  %v3773 = vadd.f32 %v3771, %v3772
  %v3774 = vrot.slane %v3773, 2
  %v3775 = vadd.f32 %v3773, %v3774
  %v3776 = vrot.slane %v3775, 1
  %v3777 = vadd.f32 %v3775, %v3776
  %v3778 = vsel %vm3288, %v3658, 0.0
  %v3779 = vsel %vm3288, %v3659, 0.0
  %v3780 = vadd.f32 %v3778, %v3779
  %v3781 = vrot.slane %v3780, 4
  %v3782 = vadd.f32 %v3780, %v3781
  %v3783 = vrot.slane %v3782, 2
  %v3784 = vadd.f32 %v3782, %v3783
  %v3785 = vrot.slane %v3784, 1
  %v3786 = vadd.f32 %v3784, %v3785
  %v3787 = vsel %vm3288, %v3660, 0.0
  %v3788 = vsel %vm3288, %v3661, 0.0
  %v3789 = vadd.f32 %v3787, %v3788
  %v3790 = vrot.slane %v3789, 4
  %v3791 = vadd.f32 %v3789, %v3790
  %v3792 = vrot.slane %v3791, 2
  %v3793 = vadd.f32 %v3791, %v3792
  %v3794 = vrot.slane %v3793, 1
  %v3795 = vadd.f32 %v3793, %v3794
  %v3796 = vsel %vm3288, %v3662, 0.0
  %v3797 = vsel %vm3288, %v3663, 0.0
  %v3798 = vadd.f32 %v3796, %v3797
  %v3799 = vrot.slane %v3798, 4
  %v3800 = vadd.f32 %v3798, %v3799
  %v3801 = vrot.slane %v3800, 2
  %v3802 = vadd.f32 %v3800, %v3801
  %v3803 = vrot.slane %v3802, 1
  %v3804 = vadd.f32 %v3802, %v3803
  %v3805 = vsel %vm3288, %v3664, 0.0
  %v3806 = vsel %vm3288, %v3665, 0.0
  %v3807 = vadd.f32 %v3805, %v3806
  %v3808 = vrot.slane %v3807, 4
  %v3809 = vadd.f32 %v3807, %v3808
  %v3810 = vrot.slane %v3809, 2
  %v3811 = vadd.f32 %v3809, %v3810
  %v3812 = vrot.slane %v3811, 1
  %v3813 = vadd.f32 %v3811, %v3812
  %v3814 = vsel %vm3288, %v3666, 0.0
  %v3815 = vsel %vm3288, %v3667, 0.0
  %v3816 = vadd.f32 %v3814, %v3815
  %v3817 = vrot.slane %v3816, 4
  %v3818 = vadd.f32 %v3816, %v3817
  %v3819 = vrot.slane %v3818, 2
  %v3820 = vadd.f32 %v3818, %v3819
  %v3821 = vrot.slane %v3820, 1
  %v3822 = vadd.f32 %v3820, %v3821
  %v3823 = vsel %vm3288, %v3668, 0.0
  %v3824 = vsel %vm3288, %v3669, 0.0
  %v3825 = vadd.f32 %v3823, %v3824
  %v3826 = vrot.slane %v3825, 4
  %v3827 = vadd.f32 %v3825, %v3826
  %v3828 = vrot.slane %v3827, 2
  %v3829 = vadd.f32 %v3827, %v3828
  %v3830 = vrot.slane %v3829, 1
  %v3831 = vadd.f32 %v3829, %v3830
  %v3832 = vsel %vm3288, %v3670, 0.0
  %v3833 = vsel %vm3288, %v3671, 0.0
  %v3834 = vadd.f32 %v3832, %v3833
  %v3835 = vrot.slane %v3834, 4
  %v3836 = vadd.f32 %v3834, %v3835
  %v3837 = vrot.slane %v3836, 2
  %v3838 = vadd.f32 %v3836, %v3837
  %v3839 = vrot.slane %v3838, 1
  %v3840 = vadd.f32 %v3838, %v3839
  %v3841 = vsel %vm3288, %v3672, 0.0
  %v3842 = vsel %vm3288, %v3673, 0.0
  %v3843 = vadd.f32 %v3841, %v3842
  %v3844 = vrot.slane %v3843, 4
  %v3845 = vadd.f32 %v3843, %v3844
  %v3846 = vrot.slane %v3845, 2
  %v3847 = vadd.f32 %v3845, %v3846
  %v3848 = vrot.slane %v3847, 1
  %v3849 = vadd.f32 %v3847, %v3848
  %v3850 = vsel %vm3288, %v3674, 0.0
  %v3851 = vsel %vm3288, %v3675, 0.0
  %v3852 = vadd.f32 %v3850, %v3851
  %v3853 = vrot.slane %v3852, 4
  %v3854 = vadd.f32 %v3852, %v3853
  %v3855 = vrot.slane %v3854, 2
  %v3856 = vadd.f32 %v3854, %v3855
  %v3857 = vrot.slane %v3856, 1
  %v3858 = vadd.f32 %v3856, %v3857
  %v3859 = vsel %vm3288, %v3676, 0.0
  %v3860 = vsel %vm3288, %v3677, 0.0
  %v3861 = vadd.f32 %v3859, %v3860
  %v3862 = vrot.slane %v3861, 4
  %v3863 = vadd.f32 %v3861, %v3862
  %v3864 = vrot.slane %v3863, 2
  %v3865 = vadd.f32 %v3863, %v3864
  %v3866 = vrot.slane %v3865, 1
  %v3867 = vadd.f32 %v3865, %v3866
  %v3868 = vsel %vm3288, %v3678, 0.0
  %v3869 = vsel %vm3288, %v3679, 0.0
  %v3870 = vadd.f32 %v3868, %v3869
  %v3871 = vrot.slane %v3870, 4
  %v3872 = vadd.f32 %v3870, %v3871
  %v3873 = vrot.slane %v3872, 2
  %v3874 = vadd.f32 %v3872, %v3873
  %v3875 = vrot.slane %v3874, 1
  %v3876 = vadd.f32 %v3874, %v3875
  %v3877 = vsel %vm3288, %v3680, 0.0
  %v3878 = vsel %vm3288, %v3681, 0.0
  %v3879 = vadd.f32 %v3877, %v3878
  %v3880 = vrot.slane %v3879, 4
  %v3881 = vadd.f32 %v3879, %v3880
  %v3882 = vrot.slane %v3881, 2
  %v3883 = vadd.f32 %v3881, %v3882
  %v3884 = vrot.slane %v3883, 1
  %v3885 = vadd.f32 %v3883, %v3884
  %v3886 = vsel %vm3288, %v3682, 0.0
  %v3887 = vsel %vm3288, %v3683, 0.0
  %v3888 = vadd.f32 %v3886, %v3887
  %v3889 = vrot.slane %v3888, 4
  %v3890 = vadd.f32 %v3888, %v3889
  %v3891 = vrot.slane %v3890, 2
  %v3892 = vadd.f32 %v3890, %v3891
  %v3893 = vrot.slane %v3892, 1
  %v3894 = vadd.f32 %v3892, %v3893
  %v3895 = vsel %vm3288, %v3684, 0.0
  %v3896 = vsel %vm3288, %v3685, 0.0
  %v3897 = vadd.f32 %v3895, %v3896
  %v3898 = vrot.slane %v3897, 4
  %v3899 = vadd.f32 %v3897, %v3898
  %v3900 = vrot.slane %v3899, 2
  %v3901 = vadd.f32 %v3899, %v3900
  %v3902 = vrot.slane %v3901, 1
  %v3903 = vadd.f32 %v3901, %v3902
  %v3904 = vsel %vm3288, %v3686, 0.0
  %v3905 = vsel %vm3288, %v3687, 0.0
  %v3906 = vadd.f32 %v3904, %v3905
  %v3907 = vrot.slane %v3906, 4
  %v3908 = vadd.f32 %v3906, %v3907
  %v3909 = vrot.slane %v3908, 2
  %v3910 = vadd.f32 %v3908, %v3909
  %v3911 = vrot.slane %v3910, 1
  %v3912 = vadd.f32 %v3910, %v3911
  %v3913 = vsel %vm3288, %v3688, 0.0
  %v3914 = vsel %vm3288, %v3689, 0.0
  %v3915 = vadd.f32 %v3913, %v3914
  %v3916 = vrot.slane %v3915, 4
  %v3917 = vadd.f32 %v3915, %v3916
  %v3918 = vrot.slane %v3917, 2
  %v3919 = vadd.f32 %v3917, %v3918
  %v3920 = vrot.slane %v3919, 1
  %v3921 = vadd.f32 %v3919, %v3920
  %v3922 = vsel %vm3288, %v3690, 0.0
  %v3923 = vsel %vm3288, %v3691, 0.0
  %v3924 = vadd.f32 %v3922, %v3923
  %v3925 = vrot.slane %v3924, 4
  %v3926 = vadd.f32 %v3924, %v3925
  %v3927 = vrot.slane %v3926, 2
  %v3928 = vadd.f32 %v3926, %v3927
  %v3929 = vrot.slane %v3928, 1
  %v3930 = vadd.f32 %v3928, %v3929
  %v3931 = vsel %vm3288, %v3692, 0.0
  %v3932 = vsel %vm3288, %v3693, 0.0
  %v3933 = vadd.f32 %v3931, %v3932
  %v3934 = vrot.slane %v3933, 4
  %v3935 = vadd.f32 %v3933, %v3934
  %v3936 = vrot.slane %v3935, 2
  %v3937 = vadd.f32 %v3935, %v3936
  %v3938 = vrot.slane %v3937, 1
  %v3939 = vadd.f32 %v3937, %v3938
  %v3940 = vsel %vm3288, %v3694, 0.0
  %v3941 = vsel %vm3288, %v3695, 0.0
  %v3942 = vadd.f32 %v3940, %v3941
  %v3943 = vrot.slane %v3942, 4
  %v3944 = vadd.f32 %v3942, %v3943
  %v3945 = vrot.slane %v3944, 2
  %v3946 = vadd.f32 %v3944, %v3945
  %v3947 = vrot.slane %v3946, 1
  %v3948 = vadd.f32 %v3946, %v3947
  %v3949 = vsel %vm3288, %v3696, 0.0
  %v3950 = vsel %vm3288, %v3697, 0.0
  %v3951 = vadd.f32 %v3949, %v3950
  %v3952 = vrot.slane %v3951, 4
  %v3953 = vadd.f32 %v3951, %v3952
  %v3954 = vrot.slane %v3953, 2
  %v3955 = vadd.f32 %v3953, %v3954
  %v3956 = vrot.slane %v3955, 1
  %v3957 = vadd.f32 %v3955, %v3956
  %v3958 = vsel %vm3288, %v3698, 0.0
  %v3959 = vsel %vm3288, %v3699, 0.0
  %v3960 = vadd.f32 %v3958, %v3959
  %v3961 = vrot.slane %v3960, 4
  %v3962 = vadd.f32 %v3960, %v3961
  %v3963 = vrot.slane %v3962, 2
  %v3964 = vadd.f32 %v3962, %v3963
  %v3965 = vrot.slane %v3964, 1
  %v3966 = vadd.f32 %v3964, %v3965
  %v3967 = vsel %vm3288, %v3700, 0.0
  %v3968 = vsel %vm3288, %v3701, 0.0
  %v3969 = vadd.f32 %v3967, %v3968
  %v3970 = vrot.slane %v3969, 4
  %v3971 = vadd.f32 %v3969, %v3970
  %v3972 = vrot.slane %v3971, 2
  %v3973 = vadd.f32 %v3971, %v3972
  %v3974 = vrot.slane %v3973, 1
  %v3975 = vadd.f32 %v3973, %v3974
  %v3976 = vsel %vm3288, %v3702, 0.0
  %v3977 = vsel %vm3288, %v3703, 0.0
  %v3978 = vadd.f32 %v3976, %v3977
  %v3979 = vrot.slane %v3978, 4
  %v3980 = vadd.f32 %v3978, %v3979
  %v3981 = vrot.slane %v3980, 2
  %v3982 = vadd.f32 %v3980, %v3981
  %v3983 = vrot.slane %v3982, 1
  %v3984 = vadd.f32 %v3982, %v3983
  %v3985 = vsel %vm3288, %v3704, 0.0
  %v3986 = vsel %vm3288, %v3705, 0.0
  %v3987 = vadd.f32 %v3985, %v3986
  %v3988 = vrot.slane %v3987, 4
  %v3989 = vadd.f32 %v3987, %v3988
  %v3990 = vrot.slane %v3989, 2
  %v3991 = vadd.f32 %v3989, %v3990
  %v3992 = vrot.slane %v3991, 1
  %v3993 = vadd.f32 %v3991, %v3992
  %v3994 = vsel %vm3288, %v3714, 0.0
  %v3995 = vsel %vm3288, %v3723, 0.0
  %v3996 = vadd.f32 %v3994, %v3995
  %v3997 = vsel %vm3288, %v3732, 0.0
  %v3998 = vadd.f32 %v3996, %v3997
  %v3999 = vsel %vm3288, %v3741, 0.0
  %v4000 = vadd.f32 %v3998, %v3999
  %v4001 = vsel %vm3288, %v3750, 0.0
  %v4002 = vadd.f32 %v4000, %v4001
  %v4003 = vsel %vm3288, %v3759, 0.0
  %v4004 = vadd.f32 %v4002, %v4003
  %v4005 = vsel %vm3288, %v3768, 0.0
  %v4006 = vadd.f32 %v4004, %v4005
  %v4007 = vsel %vm3288, %v3777, 0.0
  %v4008 = vadd.f32 %v4006, %v4007
  %v4009 = vsel %vm3288, %v3786, 0.0
  %v4010 = vadd.f32 %v4008, %v4009
  %v4011 = vsel %vm3288, %v3795, 0.0
  %v4012 = vadd.f32 %v4010, %v4011
  %v4013 = vsel %vm3288, %v3804, 0.0
  %v4014 = vadd.f32 %v4012, %v4013
  %v4015 = vsel %vm3288, %v3813, 0.0
  %v4016 = vadd.f32 %v4014, %v4015
  %v4017 = vsel %vm3288, %v3822, 0.0
  %v4018 = vadd.f32 %v4016, %v4017
  %v4019 = vsel %vm3288, %v3831, 0.0
  %v4020 = vadd.f32 %v4018, %v4019
  %v4021 = vsel %vm3288, %v3840, 0.0
  %v4022 = vadd.f32 %v4020, %v4021
  %v4023 = vsel %vm3288, %v3849, 0.0
  %v4024 = vadd.f32 %v4022, %v4023
  %v4025 = vsel %vm3288, %v3858, 0.0
  %v4026 = vadd.f32 %v4024, %v4025
  %v4027 = vsel %vm3288, %v3867, 0.0
  %v4028 = vadd.f32 %v4026, %v4027
  %v4029 = vsel %vm3288, %v3876, 0.0
  %v4030 = vadd.f32 %v4028, %v4029
  %v4031 = vsel %vm3288, %v3885, 0.0
  %v4032 = vadd.f32 %v4030, %v4031
  %v4033 = vsel %vm3288, %v3894, 0.0
  %v4034 = vadd.f32 %v4032, %v4033
  %v4035 = vsel %vm3288, %v3903, 0.0
  %v4036 = vadd.f32 %v4034, %v4035
  %v4037 = vsel %vm3288, %v3912, 0.0
  %v4038 = vadd.f32 %v4036, %v4037
  %v4039 = vsel %vm3288, %v3921, 0.0
  %v4040 = vadd.f32 %v4038, %v4039
  %v4041 = vsel %vm3288, %v3930, 0.0
  %v4042 = vadd.f32 %v4040, %v4041
  %v4043 = vsel %vm3288, %v3939, 0.0
  %v4044 = vadd.f32 %v4042, %v4043
  %v4045 = vsel %vm3288, %v3948, 0.0
  %v4046 = vadd.f32 %v4044, %v4045
  %v4047 = vsel %vm3288, %v3957, 0.0
  %v4048 = vadd.f32 %v4046, %v4047
  %v4049 = vsel %vm3288, %v3966, 0.0
  %v4050 = vadd.f32 %v4048, %v4049
  %v4051 = vsel %vm3288, %v3975, 0.0
  %v4052 = vadd.f32 %v4050, %v4051
  %v4053 = vsel %vm3288, %v3984, 0.0
  %v4054 = vadd.f32 %v4052, %v4053
  %v4055 = vsel %vm3288, %v3993, 0.0
  %v4056 = vadd.f32 %v4054, %v4055
  %v4057 = vmul.f32 %v4056, %v3640
  %v4058 = vmul.f32 %v3641, %v3641
  %v4059 = vsub.f32 %v4057, %v4058
  %v4060 = vmax.f32 %v4059, 0.0
  %v4061 = vld [vmem:[%s2] sm:$0x1]
  %v4062 = vadd.f32 %v4060, 1e-05
  %v4063 = vrsqrt.pop %v4062
  %v4064 = vmul.f32 %v4061, %v4063
  %v4065 = vld [vmem:[%s3] sm:$0x1]
  %v4066 = vmul.f32 %v3641, %v4064
  %v4067 = vsub.f32 %v4065, %v4066
  %v4069 = vlaneseq
  %v4070 = vshrl.u32 %v4069, 7
  %v4071 = vsub.s32 0, %v4070
  %v4072 = vrot.slane %v4064, %v4071
  %v4074 = vmul.f32 %v1949, %v4072
  %v4075 = vmul.f32 %v1952, %v4072
  %v4076 = vmul.f32 %v1992, %v4072
  %v4077 = vmul.f32 %v1995, %v4072
  %v4078 = vmul.f32 %v2035, %v4072
  %v4079 = vmul.f32 %v2038, %v4072
  %v4080 = vmul.f32 %v2078, %v4072
  %v4081 = vmul.f32 %v2081, %v4072
  %v4082 = vmul.f32 %v2121, %v4072
  %v4083 = vmul.f32 %v2124, %v4072
  %v4084 = vmul.f32 %v2164, %v4072
  %v4085 = vmul.f32 %v2167, %v4072
  %v4086 = vmul.f32 %v2207, %v4072
  %v4087 = vmul.f32 %v2210, %v4072
  %v4088 = vmul.f32 %v2250, %v4072
  %v4089 = vmul.f32 %v2253, %v4072
  %v4090 = vmul.f32 %v2293, %v4072
  %v4091 = vmul.f32 %v2296, %v4072
  %v4092 = vmul.f32 %v2336, %v4072
  %v4093 = vmul.f32 %v2339, %v4072
  %v4094 = vmul.f32 %v2379, %v4072
  %v4095 = vmul.f32 %v2382, %v4072
  %v4096 = vmul.f32 %v2422, %v4072
  %v4097 = vmul.f32 %v2425, %v4072
  %v4098 = vmul.f32 %v2465, %v4072
  %v4099 = vmul.f32 %v2468, %v4072
  %v4100 = vmul.f32 %v2508, %v4072
  %v4101 = vmul.f32 %v2511, %v4072
  %v4102 = vmul.f32 %v2551, %v4072
  %v4103 = vmul.f32 %v2554, %v4072
  %v4104 = vmul.f32 %v2594, %v4072
  %v4105 = vmul.f32 %v2597, %v4072
  %v4106 = vmul.f32 %v2637, %v4072
  %v4107 = vmul.f32 %v2640, %v4072
  %v4108 = vmul.f32 %v2680, %v4072
  %v4109 = vmul.f32 %v2683, %v4072
  %v4110 = vmul.f32 %v2723, %v4072
  %v4111 = vmul.f32 %v2726, %v4072
  %v4112 = vmul.f32 %v2766, %v4072
  %v4113 = vmul.f32 %v2769, %v4072
  %v4114 = vmul.f32 %v2809, %v4072
  %v4115 = vmul.f32 %v2812, %v4072
  %v4116 = vmul.f32 %v2852, %v4072
  %v4117 = vmul.f32 %v2855, %v4072
  %v4118 = vmul.f32 %v2895, %v4072
  %v4119 = vmul.f32 %v2898, %v4072
  %v4120 = vmul.f32 %v2938, %v4072
  %v4121 = vmul.f32 %v2941, %v4072
  %v4122 = vmul.f32 %v2981, %v4072
  %v4123 = vmul.f32 %v2984, %v4072
  %v4124 = vmul.f32 %v3024, %v4072
  %v4125 = vmul.f32 %v3027, %v4072
  %v4126 = vmul.f32 %v3067, %v4072
  %v4127 = vmul.f32 %v3070, %v4072
  %v4128 = vmul.f32 %v3110, %v4072
  %v4129 = vmul.f32 %v3113, %v4072
  %v4130 = vmul.f32 %v3153, %v4072
  %v4131 = vmul.f32 %v3156, %v4072
  %v4132 = vmul.f32 %v3196, %v4072
  %v4133 = vmul.f32 %v3199, %v4072
  %v4134 = vmul.f32 %v3239, %v4072
  %v4135 = vmul.f32 %v3242, %v4072
  %v4136 = vmul.f32 %v3282, %v4072
  %v4137 = vmul.f32 %v3285, %v4072
  %v4139 = vlaneseq
  %v4140 = vshrl.u32 %v4139, 7
  %v4141 = vsub.s32 0, %v4140
  %v4142 = vrot.slane %v4067, %v4141
  %v4144 = vadd.f32 %v4074, %v4142
  %v4145 = vadd.f32 %v4075, %v4142
  %v4146 = vadd.f32 %v4076, %v4142
  %v4147 = vadd.f32 %v4077, %v4142
  %v4148 = vadd.f32 %v4078, %v4142
  %v4149 = vadd.f32 %v4079, %v4142
  %v4150 = vadd.f32 %v4080, %v4142
  %v4151 = vadd.f32 %v4081, %v4142
  %v4152 = vadd.f32 %v4082, %v4142
  %v4153 = vadd.f32 %v4083, %v4142
  %v4154 = vadd.f32 %v4084, %v4142
  %v4155 = vadd.f32 %v4085, %v4142
  %v4156 = vadd.f32 %v4086, %v4142
  %v4157 = vadd.f32 %v4087, %v4142
  %v4158 = vadd.f32 %v4088, %v4142
  %v4159 = vadd.f32 %v4089, %v4142
  %v4160 = vadd.f32 %v4090, %v4142
  %v4161 = vadd.f32 %v4091, %v4142
  %v4162 = vadd.f32 %v4092, %v4142
  %v4163 = vadd.f32 %v4093, %v4142
  %v4164 = vadd.f32 %v4094, %v4142
  %v4165 = vadd.f32 %v4095, %v4142
  %v4166 = vadd.f32 %v4096, %v4142
  %v4167 = vadd.f32 %v4097, %v4142
  %v4168 = vadd.f32 %v4098, %v4142
  %v4169 = vadd.f32 %v4099, %v4142
  %v4170 = vadd.f32 %v4100, %v4142
  %v4171 = vadd.f32 %v4101, %v4142
  %v4172 = vadd.f32 %v4102, %v4142
  %v4173 = vadd.f32 %v4103, %v4142
  %v4174 = vadd.f32 %v4104, %v4142
  %v4175 = vadd.f32 %v4105, %v4142
  %v4176 = vadd.f32 %v4106, %v4142
  %v4177 = vadd.f32 %v4107, %v4142
  %v4178 = vadd.f32 %v4108, %v4142
  %v4179 = vadd.f32 %v4109, %v4142
  %v4180 = vadd.f32 %v4110, %v4142
  %v4181 = vadd.f32 %v4111, %v4142
  %v4182 = vadd.f32 %v4112, %v4142
  %v4183 = vadd.f32 %v4113, %v4142
  %v4184 = vadd.f32 %v4114, %v4142
  %v4185 = vadd.f32 %v4115, %v4142
  %v4186 = vadd.f32 %v4116, %v4142
  %v4187 = vadd.f32 %v4117, %v4142
  %v4188 = vadd.f32 %v4118, %v4142
  %v4189 = vadd.f32 %v4119, %v4142
  %v4190 = vadd.f32 %v4120, %v4142
  %v4191 = vadd.f32 %v4121, %v4142
  %v4192 = vadd.f32 %v4122, %v4142
  %v4193 = vadd.f32 %v4123, %v4142
  %v4194 = vadd.f32 %v4124, %v4142
  %v4195 = vadd.f32 %v4125, %v4142
  %v4196 = vadd.f32 %v4126, %v4142
  %v4197 = vadd.f32 %v4127, %v4142
  %v4198 = vadd.f32 %v4128, %v4142
  %v4199 = vadd.f32 %v4129, %v4142
  %v4200 = vadd.f32 %v4130, %v4142
  %v4201 = vadd.f32 %v4131, %v4142
  %v4202 = vadd.f32 %v4132, %v4142
  %v4203 = vadd.f32 %v4133, %v4142
  %v4204 = vadd.f32 %v4134, %v4142
  %v4205 = vadd.f32 %v4135, %v4142
  %v4206 = vadd.f32 %v4136, %v4142
  %v4207 = vadd.f32 %v4137, %v4142
  %vm4208 = vcmp.ge.f32.partialorder %v4144, 0.0
  %vm4209 = vcmp.ge.f32.partialorder %v4145, 0.0
  %vm4210 = vcmp.ge.f32.partialorder %v4146, 0.0
  %vm4211 = vcmp.ge.f32.partialorder %v4147, 0.0
  %vm4212 = vcmp.ge.f32.partialorder %v4148, 0.0
  %vm4213 = vcmp.ge.f32.partialorder %v4149, 0.0
  %vm4214 = vcmp.ge.f32.partialorder %v4150, 0.0
  %vm4215 = vcmp.ge.f32.partialorder %v4151, 0.0
  %vm4216 = vcmp.ge.f32.partialorder %v4152, 0.0
  %vm4217 = vcmp.ge.f32.partialorder %v4153, 0.0
  %vm4218 = vcmp.ge.f32.partialorder %v4154, 0.0
  %vm4219 = vcmp.ge.f32.partialorder %v4155, 0.0
  %vm4220 = vcmp.ge.f32.partialorder %v4156, 0.0
  %vm4221 = vcmp.ge.f32.partialorder %v4157, 0.0
  %vm4222 = vcmp.ge.f32.partialorder %v4158, 0.0
  %vm4223 = vcmp.ge.f32.partialorder %v4159, 0.0
  %vm4224 = vcmp.ge.f32.partialorder %v4160, 0.0
  %vm4225 = vcmp.ge.f32.partialorder %v4161, 0.0
  %vm4226 = vcmp.ge.f32.partialorder %v4162, 0.0
  %vm4227 = vcmp.ge.f32.partialorder %v4163, 0.0
  %vm4228 = vcmp.ge.f32.partialorder %v4164, 0.0
  %vm4229 = vcmp.ge.f32.partialorder %v4165, 0.0
  %vm4230 = vcmp.ge.f32.partialorder %v4166, 0.0
  %vm4231 = vcmp.ge.f32.partialorder %v4167, 0.0
  %vm4232 = vcmp.ge.f32.partialorder %v4168, 0.0
  %vm4233 = vcmp.ge.f32.partialorder %v4169, 0.0
  %vm4234 = vcmp.ge.f32.partialorder %v4170, 0.0
  %vm4235 = vcmp.ge.f32.partialorder %v4171, 0.0
  %vm4236 = vcmp.ge.f32.partialorder %v4172, 0.0
  %vm4237 = vcmp.ge.f32.partialorder %v4173, 0.0
  %vm4238 = vcmp.ge.f32.partialorder %v4174, 0.0
  %vm4239 = vcmp.ge.f32.partialorder %v4175, 0.0
  %vm4240 = vcmp.ge.f32.partialorder %v4176, 0.0
  %vm4241 = vcmp.ge.f32.partialorder %v4177, 0.0
  %vm4242 = vcmp.ge.f32.partialorder %v4178, 0.0
  %vm4243 = vcmp.ge.f32.partialorder %v4179, 0.0
  %vm4244 = vcmp.ge.f32.partialorder %v4180, 0.0
  %vm4245 = vcmp.ge.f32.partialorder %v4181, 0.0
  %vm4246 = vcmp.ge.f32.partialorder %v4182, 0.0
  %vm4247 = vcmp.ge.f32.partialorder %v4183, 0.0
  %vm4248 = vcmp.ge.f32.partialorder %v4184, 0.0
  %vm4249 = vcmp.ge.f32.partialorder %v4185, 0.0
  %vm4250 = vcmp.ge.f32.partialorder %v4186, 0.0
  %vm4251 = vcmp.ge.f32.partialorder %v4187, 0.0
  %vm4252 = vcmp.ge.f32.partialorder %v4188, 0.0
  %vm4253 = vcmp.ge.f32.partialorder %v4189, 0.0
  %vm4254 = vcmp.ge.f32.partialorder %v4190, 0.0
  %vm4255 = vcmp.ge.f32.partialorder %v4191, 0.0
  %vm4256 = vcmp.ge.f32.partialorder %v4192, 0.0
  %vm4257 = vcmp.ge.f32.partialorder %v4193, 0.0
  %vm4258 = vcmp.ge.f32.partialorder %v4194, 0.0
  %vm4259 = vcmp.ge.f32.partialorder %v4195, 0.0
  %vm4260 = vcmp.ge.f32.partialorder %v4196, 0.0
  %vm4261 = vcmp.ge.f32.partialorder %v4197, 0.0
  %vm4262 = vcmp.ge.f32.partialorder %v4198, 0.0
  %vm4263 = vcmp.ge.f32.partialorder %v4199, 0.0
  %vm4264 = vcmp.ge.f32.partialorder %v4200, 0.0
  %vm4265 = vcmp.ge.f32.partialorder %v4201, 0.0
  %vm4266 = vcmp.ge.f32.partialorder %v4202, 0.0
  %vm4267 = vcmp.ge.f32.partialorder %v4203, 0.0
  %vm4268 = vcmp.ge.f32.partialorder %v4204, 0.0
  %vm4269 = vcmp.ge.f32.partialorder %v4205, 0.0
  %vm4270 = vcmp.ge.f32.partialorder %v4206, 0.0
  %vm4271 = vcmp.ge.f32.partialorder %v4207, 0.0
  %v4272 = vmul.f32 %v4144, 0.2
  %v4273 = vmul.f32 %v4145, 0.2
  %v4274 = vmul.f32 %v4146, 0.2
  %v4275 = vmul.f32 %v4147, 0.2
  %v4276 = vmul.f32 %v4148, 0.2
  %v4277 = vmul.f32 %v4149, 0.2
  %v4278 = vmul.f32 %v4150, 0.2
  %v4279 = vmul.f32 %v4151, 0.2
  %v4280 = vmul.f32 %v4152, 0.2
  %v4281 = vmul.f32 %v4153, 0.2
  %v4282 = vmul.f32 %v4154, 0.2
  %v4283 = vmul.f32 %v4155, 0.2
  %v4284 = vmul.f32 %v4156, 0.2
  %v4285 = vmul.f32 %v4157, 0.2
  %v4286 = vmul.f32 %v4158, 0.2
  %v4287 = vmul.f32 %v4159, 0.2
  %v4288 = vmul.f32 %v4160, 0.2
  %v4289 = vmul.f32 %v4161, 0.2
  %v4290 = vmul.f32 %v4162, 0.2
  %v4291 = vmul.f32 %v4163, 0.2
  %v4292 = vmul.f32 %v4164, 0.2
  %v4293 = vmul.f32 %v4165, 0.2
  %v4294 = vmul.f32 %v4166, 0.2
  %v4295 = vmul.f32 %v4167, 0.2
  %v4296 = vmul.f32 %v4168, 0.2
  %v4297 = vmul.f32 %v4169, 0.2
  %v4298 = vmul.f32 %v4170, 0.2
  %v4299 = vmul.f32 %v4171, 0.2
  %v4300 = vmul.f32 %v4172, 0.2
  %v4301 = vmul.f32 %v4173, 0.2
  %v4302 = vmul.f32 %v4174, 0.2
  %v4303 = vmul.f32 %v4175, 0.2
  %v4304 = vmul.f32 %v4176, 0.2
  %v4305 = vmul.f32 %v4177, 0.2
  %v4306 = vmul.f32 %v4178, 0.2
  %v4307 = vmul.f32 %v4179, 0.2
  %v4308 = vmul.f32 %v4180, 0.2
  %v4309 = vmul.f32 %v4181, 0.2
  %v4310 = vmul.f32 %v4182, 0.2
  %v4311 = vmul.f32 %v4183, 0.2
  %v4312 = vmul.f32 %v4184, 0.2
  %v4313 = vmul.f32 %v4185, 0.2
  %v4314 = vmul.f32 %v4186, 0.2
  %v4315 = vmul.f32 %v4187, 0.2
  %v4316 = vmul.f32 %v4188, 0.2
  %v4317 = vmul.f32 %v4189, 0.2
  %v4318 = vmul.f32 %v4190, 0.2
  %v4319 = vmul.f32 %v4191, 0.2
  %v4320 = vmul.f32 %v4192, 0.2
  %v4321 = vmul.f32 %v4193, 0.2
  %v4322 = vmul.f32 %v4194, 0.2
  %v4323 = vmul.f32 %v4195, 0.2
  %v4324 = vmul.f32 %v4196, 0.2
  %v4325 = vmul.f32 %v4197, 0.2
  %v4326 = vmul.f32 %v4198, 0.2
  %v4327 = vmul.f32 %v4199, 0.2
  %v4328 = vmul.f32 %v4200, 0.2
  %v4329 = vmul.f32 %v4201, 0.2
  %v4330 = vmul.f32 %v4202, 0.2
  %v4331 = vmul.f32 %v4203, 0.2
  %v4332 = vmul.f32 %v4204, 0.2
  %v4333 = vmul.f32 %v4205, 0.2
  %v4334 = vmul.f32 %v4206, 0.2
  %v4335 = vmul.f32 %v4207, 0.2
  %v4336 = vsel %vm4208, %v4144, %v4272
  %v4337 = vsel %vm4209, %v4145, %v4273
  %v4338 = vsel %vm4210, %v4146, %v4274
  %v4339 = vsel %vm4211, %v4147, %v4275
  %v4340 = vsel %vm4212, %v4148, %v4276
  %v4341 = vsel %vm4213, %v4149, %v4277
  %v4342 = vsel %vm4214, %v4150, %v4278
  %v4343 = vsel %vm4215, %v4151, %v4279
  %v4344 = vsel %vm4216, %v4152, %v4280
  %v4345 = vsel %vm4217, %v4153, %v4281
  %v4346 = vsel %vm4218, %v4154, %v4282
  %v4347 = vsel %vm4219, %v4155, %v4283
  %v4348 = vsel %vm4220, %v4156, %v4284
  %v4349 = vsel %vm4221, %v4157, %v4285
  %v4350 = vsel %vm4222, %v4158, %v4286
  %v4351 = vsel %vm4223, %v4159, %v4287
  %v4352 = vsel %vm4224, %v4160, %v4288
  %v4353 = vsel %vm4225, %v4161, %v4289
  %v4354 = vsel %vm4226, %v4162, %v4290
  %v4355 = vsel %vm4227, %v4163, %v4291
  %v4356 = vsel %vm4228, %v4164, %v4292
  %v4357 = vsel %vm4229, %v4165, %v4293
  %v4358 = vsel %vm4230, %v4166, %v4294
  %v4359 = vsel %vm4231, %v4167, %v4295
  %v4360 = vsel %vm4232, %v4168, %v4296
  %v4361 = vsel %vm4233, %v4169, %v4297
  %v4362 = vsel %vm4234, %v4170, %v4298
  %v4363 = vsel %vm4235, %v4171, %v4299
  %v4364 = vsel %vm4236, %v4172, %v4300
  %v4365 = vsel %vm4237, %v4173, %v4301
  %v4366 = vsel %vm4238, %v4174, %v4302
  %v4367 = vsel %vm4239, %v4175, %v4303
  %v4368 = vsel %vm4240, %v4176, %v4304
  %v4369 = vsel %vm4241, %v4177, %v4305
  %v4370 = vsel %vm4242, %v4178, %v4306
  %v4371 = vsel %vm4243, %v4179, %v4307
  %v4372 = vsel %vm4244, %v4180, %v4308
  %v4373 = vsel %vm4245, %v4181, %v4309
  %v4374 = vsel %vm4246, %v4182, %v4310
  %v4375 = vsel %vm4247, %v4183, %v4311
  %v4376 = vsel %vm4248, %v4184, %v4312
  %v4377 = vsel %vm4249, %v4185, %v4313
  %v4378 = vsel %vm4250, %v4186, %v4314
  %v4379 = vsel %vm4251, %v4187, %v4315
  %v4380 = vsel %vm4252, %v4188, %v4316
  %v4381 = vsel %vm4253, %v4189, %v4317
  %v4382 = vsel %vm4254, %v4190, %v4318
  %v4383 = vsel %vm4255, %v4191, %v4319
  %v4384 = vsel %vm4256, %v4192, %v4320
  %v4385 = vsel %vm4257, %v4193, %v4321
  %v4386 = vsel %vm4258, %v4194, %v4322
  %v4387 = vsel %vm4259, %v4195, %v4323
  %v4388 = vsel %vm4260, %v4196, %v4324
  %v4389 = vsel %vm4261, %v4197, %v4325
  %v4390 = vsel %vm4262, %v4198, %v4326
  %v4391 = vsel %vm4263, %v4199, %v4327
  %v4392 = vsel %vm4264, %v4200, %v4328
  %v4393 = vsel %vm4265, %v4201, %v4329
  %v4394 = vsel %vm4266, %v4202, %v4330
  %v4395 = vsel %vm4267, %v4203, %v4331
  %v4396 = vsel %vm4268, %v4204, %v4332
  %v4397 = vsel %vm4269, %v4205, %v4333
  %v4398 = vsel %vm4270, %v4206, %v4334
  %v4399 = vsel %vm4271, %v4207, %v4335
  %v4400 = vpack.c.bf16 %v4337, %v4336
  %v4401 = vpack.c.bf16 %v4339, %v4338
  %v4402 = vpack.c.bf16 %v4341, %v4340
  %v4403 = vpack.c.bf16 %v4343, %v4342
  %v4404 = vpack.c.bf16 %v4345, %v4344
  %v4405 = vpack.c.bf16 %v4347, %v4346
  %v4406 = vpack.c.bf16 %v4349, %v4348
  %v4407 = vpack.c.bf16 %v4351, %v4350
  %v4408 = vpack.c.bf16 %v4353, %v4352
  %v4409 = vpack.c.bf16 %v4355, %v4354
  %v4410 = vpack.c.bf16 %v4357, %v4356
  %v4411 = vpack.c.bf16 %v4359, %v4358
  %v4412 = vpack.c.bf16 %v4361, %v4360
  %v4413 = vpack.c.bf16 %v4363, %v4362
  %v4414 = vpack.c.bf16 %v4365, %v4364
  %v4415 = vpack.c.bf16 %v4367, %v4366
  %v4416 = vpack.c.bf16 %v4369, %v4368
  %v4417 = vpack.c.bf16 %v4371, %v4370
  %v4418 = vpack.c.bf16 %v4373, %v4372
  %v4419 = vpack.c.bf16 %v4375, %v4374
  %v4420 = vpack.c.bf16 %v4377, %v4376
  %v4421 = vpack.c.bf16 %v4379, %v4378
  %v4422 = vpack.c.bf16 %v4381, %v4380
  %v4423 = vpack.c.bf16 %v4383, %v4382
  %v4424 = vpack.c.bf16 %v4385, %v4384
  %v4425 = vpack.c.bf16 %v4387, %v4386
  %v4426 = vpack.c.bf16 %v4389, %v4388
  %v4427 = vpack.c.bf16 %v4391, %v4390
  %v4428 = vpack.c.bf16 %v4393, %v4392
  %v4429 = vpack.c.bf16 %v4395, %v4394
  %v4430 = vpack.c.bf16 %v4397, %v4396
  %v4431 = vpack.c.bf16 %v4399, %v4398
  %v4464 = vunpack.c.l.b16 %v4400
  %v4465 = vunpack.c.h.b16 %v4400
  %v4466 = vunpack.c.l.b16 %v4401
  %v4467 = vunpack.c.h.b16 %v4401
  %v4468 = vunpack.c.l.b16 %v4402
  %v4469 = vunpack.c.h.b16 %v4402
  %v4470 = vunpack.c.l.b16 %v4403
  %v4471 = vunpack.c.h.b16 %v4403
  %v4472 = vunpack.c.l.b16 %v4404
  %v4473 = vunpack.c.h.b16 %v4404
  %v4474 = vunpack.c.l.b16 %v4405
  %v4475 = vunpack.c.h.b16 %v4405
  %v4476 = vunpack.c.l.b16 %v4406
  %v4477 = vunpack.c.h.b16 %v4406
  %v4478 = vunpack.c.l.b16 %v4407
  %v4479 = vunpack.c.h.b16 %v4407
  %v4480 = vunpack.c.l.b16 %v4408
  %v4481 = vunpack.c.h.b16 %v4408
  %v4482 = vunpack.c.l.b16 %v4409
  %v4483 = vunpack.c.h.b16 %v4409
  %v4484 = vunpack.c.l.b16 %v4410
  %v4485 = vunpack.c.h.b16 %v4410
  %v4486 = vunpack.c.l.b16 %v4411
  %v4487 = vunpack.c.h.b16 %v4411
  %v4488 = vunpack.c.l.b16 %v4412
  %v4489 = vunpack.c.h.b16 %v4412
  %v4490 = vunpack.c.l.b16 %v4413
  %v4491 = vunpack.c.h.b16 %v4413
  %v4492 = vunpack.c.l.b16 %v4414
  %v4493 = vunpack.c.h.b16 %v4414
  %v4494 = vunpack.c.l.b16 %v4415
  %v4495 = vunpack.c.h.b16 %v4415
  %v4496 = vunpack.c.l.b16 %v4416
  %v4497 = vunpack.c.h.b16 %v4416
  %v4498 = vunpack.c.l.b16 %v4417
  %v4499 = vunpack.c.h.b16 %v4417
  %v4500 = vunpack.c.l.b16 %v4418
  %v4501 = vunpack.c.h.b16 %v4418
  %v4502 = vunpack.c.l.b16 %v4419
  %v4503 = vunpack.c.h.b16 %v4419
  %v4504 = vunpack.c.l.b16 %v4420
  %v4505 = vunpack.c.h.b16 %v4420
  %v4506 = vunpack.c.l.b16 %v4421
  %v4507 = vunpack.c.h.b16 %v4421
  %v4508 = vunpack.c.l.b16 %v4422
  %v4509 = vunpack.c.h.b16 %v4422
  %v4510 = vunpack.c.l.b16 %v4423
  %v4511 = vunpack.c.h.b16 %v4423
  %v4512 = vunpack.c.l.b16 %v4424
  %v4513 = vunpack.c.h.b16 %v4424
  %v4514 = vunpack.c.l.b16 %v4425
  %v4515 = vunpack.c.h.b16 %v4425
  %v4516 = vunpack.c.l.b16 %v4426
  %v4517 = vunpack.c.h.b16 %v4426
  %v4518 = vunpack.c.l.b16 %v4427
  %v4519 = vunpack.c.h.b16 %v4427
  %v4520 = vunpack.c.l.b16 %v4428
  %v4521 = vunpack.c.h.b16 %v4428
  %v4522 = vunpack.c.l.b16 %v4429
  %v4523 = vunpack.c.h.b16 %v4429
  %v4524 = vunpack.c.l.b16 %v4430
  %v4525 = vunpack.c.h.b16 %v4430
  %v4526 = vunpack.c.l.b16 %v4431
  %v4527 = vunpack.c.h.b16 %v4431
  %v4528 = vpack.c.b16 %v4464, %v4464
  %v4529 = vpack.c.b16 %v4465, %v4465
  %v4530 = vpack.c.b16 %v4466, %v4466
  %v4531 = vpack.c.b16 %v4467, %v4467
  %v4532 = vpack.c.b16 %v4468, %v4468
  %v4533 = vpack.c.b16 %v4469, %v4469
  %v4534 = vpack.c.b16 %v4470, %v4470
  %v4535 = vpack.c.b16 %v4471, %v4471
  %v4536 = vpack.c.b16 %v4472, %v4472
  %v4537 = vpack.c.b16 %v4473, %v4473
  %v4538 = vpack.c.b16 %v4474, %v4474
  %v4539 = vpack.c.b16 %v4475, %v4475
  %v4540 = vpack.c.b16 %v4476, %v4476
  %v4541 = vpack.c.b16 %v4477, %v4477
  %v4542 = vpack.c.b16 %v4478, %v4478
  %v4543 = vpack.c.b16 %v4479, %v4479
  %v4544 = vpack.c.b16 %v4480, %v4480
  %v4545 = vpack.c.b16 %v4481, %v4481
  %v4546 = vpack.c.b16 %v4482, %v4482
  %v4547 = vpack.c.b16 %v4483, %v4483
  %v4548 = vpack.c.b16 %v4484, %v4484
  %v4549 = vpack.c.b16 %v4485, %v4485
  %v4550 = vpack.c.b16 %v4486, %v4486
  %v4551 = vpack.c.b16 %v4487, %v4487
  %v4552 = vpack.c.b16 %v4488, %v4488
  %v4553 = vpack.c.b16 %v4489, %v4489
  %v4554 = vpack.c.b16 %v4490, %v4490
  %v4555 = vpack.c.b16 %v4491, %v4491
  %v4556 = vpack.c.b16 %v4492, %v4492
  %v4557 = vpack.c.b16 %v4493, %v4493
  %v4558 = vpack.c.b16 %v4494, %v4494
  %v4559 = vpack.c.b16 %v4495, %v4495
  %v4560 = vpack.c.b16 %v4496, %v4496
  %v4561 = vpack.c.b16 %v4497, %v4497
  %v4562 = vpack.c.b16 %v4498, %v4498
  %v4563 = vpack.c.b16 %v4499, %v4499
  %v4564 = vpack.c.b16 %v4500, %v4500
  %v4565 = vpack.c.b16 %v4501, %v4501
  %v4566 = vpack.c.b16 %v4502, %v4502
  %v4567 = vpack.c.b16 %v4503, %v4503
  %v4568 = vpack.c.b16 %v4504, %v4504
  %v4569 = vpack.c.b16 %v4505, %v4505
  %v4570 = vpack.c.b16 %v4506, %v4506
  %v4571 = vpack.c.b16 %v4507, %v4507
  %v4572 = vpack.c.b16 %v4508, %v4508
  %v4573 = vpack.c.b16 %v4509, %v4509
  %v4574 = vpack.c.b16 %v4510, %v4510
  %v4575 = vpack.c.b16 %v4511, %v4511
  %v4576 = vpack.c.b16 %v4512, %v4512
  %v4577 = vpack.c.b16 %v4513, %v4513
  %v4578 = vpack.c.b16 %v4514, %v4514
  %v4579 = vpack.c.b16 %v4515, %v4515
  %v4580 = vpack.c.b16 %v4516, %v4516
  %v4581 = vpack.c.b16 %v4517, %v4517
  %v4582 = vpack.c.b16 %v4518, %v4518
  %v4583 = vpack.c.b16 %v4519, %v4519
  %v4584 = vpack.c.b16 %v4520, %v4520
  %v4585 = vpack.c.b16 %v4521, %v4521
  %v4586 = vpack.c.b16 %v4522, %v4522
  %v4587 = vpack.c.b16 %v4523, %v4523
  %v4588 = vpack.c.b16 %v4524, %v4524
  %v4589 = vpack.c.b16 %v4525, %v4525
  %v4590 = vpack.c.b16 %v4526, %v4526
  %v4591 = vpack.c.b16 %v4527, %v4527
  %vm4656 = vcmask 60416
  %4657 = vst.msk [vmem:[%s4] sm:$0xf] %vm4656, %v4528
  %4658 = vst.msk [vmem:[%s4 + $0x4] sm:$0xf] %vm4656, %v4529
  %4659 = vst.msk [vmem:[%s4 + $0x8] sm:$0xf] %vm4656, %v4530
  %4660 = vst.msk [vmem:[%s4 + $0xc] sm:$0xf] %vm4656, %v4531
  %4661 = vst.msk [vmem:[%s4 + $0x10] sm:$0xf] %vm4656, %v4532
  %4662 = vst.msk [vmem:[%s4 + $0x14] sm:$0xf] %vm4656, %v4533
  %4663 = vst.msk [vmem:[%s4 + $0x18] sm:$0xf] %vm4656, %v4534
  %4664 = vst.msk [vmem:[%s4 + $0x1c] sm:$0xf] %vm4656, %v4535
  %4665 = vst.msk [vmem:[%s4 + $0x20] sm:$0xf] %vm4656, %v4536
  %4666 = vst.msk [vmem:[%s4 + $0x24] sm:$0xf] %vm4656, %v4537
  %4667 = vst.msk [vmem:[%s4 + $0x28] sm:$0xf] %vm4656, %v4538
  %4668 = vst.msk [vmem:[%s4 + $0x2c] sm:$0xf] %vm4656, %v4539
  %4669 = vst.msk [vmem:[%s4 + $0x30] sm:$0xf] %vm4656, %v4540
  %4670 = vst.msk [vmem:[%s4 + $0x34] sm:$0xf] %vm4656, %v4541
  %4671 = vst.msk [vmem:[%s4 + $0x38] sm:$0xf] %vm4656, %v4542
  %4672 = vst.msk [vmem:[%s4 + $0x3c] sm:$0xf] %vm4656, %v4543
  %4673 = vst.msk [vmem:[%s4 + $0x40] sm:$0xf] %vm4656, %v4544
  %4674 = vst.msk [vmem:[%s4 + $0x44] sm:$0xf] %vm4656, %v4545
  %4675 = vst.msk [vmem:[%s4 + $0x48] sm:$0xf] %vm4656, %v4546
  %4676 = vst.msk [vmem:[%s4 + $0x4c] sm:$0xf] %vm4656, %v4547
  %4677 = vst.msk [vmem:[%s4 + $0x50] sm:$0xf] %vm4656, %v4548
  %4678 = vst.msk [vmem:[%s4 + $0x54] sm:$0xf] %vm4656, %v4549
  %4679 = vst.msk [vmem:[%s4 + $0x58] sm:$0xf] %vm4656, %v4550
  %4680 = vst.msk [vmem:[%s4 + $0x5c] sm:$0xf] %vm4656, %v4551
  %4681 = vst.msk [vmem:[%s4 + $0x60] sm:$0xf] %vm4656, %v4552
  %4682 = vst.msk [vmem:[%s4 + $0x64] sm:$0xf] %vm4656, %v4553
  %4683 = vst.msk [vmem:[%s4 + $0x68] sm:$0xf] %vm4656, %v4554
  %4684 = vst.msk [vmem:[%s4 + $0x6c] sm:$0xf] %vm4656, %v4555
  %4685 = vst.msk [vmem:[%s4 + $0x70] sm:$0xf] %vm4656, %v4556
  %4686 = vst.msk [vmem:[%s4 + $0x74] sm:$0xf] %vm4656, %v4557
  %4687 = vst.msk [vmem:[%s4 + $0x78] sm:$0xf] %vm4656, %v4558
  %4688 = vst.msk [vmem:[%s4 + $0x7c] sm:$0xf] %vm4656, %v4559
  %4689 = vst.msk [vmem:[%s4 + $0x80] sm:$0xf] %vm4656, %v4560
  %4690 = vst.msk [vmem:[%s4 + $0x84] sm:$0xf] %vm4656, %v4561
  %4691 = vst.msk [vmem:[%s4 + $0x88] sm:$0xf] %vm4656, %v4562
  %4692 = vst.msk [vmem:[%s4 + $0x8c] sm:$0xf] %vm4656, %v4563
  %4693 = vst.msk [vmem:[%s4 + $0x90] sm:$0xf] %vm4656, %v4564
  %4694 = vst.msk [vmem:[%s4 + $0x94] sm:$0xf] %vm4656, %v4565
  %4695 = vst.msk [vmem:[%s4 + $0x98] sm:$0xf] %vm4656, %v4566
  %4696 = vst.msk [vmem:[%s4 + $0x9c] sm:$0xf] %vm4656, %v4567
  %4697 = vst.msk [vmem:[%s4 + $0xa0] sm:$0xf] %vm4656, %v4568
  %4698 = vst.msk [vmem:[%s4 + $0xa4] sm:$0xf] %vm4656, %v4569
  %4699 = vst.msk [vmem:[%s4 + $0xa8] sm:$0xf] %vm4656, %v4570
  %4700 = vst.msk [vmem:[%s4 + $0xac] sm:$0xf] %vm4656, %v4571
  %4701 = vst.msk [vmem:[%s4 + $0xb0] sm:$0xf] %vm4656, %v4572
  %4702 = vst.msk [vmem:[%s4 + $0xb4] sm:$0xf] %vm4656, %v4573
  %4703 = vst.msk [vmem:[%s4 + $0xb8] sm:$0xf] %vm4656, %v4574
  %4704 = vst.msk [vmem:[%s4 + $0xbc] sm:$0xf] %vm4656, %v4575
  %4705 = vst.msk [vmem:[%s4 + $0xc0] sm:$0xf] %vm4656, %v4576
  %4706 = vst.msk [vmem:[%s4 + $0xc4] sm:$0xf] %vm4656, %v4577
  %4707 = vst.msk [vmem:[%s4 + $0xc8] sm:$0xf] %vm4656, %v4578
  %4708 = vst.msk [vmem:[%s4 + $0xcc] sm:$0xf] %vm4656, %v4579
  %4709 = vst.msk [vmem:[%s4 + $0xd0] sm:$0xf] %vm4656, %v4580
  %4710 = vst.msk [vmem:[%s4 + $0xd4] sm:$0xf] %vm4656, %v4581
  %4711 = vst.msk [vmem:[%s4 + $0xd8] sm:$0xf] %vm4656, %v4582
  %4712 = vst.msk [vmem:[%s4 + $0xdc] sm:$0xf] %vm4656, %v4583
  %4713 = vst.msk [vmem:[%s4 + $0xe0] sm:$0xf] %vm4656, %v4584
  %4714 = vst.msk [vmem:[%s4 + $0xe4] sm:$0xf] %vm4656, %v4585
  %4715 = vst.msk [vmem:[%s4 + $0xe8] sm:$0xf] %vm4656, %v4586
  %4716 = vst.msk [vmem:[%s4 + $0xec] sm:$0xf] %vm4656, %v4587
  %4717 = vst.msk [vmem:[%s4 + $0xf0] sm:$0xf] %vm4656, %v4588
  %4718 = vst.msk [vmem:[%s4 + $0xf4] sm:$0xf] %vm4656, %v4589
  %4719 = vst.msk [vmem:[%s4 + $0xf8] sm:$0xf] %vm4656, %v4590
  %4720 = vst.msk [vmem:[%s4 + $0xfc] sm:$0xf] %vm4656, %v4591
  // Predicated region
  $region18: #{discriminator_forward.5} parent=0 // pred_check
    _
  $region19: #{discriminator_forward.5} parent=0 // pred_check_branch
    %4722 = sbr.rel (0) target = $region21
  $region20: #{discriminator_forward.5} parent=0 // pred_region
    _
  $region21: #{discriminator_forward.5} parent=0 // pred_fallthru
    _
  // Predicated region
  $region22: #{discriminator_forward.5} parent=0 // pred_check
    _
  $region23: #{discriminator_forward.5} parent=0 // pred_check_branch
    %4724 = sbr.rel (0) target = $region25
  $region24: #{discriminator_forward.5} parent=0 // pred_region
    _
  $region25: #{discriminator_forward.5} parent=0 // pred_fallthru
    _

// kernel: discriminator_forward.6
$region0: #{discriminator_forward.6}
  #allocation0 [shape = 'u32[]', space=smem, size = 0x4, offset = 0x4, fixed_abs, tag = 'smem constant byte address 0x4 - core index']
  #allocation1 [shape = 'u32[144,128]{1,0:T(1,128)}', space=vmem, size = 0x12000, scoped, tag = 'internal scratch']
  %s0 = inlined_call_operand.vmem [shape: bf16[2,9,9,32], index: 0, kind: input, shape index: {}]
  %s1 = inlined_call_operand.vmem [shape: bf16[128,16], index: 1, kind: input, shape index: {}]
  %s2 = inlined_call_operand.vmem [shape: f32[1,1,16], index: 2, kind: input, shape index: {}]
  %s3 = inlined_call_operand.vmem [shape: f32[1,1,16], index: 3, kind: input, shape index: {}]
  %s4 = inlined_call_operand.vmem [shape: bf16[16,8,16], index: 4, kind: output, shape index: {}]
  %s5 = sld [smem:[#allocation0]]
  $region26: #{discriminator_forward.6} parent=0
    _
  %s7 = ssub.s32 1, %s5
  %s8 = scalar_select 0, %s7, %s5
  // Predicated region
  $region2: #{discriminator_forward.6} parent=0 // pred_check
    _
  $region3: #{discriminator_forward.6} parent=0 // pred_check_branch
    %10 = sbr.rel (0) target = $region5
  $region4: #{discriminator_forward.6} parent=0 // pred_region
    _
  $region5: #{discriminator_forward.6} parent=0 // pred_fallthru
    _
  // Predicated region
  $region6: #{discriminator_forward.6} parent=0 // pred_check
    _
  $region7: #{discriminator_forward.6} parent=0 // pred_check_branch
    %12 = sbr.rel (0) target = $region9
  $region8: #{discriminator_forward.6} parent=0 // pred_region
    _
  $region9: #{discriminator_forward.6} parent=0 // pred_fallthru
    _
  // Predicated region
  $region10: #{discriminator_forward.6} parent=0 // pred_check
    _
  $region11: #{discriminator_forward.6} parent=0 // pred_check_branch
    %14 = sbr.rel (0) target = $region13
  $region12: #{discriminator_forward.6} parent=0 // pred_region
    _
  $region13: #{discriminator_forward.6} parent=0 // pred_fallthru
    _
  // Predicated region
  $region14: #{discriminator_forward.6} parent=0 // pred_check
    _
  $region15: #{discriminator_forward.6} parent=0 // pred_check_branch
    %16 = sbr.rel (0) target = $region17
  $region16: #{discriminator_forward.6} parent=0 // pred_region
    _
  $region17: #{discriminator_forward.6} parent=0 // pred_fallthru
    _
  %v18 = vld [vmem:[%s0] sm:$0xf]
  %v19 = vld [vmem:[%s0 + $0x8] sm:$0xf]
  %v20 = vld [vmem:[%s0 + $0x10] sm:$0xf]
  %v21 = vld [vmem:[%s0 + $0x18] sm:$0xf]
  %v22 = vld [vmem:[%s0 + $0x20] sm:$0xf]
  %v23 = vld [vmem:[%s0 + $0x28] sm:$0xf]
  %v24 = vld [vmem:[%s0 + $0x30] sm:$0xf]
  %v25 = vld [vmem:[%s0 + $0x38] sm:$0xf]
  %v26 = vld [vmem:[%s0 + $0x48] sm:$0xf]
  %v27 = vld [vmem:[%s0 + $0x50] sm:$0xf]
  %v28 = vld [vmem:[%s0 + $0x58] sm:$0xf]
  %v29 = vld [vmem:[%s0 + $0x60] sm:$0xf]
  %v30 = vld [vmem:[%s0 + $0x68] sm:$0xf]
  %v31 = vld [vmem:[%s0 + $0x70] sm:$0xf]
  %v32 = vld [vmem:[%s0 + $0x78] sm:$0xf]
  %v33 = vld [vmem:[%s0 + $0x80] sm:$0xf]
  %v34 = vld [vmem:[%s0 + $0x4] sm:$0x1]
  %v35 = vld [vmem:[%s0 + $0xc] sm:$0x1]
  %v36 = vld [vmem:[%s0 + $0x14] sm:$0x1]
  %v37 = vld [vmem:[%s0 + $0x1c] sm:$0x1]
  %v38 = vld [vmem:[%s0 + $0x24] sm:$0x1]
  %v39 = vld [vmem:[%s0 + $0x2c] sm:$0x1]
  %v40 = vld [vmem:[%s0 + $0x34] sm:$0x1]
  %v41 = vld [vmem:[%s0 + $0x3c] sm:$0x1]
  %v42 = vld [vmem:[%s0 + $0x4c] sm:$0x1]
  %v43 = vld [vmem:[%s0 + $0x54] sm:$0x1]
  %v44 = vld [vmem:[%s0 + $0x5c] sm:$0x1]
  %v45 = vld [vmem:[%s0 + $0x64] sm:$0x1]
  %v46 = vld [vmem:[%s0 + $0x6c] sm:$0x1]
  %v47 = vld [vmem:[%s0 + $0x74] sm:$0x1]
  %v48 = vld [vmem:[%s0 + $0x7c] sm:$0x1]
  %v49 = vld [vmem:[%s0 + $0x84] sm:$0x1]
  %s50 = scalar_lea.vmem %s0, 8
  %v51 = vld [vmem:[%s50] sm:$0xf]
  %v52 = vld [vmem:[%s50 + $0x8] sm:$0xf]
  %v53 = vld [vmem:[%s50 + $0x10] sm:$0xf]
  %v54 = vld [vmem:[%s50 + $0x18] sm:$0xf]
  %v55 = vld [vmem:[%s50 + $0x20] sm:$0xf]
  %v56 = vld [vmem:[%s50 + $0x28] sm:$0xf]
  %v57 = vld [vmem:[%s50 + $0x30] sm:$0xf]
  %v58 = vld [vmem:[%s50 + $0x38] sm:$0xf]
  %v59 = vld [vmem:[%s50 + $0x48] sm:$0xf]
  %v60 = vld [vmem:[%s50 + $0x50] sm:$0xf]
  %v61 = vld [vmem:[%s50 + $0x58] sm:$0xf]
  %v62 = vld [vmem:[%s50 + $0x60] sm:$0xf]
  %v63 = vld [vmem:[%s50 + $0x68] sm:$0xf]
  %v64 = vld [vmem:[%s50 + $0x70] sm:$0xf]
  %v65 = vld [vmem:[%s50 + $0x78] sm:$0xf]
  %v66 = vld [vmem:[%s50 + $0x80] sm:$0xf]
  %v67 = vld [vmem:[%s50 + $0x4] sm:$0x1]
  %v68 = vld [vmem:[%s50 + $0xc] sm:$0x1]
  %v69 = vld [vmem:[%s50 + $0x14] sm:$0x1]
  %v70 = vld [vmem:[%s50 + $0x1c] sm:$0x1]
  %v71 = vld [vmem:[%s50 + $0x24] sm:$0x1]
  %v72 = vld [vmem:[%s50 + $0x2c] sm:$0x1]
  %v73 = vld [vmem:[%s50 + $0x34] sm:$0x1]
  %v74 = vld [vmem:[%s50 + $0x3c] sm:$0x1]
  %v75 = vld [vmem:[%s50 + $0x4c] sm:$0x1]
  %v76 = vld [vmem:[%s50 + $0x54] sm:$0x1]
  %v77 = vld [vmem:[%s50 + $0x5c] sm:$0x1]
  %v78 = vld [vmem:[%s50 + $0x64] sm:$0x1]
  %v79 = vld [vmem:[%s50 + $0x6c] sm:$0x1]
  %v80 = vld [vmem:[%s50 + $0x74] sm:$0x1]
  %v81 = vld [vmem:[%s50 + $0x7c] sm:$0x1]
  %v82 = vld [vmem:[%s50 + $0x84] sm:$0x1]
  %v115 = vunpack.c.l.b16 %v18
  %v116 = vunpack.c.l.b16 %v34
  %v117 = vunpack.c.l.b16 %v19
  %v118 = vunpack.c.l.b16 %v35
  %v119 = vunpack.c.l.b16 %v20
  %v120 = vunpack.c.l.b16 %v36
  %v121 = vunpack.c.l.b16 %v21
  %v122 = vunpack.c.l.b16 %v37
  %v123 = vunpack.c.l.b16 %v22
  %v124 = vunpack.c.l.b16 %v38
  %v125 = vunpack.c.l.b16 %v23
  %v126 = vunpack.c.l.b16 %v39
  %v127 = vunpack.c.l.b16 %v24
  %v128 = vunpack.c.l.b16 %v40
  %v129 = vunpack.c.l.b16 %v25
  %v130 = vunpack.c.l.b16 %v41
  %v131 = vunpack.c.l.b16 %v26
  %v132 = vunpack.c.l.b16 %v42
  %v133 = vunpack.c.l.b16 %v27
  %v134 = vunpack.c.l.b16 %v43
  %v135 = vunpack.c.l.b16 %v28
  %v136 = vunpack.c.l.b16 %v44
  %v137 = vunpack.c.l.b16 %v29
  %v138 = vunpack.c.l.b16 %v45
  %v139 = vunpack.c.l.b16 %v30
  %v140 = vunpack.c.l.b16 %v46
  %v141 = vunpack.c.l.b16 %v31
  %v142 = vunpack.c.l.b16 %v47
  %v143 = vunpack.c.l.b16 %v32
  %v144 = vunpack.c.l.b16 %v48
  %v145 = vunpack.c.l.b16 %v33
  %v146 = vunpack.c.l.b16 %v49
  %v147 = vpack.c.b16 %v116, %v115
  %v148 = vpack.c.b16 %v118, %v117
  %v149 = vpack.c.b16 %v120, %v119
  %v150 = vpack.c.b16 %v122, %v121
  %v151 = vpack.c.b16 %v124, %v123
  %v152 = vpack.c.b16 %v126, %v125
  %v153 = vpack.c.b16 %v128, %v127
  %v154 = vpack.c.b16 %v130, %v129
  %v155 = vpack.c.b16 %v132, %v131
  %v156 = vpack.c.b16 %v134, %v133
  %v157 = vpack.c.b16 %v136, %v135
  %v158 = vpack.c.b16 %v138, %v137
  %v159 = vpack.c.b16 %v140, %v139
  %v160 = vpack.c.b16 %v142, %v141
  %v161 = vpack.c.b16 %v144, %v143
  %v162 = vpack.c.b16 %v146, %v145
  %v164 = vshrl.u32 %v147, 16
  %v166 = vshll.u32 %v147, 16
  %v168 = vrot.slane %v166, 1
  %v169 = vor.u32 %v164, %v168
  %v171 = vshrl.u32 %v148, 16
  %v173 = vshll.u32 %v148, 16
  %v175 = vrot.slane %v173, 1
  %v176 = vor.u32 %v171, %v175
  %v178 = vshrl.u32 %v149, 16
  %v180 = vshll.u32 %v149, 16
  %v182 = vrot.slane %v180, 1
  %v183 = vor.u32 %v178, %v182
  %v185 = vshrl.u32 %v150, 16
  %v187 = vshll.u32 %v150, 16
  %v189 = vrot.slane %v187, 1
  %v190 = vor.u32 %v185, %v189
  %v192 = vshrl.u32 %v151, 16
  %v194 = vshll.u32 %v151, 16
  %v196 = vrot.slane %v194, 1
  %v197 = vor.u32 %v192, %v196
  %v199 = vshrl.u32 %v152, 16
  %v201 = vshll.u32 %v152, 16
  %v203 = vrot.slane %v201, 1
  %v204 = vor.u32 %v199, %v203
  %v206 = vshrl.u32 %v153, 16
  %v208 = vshll.u32 %v153, 16
  %v210 = vrot.slane %v208, 1
  %v211 = vor.u32 %v206, %v210
  %v213 = vshrl.u32 %v154, 16
  %v215 = vshll.u32 %v154, 16
  %v217 = vrot.slane %v215, 1
  %v218 = vor.u32 %v213, %v217
  %v220 = vshrl.u32 %v155, 16
  %v222 = vshll.u32 %v155, 16
  %v224 = vrot.slane %v222, 1
  %v225 = vor.u32 %v220, %v224
  %v227 = vshrl.u32 %v156, 16
  %v229 = vshll.u32 %v156, 16
  %v231 = vrot.slane %v229, 1
  %v232 = vor.u32 %v227, %v231
  %v234 = vshrl.u32 %v157, 16
  %v236 = vshll.u32 %v157, 16
  %v238 = vrot.slane %v236, 1
  %v239 = vor.u32 %v234, %v238
  %v241 = vshrl.u32 %v158, 16
  %v243 = vshll.u32 %v158, 16
  %v245 = vrot.slane %v243, 1
  %v246 = vor.u32 %v241, %v245
  %v248 = vshrl.u32 %v159, 16
  %v250 = vshll.u32 %v159, 16
  %v252 = vrot.slane %v250, 1
  %v253 = vor.u32 %v248, %v252
  %v255 = vshrl.u32 %v160, 16
  %v257 = vshll.u32 %v160, 16
  %v259 = vrot.slane %v257, 1
  %v260 = vor.u32 %v255, %v259
  %v262 = vshrl.u32 %v161, 16
  %v264 = vshll.u32 %v161, 16
  %v266 = vrot.slane %v264, 1
  %v267 = vor.u32 %v262, %v266
  %v269 = vshrl.u32 %v162, 16
  %v271 = vshll.u32 %v162, 16
  %v273 = vrot.slane %v271, 1
  %v274 = vor.u32 %v269, %v273
  %275 = vrot.lane.b32.xlu0 %v169, 32
  %v276 = vpop.permute.xlu0 %275
  %277 = vrot.lane.b32.xlu0 %v176, 32
  %v278 = vpop.permute.xlu0 %277
  %279 = vrot.lane.b32.xlu0 %v183, 32
  %v280 = vpop.permute.xlu0 %279
  %281 = vrot.lane.b32.xlu0 %v190, 32
  %v282 = vpop.permute.xlu0 %281
  %283 = vrot.lane.b32.xlu0 %v197, 32
  %v284 = vpop.permute.xlu0 %283
  %285 = vrot.lane.b32.xlu0 %v204, 32
  %v286 = vpop.permute.xlu0 %285
  %287 = vrot.lane.b32.xlu0 %v211, 32
  %v288 = vpop.permute.xlu0 %287
  %289 = vrot.lane.b32.xlu0 %v218, 32
  %v290 = vpop.permute.xlu0 %289
  %291 = vrot.lane.b32.xlu0 %v225, 32
  %v292 = vpop.permute.xlu0 %291
  %293 = vrot.lane.b32.xlu0 %v232, 32
  %v294 = vpop.permute.xlu0 %293
  %295 = vrot.lane.b32.xlu0 %v239, 32
  %v296 = vpop.permute.xlu0 %295
  %297 = vrot.lane.b32.xlu0 %v246, 32
  %v298 = vpop.permute.xlu0 %297
  %299 = vrot.lane.b32.xlu0 %v253, 32
  %v300 = vpop.permute.xlu0 %299
  %301 = vrot.lane.b32.xlu0 %v260, 32
  %v302 = vpop.permute.xlu0 %301
  %303 = vrot.lane.b32.xlu0 %v267, 32
  %v304 = vpop.permute.xlu0 %303
  %305 = vrot.lane.b32.xlu0 %v274, 32
  %v306 = vpop.permute.xlu0 %305
  %v323 = vunpack.c.l.b16 %v51
  %v324 = vunpack.c.l.b16 %v52
  %v325 = vunpack.c.l.b16 %v53
  %v326 = vunpack.c.l.b16 %v54
  %v327 = vunpack.c.l.b16 %v55
  %v328 = vunpack.c.l.b16 %v56
  %v329 = vunpack.c.l.b16 %v57
  %v330 = vunpack.c.l.b16 %v58
  %v331 = vunpack.c.l.b16 %v59
  %v332 = vunpack.c.l.b16 %v60
  %v333 = vunpack.c.l.b16 %v61
  %v334 = vunpack.c.l.b16 %v62
  %v335 = vunpack.c.l.b16 %v63
  %v336 = vunpack.c.l.b16 %v64
  %v337 = vunpack.c.l.b16 %v65
  %v338 = vunpack.c.l.b16 %v66
  %v339 = vpack.c.b16 %v323, %v323
  %v340 = vpack.c.b16 %v324, %v324
  %v341 = vpack.c.b16 %v325, %v325
  %v342 = vpack.c.b16 %v326, %v326
  %v343 = vpack.c.b16 %v327, %v327
  %v344 = vpack.c.b16 %v328, %v328
  %v345 = vpack.c.b16 %v329, %v329
  %v346 = vpack.c.b16 %v330, %v330
  %v347 = vpack.c.b16 %v331, %v331
  %v348 = vpack.c.b16 %v332, %v332
  %v349 = vpack.c.b16 %v333, %v333
  %v350 = vpack.c.b16 %v334, %v334
  %v351 = vpack.c.b16 %v335, %v335
  %v352 = vpack.c.b16 %v336, %v336
  %v353 = vpack.c.b16 %v337, %v337
  %v354 = vpack.c.b16 %v338, %v338
  %355 = vrot.lane.b32.xlu0 %v339, 64
  %v356 = vpop.permute.xlu0 %355
  %357 = vrot.lane.b32.xlu0 %v340, 64
  %v358 = vpop.permute.xlu0 %357
  %359 = vrot.lane.b32.xlu0 %v341, 64
  %v360 = vpop.permute.xlu0 %359
  %361 = vrot.lane.b32.xlu0 %v342, 64
  %v362 = vpop.permute.xlu0 %361
  %363 = vrot.lane.b32.xlu0 %v343, 64
  %v364 = vpop.permute.xlu0 %363
  %365 = vrot.lane.b32.xlu0 %v344, 64
  %v366 = vpop.permute.xlu0 %365
  %367 = vrot.lane.b32.xlu0 %v345, 64
  %v368 = vpop.permute.xlu0 %367
  %369 = vrot.lane.b32.xlu0 %v346, 64
  %v370 = vpop.permute.xlu0 %369
  %371 = vrot.lane.b32.xlu0 %v347, 64
  %v372 = vpop.permute.xlu0 %371
  %373 = vrot.lane.b32.xlu0 %v348, 64
  %v374 = vpop.permute.xlu0 %373
  %375 = vrot.lane.b32.xlu0 %v349, 64
  %v376 = vpop.permute.xlu0 %375
  %377 = vrot.lane.b32.xlu0 %v350, 64
  %v378 = vpop.permute.xlu0 %377
  %379 = vrot.lane.b32.xlu0 %v351, 64
  %v380 = vpop.permute.xlu0 %379
  %381 = vrot.lane.b32.xlu0 %v352, 64
  %v382 = vpop.permute.xlu0 %381
  %383 = vrot.lane.b32.xlu0 %v353, 64
  %v384 = vpop.permute.xlu0 %383
  %385 = vrot.lane.b32.xlu0 %v354, 64
  %v386 = vpop.permute.xlu0 %385
  %v403 = vunpack.c.l.b16 %v67
  %v404 = vunpack.c.l.b16 %v68
  %v405 = vunpack.c.l.b16 %v69
  %v406 = vunpack.c.l.b16 %v70
  %v407 = vunpack.c.l.b16 %v71
  %v408 = vunpack.c.l.b16 %v72
  %v409 = vunpack.c.l.b16 %v73
  %v410 = vunpack.c.l.b16 %v74
  %v411 = vunpack.c.l.b16 %v75
  %v412 = vunpack.c.l.b16 %v76
  %v413 = vunpack.c.l.b16 %v77
  %v414 = vunpack.c.l.b16 %v78
  %v415 = vunpack.c.l.b16 %v79
  %v416 = vunpack.c.l.b16 %v80
  %v417 = vunpack.c.l.b16 %v81
  %v418 = vunpack.c.l.b16 %v82
  %v419 = vpack.c.b16 %v403, %v323
  %v420 = vpack.c.b16 %v404, %v324
  %v421 = vpack.c.b16 %v405, %v325
  %v422 = vpack.c.b16 %v406, %v326
  %v423 = vpack.c.b16 %v407, %v327
  %v424 = vpack.c.b16 %v408, %v328
  %v425 = vpack.c.b16 %v409, %v329
  %v426 = vpack.c.b16 %v410, %v330
  %v427 = vpack.c.b16 %v411, %v331
  %v428 = vpack.c.b16 %v412, %v332
  %v429 = vpack.c.b16 %v413, %v333
  %v430 = vpack.c.b16 %v414, %v334
  %v431 = vpack.c.b16 %v415, %v335
  %v432 = vpack.c.b16 %v416, %v336
  %v433 = vpack.c.b16 %v417, %v337
  %v434 = vpack.c.b16 %v418, %v338
  %v436 = vshrl.u32 %v419, 16
  %v438 = vshll.u32 %v419, 16
  %v440 = vrot.slane %v438, 1
  %v441 = vor.u32 %v436, %v440
  %v443 = vshrl.u32 %v420, 16
  %v445 = vshll.u32 %v420, 16
  %v447 = vrot.slane %v445, 1
  %v448 = vor.u32 %v443, %v447
  %v450 = vshrl.u32 %v421, 16
  %v452 = vshll.u32 %v421, 16
  %v454 = vrot.slane %v452, 1
  %v455 = vor.u32 %v450, %v454
  %v457 = vshrl.u32 %v422, 16
  %v459 = vshll.u32 %v422, 16
  %v461 = vrot.slane %v459, 1
  %v462 = vor.u32 %v457, %v461
  %v464 = vshrl.u32 %v423, 16
  %v466 = vshll.u32 %v423, 16
  %v468 = vrot.slane %v466, 1
  %v469 = vor.u32 %v464, %v468
  %v471 = vshrl.u32 %v424, 16
  %v473 = vshll.u32 %v424, 16
  %v475 = vrot.slane %v473, 1
  %v476 = vor.u32 %v471, %v475
  %v478 = vshrl.u32 %v425, 16
  %v480 = vshll.u32 %v425, 16
  %v482 = vrot.slane %v480, 1
  %v483 = vor.u32 %v478, %v482
  %v485 = vshrl.u32 %v426, 16
  %v487 = vshll.u32 %v426, 16
  %v489 = vrot.slane %v487, 1
  %v490 = vor.u32 %v485, %v489
  %v492 = vshrl.u32 %v427, 16
  %v494 = vshll.u32 %v427, 16
  %v496 = vrot.slane %v494, 1
  %v497 = vor.u32 %v492, %v496
  %v499 = vshrl.u32 %v428, 16
  %v501 = vshll.u32 %v428, 16
  %v503 = vrot.slane %v501, 1
  %v504 = vor.u32 %v499, %v503
  %v506 = vshrl.u32 %v429, 16
  %v508 = vshll.u32 %v429, 16
  %v510 = vrot.slane %v508, 1
  %v511 = vor.u32 %v506, %v510
  %v513 = vshrl.u32 %v430, 16
  %v515 = vshll.u32 %v430, 16
  %v517 = vrot.slane %v515, 1
  %v518 = vor.u32 %v513, %v517
  %v520 = vshrl.u32 %v431, 16
  %v522 = vshll.u32 %v431, 16
  %v524 = vrot.slane %v522, 1
  %v525 = vor.u32 %v520, %v524
  %v527 = vshrl.u32 %v432, 16
  %v529 = vshll.u32 %v432, 16
  %v531 = vrot.slane %v529, 1
  %v532 = vor.u32 %v527, %v531
  %v534 = vshrl.u32 %v433, 16
  %v536 = vshll.u32 %v433, 16
  %v538 = vrot.slane %v536, 1
  %v539 = vor.u32 %v534, %v538
  %v541 = vshrl.u32 %v434, 16
  %v543 = vshll.u32 %v434, 16
  %v545 = vrot.slane %v543, 1
  %v546 = vor.u32 %v541, %v545
  %547 = vrot.lane.b32.xlu0 %v441, 96
  %v548 = vpop.permute.xlu0 %547
  %549 = vrot.lane.b32.xlu0 %v448, 96
  %v550 = vpop.permute.xlu0 %549
  %551 = vrot.lane.b32.xlu0 %v455, 96
  %v552 = vpop.permute.xlu0 %551
  %553 = vrot.lane.b32.xlu0 %v462, 96
  %v554 = vpop.permute.xlu0 %553
  %555 = vrot.lane.b32.xlu0 %v469, 96
  %v556 = vpop.permute.xlu0 %555
  %557 = vrot.lane.b32.xlu0 %v476, 96
  %v558 = vpop.permute.xlu0 %557
  %559 = vrot.lane.b32.xlu0 %v483, 96
  %v560 = vpop.permute.xlu0 %559
  %561 = vrot.lane.b32.xlu0 %v490, 96
  %v562 = vpop.permute.xlu0 %561
  %563 = vrot.lane.b32.xlu0 %v497, 96
  %v564 = vpop.permute.xlu0 %563
  %565 = vrot.lane.b32.xlu0 %v504, 96
  %v566 = vpop.permute.xlu0 %565
  %567 = vrot.lane.b32.xlu0 %v511, 96
  %v568 = vpop.permute.xlu0 %567
  %569 = vrot.lane.b32.xlu0 %v518, 96
  %v570 = vpop.permute.xlu0 %569
  %571 = vrot.lane.b32.xlu0 %v525, 96
  %v572 = vpop.permute.xlu0 %571
  %573 = vrot.lane.b32.xlu0 %v532, 96
  %v574 = vpop.permute.xlu0 %573
  %575 = vrot.lane.b32.xlu0 %v539, 96
  %v576 = vpop.permute.xlu0 %575
  %577 = vrot.lane.b32.xlu0 %v546, 96
  %v578 = vpop.permute.xlu0 %577
  %vm579 = vcmask 261120
  %v582 = vsel %vm579, %v18, %v276
  %v585 = vsel %vm579, %v19, %v278
  %v588 = vsel %vm579, %v20, %v280
  %v591 = vsel %vm579, %v21, %v282
  %v594 = vsel %vm579, %v22, %v284
  %v597 = vsel %vm579, %v23, %v286
  %v600 = vsel %vm579, %v24, %v288
  %v603 = vsel %vm579, %v25, %v290
  %v606 = vsel %vm579, %v26, %v292
  %v609 = vsel %vm579, %v27, %v294
  %v612 = vsel %vm579, %v28, %v296
  %v615 = vsel %vm579, %v29, %v298
  %v618 = vsel %vm579, %v30, %v300
  %v621 = vsel %vm579, %v31, %v302
  %v624 = vsel %vm579, %v32, %v304
  %v627 = vsel %vm579, %v33, %v306
  %vm628 = vcmask 523264
  %v630 = vsel %vm628, %v582, %v356
  %v632 = vsel %vm628, %v585, %v358
  %v634 = vsel %vm628, %v588, %v360
  %v636 = vsel %vm628, %v591, %v362
  %v638 = vsel %vm628, %v594, %v364
  %v640 = vsel %vm628, %v597, %v366
  %v642 = vsel %vm628, %v600, %v368
  %v644 = vsel %vm628, %v603, %v370
  %v646 = vsel %vm628, %v606, %v372
  %v648 = vsel %vm628, %v609, %v374
  %v650 = vsel %vm628, %v612, %v376
  %v652 = vsel %vm628, %v615, %v378
  %v654 = vsel %vm628, %v618, %v380
  %v656 = vsel %vm628, %v621, %v382
  %v658 = vsel %vm628, %v624, %v384
  %v660 = vsel %vm628, %v627, %v386
  %vm661 = vcmask 785408
  %v663 = vsel %vm661, %v630, %v548
  %v666 = vsel %vm661, %v632, %v550
  %v669 = vsel %vm661, %v634, %v552
  %v672 = vsel %vm661, %v636, %v554
  %v675 = vsel %vm661, %v638, %v556
  %v678 = vsel %vm661, %v640, %v558
  %v681 = vsel %vm661, %v642, %v560
  %v684 = vsel %vm661, %v644, %v562
  %v687 = vsel %vm661, %v646, %v564
  %v690 = vsel %vm661, %v648, %v566
  %v693 = vsel %vm661, %v650, %v568
  %v696 = vsel %vm661, %v652, %v570
  %v699 = vsel %vm661, %v654, %v572
  %v702 = vsel %vm661, %v656, %v574
  %v705 = vsel %vm661, %v658, %v576
  %v708 = vsel %vm661, %v660, %v578
  %v710 = vld [vmem:[%s1] sm:$0xf]
  %v711 = vld [vmem:[%s1 + $0x4] sm:$0xf]
  %v712 = vld [vmem:[%s1 + $0x8] sm:$0xf]
  %v713 = vld [vmem:[%s1 + $0xc] sm:$0xf]
  %v714 = vld [vmem:[%s1 + $0x10] sm:$0xf]
  %v715 = vld [vmem:[%s1 + $0x14] sm:$0xf]
  %v716 = vld [vmem:[%s1 + $0x18] sm:$0xf]
  %v717 = vld [vmem:[%s1 + $0x1c] sm:$0xf]
  %v718 = vld [vmem:[%s1 + $0x20] sm:$0xf]
  %v719 = vld [vmem:[%s1 + $0x24] sm:$0xf]
  %v720 = vld [vmem:[%s1 + $0x28] sm:$0xf]
  %v721 = vld [vmem:[%s1 + $0x2c] sm:$0xf]
  %v722 = vld [vmem:[%s1 + $0x30] sm:$0xf]
  %v723 = vld [vmem:[%s1 + $0x34] sm:$0xf]
  %v724 = vld [vmem:[%s1 + $0x38] sm:$0xf]
  %v725 = vld [vmem:[%s1 + $0x3c] sm:$0xf]
  %v742 = vunpack.c.l.b16 %v710
  %v743 = vunpack.c.l.b16 %v711
  %v744 = vunpack.c.l.b16 %v712
  %v745 = vunpack.c.l.b16 %v713
  %v746 = vunpack.c.l.b16 %v714
  %v747 = vunpack.c.l.b16 %v715
  %v748 = vunpack.c.l.b16 %v716
  %v749 = vunpack.c.l.b16 %v717
  %v750 = vunpack.c.l.b16 %v718
  %v751 = vunpack.c.l.b16 %v719
  %v752 = vunpack.c.l.b16 %v720
  %v753 = vunpack.c.l.b16 %v721
  %v754 = vunpack.c.l.b16 %v722
  %v755 = vunpack.c.l.b16 %v723
  %v756 = vunpack.c.l.b16 %v724
  %v757 = vunpack.c.l.b16 %v725
  %v758 = vpack.c.b16 %v743, %v742
  %v759 = vpack.c.b16 %v745, %v744
  %v760 = vpack.c.b16 %v747, %v746
  %v761 = vpack.c.b16 %v749, %v748
  %v762 = vpack.c.b16 %v751, %v750
  %v763 = vpack.c.b16 %v753, %v752
  %v764 = vpack.c.b16 %v755, %v754
  %v765 = vpack.c.b16 %v757, %v756
  %774 = vmatprep.subr.bf16.mxu0 0
  %775 = vmatpush1.bf16.msra.mxu0 %v765
  %776 = vmatprep.subr.bf16.mxu0 0
  %777 = vmatpush1.bf16.msra.mxu0 %v764
  %778 = vmatprep.subr.bf16.mxu0 0
  %779 = vmatpush1.bf16.msra.mxu0 %v763
  %780 = vmatprep.subr.bf16.mxu0 0
  %781 = vmatpush1.bf16.msra.mxu0 %v762
  %782 = vmatprep.subr.bf16.mxu0 0
  %783 = vmatpush1.bf16.msra.mxu0 %v761
  %784 = vmatprep.subr.bf16.mxu0 0
  %785 = vmatpush1.bf16.msra.mxu0 %v760
  %786 = vmatprep.subr.bf16.mxu0 0
  %787 = vmatpush1.bf16.msra.mxu0 %v759
  %788 = vmatprep.subr.bf16.mxu0 0
  %789 = vmatpush1.bf16.msra.mxu0 %v758
  %790 = vmatprep.subr.bf16.mxu0 0
  %791 = vmatpush2.bf16.msra.mxu0 0
  %792 = vmatprep.subr.bf16.mxu0 0
  %793 = vmatpush2.bf16.msra.mxu0 0
  %794 = vmatprep.subr.bf16.mxu0 0
  %795 = vmatpush2.bf16.msra.mxu0 0
  %796 = vmatprep.subr.bf16.mxu0 0
  %797 = vmatpush2.bf16.msra.mxu0 0
  %798 = vmatprep.subr.bf16.mxu0 0
  %799 = vmatpush2.bf16.msra.mxu0 0
  %800 = vmatprep.subr.bf16.mxu0 0
  %801 = vmatpush2.bf16.msra.mxu0 0
  %802 = vmatprep.subr.bf16.mxu0 0
  %803 = vmatpush2.bf16.msra.mxu0 0
  %804 = vmatprep.subr.bf16.mxu0 0
  %805 = vmatpush2.bf16.msra.mxu0 0
  %806 = vmatprep.mubr.bf16.mxu0 0
  %807 = vmatmul.mubr.bf16.gmra.mxu0 %v663
  %v808 = vpop.f32.mrf.mxu0
  %v809 = vadd.f32 0.0, %v808
  %v810 = vpop.f32.mrf.mxu0
  %v811 = vpop.f32.mrf.mxu0
  %v812 = vpop.f32.mrf.mxu0
  %813 = vdwg.mxu0
  %814 = vmatprep.subr.bf16.mxu0 0
  %815 = vmatpush1.bf16.msra.mxu0 %v765
  %816 = vmatprep.subr.bf16.mxu0 0
  %817 = vmatpush1.bf16.msra.mxu0 %v764
  %818 = vmatprep.subr.bf16.mxu0 0
  %819 = vmatpush1.bf16.msra.mxu0 %v763
  %820 = vmatprep.subr.bf16.mxu0 0
  %821 = vmatpush1.bf16.msra.mxu0 %v762
  %822 = vmatprep.subr.bf16.mxu0 0
  %823 = vmatpush1.bf16.msra.mxu0 %v761
  %824 = vmatprep.subr.bf16.mxu0 0
  %825 = vmatpush1.bf16.msra.mxu0 %v760
  %826 = vmatprep.subr.bf16.mxu0 0
  %827 = vmatpush1.bf16.msra.mxu0 %v759
  %828 = vmatprep.subr.bf16.mxu0 0
  %829 = vmatpush1.bf16.msra.mxu0 %v758
  %830 = vmatprep.subr.bf16.mxu0 0
  %831 = vmatpush2.bf16.msra.mxu0 0
  %832 = vmatprep.subr.bf16.mxu0 0
  %833 = vmatpush2.bf16.msra.mxu0 0
  %834 = vmatprep.subr.bf16.mxu0 0
  %835 = vmatpush2.bf16.msra.mxu0 0
  %836 = vmatprep.subr.bf16.mxu0 0
  %837 = vmatpush2.bf16.msra.mxu0 0
  %838 = vmatprep.subr.bf16.mxu0 0
  %839 = vmatpush2.bf16.msra.mxu0 0
  %840 = vmatprep.subr.bf16.mxu0 0
  %841 = vmatpush2.bf16.msra.mxu0 0
  %842 = vmatprep.subr.bf16.mxu0 0
  %843 = vmatpush2.bf16.msra.mxu0 0
  %844 = vmatprep.subr.bf16.mxu0 0
  %845 = vmatpush2.bf16.msra.mxu0 0
  %846 = vmatprep.mubr.bf16.mxu0 0
  %847 = vmatmul.mubr.bf16.gmra.mxu0 %v666
  %v848 = vpop.f32.mrf.mxu0
  %v849 = vadd.f32 0.0, %v848
  %v850 = vpop.f32.mrf.mxu0
  %v851 = vpop.f32.mrf.mxu0
  %v852 = vpop.f32.mrf.mxu0
  %853 = vdwg.mxu0
  %854 = vmatprep.subr.bf16.mxu0 0
  %855 = vmatpush1.bf16.msra.mxu0 %v765
  %856 = vmatprep.subr.bf16.mxu0 0
  %857 = vmatpush1.bf16.msra.mxu0 %v764
  %858 = vmatprep.subr.bf16.mxu0 0
  %859 = vmatpush1.bf16.msra.mxu0 %v763
  %860 = vmatprep.subr.bf16.mxu0 0
  %861 = vmatpush1.bf16.msra.mxu0 %v762
  %862 = vmatprep.subr.bf16.mxu0 0
  %863 = vmatpush1.bf16.msra.mxu0 %v761
  %864 = vmatprep.subr.bf16.mxu0 0
  %865 = vmatpush1.bf16.msra.mxu0 %v760
  %866 = vmatprep.subr.bf16.mxu0 0
  %867 = vmatpush1.bf16.msra.mxu0 %v759
  %868 = vmatprep.subr.bf16.mxu0 0
  %869 = vmatpush1.bf16.msra.mxu0 %v758
  %870 = vmatprep.subr.bf16.mxu0 0
  %871 = vmatpush2.bf16.msra.mxu0 0
  %872 = vmatprep.subr.bf16.mxu0 0
  %873 = vmatpush2.bf16.msra.mxu0 0
  %874 = vmatprep.subr.bf16.mxu0 0
  %875 = vmatpush2.bf16.msra.mxu0 0
  %876 = vmatprep.subr.bf16.mxu0 0
  %877 = vmatpush2.bf16.msra.mxu0 0
  %878 = vmatprep.subr.bf16.mxu0 0
  %879 = vmatpush2.bf16.msra.mxu0 0
  %880 = vmatprep.subr.bf16.mxu0 0
  %881 = vmatpush2.bf16.msra.mxu0 0
  %882 = vmatprep.subr.bf16.mxu0 0
  %883 = vmatpush2.bf16.msra.mxu0 0
  %884 = vmatprep.subr.bf16.mxu0 0
  %885 = vmatpush2.bf16.msra.mxu0 0
  %886 = vmatprep.mubr.bf16.mxu0 0
  %887 = vmatmul.mubr.bf16.gmra.mxu0 %v669
  %v888 = vpop.f32.mrf.mxu0
  %v889 = vadd.f32 0.0, %v888
  %v890 = vpop.f32.mrf.mxu0
  %v891 = vpop.f32.mrf.mxu0
  %v892 = vpop.f32.mrf.mxu0
  %893 = vdwg.mxu0
  %894 = vmatprep.subr.bf16.mxu0 0
  %895 = vmatpush1.bf16.msra.mxu0 %v765
  %896 = vmatprep.subr.bf16.mxu0 0
  %897 = vmatpush1.bf16.msra.mxu0 %v764
  %898 = vmatprep.subr.bf16.mxu0 0
  %899 = vmatpush1.bf16.msra.mxu0 %v763
  %900 = vmatprep.subr.bf16.mxu0 0
  %901 = vmatpush1.bf16.msra.mxu0 %v762
  %902 = vmatprep.subr.bf16.mxu0 0
  %903 = vmatpush1.bf16.msra.mxu0 %v761
  %904 = vmatprep.subr.bf16.mxu0 0
  %905 = vmatpush1.bf16.msra.mxu0 %v760
  %906 = vmatprep.subr.bf16.mxu0 0
  %907 = vmatpush1.bf16.msra.mxu0 %v759
  %908 = vmatprep.subr.bf16.mxu0 0
  %909 = vmatpush1.bf16.msra.mxu0 %v758
  %910 = vmatprep.subr.bf16.mxu0 0
  %911 = vmatpush2.bf16.msra.mxu0 0
  %912 = vmatprep.subr.bf16.mxu0 0
  %913 = vmatpush2.bf16.msra.mxu0 0
  %914 = vmatprep.subr.bf16.mxu0 0
  %915 = vmatpush2.bf16.msra.mxu0 0
  %916 = vmatprep.subr.bf16.mxu0 0
  %917 = vmatpush2.bf16.msra.mxu0 0
  %918 = vmatprep.subr.bf16.mxu0 0
  %919 = vmatpush2.bf16.msra.mxu0 0
  %920 = vmatprep.subr.bf16.mxu0 0
  %921 = vmatpush2.bf16.msra.mxu0 0
  %922 = vmatprep.subr.bf16.mxu0 0
  %923 = vmatpush2.bf16.msra.mxu0 0
  %924 = vmatprep.subr.bf16.mxu0 0
  %925 = vmatpush2.bf16.msra.mxu0 0
  %926 = vmatprep.mubr.bf16.mxu0 0
  %927 = vmatmul.mubr.bf16.gmra.mxu0 %v672
  %v928 = vpop.f32.mrf.mxu0
  %v929 = vadd.f32 0.0, %v928
  %v930 = vpop.f32.mrf.mxu0
  %v931 = vpop.f32.mrf.mxu0
  %v932 = vpop.f32.mrf.mxu0
  %933 = vdwg.mxu0
  %934 = vmatprep.subr.bf16.mxu0 0
  %935 = vmatpush1.bf16.msra.mxu0 %v765
  %936 = vmatprep.subr.bf16.mxu0 0
  %937 = vmatpush1.bf16.msra.mxu0 %v764
  %938 = vmatprep.subr.bf16.mxu0 0
  %939 = vmatpush1.bf16.msra.mxu0 %v763
  %940 = vmatprep.subr.bf16.mxu0 0
  %941 = vmatpush1.bf16.msra.mxu0 %v762
  %942 = vmatprep.subr.bf16.mxu0 0
  %943 = vmatpush1.bf16.msra.mxu0 %v761
  %944 = vmatprep.subr.bf16.mxu0 0
  %945 = vmatpush1.bf16.msra.mxu0 %v760
  %946 = vmatprep.subr.bf16.mxu0 0
  %947 = vmatpush1.bf16.msra.mxu0 %v759
  %948 = vmatprep.subr.bf16.mxu0 0
  %949 = vmatpush1.bf16.msra.mxu0 %v758
  %950 = vmatprep.subr.bf16.mxu0 0
  %951 = vmatpush2.bf16.msra.mxu0 0
  %952 = vmatprep.subr.bf16.mxu0 0
  %953 = vmatpush2.bf16.msra.mxu0 0
  %954 = vmatprep.subr.bf16.mxu0 0
  %955 = vmatpush2.bf16.msra.mxu0 0
  %956 = vmatprep.subr.bf16.mxu0 0
  %957 = vmatpush2.bf16.msra.mxu0 0
  %958 = vmatprep.subr.bf16.mxu0 0
  %959 = vmatpush2.bf16.msra.mxu0 0
  %960 = vmatprep.subr.bf16.mxu0 0
  %961 = vmatpush2.bf16.msra.mxu0 0
  %962 = vmatprep.subr.bf16.mxu0 0
  %963 = vmatpush2.bf16.msra.mxu0 0
  %964 = vmatprep.subr.bf16.mxu0 0
  %965 = vmatpush2.bf16.msra.mxu0 0
  %966 = vmatprep.mubr.bf16.mxu0 0
  %967 = vmatmul.mubr.bf16.gmra.mxu0 %v675
  %v968 = vpop.f32.mrf.mxu0
  %v969 = vadd.f32 0.0, %v968
  %v970 = vpop.f32.mrf.mxu0
  %v971 = vpop.f32.mrf.mxu0
  %v972 = vpop.f32.mrf.mxu0
  %973 = vdwg.mxu0
  %974 = vmatprep.subr.bf16.mxu0 0
  %975 = vmatpush1.bf16.msra.mxu0 %v765
  %976 = vmatprep.subr.bf16.mxu0 0
  %977 = vmatpush1.bf16.msra.mxu0 %v764
  %978 = vmatprep.subr.bf16.mxu0 0
  %979 = vmatpush1.bf16.msra.mxu0 %v763
  %980 = vmatprep.subr.bf16.mxu0 0
  %981 = vmatpush1.bf16.msra.mxu0 %v762
  %982 = vmatprep.subr.bf16.mxu0 0
  %983 = vmatpush1.bf16.msra.mxu0 %v761
  %984 = vmatprep.subr.bf16.mxu0 0
  %985 = vmatpush1.bf16.msra.mxu0 %v760
  %986 = vmatprep.subr.bf16.mxu0 0
  %987 = vmatpush1.bf16.msra.mxu0 %v759
  %988 = vmatprep.subr.bf16.mxu0 0
  %989 = vmatpush1.bf16.msra.mxu0 %v758
  %990 = vmatprep.subr.bf16.mxu0 0
  %991 = vmatpush2.bf16.msra.mxu0 0
  %992 = vmatprep.subr.bf16.mxu0 0
  %993 = vmatpush2.bf16.msra.mxu0 0
  %994 = vmatprep.subr.bf16.mxu0 0
  %995 = vmatpush2.bf16.msra.mxu0 0
  %996 = vmatprep.subr.bf16.mxu0 0
  %997 = vmatpush2.bf16.msra.mxu0 0
  %998 = vmatprep.subr.bf16.mxu0 0
  %999 = vmatpush2.bf16.msra.mxu0 0
  %1000 = vmatprep.subr.bf16.mxu0 0
  %1001 = vmatpush2.bf16.msra.mxu0 0
  %1002 = vmatprep.subr.bf16.mxu0 0
  %1003 = vmatpush2.bf16.msra.mxu0 0
  %1004 = vmatprep.subr.bf16.mxu0 0
  %1005 = vmatpush2.bf16.msra.mxu0 0
  %1006 = vmatprep.mubr.bf16.mxu0 0
  %1007 = vmatmul.mubr.bf16.gmra.mxu0 %v678
  %v1008 = vpop.f32.mrf.mxu0
  %v1009 = vadd.f32 0.0, %v1008
  %v1010 = vpop.f32.mrf.mxu0
  %v1011 = vpop.f32.mrf.mxu0
  %v1012 = vpop.f32.mrf.mxu0
  %1013 = vdwg.mxu0
  %1014 = vmatprep.subr.bf16.mxu0 0
  %1015 = vmatpush1.bf16.msra.mxu0 %v765
  %1016 = vmatprep.subr.bf16.mxu0 0
  %1017 = vmatpush1.bf16.msra.mxu0 %v764
  %1018 = vmatprep.subr.bf16.mxu0 0
  %1019 = vmatpush1.bf16.msra.mxu0 %v763
  %1020 = vmatprep.subr.bf16.mxu0 0
  %1021 = vmatpush1.bf16.msra.mxu0 %v762
  %1022 = vmatprep.subr.bf16.mxu0 0
  %1023 = vmatpush1.bf16.msra.mxu0 %v761
  %1024 = vmatprep.subr.bf16.mxu0 0
  %1025 = vmatpush1.bf16.msra.mxu0 %v760
  %1026 = vmatprep.subr.bf16.mxu0 0
  %1027 = vmatpush1.bf16.msra.mxu0 %v759
  %1028 = vmatprep.subr.bf16.mxu0 0
  %1029 = vmatpush1.bf16.msra.mxu0 %v758
  %1030 = vmatprep.subr.bf16.mxu0 0
  %1031 = vmatpush2.bf16.msra.mxu0 0
  %1032 = vmatprep.subr.bf16.mxu0 0
  %1033 = vmatpush2.bf16.msra.mxu0 0
  %1034 = vmatprep.subr.bf16.mxu0 0
  %1035 = vmatpush2.bf16.msra.mxu0 0
  %1036 = vmatprep.subr.bf16.mxu0 0
  %1037 = vmatpush2.bf16.msra.mxu0 0
  %1038 = vmatprep.subr.bf16.mxu0 0
  %1039 = vmatpush2.bf16.msra.mxu0 0
  %1040 = vmatprep.subr.bf16.mxu0 0
  %1041 = vmatpush2.bf16.msra.mxu0 0
  %1042 = vmatprep.subr.bf16.mxu0 0
  %1043 = vmatpush2.bf16.msra.mxu0 0
  %1044 = vmatprep.subr.bf16.mxu0 0
  %1045 = vmatpush2.bf16.msra.mxu0 0
  %1046 = vmatprep.mubr.bf16.mxu0 0
  %1047 = vmatmul.mubr.bf16.gmra.mxu0 %v681
  %v1048 = vpop.f32.mrf.mxu0
  %v1049 = vadd.f32 0.0, %v1048
  %v1050 = vpop.f32.mrf.mxu0
  %v1051 = vpop.f32.mrf.mxu0
  %v1052 = vpop.f32.mrf.mxu0
  %1053 = vdwg.mxu0
  %1054 = vmatprep.subr.bf16.mxu0 0
  %1055 = vmatpush1.bf16.msra.mxu0 %v765
  %1056 = vmatprep.subr.bf16.mxu0 0
  %1057 = vmatpush1.bf16.msra.mxu0 %v764
  %1058 = vmatprep.subr.bf16.mxu0 0
  %1059 = vmatpush1.bf16.msra.mxu0 %v763
  %1060 = vmatprep.subr.bf16.mxu0 0
  %1061 = vmatpush1.bf16.msra.mxu0 %v762
  %1062 = vmatprep.subr.bf16.mxu0 0
  %1063 = vmatpush1.bf16.msra.mxu0 %v761
  %1064 = vmatprep.subr.bf16.mxu0 0
  %1065 = vmatpush1.bf16.msra.mxu0 %v760
  %1066 = vmatprep.subr.bf16.mxu0 0
  %1067 = vmatpush1.bf16.msra.mxu0 %v759
  %1068 = vmatprep.subr.bf16.mxu0 0
  %1069 = vmatpush1.bf16.msra.mxu0 %v758
  %1070 = vmatprep.subr.bf16.mxu0 0
  %1071 = vmatpush2.bf16.msra.mxu0 0
  %1072 = vmatprep.subr.bf16.mxu0 0
  %1073 = vmatpush2.bf16.msra.mxu0 0
  %1074 = vmatprep.subr.bf16.mxu0 0
  %1075 = vmatpush2.bf16.msra.mxu0 0
  %1076 = vmatprep.subr.bf16.mxu0 0
  %1077 = vmatpush2.bf16.msra.mxu0 0
  %1078 = vmatprep.subr.bf16.mxu0 0
  %1079 = vmatpush2.bf16.msra.mxu0 0
  %1080 = vmatprep.subr.bf16.mxu0 0
  %1081 = vmatpush2.bf16.msra.mxu0 0
  %1082 = vmatprep.subr.bf16.mxu0 0
  %1083 = vmatpush2.bf16.msra.mxu0 0
  %1084 = vmatprep.subr.bf16.mxu0 0
  %1085 = vmatpush2.bf16.msra.mxu0 0
  %1086 = vmatprep.mubr.bf16.mxu0 0
  %1087 = vmatmul.mubr.bf16.gmra.mxu0 %v684
  %v1088 = vpop.f32.mrf.mxu0
  %v1089 = vadd.f32 0.0, %v1088
  %v1090 = vpop.f32.mrf.mxu0
  %v1091 = vpop.f32.mrf.mxu0
  %v1092 = vpop.f32.mrf.mxu0
  %1093 = vdwg.mxu0
  %1094 = vmatprep.subr.bf16.mxu0 0
  %1095 = vmatpush1.bf16.msra.mxu0 %v765
  %1096 = vmatprep.subr.bf16.mxu0 0
  %1097 = vmatpush1.bf16.msra.mxu0 %v764
  %1098 = vmatprep.subr.bf16.mxu0 0
  %1099 = vmatpush1.bf16.msra.mxu0 %v763
  %1100 = vmatprep.subr.bf16.mxu0 0
  %1101 = vmatpush1.bf16.msra.mxu0 %v762
  %1102 = vmatprep.subr.bf16.mxu0 0
  %1103 = vmatpush1.bf16.msra.mxu0 %v761
  %1104 = vmatprep.subr.bf16.mxu0 0
  %1105 = vmatpush1.bf16.msra.mxu0 %v760
  %1106 = vmatprep.subr.bf16.mxu0 0
  %1107 = vmatpush1.bf16.msra.mxu0 %v759
  %1108 = vmatprep.subr.bf16.mxu0 0
  %1109 = vmatpush1.bf16.msra.mxu0 %v758
  %1110 = vmatprep.subr.bf16.mxu0 0
  %1111 = vmatpush2.bf16.msra.mxu0 0
  %1112 = vmatprep.subr.bf16.mxu0 0
  %1113 = vmatpush2.bf16.msra.mxu0 0
  %1114 = vmatprep.subr.bf16.mxu0 0
  %1115 = vmatpush2.bf16.msra.mxu0 0
  %1116 = vmatprep.subr.bf16.mxu0 0
  %1117 = vmatpush2.bf16.msra.mxu0 0
  %1118 = vmatprep.subr.bf16.mxu0 0
  %1119 = vmatpush2.bf16.msra.mxu0 0
  %1120 = vmatprep.subr.bf16.mxu0 0
  %1121 = vmatpush2.bf16.msra.mxu0 0
  %1122 = vmatprep.subr.bf16.mxu0 0
  %1123 = vmatpush2.bf16.msra.mxu0 0
  %1124 = vmatprep.subr.bf16.mxu0 0
  %1125 = vmatpush2.bf16.msra.mxu0 0
  %1126 = vmatprep.mubr.bf16.mxu0 0
  %1127 = vmatmul.mubr.bf16.gmra.mxu0 %v687
  %v1128 = vpop.f32.mrf.mxu0
  %v1129 = vadd.f32 0.0, %v1128
  %v1130 = vpop.f32.mrf.mxu0
  %v1131 = vpop.f32.mrf.mxu0
  %v1132 = vpop.f32.mrf.mxu0
  %1133 = vdwg.mxu0
  %1134 = vmatprep.subr.bf16.mxu0 0
  %1135 = vmatpush1.bf16.msra.mxu0 %v765
  %1136 = vmatprep.subr.bf16.mxu0 0
  %1137 = vmatpush1.bf16.msra.mxu0 %v764
  %1138 = vmatprep.subr.bf16.mxu0 0
  %1139 = vmatpush1.bf16.msra.mxu0 %v763
  %1140 = vmatprep.subr.bf16.mxu0 0
  %1141 = vmatpush1.bf16.msra.mxu0 %v762
  %1142 = vmatprep.subr.bf16.mxu0 0
  %1143 = vmatpush1.bf16.msra.mxu0 %v761
  %1144 = vmatprep.subr.bf16.mxu0 0
  %1145 = vmatpush1.bf16.msra.mxu0 %v760
  %1146 = vmatprep.subr.bf16.mxu0 0
  %1147 = vmatpush1.bf16.msra.mxu0 %v759
  %1148 = vmatprep.subr.bf16.mxu0 0
  %1149 = vmatpush1.bf16.msra.mxu0 %v758
  %1150 = vmatprep.subr.bf16.mxu0 0
  %1151 = vmatpush2.bf16.msra.mxu0 0
  %1152 = vmatprep.subr.bf16.mxu0 0
  %1153 = vmatpush2.bf16.msra.mxu0 0
  %1154 = vmatprep.subr.bf16.mxu0 0
  %1155 = vmatpush2.bf16.msra.mxu0 0
  %1156 = vmatprep.subr.bf16.mxu0 0
  %1157 = vmatpush2.bf16.msra.mxu0 0
  %1158 = vmatprep.subr.bf16.mxu0 0
  %1159 = vmatpush2.bf16.msra.mxu0 0
  %1160 = vmatprep.subr.bf16.mxu0 0
  %1161 = vmatpush2.bf16.msra.mxu0 0
  %1162 = vmatprep.subr.bf16.mxu0 0
  %1163 = vmatpush2.bf16.msra.mxu0 0
  %1164 = vmatprep.subr.bf16.mxu0 0
  %1165 = vmatpush2.bf16.msra.mxu0 0
  %1166 = vmatprep.mubr.bf16.mxu0 0
  %1167 = vmatmul.mubr.bf16.gmra.mxu0 %v690
  %v1168 = vpop.f32.mrf.mxu0
  %v1169 = vadd.f32 0.0, %v1168
  %v1170 = vpop.f32.mrf.mxu0
  %v1171 = vpop.f32.mrf.mxu0
  %v1172 = vpop.f32.mrf.mxu0
  %1173 = vdwg.mxu0
  %1174 = vmatprep.subr.bf16.mxu0 0
  %1175 = vmatpush1.bf16.msra.mxu0 %v765
  %1176 = vmatprep.subr.bf16.mxu0 0
  %1177 = vmatpush1.bf16.msra.mxu0 %v764
  %1178 = vmatprep.subr.bf16.mxu0 0
  %1179 = vmatpush1.bf16.msra.mxu0 %v763
  %1180 = vmatprep.subr.bf16.mxu0 0
  %1181 = vmatpush1.bf16.msra.mxu0 %v762
  %1182 = vmatprep.subr.bf16.mxu0 0
  %1183 = vmatpush1.bf16.msra.mxu0 %v761
  %1184 = vmatprep.subr.bf16.mxu0 0
  %1185 = vmatpush1.bf16.msra.mxu0 %v760
  %1186 = vmatprep.subr.bf16.mxu0 0
  %1187 = vmatpush1.bf16.msra.mxu0 %v759
  %1188 = vmatprep.subr.bf16.mxu0 0
  %1189 = vmatpush1.bf16.msra.mxu0 %v758
  %1190 = vmatprep.subr.bf16.mxu0 0
  %1191 = vmatpush2.bf16.msra.mxu0 0
  %1192 = vmatprep.subr.bf16.mxu0 0
  %1193 = vmatpush2.bf16.msra.mxu0 0
  %1194 = vmatprep.subr.bf16.mxu0 0
  %1195 = vmatpush2.bf16.msra.mxu0 0
  %1196 = vmatprep.subr.bf16.mxu0 0
  %1197 = vmatpush2.bf16.msra.mxu0 0
  %1198 = vmatprep.subr.bf16.mxu0 0
  %1199 = vmatpush2.bf16.msra.mxu0 0
  %1200 = vmatprep.subr.bf16.mxu0 0
  %1201 = vmatpush2.bf16.msra.mxu0 0
  %1202 = vmatprep.subr.bf16.mxu0 0
  %1203 = vmatpush2.bf16.msra.mxu0 0
  %1204 = vmatprep.subr.bf16.mxu0 0
  %1205 = vmatpush2.bf16.msra.mxu0 0
  %1206 = vmatprep.mubr.bf16.mxu0 0
  %1207 = vmatmul.mubr.bf16.gmra.mxu0 %v693
  %v1208 = vpop.f32.mrf.mxu0
  %v1209 = vadd.f32 0.0, %v1208
  %v1210 = vpop.f32.mrf.mxu0
  %v1211 = vpop.f32.mrf.mxu0
  %v1212 = vpop.f32.mrf.mxu0
  %1213 = vdwg.mxu0
  %1214 = vmatprep.subr.bf16.mxu0 0
  %1215 = vmatpush1.bf16.msra.mxu0 %v765
  %1216 = vmatprep.subr.bf16.mxu0 0
  %1217 = vmatpush1.bf16.msra.mxu0 %v764
  %1218 = vmatprep.subr.bf16.mxu0 0
  %1219 = vmatpush1.bf16.msra.mxu0 %v763
  %1220 = vmatprep.subr.bf16.mxu0 0
  %1221 = vmatpush1.bf16.msra.mxu0 %v762
  %1222 = vmatprep.subr.bf16.mxu0 0
  %1223 = vmatpush1.bf16.msra.mxu0 %v761
  %1224 = vmatprep.subr.bf16.mxu0 0
  %1225 = vmatpush1.bf16.msra.mxu0 %v760
  %1226 = vmatprep.subr.bf16.mxu0 0
  %1227 = vmatpush1.bf16.msra.mxu0 %v759
  %1228 = vmatprep.subr.bf16.mxu0 0
  %1229 = vmatpush1.bf16.msra.mxu0 %v758
  %1230 = vmatprep.subr.bf16.mxu0 0
  %1231 = vmatpush2.bf16.msra.mxu0 0
  %1232 = vmatprep.subr.bf16.mxu0 0
  %1233 = vmatpush2.bf16.msra.mxu0 0
  %1234 = vmatprep.subr.bf16.mxu0 0
  %1235 = vmatpush2.bf16.msra.mxu0 0
  %1236 = vmatprep.subr.bf16.mxu0 0
  %1237 = vmatpush2.bf16.msra.mxu0 0
  %1238 = vmatprep.subr.bf16.mxu0 0
  %1239 = vmatpush2.bf16.msra.mxu0 0
  %1240 = vmatprep.subr.bf16.mxu0 0
  %1241 = vmatpush2.bf16.msra.mxu0 0
  %1242 = vmatprep.subr.bf16.mxu0 0
  %1243 = vmatpush2.bf16.msra.mxu0 0
  %1244 = vmatprep.subr.bf16.mxu0 0
  %1245 = vmatpush2.bf16.msra.mxu0 0
  %1246 = vmatprep.mubr.bf16.mxu0 0
  %1247 = vmatmul.mubr.bf16.gmra.mxu0 %v696
  %v1248 = vpop.f32.mrf.mxu0
  %v1249 = vadd.f32 0.0, %v1248
  %v1250 = vpop.f32.mrf.mxu0
  %v1251 = vpop.f32.mrf.mxu0
  %v1252 = vpop.f32.mrf.mxu0
  %1253 = vdwg.mxu0
  %1254 = vmatprep.subr.bf16.mxu0 0
  %1255 = vmatpush1.bf16.msra.mxu0 %v765
  %1256 = vmatprep.subr.bf16.mxu0 0
  %1257 = vmatpush1.bf16.msra.mxu0 %v764
  %1258 = vmatprep.subr.bf16.mxu0 0
  %1259 = vmatpush1.bf16.msra.mxu0 %v763
  %1260 = vmatprep.subr.bf16.mxu0 0
  %1261 = vmatpush1.bf16.msra.mxu0 %v762
  %1262 = vmatprep.subr.bf16.mxu0 0
  %1263 = vmatpush1.bf16.msra.mxu0 %v761
  %1264 = vmatprep.subr.bf16.mxu0 0
  %1265 = vmatpush1.bf16.msra.mxu0 %v760
  %1266 = vmatprep.subr.bf16.mxu0 0
  %1267 = vmatpush1.bf16.msra.mxu0 %v759
  %1268 = vmatprep.subr.bf16.mxu0 0
  %1269 = vmatpush1.bf16.msra.mxu0 %v758
  %1270 = vmatprep.subr.bf16.mxu0 0
  %1271 = vmatpush2.bf16.msra.mxu0 0
  %1272 = vmatprep.subr.bf16.mxu0 0
  %1273 = vmatpush2.bf16.msra.mxu0 0
  %1274 = vmatprep.subr.bf16.mxu0 0
  %1275 = vmatpush2.bf16.msra.mxu0 0
  %1276 = vmatprep.subr.bf16.mxu0 0
  %1277 = vmatpush2.bf16.msra.mxu0 0
  %1278 = vmatprep.subr.bf16.mxu0 0
  %1279 = vmatpush2.bf16.msra.mxu0 0
  %1280 = vmatprep.subr.bf16.mxu0 0
  %1281 = vmatpush2.bf16.msra.mxu0 0
  %1282 = vmatprep.subr.bf16.mxu0 0
  %1283 = vmatpush2.bf16.msra.mxu0 0
  %1284 = vmatprep.subr.bf16.mxu0 0
  %1285 = vmatpush2.bf16.msra.mxu0 0
  %1286 = vmatprep.mubr.bf16.mxu0 0
  %1287 = vmatmul.mubr.bf16.gmra.mxu0 %v699
  %v1288 = vpop.f32.mrf.mxu0
  %v1289 = vadd.f32 0.0, %v1288
  %v1290 = vpop.f32.mrf.mxu0
  %v1291 = vpop.f32.mrf.mxu0
  %v1292 = vpop.f32.mrf.mxu0
  %1293 = vdwg.mxu0
  %1294 = vmatprep.subr.bf16.mxu0 0
  %1295 = vmatpush1.bf16.msra.mxu0 %v765
  %1296 = vmatprep.subr.bf16.mxu0 0
  %1297 = vmatpush1.bf16.msra.mxu0 %v764
  %1298 = vmatprep.subr.bf16.mxu0 0
  %1299 = vmatpush1.bf16.msra.mxu0 %v763
  %1300 = vmatprep.subr.bf16.mxu0 0
  %1301 = vmatpush1.bf16.msra.mxu0 %v762
  %1302 = vmatprep.subr.bf16.mxu0 0
  %1303 = vmatpush1.bf16.msra.mxu0 %v761
  %1304 = vmatprep.subr.bf16.mxu0 0
  %1305 = vmatpush1.bf16.msra.mxu0 %v760
  %1306 = vmatprep.subr.bf16.mxu0 0
  %1307 = vmatpush1.bf16.msra.mxu0 %v759
  %1308 = vmatprep.subr.bf16.mxu0 0
  %1309 = vmatpush1.bf16.msra.mxu0 %v758
  %1310 = vmatprep.subr.bf16.mxu0 0
  %1311 = vmatpush2.bf16.msra.mxu0 0
  %1312 = vmatprep.subr.bf16.mxu0 0
  %1313 = vmatpush2.bf16.msra.mxu0 0
  %1314 = vmatprep.subr.bf16.mxu0 0
  %1315 = vmatpush2.bf16.msra.mxu0 0
  %1316 = vmatprep.subr.bf16.mxu0 0
  %1317 = vmatpush2.bf16.msra.mxu0 0
  %1318 = vmatprep.subr.bf16.mxu0 0
  %1319 = vmatpush2.bf16.msra.mxu0 0
  %1320 = vmatprep.subr.bf16.mxu0 0
  %1321 = vmatpush2.bf16.msra.mxu0 0
  %1322 = vmatprep.subr.bf16.mxu0 0
  %1323 = vmatpush2.bf16.msra.mxu0 0
  %1324 = vmatprep.subr.bf16.mxu0 0
  %1325 = vmatpush2.bf16.msra.mxu0 0
  %1326 = vmatprep.mubr.bf16.mxu0 0
  %1327 = vmatmul.mubr.bf16.gmra.mxu0 %v702
  %v1328 = vpop.f32.mrf.mxu0
  %v1329 = vadd.f32 0.0, %v1328
  %v1330 = vpop.f32.mrf.mxu0
  %v1331 = vpop.f32.mrf.mxu0
  %v1332 = vpop.f32.mrf.mxu0
  %1333 = vdwg.mxu0
  %1334 = vmatprep.subr.bf16.mxu0 0
  %1335 = vmatpush1.bf16.msra.mxu0 %v765
  %1336 = vmatprep.subr.bf16.mxu0 0
  %1337 = vmatpush1.bf16.msra.mxu0 %v764
  %1338 = vmatprep.subr.bf16.mxu0 0
  %1339 = vmatpush1.bf16.msra.mxu0 %v763
  %1340 = vmatprep.subr.bf16.mxu0 0
  %1341 = vmatpush1.bf16.msra.mxu0 %v762
  %1342 = vmatprep.subr.bf16.mxu0 0
  %1343 = vmatpush1.bf16.msra.mxu0 %v761
  %1344 = vmatprep.subr.bf16.mxu0 0
  %1345 = vmatpush1.bf16.msra.mxu0 %v760
  %1346 = vmatprep.subr.bf16.mxu0 0
  %1347 = vmatpush1.bf16.msra.mxu0 %v759
  %1348 = vmatprep.subr.bf16.mxu0 0
  %1349 = vmatpush1.bf16.msra.mxu0 %v758
  %1350 = vmatprep.subr.bf16.mxu0 0
  %1351 = vmatpush2.bf16.msra.mxu0 0
  %1352 = vmatprep.subr.bf16.mxu0 0
  %1353 = vmatpush2.bf16.msra.mxu0 0
  %1354 = vmatprep.subr.bf16.mxu0 0
  %1355 = vmatpush2.bf16.msra.mxu0 0
  %1356 = vmatprep.subr.bf16.mxu0 0
  %1357 = vmatpush2.bf16.msra.mxu0 0
  %1358 = vmatprep.subr.bf16.mxu0 0
  %1359 = vmatpush2.bf16.msra.mxu0 0
  %1360 = vmatprep.subr.bf16.mxu0 0
  %1361 = vmatpush2.bf16.msra.mxu0 0
  %1362 = vmatprep.subr.bf16.mxu0 0
  %1363 = vmatpush2.bf16.msra.mxu0 0
  %1364 = vmatprep.subr.bf16.mxu0 0
  %1365 = vmatpush2.bf16.msra.mxu0 0
  %1366 = vmatprep.mubr.bf16.mxu0 0
  %1367 = vmatmul.mubr.bf16.gmra.mxu0 %v705
  %v1368 = vpop.f32.mrf.mxu0
  %v1369 = vadd.f32 0.0, %v1368
  %v1370 = vpop.f32.mrf.mxu0
  %v1371 = vpop.f32.mrf.mxu0
  %v1372 = vpop.f32.mrf.mxu0
  %1373 = vdwg.mxu0
  %1374 = vmatprep.subr.bf16.mxu0 0
  %1375 = vmatpush1.bf16.msra.mxu0 %v765
  %1376 = vmatprep.subr.bf16.mxu0 0
  %1377 = vmatpush1.bf16.msra.mxu0 %v764
  %1378 = vmatprep.subr.bf16.mxu0 0
  %1379 = vmatpush1.bf16.msra.mxu0 %v763
  %1380 = vmatprep.subr.bf16.mxu0 0
  %1381 = vmatpush1.bf16.msra.mxu0 %v762
  %1382 = vmatprep.subr.bf16.mxu0 0
  %1383 = vmatpush1.bf16.msra.mxu0 %v761
  %1384 = vmatprep.subr.bf16.mxu0 0
  %1385 = vmatpush1.bf16.msra.mxu0 %v760
  %1386 = vmatprep.subr.bf16.mxu0 0
  %1387 = vmatpush1.bf16.msra.mxu0 %v759
  %1388 = vmatprep.subr.bf16.mxu0 0
  %1389 = vmatpush1.bf16.msra.mxu0 %v758
  %1390 = vmatprep.subr.bf16.mxu0 0
  %1391 = vmatpush2.bf16.msra.mxu0 0
  %1392 = vmatprep.subr.bf16.mxu0 0
  %1393 = vmatpush2.bf16.msra.mxu0 0
  %1394 = vmatprep.subr.bf16.mxu0 0
  %1395 = vmatpush2.bf16.msra.mxu0 0
  %1396 = vmatprep.subr.bf16.mxu0 0
  %1397 = vmatpush2.bf16.msra.mxu0 0
  %1398 = vmatprep.subr.bf16.mxu0 0
  %1399 = vmatpush2.bf16.msra.mxu0 0
  %1400 = vmatprep.subr.bf16.mxu0 0
  %1401 = vmatpush2.bf16.msra.mxu0 0
  %1402 = vmatprep.subr.bf16.mxu0 0
  %1403 = vmatpush2.bf16.msra.mxu0 0
  %1404 = vmatprep.subr.bf16.mxu0 0
  %1405 = vmatpush2.bf16.msra.mxu0 0
  %1406 = vmatprep.mubr.bf16.mxu0 0
  %1407 = vmatmul.mubr.bf16.gmra.mxu0 %v708
  %v1408 = vpop.f32.mrf.mxu0
  %v1409 = vadd.f32 0.0, %v1408
  %v1410 = vpop.f32.mrf.mxu0
  %v1411 = vpop.f32.mrf.mxu0
  %v1412 = vpop.f32.mrf.mxu0
  %1413 = vdwg.mxu0
  %vm1414 = vcmask 130048
  %v1415 = vsel %vm1414, %v809, 0.0
  %v1416 = vrot.slane %v1415, 4
  %v1417 = vadd.f32 %v1415, %v1416
  %v1418 = vrot.slane %v1417, 2
  %v1419 = vadd.f32 %v1417, %v1418
  %v1420 = vrot.slane %v1419, 1
  %v1421 = vadd.f32 %v1419, %v1420
  %v1422 = vsel %vm1414, %v849, 0.0
  %v1423 = vrot.slane %v1422, 4
  %v1424 = vadd.f32 %v1422, %v1423
  %v1425 = vrot.slane %v1424, 2
  %v1426 = vadd.f32 %v1424, %v1425
  %v1427 = vrot.slane %v1426, 1
  %v1428 = vadd.f32 %v1426, %v1427
  %v1429 = vsel %vm1414, %v889, 0.0
  %v1430 = vrot.slane %v1429, 4
  %v1431 = vadd.f32 %v1429, %v1430
  %v1432 = vrot.slane %v1431, 2
  %v1433 = vadd.f32 %v1431, %v1432
  %v1434 = vrot.slane %v1433, 1
  %v1435 = vadd.f32 %v1433, %v1434
  %v1436 = vsel %vm1414, %v929, 0.0
  %v1437 = vrot.slane %v1436, 4
  %v1438 = vadd.f32 %v1436, %v1437
  %v1439 = vrot.slane %v1438, 2
  %v1440 = vadd.f32 %v1438, %v1439
  %v1441 = vrot.slane %v1440, 1
  %v1442 = vadd.f32 %v1440, %v1441
  %v1443 = vsel %vm1414, %v969, 0.0
  %v1444 = vrot.slane %v1443, 4
  %v1445 = vadd.f32 %v1443, %v1444
  %v1446 = vrot.slane %v1445, 2
  %v1447 = vadd.f32 %v1445, %v1446
  %v1448 = vrot.slane %v1447, 1
  %v1449 = vadd.f32 %v1447, %v1448
  %v1450 = vsel %vm1414, %v1009, 0.0
  %v1451 = vrot.slane %v1450, 4
  %v1452 = vadd.f32 %v1450, %v1451
  %v1453 = vrot.slane %v1452, 2
  %v1454 = vadd.f32 %v1452, %v1453
  %v1455 = vrot.slane %v1454, 1
  %v1456 = vadd.f32 %v1454, %v1455
  %v1457 = vsel %vm1414, %v1049, 0.0
  %v1458 = vrot.slane %v1457, 4
  %v1459 = vadd.f32 %v1457, %v1458
  %v1460 = vrot.slane %v1459, 2
  %v1461 = vadd.f32 %v1459, %v1460
  %v1462 = vrot.slane %v1461, 1
  %v1463 = vadd.f32 %v1461, %v1462
  %v1464 = vsel %vm1414, %v1089, 0.0
  %v1465 = vrot.slane %v1464, 4
  %v1466 = vadd.f32 %v1464, %v1465
  %v1467 = vrot.slane %v1466, 2
  %v1468 = vadd.f32 %v1466, %v1467
  %v1469 = vrot.slane %v1468, 1
  %v1470 = vadd.f32 %v1468, %v1469
  %v1471 = vsel %vm1414, %v1129, 0.0
  %v1472 = vrot.slane %v1471, 4
  %v1473 = vadd.f32 %v1471, %v1472
  %v1474 = vrot.slane %v1473, 2
  %v1475 = vadd.f32 %v1473, %v1474
  %v1476 = vrot.slane %v1475, 1
  %v1477 = vadd.f32 %v1475, %v1476
  %v1478 = vsel %vm1414, %v1169, 0.0
  %v1479 = vrot.slane %v1478, 4
  %v1480 = vadd.f32 %v1478, %v1479
  %v1481 = vrot.slane %v1480, 2
  %v1482 = vadd.f32 %v1480, %v1481
  %v1483 = vrot.slane %v1482, 1
  %v1484 = vadd.f32 %v1482, %v1483
  %v1485 = vsel %vm1414, %v1209, 0.0
  %v1486 = vrot.slane %v1485, 4
  %v1487 = vadd.f32 %v1485, %v1486
  %v1488 = vrot.slane %v1487, 2
  %v1489 = vadd.f32 %v1487, %v1488
  %v1490 = vrot.slane %v1489, 1
  %v1491 = vadd.f32 %v1489, %v1490
  %v1492 = vsel %vm1414, %v1249, 0.0
  %v1493 = vrot.slane %v1492, 4
  %v1494 = vadd.f32 %v1492, %v1493
  %v1495 = vrot.slane %v1494, 2
  %v1496 = vadd.f32 %v1494, %v1495
  %v1497 = vrot.slane %v1496, 1
  %v1498 = vadd.f32 %v1496, %v1497
  %v1499 = vsel %vm1414, %v1289, 0.0
  %v1500 = vrot.slane %v1499, 4
  %v1501 = vadd.f32 %v1499, %v1500
  %v1502 = vrot.slane %v1501, 2
  %v1503 = vadd.f32 %v1501, %v1502
  %v1504 = vrot.slane %v1503, 1
  %v1505 = vadd.f32 %v1503, %v1504
  %v1506 = vsel %vm1414, %v1329, 0.0
  %v1507 = vrot.slane %v1506, 4
  %v1508 = vadd.f32 %v1506, %v1507
  %v1509 = vrot.slane %v1508, 2
  %v1510 = vadd.f32 %v1508, %v1509
  %v1511 = vrot.slane %v1510, 1
  %v1512 = vadd.f32 %v1510, %v1511
  %v1513 = vsel %vm1414, %v1369, 0.0
  %v1514 = vrot.slane %v1513, 4
  %v1515 = vadd.f32 %v1513, %v1514
  %v1516 = vrot.slane %v1515, 2
  %v1517 = vadd.f32 %v1515, %v1516
  %v1518 = vrot.slane %v1517, 1
  %v1519 = vadd.f32 %v1517, %v1518
  %v1520 = vsel %vm1414, %v1409, 0.0
  %v1521 = vrot.slane %v1520, 4
  %v1522 = vadd.f32 %v1520, %v1521
  %v1523 = vrot.slane %v1522, 2
  %v1524 = vadd.f32 %v1522, %v1523
  %v1525 = vrot.slane %v1524, 1
  %v1526 = vadd.f32 %v1524, %v1525
  %v1527 = vsel %vm1414, %v1421, 0.0
  %v1528 = vsel %vm1414, %v1428, 0.0
  %v1529 = vadd.f32 %v1527, %v1528
  %v1530 = vsel %vm1414, %v1435, 0.0
  %v1531 = vadd.f32 %v1529, %v1530
  %v1532 = vsel %vm1414, %v1442, 0.0
  %v1533 = vadd.f32 %v1531, %v1532
  %v1534 = vsel %vm1414, %v1449, 0.0
  %v1535 = vadd.f32 %v1533, %v1534
  %v1536 = vsel %vm1414, %v1456, 0.0
  %v1537 = vadd.f32 %v1535, %v1536
  %v1538 = vsel %vm1414, %v1463, 0.0
  %v1539 = vadd.f32 %v1537, %v1538
  %v1540 = vsel %vm1414, %v1470, 0.0
  %v1541 = vadd.f32 %v1539, %v1540
  %v1542 = vsel %vm1414, %v1477, 0.0
  %v1543 = vadd.f32 %v1541, %v1542
  %v1544 = vsel %vm1414, %v1484, 0.0
  %v1545 = vadd.f32 %v1543, %v1544
  %v1546 = vsel %vm1414, %v1491, 0.0
  %v1547 = vadd.f32 %v1545, %v1546
  %v1548 = vsel %vm1414, %v1498, 0.0
  %v1549 = vadd.f32 %v1547, %v1548
  %v1550 = vsel %vm1414, %v1505, 0.0
  %v1551 = vadd.f32 %v1549, %v1550
  %v1552 = vsel %vm1414, %v1512, 0.0
  %v1553 = vadd.f32 %v1551, %v1552
  %v1554 = vsel %vm1414, %v1519, 0.0
  %v1555 = vadd.f32 %v1553, %v1554
  %v1556 = vsel %vm1414, %v1526, 0.0
  %v1557 = vadd.f32 %v1555, %v1556
  %v1558 = vrcp.pop 128.0
  %v1559 = vmul.f32 %v1557, %v1558
  %v1560 = vmul.f32 %v809, %v809
  %v1561 = vmul.f32 %v849, %v849
  %v1562 = vmul.f32 %v889, %v889
  %v1563 = vmul.f32 %v929, %v929
  %v1564 = vmul.f32 %v969, %v969
  %v1565 = vmul.f32 %v1009, %v1009
  %v1566 = vmul.f32 %v1049, %v1049
  %v1567 = vmul.f32 %v1089, %v1089
  %v1568 = vmul.f32 %v1129, %v1129
  %v1569 = vmul.f32 %v1169, %v1169
  %v1570 = vmul.f32 %v1209, %v1209
  %v1571 = vmul.f32 %v1249, %v1249
  %v1572 = vmul.f32 %v1289, %v1289
  %v1573 = vmul.f32 %v1329, %v1329
  %v1574 = vmul.f32 %v1369, %v1369
  %v1575 = vmul.f32 %v1409, %v1409
  %v1576 = vsel %vm1414, %v1560, 0.0
  %v1577 = vrot.slane %v1576, 4
  %v1578 = vadd.f32 %v1576, %v1577
  %v1579 = vrot.slane %v1578, 2
  %v1580 = vadd.f32 %v1578, %v1579
  %v1581 = vrot.slane %v1580, 1
  %v1582 = vadd.f32 %v1580, %v1581
  %v1583 = vsel %vm1414, %v1561, 0.0
  %v1584 = vrot.slane %v1583, 4
  %v1585 = vadd.f32 %v1583, %v1584
  %v1586 = vrot.slane %v1585, 2
  %v1587 = vadd.f32 %v1585, %v1586
  %v1588 = vrot.slane %v1587, 1
  %v1589 = vadd.f32 %v1587, %v1588
  %v1590 = vsel %vm1414, %v1562, 0.0
  %v1591 = vrot.slane %v1590, 4
  %v1592 = vadd.f32 %v1590, %v1591
  %v1593 = vrot.slane %v1592, 2
  %v1594 = vadd.f32 %v1592, %v1593
  %v1595 = vrot.slane %v1594, 1
  %v1596 = vadd.f32 %v1594, %v1595
  %v1597 = vsel %vm1414, %v1563, 0.0
  %v1598 = vrot.slane %v1597, 4
  %v1599 = vadd.f32 %v1597, %v1598
  %v1600 = vrot.slane %v1599, 2
  %v1601 = vadd.f32 %v1599, %v1600
  %v1602 = vrot.slane %v1601, 1
  %v1603 = vadd.f32 %v1601, %v1602
  %v1604 = vsel %vm1414, %v1564, 0.0
  %v1605 = vrot.slane %v1604, 4
  %v1606 = vadd.f32 %v1604, %v1605
  %v1607 = vrot.slane %v1606, 2
  %v1608 = vadd.f32 %v1606, %v1607
  %v1609 = vrot.slane %v1608, 1
  %v1610 = vadd.f32 %v1608, %v1609
  %v1611 = vsel %vm1414, %v1565, 0.0
  %v1612 = vrot.slane %v1611, 4
  %v1613 = vadd.f32 %v1611, %v1612
  %v1614 = vrot.slane %v1613, 2
  %v1615 = vadd.f32 %v1613, %v1614
  %v1616 = vrot.slane %v1615, 1
  %v1617 = vadd.f32 %v1615, %v1616
  %v1618 = vsel %vm1414, %v1566, 0.0
  %v1619 = vrot.slane %v1618, 4
  %v1620 = vadd.f32 %v1618, %v1619
  %v1621 = vrot.slane %v1620, 2
  %v1622 = vadd.f32 %v1620, %v1621
  %v1623 = vrot.slane %v1622, 1
  %v1624 = vadd.f32 %v1622, %v1623
  %v1625 = vsel %vm1414, %v1567, 0.0
  %v1626 = vrot.slane %v1625, 4
  %v1627 = vadd.f32 %v1625, %v1626
  %v1628 = vrot.slane %v1627, 2
  %v1629 = vadd.f32 %v1627, %v1628
  %v1630 = vrot.slane %v1629, 1
  %v1631 = vadd.f32 %v1629, %v1630
  %v1632 = vsel %vm1414, %v1568, 0.0
  %v1633 = vrot.slane %v1632, 4
  %v1634 = vadd.f32 %v1632, %v1633
  %v1635 = vrot.slane %v1634, 2
  %v1636 = vadd.f32 %v1634, %v1635
  %v1637 = vrot.slane %v1636, 1
  %v1638 = vadd.f32 %v1636, %v1637
  %v1639 = vsel %vm1414, %v1569, 0.0
  %v1640 = vrot.slane %v1639, 4
  %v1641 = vadd.f32 %v1639, %v1640
  %v1642 = vrot.slane %v1641, 2
  %v1643 = vadd.f32 %v1641, %v1642
  %v1644 = vrot.slane %v1643, 1
  %v1645 = vadd.f32 %v1643, %v1644
  %v1646 = vsel %vm1414, %v1570, 0.0
  %v1647 = vrot.slane %v1646, 4
  %v1648 = vadd.f32 %v1646, %v1647
  %v1649 = vrot.slane %v1648, 2
  %v1650 = vadd.f32 %v1648, %v1649
  %v1651 = vrot.slane %v1650, 1
  %v1652 = vadd.f32 %v1650, %v1651
  %v1653 = vsel %vm1414, %v1571, 0.0
  %v1654 = vrot.slane %v1653, 4
  %v1655 = vadd.f32 %v1653, %v1654
  %v1656 = vrot.slane %v1655, 2
  %v1657 = vadd.f32 %v1655, %v1656
  %v1658 = vrot.slane %v1657, 1
  %v1659 = vadd.f32 %v1657, %v1658
  %v1660 = vsel %vm1414, %v1572, 0.0
  %v1661 = vrot.slane %v1660, 4
  %v1662 = vadd.f32 %v1660, %v1661
  %v1663 = vrot.slane %v1662, 2
  %v1664 = vadd.f32 %v1662, %v1663
  %v1665 = vrot.slane %v1664, 1
  %v1666 = vadd.f32 %v1664, %v1665
  %v1667 = vsel %vm1414, %v1573, 0.0
  %v1668 = vrot.slane %v1667, 4
  %v1669 = vadd.f32 %v1667, %v1668
  %v1670 = vrot.slane %v1669, 2
  %v1671 = vadd.f32 %v1669, %v1670
  %v1672 = vrot.slane %v1671, 1
  %v1673 = vadd.f32 %v1671, %v1672
  %v1674 = vsel %vm1414, %v1574, 0.0
  %v1675 = vrot.slane %v1674, 4
  %v1676 = vadd.f32 %v1674, %v1675
  %v1677 = vrot.slane %v1676, 2
  %v1678 = vadd.f32 %v1676, %v1677
  %v1679 = vrot.slane %v1678, 1
  %v1680 = vadd.f32 %v1678, %v1679
  %v1681 = vsel %vm1414, %v1575, 0.0
  %v1682 = vrot.slane %v1681, 4
  %v1683 = vadd.f32 %v1681, %v1682
  %v1684 = vrot.slane %v1683, 2
  %v1685 = vadd.f32 %v1683, %v1684
  %v1686 = vrot.slane %v1685, 1
  %v1687 = vadd.f32 %v1685, %v1686
  %v1688 = vsel %vm1414, %v1582, 0.0
  %v1689 = vsel %vm1414, %v1589, 0.0
  %v1690 = vadd.f32 %v1688, %v1689
  %v1691 = vsel %vm1414, %v1596, 0.0
  %v1692 = vadd.f32 %v1690, %v1691
  %v1693 = vsel %vm1414, %v1603, 0.0
  %v1694 = vadd.f32 %v1692, %v1693
  %v1695 = vsel %vm1414, %v1610, 0.0
  %v1696 = vadd.f32 %v1694, %v1695
  %v1697 = vsel %vm1414, %v1617, 0.0
  %v1698 = vadd.f32 %v1696, %v1697
  %v1699 = vsel %vm1414, %v1624, 0.0
  %v1700 = vadd.f32 %v1698, %v1699
  %v1701 = vsel %vm1414, %v1631, 0.0
  %v1702 = vadd.f32 %v1700, %v1701
  %v1703 = vsel %vm1414, %v1638, 0.0
  %v1704 = vadd.f32 %v1702, %v1703
  %v1705 = vsel %vm1414, %v1645, 0.0
  %v1706 = vadd.f32 %v1704, %v1705
  %v1707 = vsel %vm1414, %v1652, 0.0
  %v1708 = vadd.f32 %v1706, %v1707
  %v1709 = vsel %vm1414, %v1659, 0.0
  %v1710 = vadd.f32 %v1708, %v1709
  %v1711 = vsel %vm1414, %v1666, 0.0
  %v1712 = vadd.f32 %v1710, %v1711
  %v1713 = vsel %vm1414, %v1673, 0.0
  %v1714 = vadd.f32 %v1712, %v1713
  %v1715 = vsel %vm1414, %v1680, 0.0
  %v1716 = vadd.f32 %v1714, %v1715
  %v1717 = vsel %vm1414, %v1687, 0.0
  %v1718 = vadd.f32 %v1716, %v1717
  %v1719 = vmul.f32 %v1718, %v1558
  %v1720 = vmul.f32 %v1559, %v1559
  %v1721 = vsub.f32 %v1719, %v1720
  %v1722 = vmax.f32 %v1721, 0.0
  %v1723 = vld [vmem:[%s2] sm:$0x1]
  %v1724 = vadd.f32 %v1722, 1e-05
  %v1725 = vrsqrt.pop %v1724
  %v1726 = vmul.f32 %v1723, %v1725
  %v1727 = vld [vmem:[%s3] sm:$0x1]
  %v1728 = vmul.f32 %v1559, %v1726
  %v1729 = vsub.f32 %v1727, %v1728
  %v1731 = vlaneseq
  %v1732 = vshrl.u32 %v1731, 7
  %v1733 = vsub.s32 0, %v1732
  %v1734 = vrot.slane %v1726, %v1733
  %v1736 = vmul.f32 %v809, %v1734
  %v1737 = vmul.f32 %v849, %v1734
  %v1738 = vmul.f32 %v889, %v1734
  %v1739 = vmul.f32 %v929, %v1734
  %v1740 = vmul.f32 %v969, %v1734
  %v1741 = vmul.f32 %v1009, %v1734
  %v1742 = vmul.f32 %v1049, %v1734
  %v1743 = vmul.f32 %v1089, %v1734
  %v1744 = vmul.f32 %v1129, %v1734
  %v1745 = vmul.f32 %v1169, %v1734
  %v1746 = vmul.f32 %v1209, %v1734
  %v1747 = vmul.f32 %v1249, %v1734
  %v1748 = vmul.f32 %v1289, %v1734
  %v1749 = vmul.f32 %v1329, %v1734
  %v1750 = vmul.f32 %v1369, %v1734
  %v1751 = vmul.f32 %v1409, %v1734
  %v1753 = vlaneseq
  %v1754 = vshrl.u32 %v1753, 7
  %v1755 = vsub.s32 0, %v1754
  %v1756 = vrot.slane %v1729, %v1755
  %v1758 = vadd.f32 %v1736, %v1756
  %v1759 = vadd.f32 %v1737, %v1756
  %v1760 = vadd.f32 %v1738, %v1756
  %v1761 = vadd.f32 %v1739, %v1756
  %v1762 = vadd.f32 %v1740, %v1756
  %v1763 = vadd.f32 %v1741, %v1756
  %v1764 = vadd.f32 %v1742, %v1756
  %v1765 = vadd.f32 %v1743, %v1756
  %v1766 = vadd.f32 %v1744, %v1756
  %v1767 = vadd.f32 %v1745, %v1756
  %v1768 = vadd.f32 %v1746, %v1756
  %v1769 = vadd.f32 %v1747, %v1756
  %v1770 = vadd.f32 %v1748, %v1756
  %v1771 = vadd.f32 %v1749, %v1756
  %v1772 = vadd.f32 %v1750, %v1756
  %v1773 = vadd.f32 %v1751, %v1756
  %vm1774 = vcmp.ge.f32.partialorder %v1758, 0.0
  %vm1775 = vcmp.ge.f32.partialorder %v1759, 0.0
  %vm1776 = vcmp.ge.f32.partialorder %v1760, 0.0
  %vm1777 = vcmp.ge.f32.partialorder %v1761, 0.0
  %vm1778 = vcmp.ge.f32.partialorder %v1762, 0.0
  %vm1779 = vcmp.ge.f32.partialorder %v1763, 0.0
  %vm1780 = vcmp.ge.f32.partialorder %v1764, 0.0
  %vm1781 = vcmp.ge.f32.partialorder %v1765, 0.0
  %vm1782 = vcmp.ge.f32.partialorder %v1766, 0.0
  %vm1783 = vcmp.ge.f32.partialorder %v1767, 0.0
  %vm1784 = vcmp.ge.f32.partialorder %v1768, 0.0
  %vm1785 = vcmp.ge.f32.partialorder %v1769, 0.0
  %vm1786 = vcmp.ge.f32.partialorder %v1770, 0.0
  %vm1787 = vcmp.ge.f32.partialorder %v1771, 0.0
  %vm1788 = vcmp.ge.f32.partialorder %v1772, 0.0
  %vm1789 = vcmp.ge.f32.partialorder %v1773, 0.0
  %v1790 = vmul.f32 %v1758, 0.2
  %v1791 = vmul.f32 %v1759, 0.2
  %v1792 = vmul.f32 %v1760, 0.2
  %v1793 = vmul.f32 %v1761, 0.2
  %v1794 = vmul.f32 %v1762, 0.2
  %v1795 = vmul.f32 %v1763, 0.2
  %v1796 = vmul.f32 %v1764, 0.2
  %v1797 = vmul.f32 %v1765, 0.2
  %v1798 = vmul.f32 %v1766, 0.2
  %v1799 = vmul.f32 %v1767, 0.2
  %v1800 = vmul.f32 %v1768, 0.2
  %v1801 = vmul.f32 %v1769, 0.2
  %v1802 = vmul.f32 %v1770, 0.2
  %v1803 = vmul.f32 %v1771, 0.2
  %v1804 = vmul.f32 %v1772, 0.2
  %v1805 = vmul.f32 %v1773, 0.2
  %v1806 = vsel %vm1774, %v1758, %v1790
  %v1807 = vsel %vm1775, %v1759, %v1791
  %v1808 = vsel %vm1776, %v1760, %v1792
  %v1809 = vsel %vm1777, %v1761, %v1793
  %v1810 = vsel %vm1778, %v1762, %v1794
  %v1811 = vsel %vm1779, %v1763, %v1795
  %v1812 = vsel %vm1780, %v1764, %v1796
  %v1813 = vsel %vm1781, %v1765, %v1797
  %v1814 = vsel %vm1782, %v1766, %v1798
  %v1815 = vsel %vm1783, %v1767, %v1799
  %v1816 = vsel %vm1784, %v1768, %v1800
  %v1817 = vsel %vm1785, %v1769, %v1801
  %v1818 = vsel %vm1786, %v1770, %v1802
  %v1819 = vsel %vm1787, %v1771, %v1803
  %v1820 = vsel %vm1788, %v1772, %v1804
  %v1821 = vsel %vm1789, %v1773, %v1805
  %v1822 = vpack.c.bf16 %v1806, %v1806
  %v1823 = vpack.c.bf16 %v1807, %v1807
  %v1824 = vpack.c.bf16 %v1808, %v1808
  %v1825 = vpack.c.bf16 %v1809, %v1809
  %v1826 = vpack.c.bf16 %v1810, %v1810
  %v1827 = vpack.c.bf16 %v1811, %v1811
  %v1828 = vpack.c.bf16 %v1812, %v1812
  %v1829 = vpack.c.bf16 %v1813, %v1813
  %v1830 = vpack.c.bf16 %v1814, %v1814
  %v1831 = vpack.c.bf16 %v1815, %v1815
  %v1832 = vpack.c.bf16 %v1816, %v1816
  %v1833 = vpack.c.bf16 %v1817, %v1817
  %v1834 = vpack.c.bf16 %v1818, %v1818
  %v1835 = vpack.c.bf16 %v1819, %v1819
  %v1836 = vpack.c.bf16 %v1820, %v1820
  %v1837 = vpack.c.bf16 %v1821, %v1821
  %vm1838 = vcmask 125952
  %1839 = vst.msk [vmem:[%s4] sm:$0xf] %vm1838, %v1822
  %1840 = vst.msk [vmem:[%s4 + $0x4] sm:$0xf] %vm1838, %v1823
  %1841 = vst.msk [vmem:[%s4 + $0x8] sm:$0xf] %vm1838, %v1824
  %1842 = vst.msk [vmem:[%s4 + $0xc] sm:$0xf] %vm1838, %v1825
  %1843 = vst.msk [vmem:[%s4 + $0x10] sm:$0xf] %vm1838, %v1826
  %1844 = vst.msk [vmem:[%s4 + $0x14] sm:$0xf] %vm1838, %v1827
  %1845 = vst.msk [vmem:[%s4 + $0x18] sm:$0xf] %vm1838, %v1828
  %1846 = vst.msk [vmem:[%s4 + $0x1c] sm:$0xf] %vm1838, %v1829
  %1847 = vst.msk [vmem:[%s4 + $0x20] sm:$0xf] %vm1838, %v1830
  %1848 = vst.msk [vmem:[%s4 + $0x24] sm:$0xf] %vm1838, %v1831
  %1849 = vst.msk [vmem:[%s4 + $0x28] sm:$0xf] %vm1838, %v1832
  %1850 = vst.msk [vmem:[%s4 + $0x2c] sm:$0xf] %vm1838, %v1833
  %1851 = vst.msk [vmem:[%s4 + $0x30] sm:$0xf] %vm1838, %v1834
  %1852 = vst.msk [vmem:[%s4 + $0x34] sm:$0xf] %vm1838, %v1835
  %1853 = vst.msk [vmem:[%s4 + $0x38] sm:$0xf] %vm1838, %v1836
  %1854 = vst.msk [vmem:[%s4 + $0x3c] sm:$0xf] %vm1838, %v1837
  // Predicated region
  $region18: #{discriminator_forward.6} parent=0 // pred_check
    _
  $region19: #{discriminator_forward.6} parent=0 // pred_check_branch
    %1856 = sbr.rel (0) target = $region21
  $region20: #{discriminator_forward.6} parent=0 // pred_region
    _
  $region21: #{discriminator_forward.6} parent=0 // pred_fallthru
    _
  // Predicated region
  $region22: #{discriminator_forward.6} parent=0 // pred_check
    _
  $region23: #{discriminator_forward.6} parent=0 // pred_check_branch
    %1858 = sbr.rel (0) target = $region25
  $region24: #{discriminator_forward.6} parent=0 // pred_region
    _
  $region25: #{discriminator_forward.6} parent=0 // pred_fallthru
    _

// kernel: discriminator_forward.7
$region0: #{discriminator_forward.7}
  #allocation0 [shape = 'u32[]', space=smem, size = 0x4, offset = 0x4, fixed_abs, tag = 'smem constant byte address 0x4 - core index']
  #allocation1 [shape = 'u32[144,128]{1,0:T(1,128)}', space=vmem, size = 0x12000, scoped, tag = 'internal scratch']
  %s0 = inlined_call_operand.vmem [shape: bf16[2,5,5,64], index: 0, kind: input, shape index: {}]
  %s1 = inlined_call_operand.vmem [shape: bf16[256,32], index: 1, kind: input, shape index: {}]
  %s2 = inlined_call_operand.vmem [shape: f32[1,1,32], index: 2, kind: input, shape index: {}]
  %s3 = inlined_call_operand.vmem [shape: f32[1,1,32], index: 3, kind: input, shape index: {}]
  %s4 = inlined_call_operand.vmem [shape: bf16[8,4,32], index: 4, kind: output, shape index: {}]
  %s5 = sld [smem:[#allocation0]]
  $region26: #{discriminator_forward.7} parent=0
    _
  %s7 = ssub.s32 1, %s5
  %s8 = scalar_select 0, %s7, %s5
  // Predicated region
  $region2: #{discriminator_forward.7} parent=0 // pred_check
    _
  $region3: #{discriminator_forward.7} parent=0 // pred_check_branch
    %10 = sbr.rel (0) target = $region5
  $region4: #{discriminator_forward.7} parent=0 // pred_region
    _
  $region5: #{discriminator_forward.7} parent=0 // pred_fallthru
    _
  // Predicated region
  $region6: #{discriminator_forward.7} parent=0 // pred_check
    _
  $region7: #{discriminator_forward.7} parent=0 // pred_check_branch
    %12 = sbr.rel (0) target = $region9
  $region8: #{discriminator_forward.7} parent=0 // pred_region
    _
  $region9: #{discriminator_forward.7} parent=0 // pred_fallthru
    _
  // Predicated region
  $region10: #{discriminator_forward.7} parent=0 // pred_check
    _
  $region11: #{discriminator_forward.7} parent=0 // pred_check_branch
    %14 = sbr.rel (0) target = $region13
  $region12: #{discriminator_forward.7} parent=0 // pred_region
    _
  $region13: #{discriminator_forward.7} parent=0 // pred_fallthru
    _
  // Predicated region
  $region14: #{discriminator_forward.7} parent=0 // pred_check
    _
  $region15: #{discriminator_forward.7} parent=0 // pred_check_branch
    %16 = sbr.rel (0) target = $region17
  $region16: #{discriminator_forward.7} parent=0 // pred_region
    _
  $region17: #{discriminator_forward.7} parent=0 // pred_fallthru
    _
  %v18 = vld [vmem:[%s0] sm:$0x3]
  %v19 = vld [vmem:[%s0 + $0x4] sm:$0x3]
  %v20 = vld [vmem:[%s0 + $0x8] sm:$0x3]
  %v21 = vld [vmem:[%s0 + $0xc] sm:$0x3]
  %v22 = vld [vmem:[%s0 + $0x14] sm:$0x3]
  %v23 = vld [vmem:[%s0 + $0x18] sm:$0x3]
  %v24 = vld [vmem:[%s0 + $0x1c] sm:$0x3]
  %v25 = vld [vmem:[%s0 + $0x20] sm:$0x3]
  %v26 = vld [vmem:[%s0] sm:$0x7]
  %v27 = vld [vmem:[%s0 + $0x4] sm:$0x7]
  %v28 = vld [vmem:[%s0 + $0x8] sm:$0x7]
  %v29 = vld [vmem:[%s0 + $0xc] sm:$0x7]
  %v30 = vld [vmem:[%s0 + $0x14] sm:$0x7]
  %v31 = vld [vmem:[%s0 + $0x18] sm:$0x7]
  %v32 = vld [vmem:[%s0 + $0x1c] sm:$0x7]
  %v33 = vld [vmem:[%s0 + $0x20] sm:$0x7]
  %s34 = scalar_lea.vmem %s0, 4
  %v35 = vld [vmem:[%s34] sm:$0x3]
  %v36 = vld [vmem:[%s34 + $0x4] sm:$0x3]
  %v37 = vld [vmem:[%s34 + $0x8] sm:$0x3]
  %v38 = vld [vmem:[%s34 + $0xc] sm:$0x3]
  %v39 = vld [vmem:[%s34 + $0x14] sm:$0x3]
  %v40 = vld [vmem:[%s34 + $0x18] sm:$0x3]
  %v41 = vld [vmem:[%s34 + $0x1c] sm:$0x3]
  %v42 = vld [vmem:[%s34 + $0x20] sm:$0x3]
  %v43 = vld [vmem:[%s34] sm:$0x7]
  %v44 = vld [vmem:[%s34 + $0x4] sm:$0x7]
  %v45 = vld [vmem:[%s34 + $0x8] sm:$0x7]
  %v46 = vld [vmem:[%s34 + $0xc] sm:$0x7]
  %v47 = vld [vmem:[%s34 + $0x14] sm:$0x7]
  %v48 = vld [vmem:[%s34 + $0x18] sm:$0x7]
  %v49 = vld [vmem:[%s34 + $0x1c] sm:$0x7]
  %v50 = vld [vmem:[%s34 + $0x20] sm:$0x7]
  %v59 = vunpack.c.l.b16 %v26
  %v60 = vunpack.c.l.b16 %v27
  %v61 = vunpack.c.l.b16 %v28
  %v62 = vunpack.c.l.b16 %v29
  %v63 = vunpack.c.l.b16 %v30
  %v64 = vunpack.c.l.b16 %v31
  %v65 = vunpack.c.l.b16 %v32
  %v66 = vunpack.c.l.b16 %v33
  %v67 = vpack.c.b16 %v59, %v59
  %v68 = vpack.c.b16 %v60, %v60
  %v69 = vpack.c.b16 %v61, %v61
  %v70 = vpack.c.b16 %v62, %v62
  %v71 = vpack.c.b16 %v63, %v63
  %v72 = vpack.c.b16 %v64, %v64
  %v73 = vpack.c.b16 %v65, %v65
  %v74 = vpack.c.b16 %v66, %v66
  %v76 = vshrl.u32 %v67, 16
  %v78 = vshll.u32 %v67, 16
  %v80 = vrot.slane %v78, 1
  %v81 = vor.u32 %v76, %v80
  %v83 = vshrl.u32 %v68, 16
  %v85 = vshll.u32 %v68, 16
  %v87 = vrot.slane %v85, 1
  %v88 = vor.u32 %v83, %v87
  %v90 = vshrl.u32 %v69, 16
  %v92 = vshll.u32 %v69, 16
  %v94 = vrot.slane %v92, 1
  %v95 = vor.u32 %v90, %v94
  %v97 = vshrl.u32 %v70, 16
  %v99 = vshll.u32 %v70, 16
  %v101 = vrot.slane %v99, 1
  %v102 = vor.u32 %v97, %v101
  %v104 = vshrl.u32 %v71, 16
  %v106 = vshll.u32 %v71, 16
  %v108 = vrot.slane %v106, 1
  %v109 = vor.u32 %v104, %v108
  %v111 = vshrl.u32 %v72, 16
  %v113 = vshll.u32 %v72, 16
  %v115 = vrot.slane %v113, 1
  %v116 = vor.u32 %v111, %v115
  %v118 = vshrl.u32 %v73, 16
  %v120 = vshll.u32 %v73, 16
  %v122 = vrot.slane %v120, 1
  %v123 = vor.u32 %v118, %v122
  %v125 = vshrl.u32 %v74, 16
  %v127 = vshll.u32 %v74, 16
  %v129 = vrot.slane %v127, 1
  %v130 = vor.u32 %v125, %v129
  %131 = vrot.lane.b32.xlu0 %v81, 64
  %v132 = vpop.permute.xlu0 %131
  %133 = vrot.lane.b32.xlu0 %v88, 64
  %v134 = vpop.permute.xlu0 %133
  %135 = vrot.lane.b32.xlu0 %v95, 64
  %v136 = vpop.permute.xlu0 %135
  %137 = vrot.lane.b32.xlu0 %v102, 64
  %v138 = vpop.permute.xlu0 %137
  %139 = vrot.lane.b32.xlu0 %v109, 64
  %v140 = vpop.permute.xlu0 %139
  %141 = vrot.lane.b32.xlu0 %v116, 64
  %v142 = vpop.permute.xlu0 %141
  %143 = vrot.lane.b32.xlu0 %v123, 64
  %v144 = vpop.permute.xlu0 %143
  %145 = vrot.lane.b32.xlu0 %v130, 64
  %v146 = vpop.permute.xlu0 %145
  %v155 = vunpack.c.l.b16 %v43
  %v156 = vunpack.c.l.b16 %v44
  %v157 = vunpack.c.l.b16 %v45
  %v158 = vunpack.c.l.b16 %v46
  %v159 = vunpack.c.l.b16 %v47
  %v160 = vunpack.c.l.b16 %v48
  %v161 = vunpack.c.l.b16 %v49
  %v162 = vunpack.c.l.b16 %v50
  %v163 = vpack.c.b16 %v155, %v155
  %v164 = vpack.c.b16 %v156, %v156
  %v165 = vpack.c.b16 %v157, %v157
  %v166 = vpack.c.b16 %v158, %v158
  %v167 = vpack.c.b16 %v159, %v159
  %v168 = vpack.c.b16 %v160, %v160
  %v169 = vpack.c.b16 %v161, %v161
  %v170 = vpack.c.b16 %v162, %v162
  %v172 = vshrl.u32 %v163, 16
  %v174 = vshll.u32 %v163, 16
  %v176 = vrot.slane %v174, 1
  %v177 = vor.u32 %v172, %v176
  %v179 = vshrl.u32 %v164, 16
  %v181 = vshll.u32 %v164, 16
  %v183 = vrot.slane %v181, 1
  %v184 = vor.u32 %v179, %v183
  %v186 = vshrl.u32 %v165, 16
  %v188 = vshll.u32 %v165, 16
  %v190 = vrot.slane %v188, 1
  %v191 = vor.u32 %v186, %v190
  %v193 = vshrl.u32 %v166, 16
  %v195 = vshll.u32 %v166, 16
  %v197 = vrot.slane %v195, 1
  %v198 = vor.u32 %v193, %v197
  %v200 = vshrl.u32 %v167, 16
  %v202 = vshll.u32 %v167, 16
  %v204 = vrot.slane %v202, 1
  %v205 = vor.u32 %v200, %v204
  %v207 = vshrl.u32 %v168, 16
  %v209 = vshll.u32 %v168, 16
  %v211 = vrot.slane %v209, 1
  %v212 = vor.u32 %v207, %v211
  %v214 = vshrl.u32 %v169, 16
  %v216 = vshll.u32 %v169, 16
  %v218 = vrot.slane %v216, 1
  %v219 = vor.u32 %v214, %v218
  %v221 = vshrl.u32 %v170, 16
  %v223 = vshll.u32 %v170, 16
  %v225 = vrot.slane %v223, 1
  %v226 = vor.u32 %v221, %v225
  %227 = vrot.lane.b32.xlu0 %v177, 64
  %v228 = vpop.permute.xlu0 %227
  %229 = vrot.lane.b32.xlu0 %v184, 64
  %v230 = vpop.permute.xlu0 %229
  %231 = vrot.lane.b32.xlu0 %v191, 64
  %v232 = vpop.permute.xlu0 %231
  %233 = vrot.lane.b32.xlu0 %v198, 64
  %v234 = vpop.permute.xlu0 %233
  %235 = vrot.lane.b32.xlu0 %v205, 64
  %v236 = vpop.permute.xlu0 %235
  %237 = vrot.lane.b32.xlu0 %v212, 64
  %v238 = vpop.permute.xlu0 %237
  %239 = vrot.lane.b32.xlu0 %v219, 64
  %v240 = vpop.permute.xlu0 %239
  %241 = vrot.lane.b32.xlu0 %v226, 64
  %v242 = vpop.permute.xlu0 %241
  %vm243 = vcmask 523264
  %v246 = vsel %vm243, %v18, %v132
  %v250 = vsel %vm243, %v19, %v134
  %v254 = vsel %vm243, %v20, %v136
  %v258 = vsel %vm243, %v21, %v138
  %v262 = vsel %vm243, %v22, %v140
  %v266 = vsel %vm243, %v23, %v142
  %v270 = vsel %vm243, %v24, %v144
  %v274 = vsel %vm243, %v25, %v146
  %v278 = vsel %vm243, %v35, %v228
  %v282 = vsel %vm243, %v36, %v230
  %v286 = vsel %vm243, %v37, %v232
  %v290 = vsel %vm243, %v38, %v234
  %v294 = vsel %vm243, %v39, %v236
  %v298 = vsel %vm243, %v40, %v238
  %v302 = vsel %vm243, %v41, %v240
  %v306 = vsel %vm243, %v42, %v242
  %v308 = vld [vmem:[%s1] sm:$0xf]
  %v309 = vld [vmem:[%s1 + $0x4] sm:$0xf]
  %v310 = vld [vmem:[%s1 + $0x8] sm:$0xf]
  %v311 = vld [vmem:[%s1 + $0xc] sm:$0xf]
  %v312 = vld [vmem:[%s1 + $0x10] sm:$0xf]
  %v313 = vld [vmem:[%s1 + $0x14] sm:$0xf]
  %v314 = vld [vmem:[%s1 + $0x18] sm:$0xf]
  %v315 = vld [vmem:[%s1 + $0x1c] sm:$0xf]
  %v316 = vld [vmem:[%s1 + $0x20] sm:$0xf]
  %v317 = vld [vmem:[%s1 + $0x24] sm:$0xf]
  %v318 = vld [vmem:[%s1 + $0x28] sm:$0xf]
  %v319 = vld [vmem:[%s1 + $0x2c] sm:$0xf]
  %v320 = vld [vmem:[%s1 + $0x30] sm:$0xf]
  %v321 = vld [vmem:[%s1 + $0x34] sm:$0xf]
  %v322 = vld [vmem:[%s1 + $0x38] sm:$0xf]
  %v323 = vld [vmem:[%s1 + $0x3c] sm:$0xf]
  %v324 = vld [vmem:[%s1 + $0x40] sm:$0xf]
  %v325 = vld [vmem:[%s1 + $0x44] sm:$0xf]
  %v326 = vld [vmem:[%s1 + $0x48] sm:$0xf]
  %v327 = vld [vmem:[%s1 + $0x4c] sm:$0xf]
  %v328 = vld [vmem:[%s1 + $0x50] sm:$0xf]
  %v329 = vld [vmem:[%s1 + $0x54] sm:$0xf]
  %v330 = vld [vmem:[%s1 + $0x58] sm:$0xf]
  %v331 = vld [vmem:[%s1 + $0x5c] sm:$0xf]
  %v332 = vld [vmem:[%s1 + $0x60] sm:$0xf]
  %v333 = vld [vmem:[%s1 + $0x64] sm:$0xf]
  %v334 = vld [vmem:[%s1 + $0x68] sm:$0xf]
  %v335 = vld [vmem:[%s1 + $0x6c] sm:$0xf]
  %v336 = vld [vmem:[%s1 + $0x70] sm:$0xf]
  %v337 = vld [vmem:[%s1 + $0x74] sm:$0xf]
  %v338 = vld [vmem:[%s1 + $0x78] sm:$0xf]
  %v339 = vld [vmem:[%s1 + $0x7c] sm:$0xf]
  %v372 = vunpack.c.l.b16 %v308
  %v373 = vunpack.c.l.b16 %v309
  %v374 = vunpack.c.l.b16 %v310
  %v375 = vunpack.c.l.b16 %v311
  %v376 = vunpack.c.l.b16 %v312
  %v377 = vunpack.c.l.b16 %v313
  %v378 = vunpack.c.l.b16 %v314
  %v379 = vunpack.c.l.b16 %v315
  %v380 = vunpack.c.l.b16 %v316
  %v381 = vunpack.c.l.b16 %v317
  %v382 = vunpack.c.l.b16 %v318
  %v383 = vunpack.c.l.b16 %v319
  %v384 = vunpack.c.l.b16 %v320
  %v385 = vunpack.c.l.b16 %v321
  %v386 = vunpack.c.l.b16 %v322
  %v387 = vunpack.c.l.b16 %v323
  %v388 = vunpack.c.l.b16 %v324
  %v389 = vunpack.c.l.b16 %v325
  %v390 = vunpack.c.l.b16 %v326
  %v391 = vunpack.c.l.b16 %v327
  %v392 = vunpack.c.l.b16 %v328
  %v393 = vunpack.c.l.b16 %v329
  %v394 = vunpack.c.l.b16 %v330
  %v395 = vunpack.c.l.b16 %v331
  %v396 = vunpack.c.l.b16 %v332
  %v397 = vunpack.c.l.b16 %v333
  %v398 = vunpack.c.l.b16 %v334
  %v399 = vunpack.c.l.b16 %v335
  %v400 = vunpack.c.l.b16 %v336
  %v401 = vunpack.c.l.b16 %v337
  %v402 = vunpack.c.l.b16 %v338
  %v403 = vunpack.c.l.b16 %v339
  %v404 = vpack.c.b16 %v373, %v372
  %v405 = vpack.c.b16 %v375, %v374
  %v406 = vpack.c.b16 %v377, %v376
  %v407 = vpack.c.b16 %v379, %v378
  %v408 = vpack.c.b16 %v381, %v380
  %v409 = vpack.c.b16 %v383, %v382
  %v410 = vpack.c.b16 %v385, %v384
  %v411 = vpack.c.b16 %v387, %v386
  %v412 = vpack.c.b16 %v389, %v388
  %v413 = vpack.c.b16 %v391, %v390
  %v414 = vpack.c.b16 %v393, %v392
  %v415 = vpack.c.b16 %v395, %v394
  %v416 = vpack.c.b16 %v397, %v396
  %v417 = vpack.c.b16 %v399, %v398
  %v418 = vpack.c.b16 %v401, %v400
  %v419 = vpack.c.b16 %v403, %v402
  %436 = vmatprep.subr.bf16.mxu0 0
  %437 = vmatpush1.bf16.msra.mxu0 %v411
  %438 = vmatprep.subr.bf16.mxu0 0
  %439 = vmatpush1.bf16.msra.mxu0 %v410
  %440 = vmatprep.subr.bf16.mxu0 0
  %441 = vmatpush1.bf16.msra.mxu0 %v409
  %442 = vmatprep.subr.bf16.mxu0 0
  %443 = vmatpush1.bf16.msra.mxu0 %v408
  %444 = vmatprep.subr.bf16.mxu0 0
  %445 = vmatpush1.bf16.msra.mxu0 %v407
  %446 = vmatprep.subr.bf16.mxu0 0
  %447 = vmatpush1.bf16.msra.mxu0 %v406
  %448 = vmatprep.subr.bf16.mxu0 0
  %449 = vmatpush1.bf16.msra.mxu0 %v405
  %450 = vmatprep.subr.bf16.mxu0 0
  %451 = vmatpush1.bf16.msra.mxu0 %v404
  %452 = vmatprep.subr.bf16.mxu0 0
  %453 = vmatpush2.bf16.msra.mxu0 %v419
  %454 = vmatprep.subr.bf16.mxu0 0
  %455 = vmatpush2.bf16.msra.mxu0 %v418
  %456 = vmatprep.subr.bf16.mxu0 0
  %457 = vmatpush2.bf16.msra.mxu0 %v417
  %458 = vmatprep.subr.bf16.mxu0 0
  %459 = vmatpush2.bf16.msra.mxu0 %v416
  %460 = vmatprep.subr.bf16.mxu0 0
  %461 = vmatpush2.bf16.msra.mxu0 %v415
  %462 = vmatprep.subr.bf16.mxu0 0
  %463 = vmatpush2.bf16.msra.mxu0 %v414
  %464 = vmatprep.subr.bf16.mxu0 0
  %465 = vmatpush2.bf16.msra.mxu0 %v413
  %466 = vmatprep.subr.bf16.mxu0 0
  %467 = vmatpush2.bf16.msra.mxu0 %v412
  %468 = vmatprep.mubr.bf16.mxu0 %v278
  %469 = vmatmul.mubr.bf16.gmra.mxu0 %v246
  %v470 = vpop.f32.mrf.mxu0
  %v471 = vadd.f32 0.0, %v470
  %v472 = vpop.f32.mrf.mxu0
  %v473 = vpop.f32.mrf.mxu0
  %v474 = vpop.f32.mrf.mxu0
  %475 = vdwg.mxu0
  %476 = vmatprep.subr.bf16.mxu0 0
  %477 = vmatpush1.bf16.msra.mxu0 %v411
  %478 = vmatprep.subr.bf16.mxu0 0
  %479 = vmatpush1.bf16.msra.mxu0 %v410
  %480 = vmatprep.subr.bf16.mxu0 0
  %481 = vmatpush1.bf16.msra.mxu0 %v409
  %482 = vmatprep.subr.bf16.mxu0 0
  %483 = vmatpush1.bf16.msra.mxu0 %v408
  %484 = vmatprep.subr.bf16.mxu0 0
  %485 = vmatpush1.bf16.msra.mxu0 %v407
  %486 = vmatprep.subr.bf16.mxu0 0
  %487 = vmatpush1.bf16.msra.mxu0 %v406
  %488 = vmatprep.subr.bf16.mxu0 0
  %489 = vmatpush1.bf16.msra.mxu0 %v405
  %490 = vmatprep.subr.bf16.mxu0 0
  %491 = vmatpush1.bf16.msra.mxu0 %v404
  %492 = vmatprep.subr.bf16.mxu0 0
  %493 = vmatpush2.bf16.msra.mxu0 %v419
  %494 = vmatprep.subr.bf16.mxu0 0
  %495 = vmatpush2.bf16.msra.mxu0 %v418
  %496 = vmatprep.subr.bf16.mxu0 0
  %497 = vmatpush2.bf16.msra.mxu0 %v417
  %498 = vmatprep.subr.bf16.mxu0 0
  %499 = vmatpush2.bf16.msra.mxu0 %v416
  %500 = vmatprep.subr.bf16.mxu0 0
  %501 = vmatpush2.bf16.msra.mxu0 %v415
  %502 = vmatprep.subr.bf16.mxu0 0
  %503 = vmatpush2.bf16.msra.mxu0 %v414
  %504 = vmatprep.subr.bf16.mxu0 0
  %505 = vmatpush2.bf16.msra.mxu0 %v413
  %506 = vmatprep.subr.bf16.mxu0 0
  %507 = vmatpush2.bf16.msra.mxu0 %v412
  %508 = vmatprep.mubr.bf16.mxu0 %v282
  %509 = vmatmul.mubr.bf16.gmra.mxu0 %v250
  %v510 = vpop.f32.mrf.mxu0
  %v511 = vadd.f32 0.0, %v510
  %v512 = vpop.f32.mrf.mxu0
  %v513 = vpop.f32.mrf.mxu0
  %v514 = vpop.f32.mrf.mxu0
  %515 = vdwg.mxu0
  %516 = vmatprep.subr.bf16.mxu0 0
  %517 = vmatpush1.bf16.msra.mxu0 %v411
  %518 = vmatprep.subr.bf16.mxu0 0
  %519 = vmatpush1.bf16.msra.mxu0 %v410
  %520 = vmatprep.subr.bf16.mxu0 0
  %521 = vmatpush1.bf16.msra.mxu0 %v409
  %522 = vmatprep.subr.bf16.mxu0 0
  %523 = vmatpush1.bf16.msra.mxu0 %v408
  %524 = vmatprep.subr.bf16.mxu0 0
  %525 = vmatpush1.bf16.msra.mxu0 %v407
  %526 = vmatprep.subr.bf16.mxu0 0
  %527 = vmatpush1.bf16.msra.mxu0 %v406
  %528 = vmatprep.subr.bf16.mxu0 0
  %529 = vmatpush1.bf16.msra.mxu0 %v405
  %530 = vmatprep.subr.bf16.mxu0 0
  %531 = vmatpush1.bf16.msra.mxu0 %v404
  %532 = vmatprep.subr.bf16.mxu0 0
  %533 = vmatpush2.bf16.msra.mxu0 %v419
  %534 = vmatprep.subr.bf16.mxu0 0
  %535 = vmatpush2.bf16.msra.mxu0 %v418
  %536 = vmatprep.subr.bf16.mxu0 0
  %537 = vmatpush2.bf16.msra.mxu0 %v417
  %538 = vmatprep.subr.bf16.mxu0 0
  %539 = vmatpush2.bf16.msra.mxu0 %v416
  %540 = vmatprep.subr.bf16.mxu0 0
  %541 = vmatpush2.bf16.msra.mxu0 %v415
  %542 = vmatprep.subr.bf16.mxu0 0
  %543 = vmatpush2.bf16.msra.mxu0 %v414
  %544 = vmatprep.subr.bf16.mxu0 0
  %545 = vmatpush2.bf16.msra.mxu0 %v413
  %546 = vmatprep.subr.bf16.mxu0 0
  %547 = vmatpush2.bf16.msra.mxu0 %v412
  %548 = vmatprep.mubr.bf16.mxu0 %v286
  %549 = vmatmul.mubr.bf16.gmra.mxu0 %v254
  %v550 = vpop.f32.mrf.mxu0
  %v551 = vadd.f32 0.0, %v550
  %v552 = vpop.f32.mrf.mxu0
  %v553 = vpop.f32.mrf.mxu0
  %v554 = vpop.f32.mrf.mxu0
  %555 = vdwg.mxu0
  %556 = vmatprep.subr.bf16.mxu0 0
  %557 = vmatpush1.bf16.msra.mxu0 %v411
  %558 = vmatprep.subr.bf16.mxu0 0
  %559 = vmatpush1.bf16.msra.mxu0 %v410
  %560 = vmatprep.subr.bf16.mxu0 0
  %561 = vmatpush1.bf16.msra.mxu0 %v409
  %562 = vmatprep.subr.bf16.mxu0 0
  %563 = vmatpush1.bf16.msra.mxu0 %v408
  %564 = vmatprep.subr.bf16.mxu0 0
  %565 = vmatpush1.bf16.msra.mxu0 %v407
  %566 = vmatprep.subr.bf16.mxu0 0
  %567 = vmatpush1.bf16.msra.mxu0 %v406
  %568 = vmatprep.subr.bf16.mxu0 0
  %569 = vmatpush1.bf16.msra.mxu0 %v405
  %570 = vmatprep.subr.bf16.mxu0 0
  %571 = vmatpush1.bf16.msra.mxu0 %v404
  %572 = vmatprep.subr.bf16.mxu0 0
  %573 = vmatpush2.bf16.msra.mxu0 %v419
  %574 = vmatprep.subr.bf16.mxu0 0
  %575 = vmatpush2.bf16.msra.mxu0 %v418
  %576 = vmatprep.subr.bf16.mxu0 0
  %577 = vmatpush2.bf16.msra.mxu0 %v417
  %578 = vmatprep.subr.bf16.mxu0 0
  %579 = vmatpush2.bf16.msra.mxu0 %v416
  %580 = vmatprep.subr.bf16.mxu0 0
  %581 = vmatpush2.bf16.msra.mxu0 %v415
  %582 = vmatprep.subr.bf16.mxu0 0
  %583 = vmatpush2.bf16.msra.mxu0 %v414
  %584 = vmatprep.subr.bf16.mxu0 0
  %585 = vmatpush2.bf16.msra.mxu0 %v413
  %586 = vmatprep.subr.bf16.mxu0 0
  %587 = vmatpush2.bf16.msra.mxu0 %v412
  %588 = vmatprep.mubr.bf16.mxu0 %v290
  %589 = vmatmul.mubr.bf16.gmra.mxu0 %v258
  %v590 = vpop.f32.mrf.mxu0
  %v591 = vadd.f32 0.0, %v590
  %v592 = vpop.f32.mrf.mxu0
  %v593 = vpop.f32.mrf.mxu0
  %v594 = vpop.f32.mrf.mxu0
  %595 = vdwg.mxu0
  %596 = vmatprep.subr.bf16.mxu0 0
  %597 = vmatpush1.bf16.msra.mxu0 %v411
  %598 = vmatprep.subr.bf16.mxu0 0
  %599 = vmatpush1.bf16.msra.mxu0 %v410
  %600 = vmatprep.subr.bf16.mxu0 0
  %601 = vmatpush1.bf16.msra.mxu0 %v409
  %602 = vmatprep.subr.bf16.mxu0 0
  %603 = vmatpush1.bf16.msra.mxu0 %v408
  %604 = vmatprep.subr.bf16.mxu0 0
  %605 = vmatpush1.bf16.msra.mxu0 %v407
  %606 = vmatprep.subr.bf16.mxu0 0
  %607 = vmatpush1.bf16.msra.mxu0 %v406
  %608 = vmatprep.subr.bf16.mxu0 0
  %609 = vmatpush1.bf16.msra.mxu0 %v405
  %610 = vmatprep.subr.bf16.mxu0 0
  %611 = vmatpush1.bf16.msra.mxu0 %v404
  %612 = vmatprep.subr.bf16.mxu0 0
  %613 = vmatpush2.bf16.msra.mxu0 %v419
  %614 = vmatprep.subr.bf16.mxu0 0
  %615 = vmatpush2.bf16.msra.mxu0 %v418
  %616 = vmatprep.subr.bf16.mxu0 0
  %617 = vmatpush2.bf16.msra.mxu0 %v417
  %618 = vmatprep.subr.bf16.mxu0 0
  %619 = vmatpush2.bf16.msra.mxu0 %v416
  %620 = vmatprep.subr.bf16.mxu0 0
  %621 = vmatpush2.bf16.msra.mxu0 %v415
  %622 = vmatprep.subr.bf16.mxu0 0
  %623 = vmatpush2.bf16.msra.mxu0 %v414
  %624 = vmatprep.subr.bf16.mxu0 0
  %625 = vmatpush2.bf16.msra.mxu0 %v413
  %626 = vmatprep.subr.bf16.mxu0 0
  %627 = vmatpush2.bf16.msra.mxu0 %v412
  %628 = vmatprep.mubr.bf16.mxu0 %v294
  %629 = vmatmul.mubr.bf16.gmra.mxu0 %v262
  %v630 = vpop.f32.mrf.mxu0
  %v631 = vadd.f32 0.0, %v630
  %v632 = vpop.f32.mrf.mxu0
  %v633 = vpop.f32.mrf.mxu0
  %v634 = vpop.f32.mrf.mxu0
  %635 = vdwg.mxu0
  %636 = vmatprep.subr.bf16.mxu0 0
  %637 = vmatpush1.bf16.msra.mxu0 %v411
  %638 = vmatprep.subr.bf16.mxu0 0
  %639 = vmatpush1.bf16.msra.mxu0 %v410
  %640 = vmatprep.subr.bf16.mxu0 0
  %641 = vmatpush1.bf16.msra.mxu0 %v409
  %642 = vmatprep.subr.bf16.mxu0 0
  %643 = vmatpush1.bf16.msra.mxu0 %v408
  %644 = vmatprep.subr.bf16.mxu0 0
  %645 = vmatpush1.bf16.msra.mxu0 %v407
  %646 = vmatprep.subr.bf16.mxu0 0
  %647 = vmatpush1.bf16.msra.mxu0 %v406
  %648 = vmatprep.subr.bf16.mxu0 0
  %649 = vmatpush1.bf16.msra.mxu0 %v405
  %650 = vmatprep.subr.bf16.mxu0 0
  %651 = vmatpush1.bf16.msra.mxu0 %v404
  %652 = vmatprep.subr.bf16.mxu0 0
  %653 = vmatpush2.bf16.msra.mxu0 %v419
  %654 = vmatprep.subr.bf16.mxu0 0
  %655 = vmatpush2.bf16.msra.mxu0 %v418
  %656 = vmatprep.subr.bf16.mxu0 0
  %657 = vmatpush2.bf16.msra.mxu0 %v417
  %658 = vmatprep.subr.bf16.mxu0 0
  %659 = vmatpush2.bf16.msra.mxu0 %v416
  %660 = vmatprep.subr.bf16.mxu0 0
  %661 = vmatpush2.bf16.msra.mxu0 %v415
  %662 = vmatprep.subr.bf16.mxu0 0
  %663 = vmatpush2.bf16.msra.mxu0 %v414
  %664 = vmatprep.subr.bf16.mxu0 0
  %665 = vmatpush2.bf16.msra.mxu0 %v413
  %666 = vmatprep.subr.bf16.mxu0 0
  %667 = vmatpush2.bf16.msra.mxu0 %v412
  %668 = vmatprep.mubr.bf16.mxu0 %v298
  %669 = vmatmul.mubr.bf16.gmra.mxu0 %v266
  %v670 = vpop.f32.mrf.mxu0
  %v671 = vadd.f32 0.0, %v670
  %v672 = vpop.f32.mrf.mxu0
  %v673 = vpop.f32.mrf.mxu0
  %v674 = vpop.f32.mrf.mxu0
  %675 = vdwg.mxu0
  %676 = vmatprep.subr.bf16.mxu0 0
  %677 = vmatpush1.bf16.msra.mxu0 %v411
  %678 = vmatprep.subr.bf16.mxu0 0
  %679 = vmatpush1.bf16.msra.mxu0 %v410
  %680 = vmatprep.subr.bf16.mxu0 0
  %681 = vmatpush1.bf16.msra.mxu0 %v409
  %682 = vmatprep.subr.bf16.mxu0 0
  %683 = vmatpush1.bf16.msra.mxu0 %v408
  %684 = vmatprep.subr.bf16.mxu0 0
  %685 = vmatpush1.bf16.msra.mxu0 %v407
  %686 = vmatprep.subr.bf16.mxu0 0
  %687 = vmatpush1.bf16.msra.mxu0 %v406
  %688 = vmatprep.subr.bf16.mxu0 0
  %689 = vmatpush1.bf16.msra.mxu0 %v405
  %690 = vmatprep.subr.bf16.mxu0 0
  %691 = vmatpush1.bf16.msra.mxu0 %v404
  %692 = vmatprep.subr.bf16.mxu0 0
  %693 = vmatpush2.bf16.msra.mxu0 %v419
  %694 = vmatprep.subr.bf16.mxu0 0
  %695 = vmatpush2.bf16.msra.mxu0 %v418
  %696 = vmatprep.subr.bf16.mxu0 0
  %697 = vmatpush2.bf16.msra.mxu0 %v417
  %698 = vmatprep.subr.bf16.mxu0 0
  %699 = vmatpush2.bf16.msra.mxu0 %v416
  %700 = vmatprep.subr.bf16.mxu0 0
  %701 = vmatpush2.bf16.msra.mxu0 %v415
  %702 = vmatprep.subr.bf16.mxu0 0
  %703 = vmatpush2.bf16.msra.mxu0 %v414
  %704 = vmatprep.subr.bf16.mxu0 0
  %705 = vmatpush2.bf16.msra.mxu0 %v413
  %706 = vmatprep.subr.bf16.mxu0 0
  %707 = vmatpush2.bf16.msra.mxu0 %v412
  %708 = vmatprep.mubr.bf16.mxu0 %v302
  %709 = vmatmul.mubr.bf16.gmra.mxu0 %v270
  %v710 = vpop.f32.mrf.mxu0
  %v711 = vadd.f32 0.0, %v710
  %v712 = vpop.f32.mrf.mxu0
  %v713 = vpop.f32.mrf.mxu0
  %v714 = vpop.f32.mrf.mxu0
  %715 = vdwg.mxu0
  %716 = vmatprep.subr.bf16.mxu0 0
  %717 = vmatpush1.bf16.msra.mxu0 %v411
  %718 = vmatprep.subr.bf16.mxu0 0
  %719 = vmatpush1.bf16.msra.mxu0 %v410
  %720 = vmatprep.subr.bf16.mxu0 0
  %721 = vmatpush1.bf16.msra.mxu0 %v409
  %722 = vmatprep.subr.bf16.mxu0 0
  %723 = vmatpush1.bf16.msra.mxu0 %v408
  %724 = vmatprep.subr.bf16.mxu0 0
  %725 = vmatpush1.bf16.msra.mxu0 %v407
  %726 = vmatprep.subr.bf16.mxu0 0
  %727 = vmatpush1.bf16.msra.mxu0 %v406
  %728 = vmatprep.subr.bf16.mxu0 0
  %729 = vmatpush1.bf16.msra.mxu0 %v405
  %730 = vmatprep.subr.bf16.mxu0 0
  %731 = vmatpush1.bf16.msra.mxu0 %v404
  %732 = vmatprep.subr.bf16.mxu0 0
  %733 = vmatpush2.bf16.msra.mxu0 %v419
  %734 = vmatprep.subr.bf16.mxu0 0
  %735 = vmatpush2.bf16.msra.mxu0 %v418
  %736 = vmatprep.subr.bf16.mxu0 0
  %737 = vmatpush2.bf16.msra.mxu0 %v417
  %738 = vmatprep.subr.bf16.mxu0 0
  %739 = vmatpush2.bf16.msra.mxu0 %v416
  %740 = vmatprep.subr.bf16.mxu0 0
  %741 = vmatpush2.bf16.msra.mxu0 %v415
  %742 = vmatprep.subr.bf16.mxu0 0
  %743 = vmatpush2.bf16.msra.mxu0 %v414
  %744 = vmatprep.subr.bf16.mxu0 0
  %745 = vmatpush2.bf16.msra.mxu0 %v413
  %746 = vmatprep.subr.bf16.mxu0 0
  %747 = vmatpush2.bf16.msra.mxu0 %v412
  %748 = vmatprep.mubr.bf16.mxu0 %v306
  %749 = vmatmul.mubr.bf16.gmra.mxu0 %v274
  %v750 = vpop.f32.mrf.mxu0
  %v751 = vadd.f32 0.0, %v750
  %v752 = vpop.f32.mrf.mxu0
  %v753 = vpop.f32.mrf.mxu0
  %v754 = vpop.f32.mrf.mxu0
  %755 = vdwg.mxu0
  %vm756 = vcmask 257024
  %v757 = vsel %vm756, %v471, 0.0
  %v758 = vrot.slane %v757, 4
  %v759 = vadd.f32 %v757, %v758
  %v760 = vrot.slane %v759, 2
  %v761 = vadd.f32 %v759, %v760
  %v762 = vrot.slane %v761, 1
  %v763 = vadd.f32 %v761, %v762
  %v764 = vsel %vm756, %v511, 0.0
  %v765 = vrot.slane %v764, 4
  %v766 = vadd.f32 %v764, %v765
  %v767 = vrot.slane %v766, 2
  %v768 = vadd.f32 %v766, %v767
  %v769 = vrot.slane %v768, 1
  %v770 = vadd.f32 %v768, %v769
  %v771 = vsel %vm756, %v551, 0.0
  %v772 = vrot.slane %v771, 4
  %v773 = vadd.f32 %v771, %v772
  %v774 = vrot.slane %v773, 2
  %v775 = vadd.f32 %v773, %v774
  %v776 = vrot.slane %v775, 1
  %v777 = vadd.f32 %v775, %v776
  %v778 = vsel %vm756, %v591, 0.0
  %v779 = vrot.slane %v778, 4
  %v780 = vadd.f32 %v778, %v779
  %v781 = vrot.slane %v780, 2
  %v782 = vadd.f32 %v780, %v781
  %v783 = vrot.slane %v782, 1
  %v784 = vadd.f32 %v782, %v783
  %v785 = vsel %vm756, %v631, 0.0
  %v786 = vrot.slane %v785, 4
  %v787 = vadd.f32 %v785, %v786
  %v788 = vrot.slane %v787, 2
  %v789 = vadd.f32 %v787, %v788
  %v790 = vrot.slane %v789, 1
  %v791 = vadd.f32 %v789, %v790
  %v792 = vsel %vm756, %v671, 0.0
  %v793 = vrot.slane %v792, 4
  %v794 = vadd.f32 %v792, %v793
  %v795 = vrot.slane %v794, 2
  %v796 = vadd.f32 %v794, %v795
  %v797 = vrot.slane %v796, 1
  %v798 = vadd.f32 %v796, %v797
  %v799 = vsel %vm756, %v711, 0.0
  %v800 = vrot.slane %v799, 4
  %v801 = vadd.f32 %v799, %v800
  %v802 = vrot.slane %v801, 2
  %v803 = vadd.f32 %v801, %v802
  %v804 = vrot.slane %v803, 1
  %v805 = vadd.f32 %v803, %v804
  %v806 = vsel %vm756, %v751, 0.0
  %v807 = vrot.slane %v806, 4
  %v808 = vadd.f32 %v806, %v807
  %v809 = vrot.slane %v808, 2
  %v810 = vadd.f32 %v808, %v809
  %v811 = vrot.slane %v810, 1
  %v812 = vadd.f32 %v810, %v811
  %vm813 = vcmask 261120
  %v814 = vsel %vm813, %v763, 0.0
  %v815 = vsel %vm813, %v770, 0.0
  %v816 = vadd.f32 %v814, %v815
  %v817 = vsel %vm813, %v777, 0.0
  %v818 = vadd.f32 %v816, %v817
  %v819 = vsel %vm813, %v784, 0.0
  %v820 = vadd.f32 %v818, %v819
  %v821 = vsel %vm813, %v791, 0.0
  %v822 = vadd.f32 %v820, %v821
  %v823 = vsel %vm813, %v798, 0.0
  %v824 = vadd.f32 %v822, %v823
  %v825 = vsel %vm813, %v805, 0.0
  %v826 = vadd.f32 %v824, %v825
  %v827 = vsel %vm813, %v812, 0.0
  %v828 = vadd.f32 %v826, %v827
  %v829 = vrcp.pop 32.0
  %v830 = vmul.f32 %v828, %v829
  %v831 = vmul.f32 %v471, %v471
  %v832 = vmul.f32 %v511, %v511
  %v833 = vmul.f32 %v551, %v551
  %v834 = vmul.f32 %v591, %v591
  %v835 = vmul.f32 %v631, %v631
  %v836 = vmul.f32 %v671, %v671
  %v837 = vmul.f32 %v711, %v711
  %v838 = vmul.f32 %v751, %v751
  %v839 = vsel %vm756, %v831, 0.0
  %v840 = vrot.slane %v839, 4
  %v841 = vadd.f32 %v839, %v840
  %v842 = vrot.slane %v841, 2
  %v843 = vadd.f32 %v841, %v842
  %v844 = vrot.slane %v843, 1
  %v845 = vadd.f32 %v843, %v844
  %v846 = vsel %vm756, %v832, 0.0
  %v847 = vrot.slane %v846, 4
  %v848 = vadd.f32 %v846, %v847
  %v849 = vrot.slane %v848, 2
  %v850 = vadd.f32 %v848, %v849
  %v851 = vrot.slane %v850, 1
  %v852 = vadd.f32 %v850, %v851
  %v853 = vsel %vm756, %v833, 0.0
  %v854 = vrot.slane %v853, 4
  %v855 = vadd.f32 %v853, %v854
  %v856 = vrot.slane %v855, 2
  %v857 = vadd.f32 %v855, %v856
  %v858 = vrot.slane %v857, 1
  %v859 = vadd.f32 %v857, %v858
  %v860 = vsel %vm756, %v834, 0.0
  %v861 = vrot.slane %v860, 4
  %v862 = vadd.f32 %v860, %v861
  %v863 = vrot.slane %v862, 2
  %v864 = vadd.f32 %v862, %v863
  %v865 = vrot.slane %v864, 1
  %v866 = vadd.f32 %v864, %v865
  %v867 = vsel %vm756, %v835, 0.0
  %v868 = vrot.slane %v867, 4
  %v869 = vadd.f32 %v867, %v868
  %v870 = vrot.slane %v869, 2
  %v871 = vadd.f32 %v869, %v870
  %v872 = vrot.slane %v871, 1
  %v873 = vadd.f32 %v871, %v872
  %v874 = vsel %vm756, %v836, 0.0
  %v875 = vrot.slane %v874, 4
  %v876 = vadd.f32 %v874, %v875
  %v877 = vrot.slane %v876, 2
  %v878 = vadd.f32 %v876, %v877
  %v879 = vrot.slane %v878, 1
  %v880 = vadd.f32 %v878, %v879
  %v881 = vsel %vm756, %v837, 0.0
  %v882 = vrot.slane %v881, 4
  %v883 = vadd.f32 %v881, %v882
  %v884 = vrot.slane %v883, 2
  %v885 = vadd.f32 %v883, %v884
  %v886 = vrot.slane %v885, 1
  %v887 = vadd.f32 %v885, %v886
  %v888 = vsel %vm756, %v838, 0.0
  %v889 = vrot.slane %v888, 4
  %v890 = vadd.f32 %v888, %v889
  %v891 = vrot.slane %v890, 2
  %v892 = vadd.f32 %v890, %v891
  %v893 = vrot.slane %v892, 1
  %v894 = vadd.f32 %v892, %v893
  %v895 = vsel %vm813, %v845, 0.0
  %v896 = vsel %vm813, %v852, 0.0
  %v897 = vadd.f32 %v895, %v896
  %v898 = vsel %vm813, %v859, 0.0
  %v899 = vadd.f32 %v897, %v898
  %v900 = vsel %vm813, %v866, 0.0
  %v901 = vadd.f32 %v899, %v900
  %v902 = vsel %vm813, %v873, 0.0
  %v903 = vadd.f32 %v901, %v902
  %v904 = vsel %vm813, %v880, 0.0
  %v905 = vadd.f32 %v903, %v904
  %v906 = vsel %vm813, %v887, 0.0
  %v907 = vadd.f32 %v905, %v906
  %v908 = vsel %vm813, %v894, 0.0
  %v909 = vadd.f32 %v907, %v908
  %v910 = vmul.f32 %v909, %v829
  %v911 = vmul.f32 %v830, %v830
  %v912 = vsub.f32 %v910, %v911
  %v913 = vmax.f32 %v912, 0.0
  %v914 = vld [vmem:[%s2] sm:$0x1]
  %v915 = vadd.f32 %v913, 1e-05
  %v916 = vrsqrt.pop %v915
  %v917 = vmul.f32 %v914, %v916
  %v918 = vld [vmem:[%s3] sm:$0x1]
  %v919 = vmul.f32 %v830, %v917
  %v920 = vsub.f32 %v918, %v919
  %v922 = vlaneseq
  %v923 = vshrl.u32 %v922, 7
  %v924 = vsub.s32 0, %v923
  %v925 = vrot.slane %v917, %v924
  %v927 = vmul.f32 %v471, %v925
  %v928 = vmul.f32 %v511, %v925
  %v929 = vmul.f32 %v551, %v925
  %v930 = vmul.f32 %v591, %v925
  %v931 = vmul.f32 %v631, %v925
  %v932 = vmul.f32 %v671, %v925
  %v933 = vmul.f32 %v711, %v925
  %v934 = vmul.f32 %v751, %v925
  %v936 = vlaneseq
  %v937 = vshrl.u32 %v936, 7
  %v938 = vsub.s32 0, %v937
  %v939 = vrot.slane %v920, %v938
  %v941 = vadd.f32 %v927, %v939
  %v942 = vadd.f32 %v928, %v939
  %v943 = vadd.f32 %v929, %v939
  %v944 = vadd.f32 %v930, %v939
  %v945 = vadd.f32 %v931, %v939
  %v946 = vadd.f32 %v932, %v939
  %v947 = vadd.f32 %v933, %v939
  %v948 = vadd.f32 %v934, %v939
  %vm949 = vcmp.ge.f32.partialorder %v941, 0.0
  %vm950 = vcmp.ge.f32.partialorder %v942, 0.0
  %vm951 = vcmp.ge.f32.partialorder %v943, 0.0
  %vm952 = vcmp.ge.f32.partialorder %v944, 0.0
  %vm953 = vcmp.ge.f32.partialorder %v945, 0.0
  %vm954 = vcmp.ge.f32.partialorder %v946, 0.0
  %vm955 = vcmp.ge.f32.partialorder %v947, 0.0
  %vm956 = vcmp.ge.f32.partialorder %v948, 0.0
  %v957 = vmul.f32 %v941, 0.2
  %v958 = vmul.f32 %v942, 0.2
  %v959 = vmul.f32 %v943, 0.2
  %v960 = vmul.f32 %v944, 0.2
  %v961 = vmul.f32 %v945, 0.2
  %v962 = vmul.f32 %v946, 0.2
  %v963 = vmul.f32 %v947, 0.2
  %v964 = vmul.f32 %v948, 0.2
  %v965 = vsel %vm949, %v941, %v957
  %v966 = vsel %vm950, %v942, %v958
  %v967 = vsel %vm951, %v943, %v959
  %v968 = vsel %vm952, %v944, %v960
  %v969 = vsel %vm953, %v945, %v961
  %v970 = vsel %vm954, %v946, %v962
  %v971 = vsel %vm955, %v947, %v963
  %v972 = vsel %vm956, %v948, %v964
  %v973 = vpack.c.bf16 %v965, %v965
  %v974 = vpack.c.bf16 %v966, %v966
  %v975 = vpack.c.bf16 %v967, %v967
  %v976 = vpack.c.bf16 %v968, %v968
  %v977 = vpack.c.bf16 %v969, %v969
  %v978 = vpack.c.bf16 %v970, %v970
  %v979 = vpack.c.bf16 %v971, %v971
  %v980 = vpack.c.bf16 %v972, %v972
  %vm981 = vcmask 254976
  %982 = vst.msk [vmem:[%s4] sm:$0x3] %vm981, %v973
  %983 = vst.msk [vmem:[%s4 + $0x2] sm:$0x3] %vm981, %v974
  %984 = vst.msk [vmem:[%s4 + $0x4] sm:$0x3] %vm981, %v975
  %985 = vst.msk [vmem:[%s4 + $0x6] sm:$0x3] %vm981, %v976
  %986 = vst.msk [vmem:[%s4 + $0x8] sm:$0x3] %vm981, %v977
  %987 = vst.msk [vmem:[%s4 + $0xa] sm:$0x3] %vm981, %v978
  %988 = vst.msk [vmem:[%s4 + $0xc] sm:$0x3] %vm981, %v979
  %989 = vst.msk [vmem:[%s4 + $0xe] sm:$0x3] %vm981, %v980
  // Predicated region
  $region18: #{discriminator_forward.7} parent=0 // pred_check
    _
  $region19: #{discriminator_forward.7} parent=0 // pred_check_branch
    %991 = sbr.rel (0) target = $region21
  $region20: #{discriminator_forward.7} parent=0 // pred_region
    _
  $region21: #{discriminator_forward.7} parent=0 // pred_fallthru
    _
  // Predicated region
  $region22: #{discriminator_forward.7} parent=0 // pred_check
    _
  $region23: #{discriminator_forward.7} parent=0 // pred_check_branch
    %993 = sbr.rel (0) target = $region25
  $region24: #{discriminator_forward.7} parent=0 // pred_region
    _
  $region25: #{discriminator_forward.7} parent=0 // pred_fallthru
    _

// kernel: discriminator_forward.8
$region0: #{discriminator_forward.8}
  #allocation0 [shape = 'u32[]', space=smem, size = 0x4, offset = 0x4, fixed_abs, tag = 'smem constant byte address 0x4 - core index']
  #allocation1 [shape = 'u32[144,128]{1,0:T(1,128)}', space=vmem, size = 0x12000, scoped, tag = 'internal scratch']
  %s0 = inlined_call_operand.vmem [shape: bf16[2,3,3,128], index: 0, kind: input, shape index: {}]
  %s1 = inlined_call_operand.vmem [shape: bf16[512,64], index: 1, kind: input, shape index: {}]
  %s2 = inlined_call_operand.vmem [shape: f32[1,1,64], index: 2, kind: input, shape index: {}]
  %s3 = inlined_call_operand.vmem [shape: f32[1,1,64], index: 3, kind: input, shape index: {}]
  %s4 = inlined_call_operand.vmem [shape: bf16[4,2,64], index: 4, kind: output, shape index: {}]
  %s5 = sld [smem:[#allocation0]]
  $region26: #{discriminator_forward.8} parent=0
    _
  %s7 = ssub.s32 1, %s5
  %s8 = scalar_select 0, %s7, %s5
  // Predicated region
  $region2: #{discriminator_forward.8} parent=0 // pred_check
    _
  $region3: #{discriminator_forward.8} parent=0 // pred_check_branch
    %10 = sbr.rel (0) target = $region5
  $region4: #{discriminator_forward.8} parent=0 // pred_region
    _
  $region5: #{discriminator_forward.8} parent=0 // pred_fallthru
    _
  // Predicated region
  $region6: #{discriminator_forward.8} parent=0 // pred_check
    _
  $region7: #{discriminator_forward.8} parent=0 // pred_check_branch
    %12 = sbr.rel (0) target = $region9
  $region8: #{discriminator_forward.8} parent=0 // pred_region
    _
  $region9: #{discriminator_forward.8} parent=0 // pred_fallthru
    _
  // Predicated region
  $region10: #{discriminator_forward.8} parent=0 // pred_check
    _
  $region11: #{discriminator_forward.8} parent=0 // pred_check_branch
    %14 = sbr.rel (0) target = $region13
  $region12: #{discriminator_forward.8} parent=0 // pred_region
    _
  $region13: #{discriminator_forward.8} parent=0 // pred_fallthru
    _
  // Predicated region
  $region14: #{discriminator_forward.8} parent=0 // pred_check
    _
  $region15: #{discriminator_forward.8} parent=0 // pred_check_branch
    %16 = sbr.rel (0) target = $region17
  $region16: #{discriminator_forward.8} parent=0 // pred_region
    _
  $region17: #{discriminator_forward.8} parent=0 // pred_fallthru
    _
  %v18 = vld [vmem:[%s0] sm:$0x1]
  %v19 = vld [vmem:[%s0 + $0x2] sm:$0x1]
  %v20 = vld [vmem:[%s0 + $0x6] sm:$0x1]
  %v21 = vld [vmem:[%s0 + $0x8] sm:$0x1]
  %v22 = vld [vmem:[%s0] sm:$0x3]
  %v23 = vld [vmem:[%s0 + $0x2] sm:$0x3]
  %v24 = vld [vmem:[%s0 + $0x6] sm:$0x3]
  %v25 = vld [vmem:[%s0 + $0x8] sm:$0x3]
  %s26 = scalar_lea.vmem %s0, 2
  %v27 = vld [vmem:[%s26] sm:$0x1]
  %v28 = vld [vmem:[%s26 + $0x2] sm:$0x1]
  %v29 = vld [vmem:[%s26 + $0x6] sm:$0x1]
  %v30 = vld [vmem:[%s26 + $0x8] sm:$0x1]
  %v31 = vld [vmem:[%s26] sm:$0x3]
  %v32 = vld [vmem:[%s26 + $0x2] sm:$0x3]
  %v33 = vld [vmem:[%s26 + $0x6] sm:$0x3]
  %v34 = vld [vmem:[%s26 + $0x8] sm:$0x3]
  %v40 = vunpack.c.l.s4 1983009808
  %v41 = vunpack.c.0.s8 %v40
  %v42 = vlaneseq
  %v43 = vshrl.u32 %v42, 7
  %v44 = vsub.s32 %v41, %v43
  %v45 = vrot.slane %v22, %v44
  %v47 = vunpack.c.l.s4 1983009808
  %v48 = vunpack.c.0.s8 %v47
  %v49 = vlaneseq
  %v50 = vshrl.u32 %v49, 7
  %v51 = vsub.s32 %v48, %v50
  %v52 = vrot.slane %v23, %v51
  %v54 = vunpack.c.l.s4 1983009808
  %v55 = vunpack.c.0.s8 %v54
  %v56 = vlaneseq
  %v57 = vshrl.u32 %v56, 7
  %v58 = vsub.s32 %v55, %v57
  %v59 = vrot.slane %v24, %v58
  %v61 = vunpack.c.l.s4 1983009808
  %v62 = vunpack.c.0.s8 %v61
  %v63 = vlaneseq
  %v64 = vshrl.u32 %v63, 7
  %v65 = vsub.s32 %v62, %v64
  %v66 = vrot.slane %v25, %v65
  %v68 = vshrl.u32 %v45, 16
  %v70 = vshll.u32 %v45, 16
  %v72 = vrot.slane %v70, 1
  %v73 = vor.u32 %v68, %v72
  %v75 = vshrl.u32 %v52, 16
  %v77 = vshll.u32 %v52, 16
  %v79 = vrot.slane %v77, 1
  %v80 = vor.u32 %v75, %v79
  %v82 = vshrl.u32 %v59, 16
  %v84 = vshll.u32 %v59, 16
  %v86 = vrot.slane %v84, 1
  %v87 = vor.u32 %v82, %v86
  %v89 = vshrl.u32 %v66, 16
  %v91 = vshll.u32 %v66, 16
  %v93 = vrot.slane %v91, 1
  %v94 = vor.u32 %v89, %v93
  %v104 = vunpack.c.l.s4 1983009808
  %v105 = vunpack.c.0.s8 %v104
  %v106 = vlaneseq
  %v107 = vshrl.u32 %v106, 7
  %v108 = vsub.s32 %v105, %v107
  %v109 = vrot.slane %v31, %v108
  %v111 = vunpack.c.l.s4 1983009808
  %v112 = vunpack.c.0.s8 %v111
  %v113 = vlaneseq
  %v114 = vshrl.u32 %v113, 7
  %v115 = vsub.s32 %v112, %v114
  %v116 = vrot.slane %v32, %v115
  %v118 = vunpack.c.l.s4 1983009808
  %v119 = vunpack.c.0.s8 %v118
  %v120 = vlaneseq
  %v121 = vshrl.u32 %v120, 7
  %v122 = vsub.s32 %v119, %v121
  %v123 = vrot.slane %v33, %v122
  %v125 = vunpack.c.l.s4 1983009808
  %v126 = vunpack.c.0.s8 %v125
  %v127 = vlaneseq
  %v128 = vshrl.u32 %v127, 7
  %v129 = vsub.s32 %v126, %v128
  %v130 = vrot.slane %v34, %v129
  %v132 = vshrl.u32 %v109, 16
  %v134 = vshll.u32 %v109, 16
  %v136 = vrot.slane %v134, 1
  %v137 = vor.u32 %v132, %v136
  %v139 = vshrl.u32 %v116, 16
  %v141 = vshll.u32 %v116, 16
  %v143 = vrot.slane %v141, 1
  %v144 = vor.u32 %v139, %v143
  %v146 = vshrl.u32 %v123, 16
  %v148 = vshll.u32 %v123, 16
  %v150 = vrot.slane %v148, 1
  %v151 = vor.u32 %v146, %v150
  %v153 = vshrl.u32 %v130, 16
  %v155 = vshll.u32 %v130, 16
  %v157 = vrot.slane %v155, 1
  %v158 = vor.u32 %v153, %v157
  %v163 = vld [vmem:[%s1] sm:$0xf]
  %v164 = vld [vmem:[%s1 + $0x4] sm:$0xf]
  %v165 = vld [vmem:[%s1 + $0x8] sm:$0xf]
  %v166 = vld [vmem:[%s1 + $0xc] sm:$0xf]
  %v167 = vld [vmem:[%s1 + $0x10] sm:$0xf]
  %v168 = vld [vmem:[%s1 + $0x14] sm:$0xf]
  %v169 = vld [vmem:[%s1 + $0x18] sm:$0xf]
  %v170 = vld [vmem:[%s1 + $0x1c] sm:$0xf]
  %v171 = vld [vmem:[%s1 + $0x20] sm:$0xf]
  %v172 = vld [vmem:[%s1 + $0x24] sm:$0xf]
  %v173 = vld [vmem:[%s1 + $0x28] sm:$0xf]
  %v174 = vld [vmem:[%s1 + $0x2c] sm:$0xf]
  %v175 = vld [vmem:[%s1 + $0x30] sm:$0xf]
  %v176 = vld [vmem:[%s1 + $0x34] sm:$0xf]
  %v177 = vld [vmem:[%s1 + $0x38] sm:$0xf]
  %v178 = vld [vmem:[%s1 + $0x3c] sm:$0xf]
  %v179 = vld [vmem:[%s1 + $0x40] sm:$0xf]
  %v180 = vld [vmem:[%s1 + $0x44] sm:$0xf]
  %v181 = vld [vmem:[%s1 + $0x48] sm:$0xf]
  %v182 = vld [vmem:[%s1 + $0x4c] sm:$0xf]
  %v183 = vld [vmem:[%s1 + $0x50] sm:$0xf]
  %v184 = vld [vmem:[%s1 + $0x54] sm:$0xf]
  %v185 = vld [vmem:[%s1 + $0x58] sm:$0xf]
  %v186 = vld [vmem:[%s1 + $0x5c] sm:$0xf]
  %v187 = vld [vmem:[%s1 + $0x60] sm:$0xf]
  %v188 = vld [vmem:[%s1 + $0x64] sm:$0xf]
  %v189 = vld [vmem:[%s1 + $0x68] sm:$0xf]
  %v190 = vld [vmem:[%s1 + $0x6c] sm:$0xf]
  %v191 = vld [vmem:[%s1 + $0x70] sm:$0xf]
  %v192 = vld [vmem:[%s1 + $0x74] sm:$0xf]
  %v193 = vld [vmem:[%s1 + $0x78] sm:$0xf]
  %v194 = vld [vmem:[%s1 + $0x7c] sm:$0xf]
  %v195 = vld [vmem:[%s1 + $0x80] sm:$0xf]
  %v196 = vld [vmem:[%s1 + $0x84] sm:$0xf]
  %v197 = vld [vmem:[%s1 + $0x88] sm:$0xf]
  %v198 = vld [vmem:[%s1 + $0x8c] sm:$0xf]
  %v199 = vld [vmem:[%s1 + $0x90] sm:$0xf]
  %v200 = vld [vmem:[%s1 + $0x94] sm:$0xf]
  %v201 = vld [vmem:[%s1 + $0x98] sm:$0xf]
  %v202 = vld [vmem:[%s1 + $0x9c] sm:$0xf]
  %v203 = vld [vmem:[%s1 + $0xa0] sm:$0xf]
  %v204 = vld [vmem:[%s1 + $0xa4] sm:$0xf]
  %v205 = vld [vmem:[%s1 + $0xa8] sm:$0xf]
  %v206 = vld [vmem:[%s1 + $0xac] sm:$0xf]
  %v207 = vld [vmem:[%s1 + $0xb0] sm:$0xf]
  %v208 = vld [vmem:[%s1 + $0xb4] sm:$0xf]
  %v209 = vld [vmem:[%s1 + $0xb8] sm:$0xf]
  %v210 = vld [vmem:[%s1 + $0xbc] sm:$0xf]
  %v211 = vld [vmem:[%s1 + $0xc0] sm:$0xf]
  %v212 = vld [vmem:[%s1 + $0xc4] sm:$0xf]
  %v213 = vld [vmem:[%s1 + $0xc8] sm:$0xf]
  %v214 = vld [vmem:[%s1 + $0xcc] sm:$0xf]
  %v215 = vld [vmem:[%s1 + $0xd0] sm:$0xf]
  %v216 = vld [vmem:[%s1 + $0xd4] sm:$0xf]
  %v217 = vld [vmem:[%s1 + $0xd8] sm:$0xf]
  %v218 = vld [vmem:[%s1 + $0xdc] sm:$0xf]
  %v219 = vld [vmem:[%s1 + $0xe0] sm:$0xf]
  %v220 = vld [vmem:[%s1 + $0xe4] sm:$0xf]
  %v221 = vld [vmem:[%s1 + $0xe8] sm:$0xf]
  %v222 = vld [vmem:[%s1 + $0xec] sm:$0xf]
  %v223 = vld [vmem:[%s1 + $0xf0] sm:$0xf]
  %v224 = vld [vmem:[%s1 + $0xf4] sm:$0xf]
  %v225 = vld [vmem:[%s1 + $0xf8] sm:$0xf]
  %v226 = vld [vmem:[%s1 + $0xfc] sm:$0xf]
  %v291 = vunpack.c.l.b16 %v163
  %v292 = vunpack.c.l.b16 %v164
  %v293 = vunpack.c.l.b16 %v165
  %v294 = vunpack.c.l.b16 %v166
  %v295 = vunpack.c.l.b16 %v167
  %v296 = vunpack.c.l.b16 %v168
  %v297 = vunpack.c.l.b16 %v169
  %v298 = vunpack.c.l.b16 %v170
  %v299 = vunpack.c.l.b16 %v171
  %v300 = vunpack.c.l.b16 %v172
  %v301 = vunpack.c.l.b16 %v173
  %v302 = vunpack.c.l.b16 %v174
  %v303 = vunpack.c.l.b16 %v175
  %v304 = vunpack.c.l.b16 %v176
  %v305 = vunpack.c.l.b16 %v177
  %v306 = vunpack.c.l.b16 %v178
  %v307 = vunpack.c.l.b16 %v179
  %v308 = vunpack.c.l.b16 %v180
  %v309 = vunpack.c.l.b16 %v181
  %v310 = vunpack.c.l.b16 %v182
  %v311 = vunpack.c.l.b16 %v183
  %v312 = vunpack.c.l.b16 %v184
  %v313 = vunpack.c.l.b16 %v185
  %v314 = vunpack.c.l.b16 %v186
  %v315 = vunpack.c.l.b16 %v187
  %v316 = vunpack.c.l.b16 %v188
  %v317 = vunpack.c.l.b16 %v189
  %v318 = vunpack.c.l.b16 %v190
  %v319 = vunpack.c.l.b16 %v191
  %v320 = vunpack.c.l.b16 %v192
  %v321 = vunpack.c.l.b16 %v193
  %v322 = vunpack.c.l.b16 %v194
  %v323 = vunpack.c.l.b16 %v195
  %v324 = vunpack.c.l.b16 %v196
  %v325 = vunpack.c.l.b16 %v197
  %v326 = vunpack.c.l.b16 %v198
  %v327 = vunpack.c.l.b16 %v199
  %v328 = vunpack.c.l.b16 %v200
  %v329 = vunpack.c.l.b16 %v201
  %v330 = vunpack.c.l.b16 %v202
  %v331 = vunpack.c.l.b16 %v203
  %v332 = vunpack.c.l.b16 %v204
  %v333 = vunpack.c.l.b16 %v205
  %v334 = vunpack.c.l.b16 %v206
  %v335 = vunpack.c.l.b16 %v207
  %v336 = vunpack.c.l.b16 %v208
  %v337 = vunpack.c.l.b16 %v209
  %v338 = vunpack.c.l.b16 %v210
  %v339 = vunpack.c.l.b16 %v211
  %v340 = vunpack.c.l.b16 %v212
  %v341 = vunpack.c.l.b16 %v213
  %v342 = vunpack.c.l.b16 %v214
  %v343 = vunpack.c.l.b16 %v215
  %v344 = vunpack.c.l.b16 %v216
  %v345 = vunpack.c.l.b16 %v217
  %v346 = vunpack.c.l.b16 %v218
  %v347 = vunpack.c.l.b16 %v219
  %v348 = vunpack.c.l.b16 %v220
  %v349 = vunpack.c.l.b16 %v221
  %v350 = vunpack.c.l.b16 %v222
  %v351 = vunpack.c.l.b16 %v223
  %v352 = vunpack.c.l.b16 %v224
  %v353 = vunpack.c.l.b16 %v225
  %v354 = vunpack.c.l.b16 %v226
  %v355 = vpack.c.b16 %v292, %v291
  %v356 = vpack.c.b16 %v294, %v293
  %v357 = vpack.c.b16 %v296, %v295
  %v358 = vpack.c.b16 %v298, %v297
  %v359 = vpack.c.b16 %v300, %v299
  %v360 = vpack.c.b16 %v302, %v301
  %v361 = vpack.c.b16 %v304, %v303
  %v362 = vpack.c.b16 %v306, %v305
  %v363 = vpack.c.b16 %v308, %v307
  %v364 = vpack.c.b16 %v310, %v309
  %v365 = vpack.c.b16 %v312, %v311
  %v366 = vpack.c.b16 %v314, %v313
  %v367 = vpack.c.b16 %v316, %v315
  %v368 = vpack.c.b16 %v318, %v317
  %v369 = vpack.c.b16 %v320, %v319
  %v370 = vpack.c.b16 %v322, %v321
  %v371 = vpack.c.b16 %v324, %v323
  %v372 = vpack.c.b16 %v326, %v325
  %v373 = vpack.c.b16 %v328, %v327
  %v374 = vpack.c.b16 %v330, %v329
  %v375 = vpack.c.b16 %v332, %v331
  %v376 = vpack.c.b16 %v334, %v333
  %v377 = vpack.c.b16 %v336, %v335
  %v378 = vpack.c.b16 %v338, %v337
  %v379 = vpack.c.b16 %v340, %v339
  %v380 = vpack.c.b16 %v342, %v341
  %v381 = vpack.c.b16 %v344, %v343
  %v382 = vpack.c.b16 %v346, %v345
  %v383 = vpack.c.b16 %v348, %v347
  %v384 = vpack.c.b16 %v350, %v349
  %v385 = vpack.c.b16 %v352, %v351
  %v386 = vpack.c.b16 %v354, %v353
  %419 = vmatprep.subr.bf16.mxu0 0
  %420 = vmatpush1.bf16.msra.mxu0 %v362
  %421 = vmatprep.subr.bf16.mxu0 0
  %422 = vmatpush1.bf16.msra.mxu0 %v361
  %423 = vmatprep.subr.bf16.mxu0 0
  %424 = vmatpush1.bf16.msra.mxu0 %v360
  %425 = vmatprep.subr.bf16.mxu0 0
  %426 = vmatpush1.bf16.msra.mxu0 %v359
  %427 = vmatprep.subr.bf16.mxu0 0
  %428 = vmatpush1.bf16.msra.mxu0 %v358
  %429 = vmatprep.subr.bf16.mxu0 0
  %430 = vmatpush1.bf16.msra.mxu0 %v357
  %431 = vmatprep.subr.bf16.mxu0 0
  %432 = vmatpush1.bf16.msra.mxu0 %v356
  %433 = vmatprep.subr.bf16.mxu0 0
  %434 = vmatpush1.bf16.msra.mxu0 %v355
  %435 = vmatprep.subr.bf16.mxu0 0
  %436 = vmatpush2.bf16.msra.mxu0 %v370
  %437 = vmatprep.subr.bf16.mxu0 0
  %438 = vmatpush2.bf16.msra.mxu0 %v369
  %439 = vmatprep.subr.bf16.mxu0 0
  %440 = vmatpush2.bf16.msra.mxu0 %v368
  %441 = vmatprep.subr.bf16.mxu0 0
  %442 = vmatpush2.bf16.msra.mxu0 %v367
  %443 = vmatprep.subr.bf16.mxu0 0
  %444 = vmatpush2.bf16.msra.mxu0 %v366
  %445 = vmatprep.subr.bf16.mxu0 0
  %446 = vmatpush2.bf16.msra.mxu0 %v365
  %447 = vmatprep.subr.bf16.mxu0 0
  %448 = vmatpush2.bf16.msra.mxu0 %v364
  %449 = vmatprep.subr.bf16.mxu0 0
  %450 = vmatpush2.bf16.msra.mxu0 %v363
  %451 = vmatprep.mubr.bf16.mxu0 %v73
  %452 = vmatmul.mubr.bf16.gmra.mxu0 %v18
  %v453 = vpop.f32.mrf.mxu0
  %v454 = vadd.f32 0.0, %v453
  %v455 = vpop.f32.mrf.mxu0
  %v456 = vpop.f32.mrf.mxu0
  %v457 = vpop.f32.mrf.mxu0
  %458 = vdwg.mxu0
  %459 = vmatprep.subr.bf16.mxu0 0
  %460 = vmatpush1.bf16.msra.mxu0 %v378
  %461 = vmatprep.subr.bf16.mxu0 0
  %462 = vmatpush1.bf16.msra.mxu0 %v377
  %463 = vmatprep.subr.bf16.mxu0 0
  %464 = vmatpush1.bf16.msra.mxu0 %v376
  %465 = vmatprep.subr.bf16.mxu0 0
  %466 = vmatpush1.bf16.msra.mxu0 %v375
  %467 = vmatprep.subr.bf16.mxu0 0
  %468 = vmatpush1.bf16.msra.mxu0 %v374
  %469 = vmatprep.subr.bf16.mxu0 0
  %470 = vmatpush1.bf16.msra.mxu0 %v373
  %471 = vmatprep.subr.bf16.mxu0 0
  %472 = vmatpush1.bf16.msra.mxu0 %v372
  %473 = vmatprep.subr.bf16.mxu0 0
  %474 = vmatpush1.bf16.msra.mxu0 %v371
  %475 = vmatprep.subr.bf16.mxu0 0
  %476 = vmatpush2.bf16.msra.mxu0 %v386
  %477 = vmatprep.subr.bf16.mxu0 0
  %478 = vmatpush2.bf16.msra.mxu0 %v385
  %479 = vmatprep.subr.bf16.mxu0 0
  %480 = vmatpush2.bf16.msra.mxu0 %v384
  %481 = vmatprep.subr.bf16.mxu0 0
  %482 = vmatpush2.bf16.msra.mxu0 %v383
  %483 = vmatprep.subr.bf16.mxu0 0
  %484 = vmatpush2.bf16.msra.mxu0 %v382
  %485 = vmatprep.subr.bf16.mxu0 0
  %486 = vmatpush2.bf16.msra.mxu0 %v381
  %487 = vmatprep.subr.bf16.mxu0 0
  %488 = vmatpush2.bf16.msra.mxu0 %v380
  %489 = vmatprep.subr.bf16.mxu0 0
  %490 = vmatpush2.bf16.msra.mxu0 %v379
  %491 = vmatprep.mubr.bf16.mxu0 %v137
  %492 = vmatmul.mubr.bf16.gmra.mxu0 %v27
  %v493 = vpop.f32.mrf.mxu0
  %v494 = vadd.f32 %v454, %v493
  %v495 = vpop.f32.mrf.mxu0
  %v496 = vpop.f32.mrf.mxu0
  %v497 = vpop.f32.mrf.mxu0
  %498 = vdwg.mxu0
  %499 = vmatprep.subr.bf16.mxu0 0
  %500 = vmatpush1.bf16.msra.mxu0 %v362
  %501 = vmatprep.subr.bf16.mxu0 0
  %502 = vmatpush1.bf16.msra.mxu0 %v361
  %503 = vmatprep.subr.bf16.mxu0 0
  %504 = vmatpush1.bf16.msra.mxu0 %v360
  %505 = vmatprep.subr.bf16.mxu0 0
  %506 = vmatpush1.bf16.msra.mxu0 %v359
  %507 = vmatprep.subr.bf16.mxu0 0
  %508 = vmatpush1.bf16.msra.mxu0 %v358
  %509 = vmatprep.subr.bf16.mxu0 0
  %510 = vmatpush1.bf16.msra.mxu0 %v357
  %511 = vmatprep.subr.bf16.mxu0 0
  %512 = vmatpush1.bf16.msra.mxu0 %v356
  %513 = vmatprep.subr.bf16.mxu0 0
  %514 = vmatpush1.bf16.msra.mxu0 %v355
  %515 = vmatprep.subr.bf16.mxu0 0
  %516 = vmatpush2.bf16.msra.mxu0 %v370
  %517 = vmatprep.subr.bf16.mxu0 0
  %518 = vmatpush2.bf16.msra.mxu0 %v369
  %519 = vmatprep.subr.bf16.mxu0 0
  %520 = vmatpush2.bf16.msra.mxu0 %v368
  %521 = vmatprep.subr.bf16.mxu0 0
  %522 = vmatpush2.bf16.msra.mxu0 %v367
  %523 = vmatprep.subr.bf16.mxu0 0
  %524 = vmatpush2.bf16.msra.mxu0 %v366
  %525 = vmatprep.subr.bf16.mxu0 0
  %526 = vmatpush2.bf16.msra.mxu0 %v365
  %527 = vmatprep.subr.bf16.mxu0 0
  %528 = vmatpush2.bf16.msra.mxu0 %v364
  %529 = vmatprep.subr.bf16.mxu0 0
  %530 = vmatpush2.bf16.msra.mxu0 %v363
  %531 = vmatprep.mubr.bf16.mxu0 %v80
  %532 = vmatmul.mubr.bf16.gmra.mxu0 %v19
  %v533 = vpop.f32.mrf.mxu0
  %v534 = vadd.f32 0.0, %v533
  %v535 = vpop.f32.mrf.mxu0
  %v536 = vpop.f32.mrf.mxu0
  %v537 = vpop.f32.mrf.mxu0
  %538 = vdwg.mxu0
  %539 = vmatprep.subr.bf16.mxu0 0
  %540 = vmatpush1.bf16.msra.mxu0 %v378
  %541 = vmatprep.subr.bf16.mxu0 0
  %542 = vmatpush1.bf16.msra.mxu0 %v377
  %543 = vmatprep.subr.bf16.mxu0 0
  %544 = vmatpush1.bf16.msra.mxu0 %v376
  %545 = vmatprep.subr.bf16.mxu0 0
  %546 = vmatpush1.bf16.msra.mxu0 %v375
  %547 = vmatprep.subr.bf16.mxu0 0
  %548 = vmatpush1.bf16.msra.mxu0 %v374
  %549 = vmatprep.subr.bf16.mxu0 0
  %550 = vmatpush1.bf16.msra.mxu0 %v373
  %551 = vmatprep.subr.bf16.mxu0 0
  %552 = vmatpush1.bf16.msra.mxu0 %v372
  %553 = vmatprep.subr.bf16.mxu0 0
  %554 = vmatpush1.bf16.msra.mxu0 %v371
  %555 = vmatprep.subr.bf16.mxu0 0
  %556 = vmatpush2.bf16.msra.mxu0 %v386
  %557 = vmatprep.subr.bf16.mxu0 0
  %558 = vmatpush2.bf16.msra.mxu0 %v385
  %559 = vmatprep.subr.bf16.mxu0 0
  %560 = vmatpush2.bf16.msra.mxu0 %v384
  %561 = vmatprep.subr.bf16.mxu0 0
  %562 = vmatpush2.bf16.msra.mxu0 %v383
  %563 = vmatprep.subr.bf16.mxu0 0
  %564 = vmatpush2.bf16.msra.mxu0 %v382
  %565 = vmatprep.subr.bf16.mxu0 0
  %566 = vmatpush2.bf16.msra.mxu0 %v381
  %567 = vmatprep.subr.bf16.mxu0 0
  %568 = vmatpush2.bf16.msra.mxu0 %v380
  %569 = vmatprep.subr.bf16.mxu0 0
  %570 = vmatpush2.bf16.msra.mxu0 %v379
  %571 = vmatprep.mubr.bf16.mxu0 %v144
  %572 = vmatmul.mubr.bf16.gmra.mxu0 %v28
  %v573 = vpop.f32.mrf.mxu0
  %v574 = vadd.f32 %v534, %v573
  %v575 = vpop.f32.mrf.mxu0
  %v576 = vpop.f32.mrf.mxu0
  %v577 = vpop.f32.mrf.mxu0
  %578 = vdwg.mxu0
  %579 = vmatprep.subr.bf16.mxu0 0
  %580 = vmatpush1.bf16.msra.mxu0 %v362
  %581 = vmatprep.subr.bf16.mxu0 0
  %582 = vmatpush1.bf16.msra.mxu0 %v361
  %583 = vmatprep.subr.bf16.mxu0 0
  %584 = vmatpush1.bf16.msra.mxu0 %v360
  %585 = vmatprep.subr.bf16.mxu0 0
  %586 = vmatpush1.bf16.msra.mxu0 %v359
  %587 = vmatprep.subr.bf16.mxu0 0
  %588 = vmatpush1.bf16.msra.mxu0 %v358
  %589 = vmatprep.subr.bf16.mxu0 0
  %590 = vmatpush1.bf16.msra.mxu0 %v357
  %591 = vmatprep.subr.bf16.mxu0 0
  %592 = vmatpush1.bf16.msra.mxu0 %v356
  %593 = vmatprep.subr.bf16.mxu0 0
  %594 = vmatpush1.bf16.msra.mxu0 %v355
  %595 = vmatprep.subr.bf16.mxu0 0
  %596 = vmatpush2.bf16.msra.mxu0 %v370
  %597 = vmatprep.subr.bf16.mxu0 0
  %598 = vmatpush2.bf16.msra.mxu0 %v369
  %599 = vmatprep.subr.bf16.mxu0 0
  %600 = vmatpush2.bf16.msra.mxu0 %v368
  %601 = vmatprep.subr.bf16.mxu0 0
  %602 = vmatpush2.bf16.msra.mxu0 %v367
  %603 = vmatprep.subr.bf16.mxu0 0
  %604 = vmatpush2.bf16.msra.mxu0 %v366
  %605 = vmatprep.subr.bf16.mxu0 0
  %606 = vmatpush2.bf16.msra.mxu0 %v365
  %607 = vmatprep.subr.bf16.mxu0 0
  %608 = vmatpush2.bf16.msra.mxu0 %v364
  %609 = vmatprep.subr.bf16.mxu0 0
  %610 = vmatpush2.bf16.msra.mxu0 %v363
  %611 = vmatprep.mubr.bf16.mxu0 %v87
  %612 = vmatmul.mubr.bf16.gmra.mxu0 %v20
  %v613 = vpop.f32.mrf.mxu0
  %v614 = vadd.f32 0.0, %v613
  %v615 = vpop.f32.mrf.mxu0
  %v616 = vpop.f32.mrf.mxu0
  %v617 = vpop.f32.mrf.mxu0
  %618 = vdwg.mxu0
  %619 = vmatprep.subr.bf16.mxu0 0
  %620 = vmatpush1.bf16.msra.mxu0 %v378
  %621 = vmatprep.subr.bf16.mxu0 0
  %622 = vmatpush1.bf16.msra.mxu0 %v377
  %623 = vmatprep.subr.bf16.mxu0 0
  %624 = vmatpush1.bf16.msra.mxu0 %v376
  %625 = vmatprep.subr.bf16.mxu0 0
  %626 = vmatpush1.bf16.msra.mxu0 %v375
  %627 = vmatprep.subr.bf16.mxu0 0
  %628 = vmatpush1.bf16.msra.mxu0 %v374
  %629 = vmatprep.subr.bf16.mxu0 0
  %630 = vmatpush1.bf16.msra.mxu0 %v373
  %631 = vmatprep.subr.bf16.mxu0 0
  %632 = vmatpush1.bf16.msra.mxu0 %v372
  %633 = vmatprep.subr.bf16.mxu0 0
  %634 = vmatpush1.bf16.msra.mxu0 %v371
  %635 = vmatprep.subr.bf16.mxu0 0
  %636 = vmatpush2.bf16.msra.mxu0 %v386
  %637 = vmatprep.subr.bf16.mxu0 0
  %638 = vmatpush2.bf16.msra.mxu0 %v385
  %639 = vmatprep.subr.bf16.mxu0 0
  %640 = vmatpush2.bf16.msra.mxu0 %v384
  %641 = vmatprep.subr.bf16.mxu0 0
  %642 = vmatpush2.bf16.msra.mxu0 %v383
  %643 = vmatprep.subr.bf16.mxu0 0
  %644 = vmatpush2.bf16.msra.mxu0 %v382
  %645 = vmatprep.subr.bf16.mxu0 0
  %646 = vmatpush2.bf16.msra.mxu0 %v381
  %647 = vmatprep.subr.bf16.mxu0 0
  %648 = vmatpush2.bf16.msra.mxu0 %v380
  %649 = vmatprep.subr.bf16.mxu0 0
  %650 = vmatpush2.bf16.msra.mxu0 %v379
  %651 = vmatprep.mubr.bf16.mxu0 %v151
  %652 = vmatmul.mubr.bf16.gmra.mxu0 %v29
  %v653 = vpop.f32.mrf.mxu0
  %v654 = vadd.f32 %v614, %v653
  %v655 = vpop.f32.mrf.mxu0
  %v656 = vpop.f32.mrf.mxu0
  %v657 = vpop.f32.mrf.mxu0
  %658 = vdwg.mxu0
  %659 = vmatprep.subr.bf16.mxu0 0
  %660 = vmatpush1.bf16.msra.mxu0 %v362
  %661 = vmatprep.subr.bf16.mxu0 0
  %662 = vmatpush1.bf16.msra.mxu0 %v361
  %663 = vmatprep.subr.bf16.mxu0 0
  %664 = vmatpush1.bf16.msra.mxu0 %v360
  %665 = vmatprep.subr.bf16.mxu0 0
  %666 = vmatpush1.bf16.msra.mxu0 %v359
  %667 = vmatprep.subr.bf16.mxu0 0
  %668 = vmatpush1.bf16.msra.mxu0 %v358
  %669 = vmatprep.subr.bf16.mxu0 0
  %670 = vmatpush1.bf16.msra.mxu0 %v357
  %671 = vmatprep.subr.bf16.mxu0 0
  %672 = vmatpush1.bf16.msra.mxu0 %v356
  %673 = vmatprep.subr.bf16.mxu0 0
  %674 = vmatpush1.bf16.msra.mxu0 %v355
  %675 = vmatprep.subr.bf16.mxu0 0
  %676 = vmatpush2.bf16.msra.mxu0 %v370
  %677 = vmatprep.subr.bf16.mxu0 0
  %678 = vmatpush2.bf16.msra.mxu0 %v369
  %679 = vmatprep.subr.bf16.mxu0 0
  %680 = vmatpush2.bf16.msra.mxu0 %v368
  %681 = vmatprep.subr.bf16.mxu0 0
  %682 = vmatpush2.bf16.msra.mxu0 %v367
  %683 = vmatprep.subr.bf16.mxu0 0
  %684 = vmatpush2.bf16.msra.mxu0 %v366
  %685 = vmatprep.subr.bf16.mxu0 0
  %686 = vmatpush2.bf16.msra.mxu0 %v365
  %687 = vmatprep.subr.bf16.mxu0 0
  %688 = vmatpush2.bf16.msra.mxu0 %v364
  %689 = vmatprep.subr.bf16.mxu0 0
  %690 = vmatpush2.bf16.msra.mxu0 %v363
  %691 = vmatprep.mubr.bf16.mxu0 %v94
  %692 = vmatmul.mubr.bf16.gmra.mxu0 %v21
  %v693 = vpop.f32.mrf.mxu0
  %v694 = vadd.f32 0.0, %v693
  %v695 = vpop.f32.mrf.mxu0
  %v696 = vpop.f32.mrf.mxu0
  %v697 = vpop.f32.mrf.mxu0
  %698 = vdwg.mxu0
  %699 = vmatprep.subr.bf16.mxu0 0
  %700 = vmatpush1.bf16.msra.mxu0 %v378
  %701 = vmatprep.subr.bf16.mxu0 0
  %702 = vmatpush1.bf16.msra.mxu0 %v377
  %703 = vmatprep.subr.bf16.mxu0 0
  %704 = vmatpush1.bf16.msra.mxu0 %v376
  %705 = vmatprep.subr.bf16.mxu0 0
  %706 = vmatpush1.bf16.msra.mxu0 %v375
  %707 = vmatprep.subr.bf16.mxu0 0
  %708 = vmatpush1.bf16.msra.mxu0 %v374
  %709 = vmatprep.subr.bf16.mxu0 0
  %710 = vmatpush1.bf16.msra.mxu0 %v373
  %711 = vmatprep.subr.bf16.mxu0 0
  %712 = vmatpush1.bf16.msra.mxu0 %v372
  %713 = vmatprep.subr.bf16.mxu0 0
  %714 = vmatpush1.bf16.msra.mxu0 %v371
  %715 = vmatprep.subr.bf16.mxu0 0
  %716 = vmatpush2.bf16.msra.mxu0 %v386
  %717 = vmatprep.subr.bf16.mxu0 0
  %718 = vmatpush2.bf16.msra.mxu0 %v385
  %719 = vmatprep.subr.bf16.mxu0 0
  %720 = vmatpush2.bf16.msra.mxu0 %v384
  %721 = vmatprep.subr.bf16.mxu0 0
  %722 = vmatpush2.bf16.msra.mxu0 %v383
  %723 = vmatprep.subr.bf16.mxu0 0
  %724 = vmatpush2.bf16.msra.mxu0 %v382
  %725 = vmatprep.subr.bf16.mxu0 0
  %726 = vmatpush2.bf16.msra.mxu0 %v381
  %727 = vmatprep.subr.bf16.mxu0 0
  %728 = vmatpush2.bf16.msra.mxu0 %v380
  %729 = vmatprep.subr.bf16.mxu0 0
  %730 = vmatpush2.bf16.msra.mxu0 %v379
  %731 = vmatprep.mubr.bf16.mxu0 %v158
  %732 = vmatmul.mubr.bf16.gmra.mxu0 %v30
  %v733 = vpop.f32.mrf.mxu0
  %v734 = vadd.f32 %v694, %v733
  %v735 = vpop.f32.mrf.mxu0
  %v736 = vpop.f32.mrf.mxu0
  %v737 = vpop.f32.mrf.mxu0
  %738 = vdwg.mxu0
  %vm739 = vcmask 517120
  %v740 = vsel %vm739, %v494, 0.0
  %v741 = vrot.slane %v740, 4
  %v742 = vadd.f32 %v740, %v741
  %v743 = vrot.slane %v742, 2
  %v744 = vadd.f32 %v742, %v743
  %v745 = vrot.slane %v744, 1
  %v746 = vadd.f32 %v744, %v745
  %v747 = vsel %vm739, %v574, 0.0
  %v748 = vrot.slane %v747, 4
  %v749 = vadd.f32 %v747, %v748
  %v750 = vrot.slane %v749, 2
  %v751 = vadd.f32 %v749, %v750
  %v752 = vrot.slane %v751, 1
  %v753 = vadd.f32 %v751, %v752
  %v754 = vsel %vm739, %v654, 0.0
  %v755 = vrot.slane %v754, 4
  %v756 = vadd.f32 %v754, %v755
  %v757 = vrot.slane %v756, 2
  %v758 = vadd.f32 %v756, %v757
  %v759 = vrot.slane %v758, 1
  %v760 = vadd.f32 %v758, %v759
  %v761 = vsel %vm739, %v734, 0.0
  %v762 = vrot.slane %v761, 4
  %v763 = vadd.f32 %v761, %v762
  %v764 = vrot.slane %v763, 2
  %v765 = vadd.f32 %v763, %v764
  %v766 = vrot.slane %v765, 1
  %v767 = vadd.f32 %v765, %v766
  %vm768 = vcmask 523264
  %v769 = vsel %vm768, %v746, 0.0
  %v770 = vsel %vm768, %v753, 0.0
  %v771 = vadd.f32 %v769, %v770
  %v772 = vsel %vm768, %v760, 0.0
  %v773 = vadd.f32 %v771, %v772
  %v774 = vsel %vm768, %v767, 0.0
  %v775 = vadd.f32 %v773, %v774
  %v776 = vrcp.pop 8.0
  %v777 = vmul.f32 %v775, %v776
  %v778 = vmul.f32 %v494, %v494
  %v779 = vmul.f32 %v574, %v574
  %v780 = vmul.f32 %v654, %v654
  %v781 = vmul.f32 %v734, %v734
  %v782 = vsel %vm739, %v778, 0.0
  %v783 = vrot.slane %v782, 4
  %v784 = vadd.f32 %v782, %v783
  %v785 = vrot.slane %v784, 2
  %v786 = vadd.f32 %v784, %v785
  %v787 = vrot.slane %v786, 1
  %v788 = vadd.f32 %v786, %v787
  %v789 = vsel %vm739, %v779, 0.0
  %v790 = vrot.slane %v789, 4
  %v791 = vadd.f32 %v789, %v790
  %v792 = vrot.slane %v791, 2
  %v793 = vadd.f32 %v791, %v792
  %v794 = vrot.slane %v793, 1
  %v795 = vadd.f32 %v793, %v794
  %v796 = vsel %vm739, %v780, 0.0
  %v797 = vrot.slane %v796, 4
  %v798 = vadd.f32 %v796, %v797
  %v799 = vrot.slane %v798, 2
  %v800 = vadd.f32 %v798, %v799
  %v801 = vrot.slane %v800, 1
  %v802 = vadd.f32 %v800, %v801
  %v803 = vsel %vm739, %v781, 0.0
  %v804 = vrot.slane %v803, 4
  %v805 = vadd.f32 %v803, %v804
  %v806 = vrot.slane %v805, 2
  %v807 = vadd.f32 %v805, %v806
  %v808 = vrot.slane %v807, 1
  %v809 = vadd.f32 %v807, %v808
  %v810 = vsel %vm768, %v788, 0.0
  %v811 = vsel %vm768, %v795, 0.0
  %v812 = vadd.f32 %v810, %v811
  %v813 = vsel %vm768, %v802, 0.0
  %v814 = vadd.f32 %v812, %v813
  %v815 = vsel %vm768, %v809, 0.0
  %v816 = vadd.f32 %v814, %v815
  %v817 = vmul.f32 %v816, %v776
  %v818 = vmul.f32 %v777, %v777
  %v819 = vsub.f32 %v817, %v818
  %v820 = vmax.f32 %v819, 0.0
  %v821 = vld [vmem:[%s2] sm:$0x1]
  %v822 = vadd.f32 %v820, 1e-05
  %v823 = vrsqrt.pop %v822
  %v824 = vmul.f32 %v821, %v823
  %v825 = vld [vmem:[%s3] sm:$0x1]
  %v826 = vmul.f32 %v777, %v824
  %v827 = vsub.f32 %v825, %v826
  %v829 = vlaneseq
  %v830 = vshrl.u32 %v829, 7
  %v831 = vsub.s32 0, %v830
  %v832 = vrot.slane %v824, %v831
  %v834 = vmul.f32 %v494, %v832
  %v835 = vmul.f32 %v574, %v832
  %v836 = vmul.f32 %v654, %v832
  %v837 = vmul.f32 %v734, %v832
  %v839 = vlaneseq
  %v840 = vshrl.u32 %v839, 7
  %v841 = vsub.s32 0, %v840
  %v842 = vrot.slane %v827, %v841
  %v844 = vadd.f32 %v834, %v842
  %v845 = vadd.f32 %v835, %v842
  %v846 = vadd.f32 %v836, %v842
  %v847 = vadd.f32 %v837, %v842
  %vm848 = vcmp.ge.f32.partialorder %v844, 0.0
  %vm849 = vcmp.ge.f32.partialorder %v845, 0.0
  %vm850 = vcmp.ge.f32.partialorder %v846, 0.0
  %vm851 = vcmp.ge.f32.partialorder %v847, 0.0
  %v852 = vmul.f32 %v844, 0.2
  %v853 = vmul.f32 %v845, 0.2
  %v854 = vmul.f32 %v846, 0.2
  %v855 = vmul.f32 %v847, 0.2
  %v856 = vsel %vm848, %v844, %v852
  %v857 = vsel %vm849, %v845, %v853
  %v858 = vsel %vm850, %v846, %v854
  %v859 = vsel %vm851, %v847, %v855
  %v860 = vpack.c.bf16 %v856, %v856
  %v861 = vpack.c.bf16 %v857, %v857
  %v862 = vpack.c.bf16 %v858, %v858
  %v863 = vpack.c.bf16 %v859, %v859
  %vm864 = vcmask 516096
  %865 = vst.msk [vmem:[%s4] sm:$0x1] %vm864, %v860
  %866 = vst.msk [vmem:[%s4 + $0x1] sm:$0x1] %vm864, %v861
  %867 = vst.msk [vmem:[%s4 + $0x2] sm:$0x1] %vm864, %v862
  %868 = vst.msk [vmem:[%s4 + $0x3] sm:$0x1] %vm864, %v863
  // Predicated region
  $region18: #{discriminator_forward.8} parent=0 // pred_check
    _
  $region19: #{discriminator_forward.8} parent=0 // pred_check_branch
    %870 = sbr.rel (0) target = $region21
  $region20: #{discriminator_forward.8} parent=0 // pred_region
    _
  $region21: #{discriminator_forward.8} parent=0 // pred_fallthru
    _
  // Predicated region
  $region22: #{discriminator_forward.8} parent=0 // pred_check
    _
  $region23: #{discriminator_forward.8} parent=0 // pred_check_branch
    %872 = sbr.rel (0) target = $region25
  $region24: #{discriminator_forward.8} parent=0 // pred_region
    _
  $region25: #{discriminator_forward.8} parent=0 // pred_fallthru
    _

// kernel: discriminator_forward.9
$region0: #{discriminator_forward.9}
  #allocation0 [shape = 'u32[]', space=smem, size = 0x4, offset = 0x4, fixed_abs, tag = 'smem constant byte address 0x4 - core index']
  #allocation1 [shape = 'u32[144,128]{1,0:T(1,128)}', space=vmem, size = 0x12000, scoped, tag = 'internal scratch']
  %s0 = inlined_call_operand.vmem [shape: bf16[2,4,4,64], index: 0, kind: input, shape index: {}]
  %s1 = inlined_call_operand.vmem [shape: bf16[1024,1], index: 1, kind: input, shape index: {}]
  %s2 = inlined_call_operand.vmem [shape: f32[2,1,1], index: 2, kind: output, shape index: {}]
  %s3 = sld [smem:[#allocation0]]
  $region18: #{discriminator_forward.9} parent=0
    _
  %s5 = ssub.s32 1, %s3
  %s6 = scalar_select 0, %s5, %s3
  // Predicated region
  $region2: #{discriminator_forward.9} parent=0 // pred_check
    _
  $region3: #{discriminator_forward.9} parent=0 // pred_check_branch
    %8 = sbr.rel (0) target = $region5
  $region4: #{discriminator_forward.9} parent=0 // pred_region
    _
  $region5: #{discriminator_forward.9} parent=0 // pred_fallthru
    _
  // Predicated region
  $region6: #{discriminator_forward.9} parent=0 // pred_check
    _
  $region7: #{discriminator_forward.9} parent=0 // pred_check_branch
    %10 = sbr.rel (0) target = $region9
  $region8: #{discriminator_forward.9} parent=0 // pred_region
    _
  $region9: #{discriminator_forward.9} parent=0 // pred_fallthru
    _
  %v12 = vld [vmem:[%s0] sm:$0x1]
  %v13 = vld [vmem:[%s0 + $0x8] sm:$0x1]
  %v14 = vld [vmem:[%s0] sm:$0x2]
  %v15 = vld [vmem:[%s0 + $0x8] sm:$0x2]
  %s16 = scalar_lea.vmem %s0, 2
  %v17 = vld [vmem:[%s16] sm:$0x1]
  %v18 = vld [vmem:[%s16 + $0x8] sm:$0x1]
  %v19 = vld [vmem:[%s16] sm:$0x2]
  %v20 = vld [vmem:[%s16 + $0x8] sm:$0x2]
  %s21 = scalar_lea.vmem %s0, 4
  %v22 = vld [vmem:[%s21] sm:$0x1]
  %v23 = vld [vmem:[%s21 + $0x8] sm:$0x1]
  %v24 = vld [vmem:[%s21] sm:$0x2]
  %v25 = vld [vmem:[%s21 + $0x8] sm:$0x2]
  %s26 = scalar_lea.vmem %s0, 6
  %v27 = vld [vmem:[%s26] sm:$0x1]
  %v28 = vld [vmem:[%s26 + $0x8] sm:$0x1]
  %v29 = vld [vmem:[%s26] sm:$0x2]
  %v30 = vld [vmem:[%s26 + $0x8] sm:$0x2]
  %v34 = vunpack.c.l.s4 1983009808
  %v35 = vunpack.c.0.s8 %v34
  %v36 = vlaneseq
  %v37 = vshrl.u32 %v36, 7
  %v38 = vsub.s32 %v35, %v37
  %v39 = vrot.slane %v12, %v38
  %v41 = vunpack.c.l.s4 1983009808
  %v42 = vunpack.c.0.s8 %v41
  %v43 = vlaneseq
  %v44 = vshrl.u32 %v43, 7
  %v45 = vsub.s32 %v42, %v44
  %v46 = vrot.slane %v13, %v45
  %v48 = vshrl.u32 %v39, 16
  %v51 = vshrl.u32 %v46, 16
  %53 = vrot.lane.b32.xlu0 %v48, 64
  %v54 = vpop.permute.xlu0 %53
  %55 = vrot.lane.b32.xlu0 %v51, 64
  %v56 = vpop.permute.xlu0 %55
  %v60 = vunpack.c.l.s4 1983009808
  %v61 = vunpack.c.0.s8 %v60
  %v62 = vlaneseq
  %v63 = vshrl.u32 %v62, 7
  %v64 = vsub.s32 %v61, %v63
  %v65 = vrot.slane %v14, %v64
  %v67 = vunpack.c.l.s4 1983009808
  %v68 = vunpack.c.0.s8 %v67
  %v69 = vlaneseq
  %v70 = vshrl.u32 %v69, 7
  %v71 = vsub.s32 %v68, %v70
  %v72 = vrot.slane %v15, %v71
  %v73 = vrot.slane %v65, 1
  %v74 = vrot.slane %v72, 1
  %v76 = vshrl.u32 %v65, 16
  %v78 = vrot.slane %v76, 1
  %v80 = vshrl.u32 %v72, 16
  %v82 = vrot.slane %v80, 1
  %83 = vrot.lane.b32.xlu0 %v78, 64
  %v84 = vpop.permute.xlu0 %83
  %85 = vrot.lane.b32.xlu0 %v82, 64
  %v86 = vpop.permute.xlu0 %85
  %v90 = vunpack.c.l.s4 1983009808
  %v91 = vunpack.c.0.s8 %v90
  %v92 = vlaneseq
  %v93 = vshrl.u32 %v92, 7
  %v94 = vsub.s32 %v91, %v93
  %v95 = vrot.slane %v17, %v94
  %v97 = vunpack.c.l.s4 1983009808
  %v98 = vunpack.c.0.s8 %v97
  %v99 = vlaneseq
  %v100 = vshrl.u32 %v99, 7
  %v101 = vsub.s32 %v98, %v100
  %v102 = vrot.slane %v18, %v101
  %v104 = vshrl.u32 %v95, 16
  %v107 = vshrl.u32 %v102, 16
  %109 = vrot.lane.b32.xlu0 %v104, 64
  %v110 = vpop.permute.xlu0 %109
  %111 = vrot.lane.b32.xlu0 %v107, 64
  %v112 = vpop.permute.xlu0 %111
  %v116 = vunpack.c.l.s4 1983009808
  %v117 = vunpack.c.0.s8 %v116
  %v118 = vlaneseq
  %v119 = vshrl.u32 %v118, 7
  %v120 = vsub.s32 %v117, %v119
  %v121 = vrot.slane %v19, %v120
  %v123 = vunpack.c.l.s4 1983009808
  %v124 = vunpack.c.0.s8 %v123
  %v125 = vlaneseq
  %v126 = vshrl.u32 %v125, 7
  %v127 = vsub.s32 %v124, %v126
  %v128 = vrot.slane %v20, %v127
  %v129 = vrot.slane %v121, 1
  %v130 = vrot.slane %v128, 1
  %v132 = vshrl.u32 %v121, 16
  %v134 = vrot.slane %v132, 1
  %v136 = vshrl.u32 %v128, 16
  %v138 = vrot.slane %v136, 1
  %139 = vrot.lane.b32.xlu0 %v134, 64
  %v140 = vpop.permute.xlu0 %139
  %141 = vrot.lane.b32.xlu0 %v138, 64
  %v142 = vpop.permute.xlu0 %141
  %v146 = vunpack.c.l.s4 1983009808
  %v147 = vunpack.c.0.s8 %v146
  %v148 = vlaneseq
  %v149 = vshrl.u32 %v148, 7
  %v150 = vsub.s32 %v147, %v149
  %v151 = vrot.slane %v22, %v150
  %v153 = vunpack.c.l.s4 1983009808
  %v154 = vunpack.c.0.s8 %v153
  %v155 = vlaneseq
  %v156 = vshrl.u32 %v155, 7
  %v157 = vsub.s32 %v154, %v156
  %v158 = vrot.slane %v23, %v157
  %v160 = vshrl.u32 %v151, 16
  %v163 = vshrl.u32 %v158, 16
  %165 = vrot.lane.b32.xlu0 %v160, 64
  %v166 = vpop.permute.xlu0 %165
  %167 = vrot.lane.b32.xlu0 %v163, 64
  %v168 = vpop.permute.xlu0 %167
  %v172 = vunpack.c.l.s4 1983009808
  %v173 = vunpack.c.0.s8 %v172
  %v174 = vlaneseq
  %v175 = vshrl.u32 %v174, 7
  %v176 = vsub.s32 %v173, %v175
  %v177 = vrot.slane %v24, %v176
  %v179 = vunpack.c.l.s4 1983009808
  %v180 = vunpack.c.0.s8 %v179
  %v181 = vlaneseq
  %v182 = vshrl.u32 %v181, 7
  %v183 = vsub.s32 %v180, %v182
  %v184 = vrot.slane %v25, %v183
  %v185 = vrot.slane %v177, 1
  %v186 = vrot.slane %v184, 1
  %v188 = vshrl.u32 %v177, 16
  %v190 = vrot.slane %v188, 1
  %v192 = vshrl.u32 %v184, 16
  %v194 = vrot.slane %v192, 1
  %195 = vrot.lane.b32.xlu0 %v190, 64
  %v196 = vpop.permute.xlu0 %195
  %197 = vrot.lane.b32.xlu0 %v194, 64
  %v198 = vpop.permute.xlu0 %197
  %v202 = vunpack.c.l.s4 1983009808
  %v203 = vunpack.c.0.s8 %v202
  %v204 = vlaneseq
  %v205 = vshrl.u32 %v204, 7
  %v206 = vsub.s32 %v203, %v205
  %v207 = vrot.slane %v27, %v206
  %v209 = vunpack.c.l.s4 1983009808
  %v210 = vunpack.c.0.s8 %v209
  %v211 = vlaneseq
  %v212 = vshrl.u32 %v211, 7
  %v213 = vsub.s32 %v210, %v212
  %v214 = vrot.slane %v28, %v213
  %v216 = vshrl.u32 %v207, 16
  %v219 = vshrl.u32 %v214, 16
  %221 = vrot.lane.b32.xlu0 %v216, 64
  %v222 = vpop.permute.xlu0 %221
  %223 = vrot.lane.b32.xlu0 %v219, 64
  %v224 = vpop.permute.xlu0 %223
  %v228 = vunpack.c.l.s4 1983009808
  %v229 = vunpack.c.0.s8 %v228
  %v230 = vlaneseq
  %v231 = vshrl.u32 %v230, 7
  %v232 = vsub.s32 %v229, %v231
  %v233 = vrot.slane %v29, %v232
  %v235 = vunpack.c.l.s4 1983009808
  %v236 = vunpack.c.0.s8 %v235
  %v237 = vlaneseq
  %v238 = vshrl.u32 %v237, 7
  %v239 = vsub.s32 %v236, %v238
  %v240 = vrot.slane %v30, %v239
  %v241 = vrot.slane %v233, 1
  %v242 = vrot.slane %v240, 1
  %v244 = vshrl.u32 %v233, 16
  %v246 = vrot.slane %v244, 1
  %v248 = vshrl.u32 %v240, 16
  %v250 = vrot.slane %v248, 1
  %251 = vrot.lane.b32.xlu0 %v246, 64
  %v252 = vpop.permute.xlu0 %251
  %253 = vrot.lane.b32.xlu0 %v250, 64
  %v254 = vpop.permute.xlu0 %253
  %vm255 = vcmask 523264
  %v258 = vsel %vm255, %v12, %v54
  %v262 = vsel %vm255, %v13, %v56
  %v266 = vsel %vm255, %v73, %v84
  %v270 = vsel %vm255, %v74, %v86
  %v274 = vsel %vm255, %v17, %v110
  %v278 = vsel %vm255, %v18, %v112
  %v282 = vsel %vm255, %v129, %v140
  %v286 = vsel %vm255, %v130, %v142
  %v290 = vsel %vm255, %v22, %v166
  %v294 = vsel %vm255, %v23, %v168
  %v298 = vsel %vm255, %v185, %v196
  %v302 = vsel %vm255, %v186, %v198
  %v306 = vsel %vm255, %v27, %v222
  %v310 = vsel %vm255, %v28, %v224
  %v314 = vsel %vm255, %v241, %v252
  %v318 = vsel %vm255, %v242, %v254
  %v320 = vld [vmem:[%s1] sm:$0xf]
  %v321 = vld [vmem:[%s1 + $0x4] sm:$0xf]
  %v322 = vld [vmem:[%s1 + $0x8] sm:$0xf]
  %v323 = vld [vmem:[%s1 + $0xc] sm:$0xf]
  %v324 = vld [vmem:[%s1 + $0x10] sm:$0xf]
  %v325 = vld [vmem:[%s1 + $0x14] sm:$0xf]
  %v326 = vld [vmem:[%s1 + $0x18] sm:$0xf]
  %v327 = vld [vmem:[%s1 + $0x1c] sm:$0xf]
  %v328 = vld [vmem:[%s1 + $0x20] sm:$0xf]
  %v329 = vld [vmem:[%s1 + $0x24] sm:$0xf]
  %v330 = vld [vmem:[%s1 + $0x28] sm:$0xf]
  %v331 = vld [vmem:[%s1 + $0x2c] sm:$0xf]
  %v332 = vld [vmem:[%s1 + $0x30] sm:$0xf]
  %v333 = vld [vmem:[%s1 + $0x34] sm:$0xf]
  %v334 = vld [vmem:[%s1 + $0x38] sm:$0xf]
  %v335 = vld [vmem:[%s1 + $0x3c] sm:$0xf]
  %v336 = vld [vmem:[%s1 + $0x40] sm:$0xf]
  %v337 = vld [vmem:[%s1 + $0x44] sm:$0xf]
  %v338 = vld [vmem:[%s1 + $0x48] sm:$0xf]
  %v339 = vld [vmem:[%s1 + $0x4c] sm:$0xf]
  %v340 = vld [vmem:[%s1 + $0x50] sm:$0xf]
  %v341 = vld [vmem:[%s1 + $0x54] sm:$0xf]
  %v342 = vld [vmem:[%s1 + $0x58] sm:$0xf]
  %v343 = vld [vmem:[%s1 + $0x5c] sm:$0xf]
  %v344 = vld [vmem:[%s1 + $0x60] sm:$0xf]
  %v345 = vld [vmem:[%s1 + $0x64] sm:$0xf]
  %v346 = vld [vmem:[%s1 + $0x68] sm:$0xf]
  %v347 = vld [vmem:[%s1 + $0x6c] sm:$0xf]
  %v348 = vld [vmem:[%s1 + $0x70] sm:$0xf]
  %v349 = vld [vmem:[%s1 + $0x74] sm:$0xf]
  %v350 = vld [vmem:[%s1 + $0x78] sm:$0xf]
  %v351 = vld [vmem:[%s1 + $0x7c] sm:$0xf]
  %v352 = vld [vmem:[%s1 + $0x80] sm:$0xf]
  %v353 = vld [vmem:[%s1 + $0x84] sm:$0xf]
  %v354 = vld [vmem:[%s1 + $0x88] sm:$0xf]
  %v355 = vld [vmem:[%s1 + $0x8c] sm:$0xf]
  %v356 = vld [vmem:[%s1 + $0x90] sm:$0xf]
  %v357 = vld [vmem:[%s1 + $0x94] sm:$0xf]
  %v358 = vld [vmem:[%s1 + $0x98] sm:$0xf]
  %v359 = vld [vmem:[%s1 + $0x9c] sm:$0xf]
  %v360 = vld [vmem:[%s1 + $0xa0] sm:$0xf]
  %v361 = vld [vmem:[%s1 + $0xa4] sm:$0xf]
  %v362 = vld [vmem:[%s1 + $0xa8] sm:$0xf]
  %v363 = vld [vmem:[%s1 + $0xac] sm:$0xf]
  %v364 = vld [vmem:[%s1 + $0xb0] sm:$0xf]
  %v365 = vld [vmem:[%s1 + $0xb4] sm:$0xf]
  %v366 = vld [vmem:[%s1 + $0xb8] sm:$0xf]
  %v367 = vld [vmem:[%s1 + $0xbc] sm:$0xf]
  %v368 = vld [vmem:[%s1 + $0xc0] sm:$0xf]
  %v369 = vld [vmem:[%s1 + $0xc4] sm:$0xf]
  %v370 = vld [vmem:[%s1 + $0xc8] sm:$0xf]
  %v371 = vld [vmem:[%s1 + $0xcc] sm:$0xf]
  %v372 = vld [vmem:[%s1 + $0xd0] sm:$0xf]
  %v373 = vld [vmem:[%s1 + $0xd4] sm:$0xf]
  %v374 = vld [vmem:[%s1 + $0xd8] sm:$0xf]
  %v375 = vld [vmem:[%s1 + $0xdc] sm:$0xf]
  %v376 = vld [vmem:[%s1 + $0xe0] sm:$0xf]
  %v377 = vld [vmem:[%s1 + $0xe4] sm:$0xf]
  %v378 = vld [vmem:[%s1 + $0xe8] sm:$0xf]
  %v379 = vld [vmem:[%s1 + $0xec] sm:$0xf]
  %v380 = vld [vmem:[%s1 + $0xf0] sm:$0xf]
  %v381 = vld [vmem:[%s1 + $0xf4] sm:$0xf]
  %v382 = vld [vmem:[%s1 + $0xf8] sm:$0xf]
  %v383 = vld [vmem:[%s1 + $0xfc] sm:$0xf]
  %v384 = vld [vmem:[%s1 + $0x100] sm:$0xf]
  %v385 = vld [vmem:[%s1 + $0x104] sm:$0xf]
  %v386 = vld [vmem:[%s1 + $0x108] sm:$0xf]
  %v387 = vld [vmem:[%s1 + $0x10c] sm:$0xf]
  %v388 = vld [vmem:[%s1 + $0x110] sm:$0xf]
  %v389 = vld [vmem:[%s1 + $0x114] sm:$0xf]
  %v390 = vld [vmem:[%s1 + $0x118] sm:$0xf]
  %v391 = vld [vmem:[%s1 + $0x11c] sm:$0xf]
  %v392 = vld [vmem:[%s1 + $0x120] sm:$0xf]
  %v393 = vld [vmem:[%s1 + $0x124] sm:$0xf]
  %v394 = vld [vmem:[%s1 + $0x128] sm:$0xf]
  %v395 = vld [vmem:[%s1 + $0x12c] sm:$0xf]
  %v396 = vld [vmem:[%s1 + $0x130] sm:$0xf]
  %v397 = vld [vmem:[%s1 + $0x134] sm:$0xf]
  %v398 = vld [vmem:[%s1 + $0x138] sm:$0xf]
  %v399 = vld [vmem:[%s1 + $0x13c] sm:$0xf]
  %v400 = vld [vmem:[%s1 + $0x140] sm:$0xf]
  %v401 = vld [vmem:[%s1 + $0x144] sm:$0xf]
  %v402 = vld [vmem:[%s1 + $0x148] sm:$0xf]
  %v403 = vld [vmem:[%s1 + $0x14c] sm:$0xf]
  %v404 = vld [vmem:[%s1 + $0x150] sm:$0xf]
  %v405 = vld [vmem:[%s1 + $0x154] sm:$0xf]
  %v406 = vld [vmem:[%s1 + $0x158] sm:$0xf]
  %v407 = vld [vmem:[%s1 + $0x15c] sm:$0xf]
  %v408 = vld [vmem:[%s1 + $0x160] sm:$0xf]
  %v409 = vld [vmem:[%s1 + $0x164] sm:$0xf]
  %v410 = vld [vmem:[%s1 + $0x168] sm:$0xf]
  %v411 = vld [vmem:[%s1 + $0x16c] sm:$0xf]
  %v412 = vld [vmem:[%s1 + $0x170] sm:$0xf]
  %v413 = vld [vmem:[%s1 + $0x174] sm:$0xf]
  %v414 = vld [vmem:[%s1 + $0x178] sm:$0xf]
  %v415 = vld [vmem:[%s1 + $0x17c] sm:$0xf]
  %v416 = vld [vmem:[%s1 + $0x180] sm:$0xf]
  %v417 = vld [vmem:[%s1 + $0x184] sm:$0xf]
  %v418 = vld [vmem:[%s1 + $0x188] sm:$0xf]
  %v419 = vld [vmem:[%s1 + $0x18c] sm:$0xf]
  %v420 = vld [vmem:[%s1 + $0x190] sm:$0xf]
  %v421 = vld [vmem:[%s1 + $0x194] sm:$0xf]
  %v422 = vld [vmem:[%s1 + $0x198] sm:$0xf]
  %v423 = vld [vmem:[%s1 + $0x19c] sm:$0xf]
  %v424 = vld [vmem:[%s1 + $0x1a0] sm:$0xf]
  %v425 = vld [vmem:[%s1 + $0x1a4] sm:$0xf]
  %v426 = vld [vmem:[%s1 + $0x1a8] sm:$0xf]
  %v427 = vld [vmem:[%s1 + $0x1ac] sm:$0xf]
  %v428 = vld [vmem:[%s1 + $0x1b0] sm:$0xf]
  %v429 = vld [vmem:[%s1 + $0x1b4] sm:$0xf]
  %v430 = vld [vmem:[%s1 + $0x1b8] sm:$0xf]
  %v431 = vld [vmem:[%s1 + $0x1bc] sm:$0xf]
  %v432 = vld [vmem:[%s1 + $0x1c0] sm:$0xf]
  %v433 = vld [vmem:[%s1 + $0x1c4] sm:$0xf]
  %v434 = vld [vmem:[%s1 + $0x1c8] sm:$0xf]
  %v435 = vld [vmem:[%s1 + $0x1cc] sm:$0xf]
  %v436 = vld [vmem:[%s1 + $0x1d0] sm:$0xf]
  %v437 = vld [vmem:[%s1 + $0x1d4] sm:$0xf]
  %v438 = vld [vmem:[%s1 + $0x1d8] sm:$0xf]
  %v439 = vld [vmem:[%s1 + $0x1dc] sm:$0xf]
  %v440 = vld [vmem:[%s1 + $0x1e0] sm:$0xf]
  %v441 = vld [vmem:[%s1 + $0x1e4] sm:$0xf]
  %v442 = vld [vmem:[%s1 + $0x1e8] sm:$0xf]
  %v443 = vld [vmem:[%s1 + $0x1ec] sm:$0xf]
  %v444 = vld [vmem:[%s1 + $0x1f0] sm:$0xf]
  %v445 = vld [vmem:[%s1 + $0x1f4] sm:$0xf]
  %v446 = vld [vmem:[%s1 + $0x1f8] sm:$0xf]
  %v447 = vld [vmem:[%s1 + $0x1fc] sm:$0xf]
  %v576 = vunpack.c.l.b16 %v320
  %v577 = vunpack.c.l.b16 %v321
  %v578 = vunpack.c.l.b16 %v322
  %v579 = vunpack.c.l.b16 %v323
  %v580 = vunpack.c.l.b16 %v324
  %v581 = vunpack.c.l.b16 %v325
  %v582 = vunpack.c.l.b16 %v326
  %v583 = vunpack.c.l.b16 %v327
  %v584 = vunpack.c.l.b16 %v328
  %v585 = vunpack.c.l.b16 %v329
  %v586 = vunpack.c.l.b16 %v330
  %v587 = vunpack.c.l.b16 %v331
  %v588 = vunpack.c.l.b16 %v332
  %v589 = vunpack.c.l.b16 %v333
  %v590 = vunpack.c.l.b16 %v334
  %v591 = vunpack.c.l.b16 %v335
  %v592 = vunpack.c.l.b16 %v336
  %v593 = vunpack.c.l.b16 %v337
  %v594 = vunpack.c.l.b16 %v338
  %v595 = vunpack.c.l.b16 %v339
  %v596 = vunpack.c.l.b16 %v340
  %v597 = vunpack.c.l.b16 %v341
  %v598 = vunpack.c.l.b16 %v342
  %v599 = vunpack.c.l.b16 %v343
  %v600 = vunpack.c.l.b16 %v344
  %v601 = vunpack.c.l.b16 %v345
  %v602 = vunpack.c.l.b16 %v346
  %v603 = vunpack.c.l.b16 %v347
  %v604 = vunpack.c.l.b16 %v348
  %v605 = vunpack.c.l.b16 %v349
  %v606 = vunpack.c.l.b16 %v350
  %v607 = vunpack.c.l.b16 %v351
  %v608 = vunpack.c.l.b16 %v352
  %v609 = vunpack.c.l.b16 %v353
  %v610 = vunpack.c.l.b16 %v354
  %v611 = vunpack.c.l.b16 %v355
  %v612 = vunpack.c.l.b16 %v356
  %v613 = vunpack.c.l.b16 %v357
  %v614 = vunpack.c.l.b16 %v358
  %v615 = vunpack.c.l.b16 %v359
  %v616 = vunpack.c.l.b16 %v360
  %v617 = vunpack.c.l.b16 %v361
  %v618 = vunpack.c.l.b16 %v362
  %v619 = vunpack.c.l.b16 %v363
  %v620 = vunpack.c.l.b16 %v364
  %v621 = vunpack.c.l.b16 %v365
  %v622 = vunpack.c.l.b16 %v366
  %v623 = vunpack.c.l.b16 %v367
  %v624 = vunpack.c.l.b16 %v368
  %v625 = vunpack.c.l.b16 %v369
  %v626 = vunpack.c.l.b16 %v370
  %v627 = vunpack.c.l.b16 %v371
  %v628 = vunpack.c.l.b16 %v372
  %v629 = vunpack.c.l.b16 %v373
  %v630 = vunpack.c.l.b16 %v374
  %v631 = vunpack.c.l.b16 %v375
  %v632 = vunpack.c.l.b16 %v376
  %v633 = vunpack.c.l.b16 %v377
  %v634 = vunpack.c.l.b16 %v378
  %v635 = vunpack.c.l.b16 %v379
  %v636 = vunpack.c.l.b16 %v380
  %v637 = vunpack.c.l.b16 %v381
  %v638 = vunpack.c.l.b16 %v382
  %v639 = vunpack.c.l.b16 %v383
  %v640 = vunpack.c.l.b16 %v384
  %v641 = vunpack.c.l.b16 %v385
  %v642 = vunpack.c.l.b16 %v386
  %v643 = vunpack.c.l.b16 %v387
  %v644 = vunpack.c.l.b16 %v388
  %v645 = vunpack.c.l.b16 %v389
  %v646 = vunpack.c.l.b16 %v390
  %v647 = vunpack.c.l.b16 %v391
  %v648 = vunpack.c.l.b16 %v392
  %v649 = vunpack.c.l.b16 %v393
  %v650 = vunpack.c.l.b16 %v394
  %v651 = vunpack.c.l.b16 %v395
  %v652 = vunpack.c.l.b16 %v396
  %v653 = vunpack.c.l.b16 %v397
  %v654 = vunpack.c.l.b16 %v398
  %v655 = vunpack.c.l.b16 %v399
  %v656 = vunpack.c.l.b16 %v400
  %v657 = vunpack.c.l.b16 %v401
  %v658 = vunpack.c.l.b16 %v402
  %v659 = vunpack.c.l.b16 %v403
  %v660 = vunpack.c.l.b16 %v404
  %v661 = vunpack.c.l.b16 %v405
  %v662 = vunpack.c.l.b16 %v406
  %v663 = vunpack.c.l.b16 %v407
  %v664 = vunpack.c.l.b16 %v408
  %v665 = vunpack.c.l.b16 %v409
  %v666 = vunpack.c.l.b16 %v410
  %v667 = vunpack.c.l.b16 %v411
  %v668 = vunpack.c.l.b16 %v412
  %v669 = vunpack.c.l.b16 %v413
  %v670 = vunpack.c.l.b16 %v414
  %v671 = vunpack.c.l.b16 %v415
  %v672 = vunpack.c.l.b16 %v416
  %v673 = vunpack.c.l.b16 %v417
  %v674 = vunpack.c.l.b16 %v418
  %v675 = vunpack.c.l.b16 %v419
  %v676 = vunpack.c.l.b16 %v420
  %v677 = vunpack.c.l.b16 %v421
  %v678 = vunpack.c.l.b16 %v422
  %v679 = vunpack.c.l.b16 %v423
  %v680 = vunpack.c.l.b16 %v424
  %v681 = vunpack.c.l.b16 %v425
  %v682 = vunpack.c.l.b16 %v426
  %v683 = vunpack.c.l.b16 %v427
  %v684 = vunpack.c.l.b16 %v428
  %v685 = vunpack.c.l.b16 %v429
  %v686 = vunpack.c.l.b16 %v430
  %v687 = vunpack.c.l.b16 %v431
  %v688 = vunpack.c.l.b16 %v432
  %v689 = vunpack.c.l.b16 %v433
  %v690 = vunpack.c.l.b16 %v434
  %v691 = vunpack.c.l.b16 %v435
  %v692 = vunpack.c.l.b16 %v436
  %v693 = vunpack.c.l.b16 %v437
  %v694 = vunpack.c.l.b16 %v438
  %v695 = vunpack.c.l.b16 %v439
  %v696 = vunpack.c.l.b16 %v440
  %v697 = vunpack.c.l.b16 %v441
  %v698 = vunpack.c.l.b16 %v442
  %v699 = vunpack.c.l.b16 %v443
  %v700 = vunpack.c.l.b16 %v444
  %v701 = vunpack.c.l.b16 %v445
  %v702 = vunpack.c.l.b16 %v446
  %v703 = vunpack.c.l.b16 %v447
  %v704 = vpack.c.b16 %v577, %v576
  %v705 = vpack.c.b16 %v579, %v578
  %v706 = vpack.c.b16 %v581, %v580
  %v707 = vpack.c.b16 %v583, %v582
  %v708 = vpack.c.b16 %v585, %v584
  %v709 = vpack.c.b16 %v587, %v586
  %v710 = vpack.c.b16 %v589, %v588
  %v711 = vpack.c.b16 %v591, %v590
  %v712 = vpack.c.b16 %v593, %v592
  %v713 = vpack.c.b16 %v595, %v594
  %v714 = vpack.c.b16 %v597, %v596
  %v715 = vpack.c.b16 %v599, %v598
  %v716 = vpack.c.b16 %v601, %v600
  %v717 = vpack.c.b16 %v603, %v602
  %v718 = vpack.c.b16 %v605, %v604
  %v719 = vpack.c.b16 %v607, %v606
  %v720 = vpack.c.b16 %v609, %v608
  %v721 = vpack.c.b16 %v611, %v610
  %v722 = vpack.c.b16 %v613, %v612
  %v723 = vpack.c.b16 %v615, %v614
  %v724 = vpack.c.b16 %v617, %v616
  %v725 = vpack.c.b16 %v619, %v618
  %v726 = vpack.c.b16 %v621, %v620
  %v727 = vpack.c.b16 %v623, %v622
  %v728 = vpack.c.b16 %v625, %v624
  %v729 = vpack.c.b16 %v627, %v626
  %v730 = vpack.c.b16 %v629, %v628
  %v731 = vpack.c.b16 %v631, %v630
  %v732 = vpack.c.b16 %v633, %v632
  %v733 = vpack.c.b16 %v635, %v634
  %v734 = vpack.c.b16 %v637, %v636
  %v735 = vpack.c.b16 %v639, %v638
  %v736 = vpack.c.b16 %v641, %v640
  %v737 = vpack.c.b16 %v643, %v642
  %v738 = vpack.c.b16 %v645, %v644
  %v739 = vpack.c.b16 %v647, %v646
  %v740 = vpack.c.b16 %v649, %v648
  %v741 = vpack.c.b16 %v651, %v650
  %v742 = vpack.c.b16 %v653, %v652
  %v743 = vpack.c.b16 %v655, %v654
  %v744 = vpack.c.b16 %v657, %v656
  %v745 = vpack.c.b16 %v659, %v658
  %v746 = vpack.c.b16 %v661, %v660
  %v747 = vpack.c.b16 %v663, %v662
  %v748 = vpack.c.b16 %v665, %v664
  %v749 = vpack.c.b16 %v667, %v666
  %v750 = vpack.c.b16 %v669, %v668
  %v751 = vpack.c.b16 %v671, %v670
  %v752 = vpack.c.b16 %v673, %v672
  %v753 = vpack.c.b16 %v675, %v674
  %v754 = vpack.c.b16 %v677, %v676
  %v755 = vpack.c.b16 %v679, %v678
  %v756 = vpack.c.b16 %v681, %v680
  %v757 = vpack.c.b16 %v683, %v682
  %v758 = vpack.c.b16 %v685, %v684
  %v759 = vpack.c.b16 %v687, %v686
  %v760 = vpack.c.b16 %v689, %v688
  %v761 = vpack.c.b16 %v691, %v690
  %v762 = vpack.c.b16 %v693, %v692
  %v763 = vpack.c.b16 %v695, %v694
  %v764 = vpack.c.b16 %v697, %v696
  %v765 = vpack.c.b16 %v699, %v698
  %v766 = vpack.c.b16 %v701, %v700
  %v767 = vpack.c.b16 %v703, %v702
  %832 = vmatprep.subr.bf16.mxu0 0
  %833 = vmatpush1.bf16.msra.mxu0 %v711
  %834 = vmatprep.subr.bf16.mxu0 0
  %835 = vmatpush1.bf16.msra.mxu0 %v710
  %836 = vmatprep.subr.bf16.mxu0 0
  %837 = vmatpush1.bf16.msra.mxu0 %v709
  %838 = vmatprep.subr.bf16.mxu0 0
  %839 = vmatpush1.bf16.msra.mxu0 %v708
  %840 = vmatprep.subr.bf16.mxu0 0
  %841 = vmatpush1.bf16.msra.mxu0 %v707
  %842 = vmatprep.subr.bf16.mxu0 0
  %843 = vmatpush1.bf16.msra.mxu0 %v706
  %844 = vmatprep.subr.bf16.mxu0 0
  %845 = vmatpush1.bf16.msra.mxu0 %v705
  %846 = vmatprep.subr.bf16.mxu0 0
  %847 = vmatpush1.bf16.msra.mxu0 %v704
  %848 = vmatprep.subr.bf16.mxu0 0
  %849 = vmatpush2.bf16.msra.mxu0 %v719
  %850 = vmatprep.subr.bf16.mxu0 0
  %851 = vmatpush2.bf16.msra.mxu0 %v718
  %852 = vmatprep.subr.bf16.mxu0 0
  %853 = vmatpush2.bf16.msra.mxu0 %v717
  %854 = vmatprep.subr.bf16.mxu0 0
  %855 = vmatpush2.bf16.msra.mxu0 %v716
  %856 = vmatprep.subr.bf16.mxu0 0
  %857 = vmatpush2.bf16.msra.mxu0 %v715
  %858 = vmatprep.subr.bf16.mxu0 0
  %859 = vmatpush2.bf16.msra.mxu0 %v714
  %860 = vmatprep.subr.bf16.mxu0 0
  %861 = vmatpush2.bf16.msra.mxu0 %v713
  %862 = vmatprep.subr.bf16.mxu0 0
  %863 = vmatpush2.bf16.msra.mxu0 %v712
  %864 = vmatprep.mubr.bf16.mxu0 %v266
  %865 = vmatmul.mubr.bf16.gmra.mxu0 %v258
  %v866 = vpop.f32.mrf.mxu0
  %v867 = vadd.f32 0.0, %v866
  %v868 = vpop.f32.mrf.mxu0
  %v869 = vpop.f32.mrf.mxu0
  %v870 = vpop.f32.mrf.mxu0
  %871 = vdwg.mxu0
  %872 = vmatprep.subr.bf16.mxu0 0
  %873 = vmatpush1.bf16.msra.mxu0 %v727
  %874 = vmatprep.subr.bf16.mxu0 0
  %875 = vmatpush1.bf16.msra.mxu0 %v726
  %876 = vmatprep.subr.bf16.mxu0 0
  %877 = vmatpush1.bf16.msra.mxu0 %v725
  %878 = vmatprep.subr.bf16.mxu0 0
  %879 = vmatpush1.bf16.msra.mxu0 %v724
  %880 = vmatprep.subr.bf16.mxu0 0
  %881 = vmatpush1.bf16.msra.mxu0 %v723
  %882 = vmatprep.subr.bf16.mxu0 0
  %883 = vmatpush1.bf16.msra.mxu0 %v722
  %884 = vmatprep.subr.bf16.mxu0 0
  %885 = vmatpush1.bf16.msra.mxu0 %v721
  %886 = vmatprep.subr.bf16.mxu0 0
  %887 = vmatpush1.bf16.msra.mxu0 %v720
  %888 = vmatprep.subr.bf16.mxu0 0
  %889 = vmatpush2.bf16.msra.mxu0 %v735
  %890 = vmatprep.subr.bf16.mxu0 0
  %891 = vmatpush2.bf16.msra.mxu0 %v734
  %892 = vmatprep.subr.bf16.mxu0 0
  %893 = vmatpush2.bf16.msra.mxu0 %v733
  %894 = vmatprep.subr.bf16.mxu0 0
  %895 = vmatpush2.bf16.msra.mxu0 %v732
  %896 = vmatprep.subr.bf16.mxu0 0
  %897 = vmatpush2.bf16.msra.mxu0 %v731
  %898 = vmatprep.subr.bf16.mxu0 0
  %899 = vmatpush2.bf16.msra.mxu0 %v730
  %900 = vmatprep.subr.bf16.mxu0 0
  %901 = vmatpush2.bf16.msra.mxu0 %v729
  %902 = vmatprep.subr.bf16.mxu0 0
  %903 = vmatpush2.bf16.msra.mxu0 %v728
  %904 = vmatprep.mubr.bf16.mxu0 %v282
  %905 = vmatmul.mubr.bf16.gmra.mxu0 %v274
  %v906 = vpop.f32.mrf.mxu0
  %v907 = vadd.f32 %v867, %v906
  %v908 = vpop.f32.mrf.mxu0
  %v909 = vpop.f32.mrf.mxu0
  %v910 = vpop.f32.mrf.mxu0
  %911 = vdwg.mxu0
  %912 = vmatprep.subr.bf16.mxu0 0
  %913 = vmatpush1.bf16.msra.mxu0 %v743
  %914 = vmatprep.subr.bf16.mxu0 0
  %915 = vmatpush1.bf16.msra.mxu0 %v742
  %916 = vmatprep.subr.bf16.mxu0 0
  %917 = vmatpush1.bf16.msra.mxu0 %v741
  %918 = vmatprep.subr.bf16.mxu0 0
  %919 = vmatpush1.bf16.msra.mxu0 %v740
  %920 = vmatprep.subr.bf16.mxu0 0
  %921 = vmatpush1.bf16.msra.mxu0 %v739
  %922 = vmatprep.subr.bf16.mxu0 0
  %923 = vmatpush1.bf16.msra.mxu0 %v738
  %924 = vmatprep.subr.bf16.mxu0 0
  %925 = vmatpush1.bf16.msra.mxu0 %v737
  %926 = vmatprep.subr.bf16.mxu0 0
  %927 = vmatpush1.bf16.msra.mxu0 %v736
  %928 = vmatprep.subr.bf16.mxu0 0
  %929 = vmatpush2.bf16.msra.mxu0 %v751
  %930 = vmatprep.subr.bf16.mxu0 0
  %931 = vmatpush2.bf16.msra.mxu0 %v750
  %932 = vmatprep.subr.bf16.mxu0 0
  %933 = vmatpush2.bf16.msra.mxu0 %v749
  %934 = vmatprep.subr.bf16.mxu0 0
  %935 = vmatpush2.bf16.msra.mxu0 %v748
  %936 = vmatprep.subr.bf16.mxu0 0
  %937 = vmatpush2.bf16.msra.mxu0 %v747
  %938 = vmatprep.subr.bf16.mxu0 0
  %939 = vmatpush2.bf16.msra.mxu0 %v746
  %940 = vmatprep.subr.bf16.mxu0 0
  %941 = vmatpush2.bf16.msra.mxu0 %v745
  %942 = vmatprep.subr.bf16.mxu0 0
  %943 = vmatpush2.bf16.msra.mxu0 %v744
  %944 = vmatprep.mubr.bf16.mxu0 %v298
  %945 = vmatmul.mubr.bf16.gmra.mxu0 %v290
  %v946 = vpop.f32.mrf.mxu0
  %v947 = vadd.f32 %v907, %v946
  %v948 = vpop.f32.mrf.mxu0
  %v949 = vpop.f32.mrf.mxu0
  %v950 = vpop.f32.mrf.mxu0
  %951 = vdwg.mxu0
  %952 = vmatprep.subr.bf16.mxu0 0
  %953 = vmatpush1.bf16.msra.mxu0 %v759
  %954 = vmatprep.subr.bf16.mxu0 0
  %955 = vmatpush1.bf16.msra.mxu0 %v758
  %956 = vmatprep.subr.bf16.mxu0 0
  %957 = vmatpush1.bf16.msra.mxu0 %v757
  %958 = vmatprep.subr.bf16.mxu0 0
  %959 = vmatpush1.bf16.msra.mxu0 %v756
  %960 = vmatprep.subr.bf16.mxu0 0
  %961 = vmatpush1.bf16.msra.mxu0 %v755
  %962 = vmatprep.subr.bf16.mxu0 0
  %963 = vmatpush1.bf16.msra.mxu0 %v754
  %964 = vmatprep.subr.bf16.mxu0 0
  %965 = vmatpush1.bf16.msra.mxu0 %v753
  %966 = vmatprep.subr.bf16.mxu0 0
  %967 = vmatpush1.bf16.msra.mxu0 %v752
  %968 = vmatprep.subr.bf16.mxu0 0
  %969 = vmatpush2.bf16.msra.mxu0 %v767
  %970 = vmatprep.subr.bf16.mxu0 0
  %971 = vmatpush2.bf16.msra.mxu0 %v766
  %972 = vmatprep.subr.bf16.mxu0 0
  %973 = vmatpush2.bf16.msra.mxu0 %v765
  %974 = vmatprep.subr.bf16.mxu0 0
  %975 = vmatpush2.bf16.msra.mxu0 %v764
  %976 = vmatprep.subr.bf16.mxu0 0
  %977 = vmatpush2.bf16.msra.mxu0 %v763
  %978 = vmatprep.subr.bf16.mxu0 0
  %979 = vmatpush2.bf16.msra.mxu0 %v762
  %980 = vmatprep.subr.bf16.mxu0 0
  %981 = vmatpush2.bf16.msra.mxu0 %v761
  %982 = vmatprep.subr.bf16.mxu0 0
  %983 = vmatpush2.bf16.msra.mxu0 %v760
  %984 = vmatprep.mubr.bf16.mxu0 %v314
  %985 = vmatmul.mubr.bf16.gmra.mxu0 %v306
  %v986 = vpop.f32.mrf.mxu0
  %v987 = vadd.f32 %v947, %v986
  %v988 = vpop.f32.mrf.mxu0
  %v989 = vpop.f32.mrf.mxu0
  %v990 = vpop.f32.mrf.mxu0
  %991 = vdwg.mxu0
  %992 = vmatprep.subr.bf16.mxu0 0
  %993 = vmatpush1.bf16.msra.mxu0 %v711
  %994 = vmatprep.subr.bf16.mxu0 0
  %995 = vmatpush1.bf16.msra.mxu0 %v710
  %996 = vmatprep.subr.bf16.mxu0 0
  %997 = vmatpush1.bf16.msra.mxu0 %v709
  %998 = vmatprep.subr.bf16.mxu0 0
  %999 = vmatpush1.bf16.msra.mxu0 %v708
  %1000 = vmatprep.subr.bf16.mxu0 0
  %1001 = vmatpush1.bf16.msra.mxu0 %v707
  %1002 = vmatprep.subr.bf16.mxu0 0
  %1003 = vmatpush1.bf16.msra.mxu0 %v706
  %1004 = vmatprep.subr.bf16.mxu0 0
  %1005 = vmatpush1.bf16.msra.mxu0 %v705
  %1006 = vmatprep.subr.bf16.mxu0 0
  %1007 = vmatpush1.bf16.msra.mxu0 %v704
  %1008 = vmatprep.subr.bf16.mxu0 0
  %1009 = vmatpush2.bf16.msra.mxu0 %v719
  %1010 = vmatprep.subr.bf16.mxu0 0
  %1011 = vmatpush2.bf16.msra.mxu0 %v718
  %1012 = vmatprep.subr.bf16.mxu0 0
  %1013 = vmatpush2.bf16.msra.mxu0 %v717
  %1014 = vmatprep.subr.bf16.mxu0 0
  %1015 = vmatpush2.bf16.msra.mxu0 %v716
  %1016 = vmatprep.subr.bf16.mxu0 0
  %1017 = vmatpush2.bf16.msra.mxu0 %v715
  %1018 = vmatprep.subr.bf16.mxu0 0
  %1019 = vmatpush2.bf16.msra.mxu0 %v714
  %1020 = vmatprep.subr.bf16.mxu0 0
  %1021 = vmatpush2.bf16.msra.mxu0 %v713
  %1022 = vmatprep.subr.bf16.mxu0 0
  %1023 = vmatpush2.bf16.msra.mxu0 %v712
  %1024 = vmatprep.mubr.bf16.mxu0 %v270
  %1025 = vmatmul.mubr.bf16.gmra.mxu0 %v262
  %v1026 = vpop.f32.mrf.mxu0
  %v1027 = vadd.f32 0.0, %v1026
  %v1028 = vpop.f32.mrf.mxu0
  %v1029 = vpop.f32.mrf.mxu0
  %v1030 = vpop.f32.mrf.mxu0
  %1031 = vdwg.mxu0
  %1032 = vmatprep.subr.bf16.mxu0 0
  %1033 = vmatpush1.bf16.msra.mxu0 %v727
  %1034 = vmatprep.subr.bf16.mxu0 0
  %1035 = vmatpush1.bf16.msra.mxu0 %v726
  %1036 = vmatprep.subr.bf16.mxu0 0
  %1037 = vmatpush1.bf16.msra.mxu0 %v725
  %1038 = vmatprep.subr.bf16.mxu0 0
  %1039 = vmatpush1.bf16.msra.mxu0 %v724
  %1040 = vmatprep.subr.bf16.mxu0 0
  %1041 = vmatpush1.bf16.msra.mxu0 %v723
  %1042 = vmatprep.subr.bf16.mxu0 0
  %1043 = vmatpush1.bf16.msra.mxu0 %v722
  %1044 = vmatprep.subr.bf16.mxu0 0
  %1045 = vmatpush1.bf16.msra.mxu0 %v721
  %1046 = vmatprep.subr.bf16.mxu0 0
  %1047 = vmatpush1.bf16.msra.mxu0 %v720
  %1048 = vmatprep.subr.bf16.mxu0 0
  %1049 = vmatpush2.bf16.msra.mxu0 %v735
  %1050 = vmatprep.subr.bf16.mxu0 0
  %1051 = vmatpush2.bf16.msra.mxu0 %v734
  %1052 = vmatprep.subr.bf16.mxu0 0
  %1053 = vmatpush2.bf16.msra.mxu0 %v733
  %1054 = vmatprep.subr.bf16.mxu0 0
  %1055 = vmatpush2.bf16.msra.mxu0 %v732
  %1056 = vmatprep.subr.bf16.mxu0 0
  %1057 = vmatpush2.bf16.msra.mxu0 %v731
  %1058 = vmatprep.subr.bf16.mxu0 0
  %1059 = vmatpush2.bf16.msra.mxu0 %v730
  %1060 = vmatprep.subr.bf16.mxu0 0
  %1061 = vmatpush2.bf16.msra.mxu0 %v729
  %1062 = vmatprep.subr.bf16.mxu0 0
  %1063 = vmatpush2.bf16.msra.mxu0 %v728
  %1064 = vmatprep.mubr.bf16.mxu0 %v286
  %1065 = vmatmul.mubr.bf16.gmra.mxu0 %v278
  %v1066 = vpop.f32.mrf.mxu0
  %v1067 = vadd.f32 %v1027, %v1066
  %v1068 = vpop.f32.mrf.mxu0
  %v1069 = vpop.f32.mrf.mxu0
  %v1070 = vpop.f32.mrf.mxu0
  %1071 = vdwg.mxu0
  %1072 = vmatprep.subr.bf16.mxu0 0
  %1073 = vmatpush1.bf16.msra.mxu0 %v743
  %1074 = vmatprep.subr.bf16.mxu0 0
  %1075 = vmatpush1.bf16.msra.mxu0 %v742
  %1076 = vmatprep.subr.bf16.mxu0 0
  %1077 = vmatpush1.bf16.msra.mxu0 %v741
  %1078 = vmatprep.subr.bf16.mxu0 0
  %1079 = vmatpush1.bf16.msra.mxu0 %v740
  %1080 = vmatprep.subr.bf16.mxu0 0
  %1081 = vmatpush1.bf16.msra.mxu0 %v739
  %1082 = vmatprep.subr.bf16.mxu0 0
  %1083 = vmatpush1.bf16.msra.mxu0 %v738
  %1084 = vmatprep.subr.bf16.mxu0 0
  %1085 = vmatpush1.bf16.msra.mxu0 %v737
  %1086 = vmatprep.subr.bf16.mxu0 0
  %1087 = vmatpush1.bf16.msra.mxu0 %v736
  %1088 = vmatprep.subr.bf16.mxu0 0
  %1089 = vmatpush2.bf16.msra.mxu0 %v751
  %1090 = vmatprep.subr.bf16.mxu0 0
  %1091 = vmatpush2.bf16.msra.mxu0 %v750
  %1092 = vmatprep.subr.bf16.mxu0 0
  %1093 = vmatpush2.bf16.msra.mxu0 %v749
  %1094 = vmatprep.subr.bf16.mxu0 0
  %1095 = vmatpush2.bf16.msra.mxu0 %v748
  %1096 = vmatprep.subr.bf16.mxu0 0
  %1097 = vmatpush2.bf16.msra.mxu0 %v747
  %1098 = vmatprep.subr.bf16.mxu0 0
  %1099 = vmatpush2.bf16.msra.mxu0 %v746
  %1100 = vmatprep.subr.bf16.mxu0 0
  %1101 = vmatpush2.bf16.msra.mxu0 %v745
  %1102 = vmatprep.subr.bf16.mxu0 0
  %1103 = vmatpush2.bf16.msra.mxu0 %v744
  %1104 = vmatprep.mubr.bf16.mxu0 %v302
  %1105 = vmatmul.mubr.bf16.gmra.mxu0 %v294
  %v1106 = vpop.f32.mrf.mxu0
  %v1107 = vadd.f32 %v1067, %v1106
  %v1108 = vpop.f32.mrf.mxu0
  %v1109 = vpop.f32.mrf.mxu0
  %v1110 = vpop.f32.mrf.mxu0
  %1111 = vdwg.mxu0
  %1112 = vmatprep.subr.bf16.mxu0 0
  %1113 = vmatpush1.bf16.msra.mxu0 %v759
  %1114 = vmatprep.subr.bf16.mxu0 0
  %1115 = vmatpush1.bf16.msra.mxu0 %v758
  %1116 = vmatprep.subr.bf16.mxu0 0
  %1117 = vmatpush1.bf16.msra.mxu0 %v757
  %1118 = vmatprep.subr.bf16.mxu0 0
  %1119 = vmatpush1.bf16.msra.mxu0 %v756
  %1120 = vmatprep.subr.bf16.mxu0 0
  %1121 = vmatpush1.bf16.msra.mxu0 %v755
  %1122 = vmatprep.subr.bf16.mxu0 0
  %1123 = vmatpush1.bf16.msra.mxu0 %v754
  %1124 = vmatprep.subr.bf16.mxu0 0
  %1125 = vmatpush1.bf16.msra.mxu0 %v753
  %1126 = vmatprep.subr.bf16.mxu0 0
  %1127 = vmatpush1.bf16.msra.mxu0 %v752
  %1128 = vmatprep.subr.bf16.mxu0 0
  %1129 = vmatpush2.bf16.msra.mxu0 %v767
  %1130 = vmatprep.subr.bf16.mxu0 0
  %1131 = vmatpush2.bf16.msra.mxu0 %v766
  %1132 = vmatprep.subr.bf16.mxu0 0
  %1133 = vmatpush2.bf16.msra.mxu0 %v765
  %1134 = vmatprep.subr.bf16.mxu0 0
  %1135 = vmatpush2.bf16.msra.mxu0 %v764
  %1136 = vmatprep.subr.bf16.mxu0 0
  %1137 = vmatpush2.bf16.msra.mxu0 %v763
  %1138 = vmatprep.subr.bf16.mxu0 0
  %1139 = vmatpush2.bf16.msra.mxu0 %v762
  %1140 = vmatprep.subr.bf16.mxu0 0
  %1141 = vmatpush2.bf16.msra.mxu0 %v761
  %1142 = vmatprep.subr.bf16.mxu0 0
  %1143 = vmatpush2.bf16.msra.mxu0 %v760
  %1144 = vmatprep.mubr.bf16.mxu0 %v318
  %1145 = vmatmul.mubr.bf16.gmra.mxu0 %v310
  %v1146 = vpop.f32.mrf.mxu0
  %v1147 = vadd.f32 %v1107, %v1146
  %v1148 = vpop.f32.mrf.mxu0
  %v1149 = vpop.f32.mrf.mxu0
  %v1150 = vpop.f32.mrf.mxu0
  %1151 = vdwg.mxu0
  %vm1152 = vcmask 0
  %1153 = vst.msk [vmem:[%s2] sm:$0x1] %vm1152, %v987
  %1154 = vst.msk [vmem:[%s2 + $0x1] sm:$0x1] %vm1152, %v1147
  // Predicated region
  $region10: #{discriminator_forward.9} parent=0 // pred_check
    _
  $region11: #{discriminator_forward.9} parent=0 // pred_check_branch
    %1156 = sbr.rel (0) target = $region13
  $region12: #{discriminator_forward.9} parent=0 // pred_region
    _
  $region13: #{discriminator_forward.9} parent=0 // pred_fallthru
    _
  // Predicated region
  $region14: #{discriminator_forward.9} parent=0 // pred_check
    _
  $region15: #{discriminator_forward.9} parent=0 // pred_check_branch
    %1158 = sbr.rel (0) target = $region17
  $region16: #{discriminator_forward.9} parent=0 // pred_region
    _
  $region17: #{discriminator_forward.9} parent=0 // pred_fallthru
    _

</llo_original>
